<compile_context>
chip_gen: v7x
topology: tpu7x:2x2x1
jax: 0.10.0
libtpu: 0.0.40
codegen_flags: <defaults>
</compile_context>

<pallas_src>
import numpy as np
import jax
import jax.numpy as jnp
from jax.experimental import pallas as pl
from jax.experimental.pallas import tpu as pltpu


# ----------------------------------------------------------------------------
# Operator construction (plain numpy glue): bicubic resize / gaussian blur.
# ----------------------------------------------------------------------------
def _cubic_weight(t, a=-0.75):
    # a=-0.75 matches torchvision's tensor-backend bicubic.
    # TODO(synk): torchvision antialiases on downscale; not implemented here.
    t = np.abs(t)
    return np.where(
        t <= 1.0,
        (a + 2.0) * t**3 - (a + 3.0) * t**2 + 1.0,
        np.where(t < 2.0, a * t**3 - 5.0 * a * t**2 + 8.0 * a * t - 4.0 * a, 0.0),
    )


def bicubic_resize_matrix(n_out, n_in):
    """(n_out, n_in) matrix M so that y = M @ x is a 1-D bicubic resize."""
    M = np.zeros((n_out, n_in), dtype=np.float64)
    scale = n_in / n_out
    for i in range(n_out):
        src = (i + 0.5) * scale - 0.5
        base = int(np.floor(src))
        idxs = np.array([base - 1, base, base + 1, base + 2])
        w = _cubic_weight(src - idxs)
        w = w / w.sum()
        idxs = np.clip(idxs, 0, n_in - 1)
        for j, wj in zip(idxs, w):
            M[i, j] += wj
    return M


def gaussian_blur_matrix(n, ksize=5, sigma=1.0):
    """Banded (n, n) matrix for 1-D gaussian blur with reflect padding."""
    half = ksize // 2
    xs = np.arange(-half, half + 1)
    g = np.exp(-0.5 * (xs / sigma) ** 2)
    g = g / g.sum()
    B = np.zeros((n, n), dtype=np.float64)
    for i in range(n):
        for k, gk in zip(xs, g):
            j = i + k
            if j < 0:
                j = -j
            elif j >= n:
                j = 2 * (n - 1) - j
            B[i, j] += gk
    return B


def _query_vmem_capacity(default=64 << 20):
    try:
        info = pltpu.get_tpu_info()
        cap = getattr(info, "vmem_capacity_bytes", None)
        if cap:
            return int(cap)
    except Exception:
        pass
    return default


# ----------------------------------------------------------------------------
# Fused multi-crop kernel.
# ----------------------------------------------------------------------------
def _make_kernel(nt, hg, hl, blur_from_g2, out_dtype):
    def kernel(scale_ref, off_ref, x_ref, lcat_ref, rg_ref, rl_ref, *rest):
        if blur_from_g2:
            bh_ref, bwt_ref, g1_ref, g2_ref, lo_ref = rest
        else:
            r1_ref, g1_ref, g2_ref, lo_ref = rest

        base = pl.program_id(0) * nt
        lcat = lcat_ref[...]                      # (rows, Hin) bf16, resident
        rg = rg_ref[...]                          # (Win, 224)  bf16
        rl = rl_ref[...]                          # (Win,  96)  bf16
        if blur_from_g2:
            bh = bh_ref[...]                      # (224, 224) bf16
            bwt = bwt_ref[...]                    # (224, 224) bf16
        else:
            r1 = r1_ref[...]                      # (Win, 224) bf16

        # nt <= 8: a static per-slab loop keeps every matmul rank-2 (robust
        # Mosaic lowering) while never replicating the operator matrices.
        for j in range(nt):
            xj = x_ref[j]                                                   # (Hin, Win) bf16
            # Stage A: one matmul against the row-concatenated L operators.
            t = jnp.dot(lcat, xj, preferred_element_type=jnp.float32)       # (rows, Win) f32
            tg = t[0:hg].astype(jnp.bfloat16)                               # global resize rows
            if blur_from_g2:
                tl = t[hg:hg + hl].astype(jnp.bfloat16)
            else:
                t1 = t[hg:2 * hg].astype(jnp.bfloat16)                      # blurred-global rows
                tl = t[2 * hg:2 * hg + hl].astype(jnp.bfloat16)
            # Stage B: right resize operators (f32 accumulation on the MXU).
            g2a = jnp.dot(tg, rg, preferred_element_type=jnp.float32)       # (224, 224)
            loa = jnp.dot(tl, rl, preferred_element_type=jnp.float32)       # ( 96,  96)
            if blur_from_g2:
                # g1 = Bh @ g2 @ Bw^T; the blur rows/cols sum to 1 so the
                # affine normalisation below commutes with it.
                g1a = jnp.dot(
                    jnp.dot(bh, g2a.astype(jnp.bfloat16),
                            preferred_element_type=jnp.float32).astype(jnp.bfloat16),
                    bwt, preferred_element_type=jnp.float32)
            else:
                g1a = jnp.dot(t1, r1, preferred_element_type=jnp.float32)
            # Normalize folded onto the f32 accumulators (reference applies
            # Normalize last): y -> y * invstd - mean * invstd.
            s = scale_ref[base + j]
            b = off_ref[base + j]
            g1_ref[j] = (g1a * s + b).astype(out_dtype)
            g2_ref[j] = (g2a * s + b).astype(out_dtype)
            lo_ref[j] = (loa * s + b).astype(out_dtype)

    return kernel


def multi_crop(scale_n, off_n, x_bf16, lcat, rg, rl, extra_ops, *,
               nt, hg, wg, hl, wl, blur_from_g2, out_dtype,
               vmem_limit_bytes, cost_estimate):
    N, hin, win = x_bf16.shape
    rows = lcat.shape[0]

    const_specs = ([pl.BlockSpec((rows, hin), lambda i, *_: (0, 0)),
                    pl.BlockSpec((win, wg), lambda i, *_: (0, 0)),
                    pl.BlockSpec((win, wl), lambda i, *_: (0, 0))]
                   + [pl.BlockSpec(tuple(op.shape), lambda i, *_: (0, 0))
                      for op in extra_ops])
    in_specs = [pl.BlockSpec((nt, hin, win), lambda i, *_: (i, 0, 0))] + const_specs
    out_specs = [pl.BlockSpec((nt, hg, wg), lambda i, *_: (i, 0, 0)),
                 pl.BlockSpec((nt, hg, wg), lambda i, *_: (i, 0, 0)),
                 pl.BlockSpec((nt, hl, wl), lambda i, *_: (i, 0, 0))]
    out_shape = (jax.ShapeDtypeStruct((N, hg, wg), out_dtype),
                 jax.ShapeDtypeStruct((N, hg, wg), out_dtype),
                 jax.ShapeDtypeStruct((N, hl, wl), out_dtype))

    kernel = _make_kernel(nt, hg, hl, blur_from_g2, out_dtype)
    return pl.pallas_call(
        kernel,
        out_shape=out_shape,
        grid_spec=pltpu.PrefetchScalarGridSpec(
            num_scalar_prefetch=2,
            grid=(N // nt,),
            in_specs=in_specs,
            out_specs=out_specs),
        compiler_params=pltpu.CompilerParams(
            dimension_semantics=("parallel",),
            vmem_limit_bytes=vmem_limit_bytes),
        cost_estimate=cost_estimate,
    )(scale_n, off_n, x_bf16, lcat, rg, rl, *extra_ops)


# ----------------------------------------------------------------------------
# Module equivalent
# ----------------------------------------------------------------------------
class CropperPallas:
    def __init__(self, global_crops_scale, local_crops_scale, local_crops_number,
                 in_h, in_w, global_size=224, local_size=96,
                 out_dtype=jnp.bfloat16):
        # TODO(synk): global/local_crops_scale only drive random crop-box
        # sampling, which is stripped (see header).
        del global_crops_scale, local_crops_scale
        self.local_crops_number = local_crops_number
        self.hg = self.wg = global_size
        self.hl = self.wl = local_size
        self.out_dtype = out_dtype
        self._vmem_cap = _query_vmem_capacity()

        mean = np.array([0.485, 0.456, 0.406], np.float32)
        std = np.array([0.229, 0.224, 0.225], np.float32)
        self._invstd_c = jnp.asarray(1.0 / std, jnp.float32)
        self._offset_c = jnp.asarray(-mean / std, jnp.float32)

        Ry_g = bicubic_resize_matrix(global_size, in_h)
        Rx_g = bicubic_resize_matrix(global_size, in_w)
        Ry_l = bicubic_resize_matrix(local_size, in_h)
        Rx_l = bicubic_resize_matrix(local_size, in_w)
        # TODO(synk): GaussianBlur sigma is sampled in (0.1, 2.0) per call in the
        # reference; fixed to 1.0 here, and only applied (always) to global crop 1.
        Bh = gaussian_blur_matrix(global_size, ksize=5, sigma=1.0)
        Bw = gaussian_blur_matrix(global_size, ksize=5, sigma=1.0)

        # Static choice: derive g1 from g2 via the 224x224 blur operators when
        # that needs fewer MACs than an independent resize+blur chain.
        self.blur_from_g2 = (self.wg * (self.hg + self.wg)) < (in_w * (in_h + self.wg))

        def bf16(a):
            return jnp.asarray(a, jnp.bfloat16)

        self.Rg = bf16(Rx_g.T)                       # (Win, 224)
        self.Rl = bf16(Rx_l.T)                       # (Win,  96)
        if self.blur_from_g2:
            self.Lcat = bf16(np.concatenate([Ry_g, Ry_l], axis=0))            # (320, Hin)
            self._extra_ops = [bf16(Bh), bf16(Bw.T)]                          # Bh, Bw^T
        else:
            self.Lcat = bf16(np.concatenate([Ry_g, Bh @ Ry_g, Ry_l], axis=0)) # (544, Hin)
            self._extra_ops = [bf16((Bw @ Rx_g).T)]                           # R1 = (Bw Rx)^T
        self._consts = [self.Lcat, self.Rg, self.Rl] + self._extra_ops

        self._forward = jax.jit(self._forward_impl)

    # ---- VMEM-budget-aware tiling ------------------------------------------
    def _pick_tiling(self, N, hin, win):
        out_b = int(jnp.dtype(self.out_dtype).itemsize)
        rows = int(self.Lcat.shape[0])
        const_bytes = 2 * sum(int(np.prod(a.shape)) * 2 for a in self._consts)  # dbl-buffered bf16
        live_f32 = 4 * (rows * win + 4 * self.hg * self.wg + self.hl * self.wl)
        fixed = const_bytes + live_f32
        per_slab = (2 * hin * win * 2                                       # x bf16, dbl-buffered
                    + 2 * (2 * self.hg * self.wg + self.hl * self.wl) * out_b)  # outs, dbl-buffered
        budget = int(self._vmem_cap * 0.6)
        nt_max = max(1, (budget - fixed) // per_slab)
        nt_max = int(min(nt_max, 8, N))
        nt = max(d for d in range(1, nt_max + 1) if N % d == 0)
        est = fixed + nt * per_slab + (4 << 20)
        vmem_limit = int(min(self._vmem_cap * 0.9, max(2 * est, 64 << 20)))
        return nt, vmem_limit

    def _cost(self, N, hin, win):
        rows = int(self.Lcat.shape[0])
        stage_a = rows * hin * win
        stage_b = self.hg * win * self.wg + self.hl * win * self.wl
        if self.blur_from_g2:
            stage_b += self.hg * self.wg * (self.hg + self.wg)
        else:
            stage_b += self.hg * win * self.wg
        flops = 2 * N * (stage_a + stage_b)
        out_b = int(jnp.dtype(self.out_dtype).itemsize)
        const_bytes = sum(int(np.prod(a.shape)) * 2 for a in self._consts)
        bytes_accessed = (N * hin * win * 2 + const_bytes + 2 * N * 4
                          + N * (2 * self.hg * self.wg + self.hl * self.wl) * out_b)
        return pl.CostEstimate(flops=int(flops), transcendentals=0,
                               bytes_accessed=int(bytes_accessed))

    # ---- forward -------------------------------------------------------------
    def _forward_impl(self, x):
        B, C, H, W = x.shape
        assert C == 3, "Normalize is defined for 3 channels"
        N = B * C
        x_flat = x.reshape(N, H, W).astype(jnp.bfloat16)
        scale_n = jnp.tile(self._invstd_c, B)          # (N,) = invstd[c]
        off_n = jnp.tile(self._offset_c, B)            # (N,) = -mean[c]*invstd[c]
        nt, vmem_limit = self._pick_tiling(N, H, W)
        g1, g2, lo = multi_crop(
            scale_n, off_n, x_flat, self.Lcat, self.Rg, self.Rl, self._extra_ops,
            nt=nt, hg=self.hg, wg=self.wg, hl=self.hl, wl=self.wl,
            blur_from_g2=self.blur_from_g2, out_dtype=self.out_dtype,
            vmem_limit_bytes=vmem_limit, cost_estimate=self._cost(N, H, W))
        return (g1.reshape(B, C, self.hg, self.wg),
                g2.reshape(B, C, self.hg, self.wg),
                lo.reshape(B, C, self.hl, self.wl))

    def __call__(self, x):
        """x: (B, 3, H, W) NCHW float. Returns list of crops, NCHW each."""
        g1, g2, lo = self._forward(x)
        # TODO(synk): with randomness stripped every local crop is bit-identical,
        # so it is computed once and reused (no extra kernel launches).
        return [g1, g2] + [lo] * self.local_crops_number


if __name__ == "__main__":
    key = jax.random.PRNGKey(0)
    B, C, H, W = 2, 3, 16, 16
    x = jax.random.uniform(key, (B, C, H, W), dtype=jnp.float32)

    cropper = CropperPallas(global_crops_scale=(0.4, 1.0),
                            local_crops_scale=(0.05, 0.4),
                            local_crops_number=2,
                            in_h=H, in_w=W)
    crops = cropper(x)
    for c in crops:
        jax.block_until_ready(c)

    assert len(crops) == 2 + 2
    assert crops[0].shape == (B, C, 224, 224)
    assert crops[1].shape == (B, C, 224, 224)
    assert crops[2].shape == (B, C, 96, 96)
    assert crops[3].shape == (B, C, 96, 96)
    assert all(bool(jnp.all(jnp.isfinite(c.astype(jnp.float32)))) for c in crops)

    # Pure-JAX f32 reference for the resize + normalize path (global crop 2).
    Ry = jnp.asarray(bicubic_resize_matrix(224, H), jnp.float32)
    Rx = jnp.asarray(bicubic_resize_matrix(224, W), jnp.float32)
    mean = jnp.asarray([0.485, 0.456, 0.406], jnp.float32).reshape(1, 3, 1, 1)
    std = jnp.asarray([0.229, 0.224, 0.225], jnp.float32).reshape(1, 3, 1, 1)
    ref_g2 = (jnp.einsum('oh,bchw,wv->bcov', Ry, x, Rx.T) - mean) / std
    err = float(jnp.max(jnp.abs(crops[1].astype(jnp.float32) - ref_g2)))
    assert err < 0.2, f"global crop 2 mismatch vs f32 reference: {err}"

    print("KERNEL_OK")
</pallas_src>

<mosaic_0001>
module attributes {stable_mosaic.version = 11 : i64} {
  func.func @kernel(%arg0: i32, %arg1: memref<6xf32, #tpu.memory_space<smem>>, %arg2: memref<6xf32, #tpu.memory_space<smem>>, %arg3: memref<6x16x16xbf16, #tpu.memory_space<vmem>>, %arg4: memref<544x16xbf16, #tpu.memory_space<vmem>>, %arg5: memref<16x224xbf16, #tpu.memory_space<vmem>>, %arg6: memref<16x96xbf16, #tpu.memory_space<vmem>>, %arg7: memref<16x224xbf16, #tpu.memory_space<vmem>>, %arg8: memref<6x224x224xbf16, #tpu.memory_space<vmem>>, %arg9: memref<6x224x224xbf16, #tpu.memory_space<vmem>>, %arg10: memref<6x96x96xbf16, #tpu.memory_space<vmem>>) attributes {dimension_semantics = [#tpu.dimension_semantics<parallel>], iteration_bounds = array<i64: 1>, scalar_prefetch = 2 : i64, scratch_operands = 0 : i64, tpu.core_type = #tpu.core_type<tc>, window_params = [{transform_indices = @transform_0, window_bounds = array<i64: 6, 16, 16>}, {pipeline_mode = #tpu.pipeline_mode<synchronous>, transform_indices = @transform_1, window_bounds = array<i64: 544, 16>}, {pipeline_mode = #tpu.pipeline_mode<synchronous>, transform_indices = @transform_2, window_bounds = array<i64: 16, 224>}, {pipeline_mode = #tpu.pipeline_mode<synchronous>, transform_indices = @transform_3, window_bounds = array<i64: 16, 96>}, {pipeline_mode = #tpu.pipeline_mode<synchronous>, transform_indices = @transform_4, window_bounds = array<i64: 16, 224>}, {transform_indices = @transform_5, window_bounds = array<i64: 6, 224, 224>}, {transform_indices = @transform_6, window_bounds = array<i64: 6, 224, 224>}, {transform_indices = @transform_7, window_bounds = array<i64: 6, 96, 96>}]} {
    %c6_i32 = arith.constant 6 : i32
    %0 = arith.muli %arg0, %c6_i32 : i32
    %c0 = arith.constant 0 : index
    %c0_0 = arith.constant 0 : index
    %1 = vector.load %arg4[%c0, %c0_0] : memref<544x16xbf16, #tpu.memory_space<vmem>>, vector<544x16xbf16>
    %c0_1 = arith.constant 0 : index
    %c0_2 = arith.constant 0 : index
    %2 = vector.load %arg5[%c0_1, %c0_2] : memref<16x224xbf16, #tpu.memory_space<vmem>>, vector<16x224xbf16>
    %c0_3 = arith.constant 0 : index
    %c0_4 = arith.constant 0 : index
    %3 = vector.load %arg6[%c0_3, %c0_4] : memref<16x96xbf16, #tpu.memory_space<vmem>>, vector<16x96xbf16>
    %c0_5 = arith.constant 0 : index
    %c0_6 = arith.constant 0 : index
    %4 = vector.load %arg7[%c0_5, %c0_6] : memref<16x224xbf16, #tpu.memory_space<vmem>>, vector<16x224xbf16>
    %c0_7 = arith.constant 0 : index
    %c0_8 = arith.constant 0 : index
    %c0_9 = arith.constant 0 : index
    %5 = vector.load %arg3[%c0_7, %c0_8, %c0_9] : memref<6x16x16xbf16, #tpu.memory_space<vmem>>, vector<1x16x16xbf16>
    %6 = vector.shape_cast %5 : vector<1x16x16xbf16> to vector<16x16xbf16>
    %cst = arith.constant dense<0.000000e+00> : vector<544x16xf32>
    %7 = tpu.matmul %1, %6, %cst {dimension_numbers = #tpu.dot_dimension_numbers<[1], [0], [0], [1], [0, 0, 1, 1], [], []>} : vector<544x16xbf16>, vector<16x16xbf16>, vector<544x16xf32> -> vector<544x16xf32>
    %8 = vector.extract_strided_slice %7 {offsets = [0, 0], sizes = [224, 16], strides = [1, 1]} : vector<544x16xf32> to vector<224x16xf32>
    %9 = arith.truncf %8 : vector<224x16xf32> to vector<224x16xbf16>
    %10 = vector.extract_strided_slice %7 {offsets = [224, 0], sizes = [224, 16], strides = [1, 1]} : vector<544x16xf32> to vector<224x16xf32>
    %11 = arith.truncf %10 : vector<224x16xf32> to vector<224x16xbf16>
    %12 = vector.extract_strided_slice %7 {offsets = [448, 0], sizes = [96, 16], strides = [1, 1]} : vector<544x16xf32> to vector<96x16xf32>
    %13 = arith.truncf %12 : vector<96x16xf32> to vector<96x16xbf16>
    %cst_10 = arith.constant dense<0.000000e+00> : vector<224x224xf32>
    %14 = tpu.matmul %9, %2, %cst_10 {dimension_numbers = #tpu.dot_dimension_numbers<[1], [0], [0], [1], [0, 0, 1, 1], [], []>} : vector<224x16xbf16>, vector<16x224xbf16>, vector<224x224xf32> -> vector<224x224xf32>
    %cst_11 = arith.constant dense<0.000000e+00> : vector<96x96xf32>
    %15 = tpu.matmul %13, %3, %cst_11 {dimension_numbers = #tpu.dot_dimension_numbers<[1], [0], [0], [1], [0, 0, 1, 1], [], []>} : vector<96x16xbf16>, vector<16x96xbf16>, vector<96x96xf32> -> vector<96x96xf32>
    %cst_12 = arith.constant dense<0.000000e+00> : vector<224x224xf32>
    %16 = tpu.matmul %11, %4, %cst_12 {dimension_numbers = #tpu.dot_dimension_numbers<[1], [0], [0], [1], [0, 0, 1, 1], [], []>} : vector<224x16xbf16>, vector<16x224xbf16>, vector<224x224xf32> -> vector<224x224xf32>
    %c0_i32 = arith.constant 0 : i32
    %17 = arith.addi %0, %c0_i32 : i32
    %18 = arith.index_cast %17 : i32 to index
    %19 = memref.load %arg1[%18] : memref<6xf32, #tpu.memory_space<smem>>
    %c0_i32_13 = arith.constant 0 : i32
    %20 = arith.addi %0, %c0_i32_13 : i32
    %21 = arith.index_cast %20 : i32 to index
    %22 = memref.load %arg2[%21] : memref<6xf32, #tpu.memory_space<smem>>
    %23 = vector.broadcast %19 : f32 to vector<224x224xf32>
    %24 = arith.mulf %16, %23 : vector<224x224xf32>
    %25 = vector.broadcast %22 : f32 to vector<224x224xf32>
    %26 = arith.addf %24, %25 : vector<224x224xf32>
    %27 = arith.truncf %26 : vector<224x224xf32> to vector<224x224xbf16>
    %c0_14 = arith.constant 0 : index
    %c0_15 = arith.constant 0 : index
    %c0_16 = arith.constant 0 : index
    %28 = vector.load %arg8[%c0_14, %c0_15, %c0_16] : memref<6x224x224xbf16, #tpu.memory_space<vmem>>, vector<1x224x224xbf16>
    %29 = vector.shape_cast %28 : vector<1x224x224xbf16> to vector<224x224xbf16>
    %30 = vector.shape_cast %27 : vector<224x224xbf16> to vector<1x224x224xbf16>
    tpu.vector_store %arg8[%c0_14, %c0_15, %c0_16], %30 {strides = array<i32>} : memref<6x224x224xbf16, #tpu.memory_space<vmem>>, vector<1x224x224xbf16>,
    %31 = vector.broadcast %19 : f32 to vector<224x224xf32>
    %32 = arith.mulf %14, %31 : vector<224x224xf32>
    %33 = vector.broadcast %22 : f32 to vector<224x224xf32>
    %34 = arith.addf %32, %33 : vector<224x224xf32>
    %35 = arith.truncf %34 : vector<224x224xf32> to vector<224x224xbf16>
    %c0_17 = arith.constant 0 : index
    %c0_18 = arith.constant 0 : index
    %c0_19 = arith.constant 0 : index
    %36 = vector.load %arg9[%c0_17, %c0_18, %c0_19] : memref<6x224x224xbf16, #tpu.memory_space<vmem>>, vector<1x224x224xbf16>
    %37 = vector.shape_cast %36 : vector<1x224x224xbf16> to vector<224x224xbf16>
    %38 = vector.shape_cast %35 : vector<224x224xbf16> to vector<1x224x224xbf16>
    tpu.vector_store %arg9[%c0_17, %c0_18, %c0_19], %38 {strides = array<i32>} : memref<6x224x224xbf16, #tpu.memory_space<vmem>>, vector<1x224x224xbf16>,
    %39 = vector.broadcast %19 : f32 to vector<96x96xf32>
    %40 = arith.mulf %15, %39 : vector<96x96xf32>
    %41 = vector.broadcast %22 : f32 to vector<96x96xf32>
    %42 = arith.addf %40, %41 : vector<96x96xf32>
    %43 = arith.truncf %42 : vector<96x96xf32> to vector<96x96xbf16>
    %c0_20 = arith.constant 0 : index
    %c0_21 = arith.constant 0 : index
    %c0_22 = arith.constant 0 : index
    %44 = vector.load %arg10[%c0_20, %c0_21, %c0_22] : memref<6x96x96xbf16, #tpu.memory_space<vmem>>, vector<1x96x96xbf16>
    %45 = vector.shape_cast %44 : vector<1x96x96xbf16> to vector<96x96xbf16>
    %46 = vector.shape_cast %43 : vector<96x96xbf16> to vector<1x96x96xbf16>
    tpu.vector_store %arg10[%c0_20, %c0_21, %c0_22], %46 {strides = array<i32>} : memref<6x96x96xbf16, #tpu.memory_space<vmem>>, vector<1x96x96xbf16>,
    %c1 = arith.constant 1 : index
    %c0_23 = arith.constant 0 : index
    %c0_24 = arith.constant 0 : index
    %47 = vector.load %arg3[%c1, %c0_23, %c0_24] : memref<6x16x16xbf16, #tpu.memory_space<vmem>>, vector<1x16x16xbf16>
    %48 = vector.shape_cast %47 : vector<1x16x16xbf16> to vector<16x16xbf16>
    %cst_25 = arith.constant dense<0.000000e+00> : vector<544x16xf32>
    %49 = tpu.matmul %1, %48, %cst_25 {dimension_numbers = #tpu.dot_dimension_numbers<[1], [0], [0], [1], [0, 0, 1, 1], [], []>} : vector<544x16xbf16>, vector<16x16xbf16>, vector<544x16xf32> -> vector<544x16xf32>
    %50 = vector.extract_strided_slice %49 {offsets = [0, 0], sizes = [224, 16], strides = [1, 1]} : vector<544x16xf32> to vector<224x16xf32>
    %51 = arith.truncf %50 : vector<224x16xf32> to vector<224x16xbf16>
    %52 = vector.extract_strided_slice %49 {offsets = [224, 0], sizes = [224, 16], strides = [1, 1]} : vector<544x16xf32> to vector<224x16xf32>
    %53 = arith.truncf %52 : vector<224x16xf32> to vector<224x16xbf16>
    %54 = vector.extract_strided_slice %49 {offsets = [448, 0], sizes = [96, 16], strides = [1, 1]} : vector<544x16xf32> to vector<96x16xf32>
    %55 = arith.truncf %54 : vector<96x16xf32> to vector<96x16xbf16>
    %cst_26 = arith.constant dense<0.000000e+00> : vector<224x224xf32>
    %56 = tpu.matmul %51, %2, %cst_26 {dimension_numbers = #tpu.dot_dimension_numbers<[1], [0], [0], [1], [0, 0, 1, 1], [], []>} : vector<224x16xbf16>, vector<16x224xbf16>, vector<224x224xf32> -> vector<224x224xf32>
    %cst_27 = arith.constant dense<0.000000e+00> : vector<96x96xf32>
    %57 = tpu.matmul %55, %3, %cst_27 {dimension_numbers = #tpu.dot_dimension_numbers<[1], [0], [0], [1], [0, 0, 1, 1], [], []>} : vector<96x16xbf16>, vector<16x96xbf16>, vector<96x96xf32> -> vector<96x96xf32>
    %cst_28 = arith.constant dense<0.000000e+00> : vector<224x224xf32>
    %58 = tpu.matmul %53, %4, %cst_28 {dimension_numbers = #tpu.dot_dimension_numbers<[1], [0], [0], [1], [0, 0, 1, 1], [], []>} : vector<224x16xbf16>, vector<16x224xbf16>, vector<224x224xf32> -> vector<224x224xf32>
    %c1_i32 = arith.constant 1 : i32
    %59 = arith.addi %0, %c1_i32 : i32
    %60 = arith.index_cast %59 : i32 to index
    %61 = memref.load %arg1[%60] : memref<6xf32, #tpu.memory_space<smem>>
    %c1_i32_29 = arith.constant 1 : i32
    %62 = arith.addi %0, %c1_i32_29 : i32
    %63 = arith.index_cast %62 : i32 to index
    %64 = memref.load %arg2[%63] : memref<6xf32, #tpu.memory_space<smem>>
    %65 = vector.broadcast %61 : f32 to vector<224x224xf32>
    %66 = arith.mulf %58, %65 : vector<224x224xf32>
    %67 = vector.broadcast %64 : f32 to vector<224x224xf32>
    %68 = arith.addf %66, %67 : vector<224x224xf32>
    %69 = arith.truncf %68 : vector<224x224xf32> to vector<224x224xbf16>
    %c1_30 = arith.constant 1 : index
    %c0_31 = arith.constant 0 : index
    %c0_32 = arith.constant 0 : index
    %70 = vector.load %arg8[%c1_30, %c0_31, %c0_32] : memref<6x224x224xbf16, #tpu.memory_space<vmem>>, vector<1x224x224xbf16>
    %71 = vector.shape_cast %70 : vector<1x224x224xbf16> to vector<224x224xbf16>
    %72 = vector.shape_cast %69 : vector<224x224xbf16> to vector<1x224x224xbf16>
    tpu.vector_store %arg8[%c1_30, %c0_31, %c0_32], %72 {strides = array<i32>} : memref<6x224x224xbf16, #tpu.memory_space<vmem>>, vector<1x224x224xbf16>,
    %73 = vector.broadcast %61 : f32 to vector<224x224xf32>
    %74 = arith.mulf %56, %73 : vector<224x224xf32>
    %75 = vector.broadcast %64 : f32 to vector<224x224xf32>
    %76 = arith.addf %74, %75 : vector<224x224xf32>
    %77 = arith.truncf %76 : vector<224x224xf32> to vector<224x224xbf16>
    %c1_33 = arith.constant 1 : index
    %c0_34 = arith.constant 0 : index
    %c0_35 = arith.constant 0 : index
    %78 = vector.load %arg9[%c1_33, %c0_34, %c0_35] : memref<6x224x224xbf16, #tpu.memory_space<vmem>>, vector<1x224x224xbf16>
    %79 = vector.shape_cast %78 : vector<1x224x224xbf16> to vector<224x224xbf16>
    %80 = vector.shape_cast %77 : vector<224x224xbf16> to vector<1x224x224xbf16>
    tpu.vector_store %arg9[%c1_33, %c0_34, %c0_35], %80 {strides = array<i32>} : memref<6x224x224xbf16, #tpu.memory_space<vmem>>, vector<1x224x224xbf16>,
    %81 = vector.broadcast %61 : f32 to vector<96x96xf32>
    %82 = arith.mulf %57, %81 : vector<96x96xf32>
    %83 = vector.broadcast %64 : f32 to vector<96x96xf32>
    %84 = arith.addf %82, %83 : vector<96x96xf32>
    %85 = arith.truncf %84 : vector<96x96xf32> to vector<96x96xbf16>
    %c1_36 = arith.constant 1 : index
    %c0_37 = arith.constant 0 : index
    %c0_38 = arith.constant 0 : index
    %86 = vector.load %arg10[%c1_36, %c0_37, %c0_38] : memref<6x96x96xbf16, #tpu.memory_space<vmem>>, vector<1x96x96xbf16>
    %87 = vector.shape_cast %86 : vector<1x96x96xbf16> to vector<96x96xbf16>
    %88 = vector.shape_cast %85 : vector<96x96xbf16> to vector<1x96x96xbf16>
    tpu.vector_store %arg10[%c1_36, %c0_37, %c0_38], %88 {strides = array<i32>} : memref<6x96x96xbf16, #tpu.memory_space<vmem>>, vector<1x96x96xbf16>,
    %c2 = arith.constant 2 : index
    %c0_39 = arith.constant 0 : index
    %c0_40 = arith.constant 0 : index
    %89 = vector.load %arg3[%c2, %c0_39, %c0_40] : memref<6x16x16xbf16, #tpu.memory_space<vmem>>, vector<1x16x16xbf16>
    %90 = vector.shape_cast %89 : vector<1x16x16xbf16> to vector<16x16xbf16>
    %cst_41 = arith.constant dense<0.000000e+00> : vector<544x16xf32>
    %91 = tpu.matmul %1, %90, %cst_41 {dimension_numbers = #tpu.dot_dimension_numbers<[1], [0], [0], [1], [0, 0, 1, 1], [], []>} : vector<544x16xbf16>, vector<16x16xbf16>, vector<544x16xf32> -> vector<544x16xf32>
    %92 = vector.extract_strided_slice %91 {offsets = [0, 0], sizes = [224, 16], strides = [1, 1]} : vector<544x16xf32> to vector<224x16xf32>
    %93 = arith.truncf %92 : vector<224x16xf32> to vector<224x16xbf16>
    %94 = vector.extract_strided_slice %91 {offsets = [224, 0], sizes = [224, 16], strides = [1, 1]} : vector<544x16xf32> to vector<224x16xf32>
    %95 = arith.truncf %94 : vector<224x16xf32> to vector<224x16xbf16>
    %96 = vector.extract_strided_slice %91 {offsets = [448, 0], sizes = [96, 16], strides = [1, 1]} : vector<544x16xf32> to vector<96x16xf32>
    %97 = arith.truncf %96 : vector<96x16xf32> to vector<96x16xbf16>
    %cst_42 = arith.constant dense<0.000000e+00> : vector<224x224xf32>
    %98 = tpu.matmul %93, %2, %cst_42 {dimension_numbers = #tpu.dot_dimension_numbers<[1], [0], [0], [1], [0, 0, 1, 1], [], []>} : vector<224x16xbf16>, vector<16x224xbf16>, vector<224x224xf32> -> vector<224x224xf32>
    %cst_43 = arith.constant dense<0.000000e+00> : vector<96x96xf32>
    %99 = tpu.matmul %97, %3, %cst_43 {dimension_numbers = #tpu.dot_dimension_numbers<[1], [0], [0], [1], [0, 0, 1, 1], [], []>} : vector<96x16xbf16>, vector<16x96xbf16>, vector<96x96xf32> -> vector<96x96xf32>
    %cst_44 = arith.constant dense<0.000000e+00> : vector<224x224xf32>
    %100 = tpu.matmul %95, %4, %cst_44 {dimension_numbers = #tpu.dot_dimension_numbers<[1], [0], [0], [1], [0, 0, 1, 1], [], []>} : vector<224x16xbf16>, vector<16x224xbf16>, vector<224x224xf32> -> vector<224x224xf32>
    %c2_i32 = arith.constant 2 : i32
    %101 = arith.addi %0, %c2_i32 : i32
    %102 = arith.index_cast %101 : i32 to index
    %103 = memref.load %arg1[%102] : memref<6xf32, #tpu.memory_space<smem>>
    %c2_i32_45 = arith.constant 2 : i32
    %104 = arith.addi %0, %c2_i32_45 : i32
    %105 = arith.index_cast %104 : i32 to index
    %106 = memref.load %arg2[%105] : memref<6xf32, #tpu.memory_space<smem>>
    %107 = vector.broadcast %103 : f32 to vector<224x224xf32>
    %108 = arith.mulf %100, %107 : vector<224x224xf32>
    %109 = vector.broadcast %106 : f32 to vector<224x224xf32>
    %110 = arith.addf %108, %109 : vector<224x224xf32>
    %111 = arith.truncf %110 : vector<224x224xf32> to vector<224x224xbf16>
    %c2_46 = arith.constant 2 : index
    %c0_47 = arith.constant 0 : index
    %c0_48 = arith.constant 0 : index
    %112 = vector.load %arg8[%c2_46, %c0_47, %c0_48] : memref<6x224x224xbf16, #tpu.memory_space<vmem>>, vector<1x224x224xbf16>
    %113 = vector.shape_cast %112 : vector<1x224x224xbf16> to vector<224x224xbf16>
    %114 = vector.shape_cast %111 : vector<224x224xbf16> to vector<1x224x224xbf16>
    tpu.vector_store %arg8[%c2_46, %c0_47, %c0_48], %114 {strides = array<i32>} : memref<6x224x224xbf16, #tpu.memory_space<vmem>>, vector<1x224x224xbf16>,
    %115 = vector.broadcast %103 : f32 to vector<224x224xf32>
    %116 = arith.mulf %98, %115 : vector<224x224xf32>
    %117 = vector.broadcast %106 : f32 to vector<224x224xf32>
    %118 = arith.addf %116, %117 : vector<224x224xf32>
    %119 = arith.truncf %118 : vector<224x224xf32> to vector<224x224xbf16>
    %c2_49 = arith.constant 2 : index
    %c0_50 = arith.constant 0 : index
    %c0_51 = arith.constant 0 : index
    %120 = vector.load %arg9[%c2_49, %c0_50, %c0_51] : memref<6x224x224xbf16, #tpu.memory_space<vmem>>, vector<1x224x224xbf16>
    %121 = vector.shape_cast %120 : vector<1x224x224xbf16> to vector<224x224xbf16>
    %122 = vector.shape_cast %119 : vector<224x224xbf16> to vector<1x224x224xbf16>
    tpu.vector_store %arg9[%c2_49, %c0_50, %c0_51], %122 {strides = array<i32>} : memref<6x224x224xbf16, #tpu.memory_space<vmem>>, vector<1x224x224xbf16>,
    %123 = vector.broadcast %103 : f32 to vector<96x96xf32>
    %124 = arith.mulf %99, %123 : vector<96x96xf32>
    %125 = vector.broadcast %106 : f32 to vector<96x96xf32>
    %126 = arith.addf %124, %125 : vector<96x96xf32>
    %127 = arith.truncf %126 : vector<96x96xf32> to vector<96x96xbf16>
    %c2_52 = arith.constant 2 : index
    %c0_53 = arith.constant 0 : index
    %c0_54 = arith.constant 0 : index
    %128 = vector.load %arg10[%c2_52, %c0_53, %c0_54] : memref<6x96x96xbf16, #tpu.memory_space<vmem>>, vector<1x96x96xbf16>
    %129 = vector.shape_cast %128 : vector<1x96x96xbf16> to vector<96x96xbf16>
    %130 = vector.shape_cast %127 : vector<96x96xbf16> to vector<1x96x96xbf16>
    tpu.vector_store %arg10[%c2_52, %c0_53, %c0_54], %130 {strides = array<i32>} : memref<6x96x96xbf16, #tpu.memory_space<vmem>>, vector<1x96x96xbf16>,
    %c3 = arith.constant 3 : index
    %c0_55 = arith.constant 0 : index
    %c0_56 = arith.constant 0 : index
    %131 = vector.load %arg3[%c3, %c0_55, %c0_56] : memref<6x16x16xbf16, #tpu.memory_space<vmem>>, vector<1x16x16xbf16>
    %132 = vector.shape_cast %131 : vector<1x16x16xbf16> to vector<16x16xbf16>
    %cst_57 = arith.constant dense<0.000000e+00> : vector<544x16xf32>
    %133 = tpu.matmul %1, %132, %cst_57 {dimension_numbers = #tpu.dot_dimension_numbers<[1], [0], [0], [1], [0, 0, 1, 1], [], []>} : vector<544x16xbf16>, vector<16x16xbf16>, vector<544x16xf32> -> vector<544x16xf32>
    %134 = vector.extract_strided_slice %133 {offsets = [0, 0], sizes = [224, 16], strides = [1, 1]} : vector<544x16xf32> to vector<224x16xf32>
    %135 = arith.truncf %134 : vector<224x16xf32> to vector<224x16xbf16>
    %136 = vector.extract_strided_slice %133 {offsets = [224, 0], sizes = [224, 16], strides = [1, 1]} : vector<544x16xf32> to vector<224x16xf32>
    %137 = arith.truncf %136 : vector<224x16xf32> to vector<224x16xbf16>
    %138 = vector.extract_strided_slice %133 {offsets = [448, 0], sizes = [96, 16], strides = [1, 1]} : vector<544x16xf32> to vector<96x16xf32>
    %139 = arith.truncf %138 : vector<96x16xf32> to vector<96x16xbf16>
    %cst_58 = arith.constant dense<0.000000e+00> : vector<224x224xf32>
    %140 = tpu.matmul %135, %2, %cst_58 {dimension_numbers = #tpu.dot_dimension_numbers<[1], [0], [0], [1], [0, 0, 1, 1], [], []>} : vector<224x16xbf16>, vector<16x224xbf16>, vector<224x224xf32> -> vector<224x224xf32>
    %cst_59 = arith.constant dense<0.000000e+00> : vector<96x96xf32>
    %141 = tpu.matmul %139, %3, %cst_59 {dimension_numbers = #tpu.dot_dimension_numbers<[1], [0], [0], [1], [0, 0, 1, 1], [], []>} : vector<96x16xbf16>, vector<16x96xbf16>, vector<96x96xf32> -> vector<96x96xf32>
    %cst_60 = arith.constant dense<0.000000e+00> : vector<224x224xf32>
    %142 = tpu.matmul %137, %4, %cst_60 {dimension_numbers = #tpu.dot_dimension_numbers<[1], [0], [0], [1], [0, 0, 1, 1], [], []>} : vector<224x16xbf16>, vector<16x224xbf16>, vector<224x224xf32> -> vector<224x224xf32>
    %c3_i32 = arith.constant 3 : i32
    %143 = arith.addi %0, %c3_i32 : i32
    %144 = arith.index_cast %143 : i32 to index
    %145 = memref.load %arg1[%144] : memref<6xf32, #tpu.memory_space<smem>>
    %c3_i32_61 = arith.constant 3 : i32
    %146 = arith.addi %0, %c3_i32_61 : i32
    %147 = arith.index_cast %146 : i32 to index
    %148 = memref.load %arg2[%147] : memref<6xf32, #tpu.memory_space<smem>>
    %149 = vector.broadcast %145 : f32 to vector<224x224xf32>
    %150 = arith.mulf %142, %149 : vector<224x224xf32>
    %151 = vector.broadcast %148 : f32 to vector<224x224xf32>
    %152 = arith.addf %150, %151 : vector<224x224xf32>
    %153 = arith.truncf %152 : vector<224x224xf32> to vector<224x224xbf16>
    %c3_62 = arith.constant 3 : index
    %c0_63 = arith.constant 0 : index
    %c0_64 = arith.constant 0 : index
    %154 = vector.load %arg8[%c3_62, %c0_63, %c0_64] : memref<6x224x224xbf16, #tpu.memory_space<vmem>>, vector<1x224x224xbf16>
    %155 = vector.shape_cast %154 : vector<1x224x224xbf16> to vector<224x224xbf16>
    %156 = vector.shape_cast %153 : vector<224x224xbf16> to vector<1x224x224xbf16>
    tpu.vector_store %arg8[%c3_62, %c0_63, %c0_64], %156 {strides = array<i32>} : memref<6x224x224xbf16, #tpu.memory_space<vmem>>, vector<1x224x224xbf16>,
    %157 = vector.broadcast %145 : f32 to vector<224x224xf32>
    %158 = arith.mulf %140, %157 : vector<224x224xf32>
    %159 = vector.broadcast %148 : f32 to vector<224x224xf32>
    %160 = arith.addf %158, %159 : vector<224x224xf32>
    %161 = arith.truncf %160 : vector<224x224xf32> to vector<224x224xbf16>
    %c3_65 = arith.constant 3 : index
    %c0_66 = arith.constant 0 : index
    %c0_67 = arith.constant 0 : index
    %162 = vector.load %arg9[%c3_65, %c0_66, %c0_67] : memref<6x224x224xbf16, #tpu.memory_space<vmem>>, vector<1x224x224xbf16>
    %163 = vector.shape_cast %162 : vector<1x224x224xbf16> to vector<224x224xbf16>
    %164 = vector.shape_cast %161 : vector<224x224xbf16> to vector<1x224x224xbf16>
    tpu.vector_store %arg9[%c3_65, %c0_66, %c0_67], %164 {strides = array<i32>} : memref<6x224x224xbf16, #tpu.memory_space<vmem>>, vector<1x224x224xbf16>,
    %165 = vector.broadcast %145 : f32 to vector<96x96xf32>
    %166 = arith.mulf %141, %165 : vector<96x96xf32>
    %167 = vector.broadcast %148 : f32 to vector<96x96xf32>
    %168 = arith.addf %166, %167 : vector<96x96xf32>
    %169 = arith.truncf %168 : vector<96x96xf32> to vector<96x96xbf16>
    %c3_68 = arith.constant 3 : index
    %c0_69 = arith.constant 0 : index
    %c0_70 = arith.constant 0 : index
    %170 = vector.load %arg10[%c3_68, %c0_69, %c0_70] : memref<6x96x96xbf16, #tpu.memory_space<vmem>>, vector<1x96x96xbf16>
    %171 = vector.shape_cast %170 : vector<1x96x96xbf16> to vector<96x96xbf16>
    %172 = vector.shape_cast %169 : vector<96x96xbf16> to vector<1x96x96xbf16>
    tpu.vector_store %arg10[%c3_68, %c0_69, %c0_70], %172 {strides = array<i32>} : memref<6x96x96xbf16, #tpu.memory_space<vmem>>, vector<1x96x96xbf16>,
    %c4 = arith.constant 4 : index
    %c0_71 = arith.constant 0 : index
    %c0_72 = arith.constant 0 : index
    %173 = vector.load %arg3[%c4, %c0_71, %c0_72] : memref<6x16x16xbf16, #tpu.memory_space<vmem>>, vector<1x16x16xbf16>
    %174 = vector.shape_cast %173 : vector<1x16x16xbf16> to vector<16x16xbf16>
    %cst_73 = arith.constant dense<0.000000e+00> : vector<544x16xf32>
    %175 = tpu.matmul %1, %174, %cst_73 {dimension_numbers = #tpu.dot_dimension_numbers<[1], [0], [0], [1], [0, 0, 1, 1], [], []>} : vector<544x16xbf16>, vector<16x16xbf16>, vector<544x16xf32> -> vector<544x16xf32>
    %176 = vector.extract_strided_slice %175 {offsets = [0, 0], sizes = [224, 16], strides = [1, 1]} : vector<544x16xf32> to vector<224x16xf32>
    %177 = arith.truncf %176 : vector<224x16xf32> to vector<224x16xbf16>
    %178 = vector.extract_strided_slice %175 {offsets = [224, 0], sizes = [224, 16], strides = [1, 1]} : vector<544x16xf32> to vector<224x16xf32>
    %179 = arith.truncf %178 : vector<224x16xf32> to vector<224x16xbf16>
    %180 = vector.extract_strided_slice %175 {offsets = [448, 0], sizes = [96, 16], strides = [1, 1]} : vector<544x16xf32> to vector<96x16xf32>
    %181 = arith.truncf %180 : vector<96x16xf32> to vector<96x16xbf16>
    %cst_74 = arith.constant dense<0.000000e+00> : vector<224x224xf32>
    %182 = tpu.matmul %177, %2, %cst_74 {dimension_numbers = #tpu.dot_dimension_numbers<[1], [0], [0], [1], [0, 0, 1, 1], [], []>} : vector<224x16xbf16>, vector<16x224xbf16>, vector<224x224xf32> -> vector<224x224xf32>
    %cst_75 = arith.constant dense<0.000000e+00> : vector<96x96xf32>
    %183 = tpu.matmul %181, %3, %cst_75 {dimension_numbers = #tpu.dot_dimension_numbers<[1], [0], [0], [1], [0, 0, 1, 1], [], []>} : vector<96x16xbf16>, vector<16x96xbf16>, vector<96x96xf32> -> vector<96x96xf32>
    %cst_76 = arith.constant dense<0.000000e+00> : vector<224x224xf32>
    %184 = tpu.matmul %179, %4, %cst_76 {dimension_numbers = #tpu.dot_dimension_numbers<[1], [0], [0], [1], [0, 0, 1, 1], [], []>} : vector<224x16xbf16>, vector<16x224xbf16>, vector<224x224xf32> -> vector<224x224xf32>
    %c4_i32 = arith.constant 4 : i32
    %185 = arith.addi %0, %c4_i32 : i32
    %186 = arith.index_cast %185 : i32 to index
    %187 = memref.load %arg1[%186] : memref<6xf32, #tpu.memory_space<smem>>
    %c4_i32_77 = arith.constant 4 : i32
    %188 = arith.addi %0, %c4_i32_77 : i32
    %189 = arith.index_cast %188 : i32 to index
    %190 = memref.load %arg2[%189] : memref<6xf32, #tpu.memory_space<smem>>
    %191 = vector.broadcast %187 : f32 to vector<224x224xf32>
    %192 = arith.mulf %184, %191 : vector<224x224xf32>
    %193 = vector.broadcast %190 : f32 to vector<224x224xf32>
    %194 = arith.addf %192, %193 : vector<224x224xf32>
    %195 = arith.truncf %194 : vector<224x224xf32> to vector<224x224xbf16>
    %c4_78 = arith.constant 4 : index
    %c0_79 = arith.constant 0 : index
    %c0_80 = arith.constant 0 : index
    %196 = vector.load %arg8[%c4_78, %c0_79, %c0_80] : memref<6x224x224xbf16, #tpu.memory_space<vmem>>, vector<1x224x224xbf16>
    %197 = vector.shape_cast %196 : vector<1x224x224xbf16> to vector<224x224xbf16>
    %198 = vector.shape_cast %195 : vector<224x224xbf16> to vector<1x224x224xbf16>
    tpu.vector_store %arg8[%c4_78, %c0_79, %c0_80], %198 {strides = array<i32>} : memref<6x224x224xbf16, #tpu.memory_space<vmem>>, vector<1x224x224xbf16>,
    %199 = vector.broadcast %187 : f32 to vector<224x224xf32>
    %200 = arith.mulf %182, %199 : vector<224x224xf32>
    %201 = vector.broadcast %190 : f32 to vector<224x224xf32>
    %202 = arith.addf %200, %201 : vector<224x224xf32>
    %203 = arith.truncf %202 : vector<224x224xf32> to vector<224x224xbf16>
    %c4_81 = arith.constant 4 : index
    %c0_82 = arith.constant 0 : index
    %c0_83 = arith.constant 0 : index
    %204 = vector.load %arg9[%c4_81, %c0_82, %c0_83] : memref<6x224x224xbf16, #tpu.memory_space<vmem>>, vector<1x224x224xbf16>
    %205 = vector.shape_cast %204 : vector<1x224x224xbf16> to vector<224x224xbf16>
    %206 = vector.shape_cast %203 : vector<224x224xbf16> to vector<1x224x224xbf16>
    tpu.vector_store %arg9[%c4_81, %c0_82, %c0_83], %206 {strides = array<i32>} : memref<6x224x224xbf16, #tpu.memory_space<vmem>>, vector<1x224x224xbf16>,
    %207 = vector.broadcast %187 : f32 to vector<96x96xf32>
    %208 = arith.mulf %183, %207 : vector<96x96xf32>
    %209 = vector.broadcast %190 : f32 to vector<96x96xf32>
    %210 = arith.addf %208, %209 : vector<96x96xf32>
    %211 = arith.truncf %210 : vector<96x96xf32> to vector<96x96xbf16>
    %c4_84 = arith.constant 4 : index
    %c0_85 = arith.constant 0 : index
    %c0_86 = arith.constant 0 : index
    %212 = vector.load %arg10[%c4_84, %c0_85, %c0_86] : memref<6x96x96xbf16, #tpu.memory_space<vmem>>, vector<1x96x96xbf16>
    %213 = vector.shape_cast %212 : vector<1x96x96xbf16> to vector<96x96xbf16>
    %214 = vector.shape_cast %211 : vector<96x96xbf16> to vector<1x96x96xbf16>
    tpu.vector_store %arg10[%c4_84, %c0_85, %c0_86], %214 {strides = array<i32>} : memref<6x96x96xbf16, #tpu.memory_space<vmem>>, vector<1x96x96xbf16>,
    %c5 = arith.constant 5 : index
    %c0_87 = arith.constant 0 : index
    %c0_88 = arith.constant 0 : index
    %215 = vector.load %arg3[%c5, %c0_87, %c0_88] : memref<6x16x16xbf16, #tpu.memory_space<vmem>>, vector<1x16x16xbf16>
    %216 = vector.shape_cast %215 : vector<1x16x16xbf16> to vector<16x16xbf16>
    %cst_89 = arith.constant dense<0.000000e+00> : vector<544x16xf32>
    %217 = tpu.matmul %1, %216, %cst_89 {dimension_numbers = #tpu.dot_dimension_numbers<[1], [0], [0], [1], [0, 0, 1, 1], [], []>} : vector<544x16xbf16>, vector<16x16xbf16>, vector<544x16xf32> -> vector<544x16xf32>
    %218 = vector.extract_strided_slice %217 {offsets = [0, 0], sizes = [224, 16], strides = [1, 1]} : vector<544x16xf32> to vector<224x16xf32>
    %219 = arith.truncf %218 : vector<224x16xf32> to vector<224x16xbf16>
    %220 = vector.extract_strided_slice %217 {offsets = [224, 0], sizes = [224, 16], strides = [1, 1]} : vector<544x16xf32> to vector<224x16xf32>
    %221 = arith.truncf %220 : vector<224x16xf32> to vector<224x16xbf16>
    %222 = vector.extract_strided_slice %217 {offsets = [448, 0], sizes = [96, 16], strides = [1, 1]} : vector<544x16xf32> to vector<96x16xf32>
    %223 = arith.truncf %222 : vector<96x16xf32> to vector<96x16xbf16>
    %cst_90 = arith.constant dense<0.000000e+00> : vector<224x224xf32>
    %224 = tpu.matmul %219, %2, %cst_90 {dimension_numbers = #tpu.dot_dimension_numbers<[1], [0], [0], [1], [0, 0, 1, 1], [], []>} : vector<224x16xbf16>, vector<16x224xbf16>, vector<224x224xf32> -> vector<224x224xf32>
    %cst_91 = arith.constant dense<0.000000e+00> : vector<96x96xf32>
    %225 = tpu.matmul %223, %3, %cst_91 {dimension_numbers = #tpu.dot_dimension_numbers<[1], [0], [0], [1], [0, 0, 1, 1], [], []>} : vector<96x16xbf16>, vector<16x96xbf16>, vector<96x96xf32> -> vector<96x96xf32>
    %cst_92 = arith.constant dense<0.000000e+00> : vector<224x224xf32>
    %226 = tpu.matmul %221, %4, %cst_92 {dimension_numbers = #tpu.dot_dimension_numbers<[1], [0], [0], [1], [0, 0, 1, 1], [], []>} : vector<224x16xbf16>, vector<16x224xbf16>, vector<224x224xf32> -> vector<224x224xf32>
    %c5_i32 = arith.constant 5 : i32
    %227 = arith.addi %0, %c5_i32 : i32
    %228 = arith.index_cast %227 : i32 to index
    %229 = memref.load %arg1[%228] : memref<6xf32, #tpu.memory_space<smem>>
    %c5_i32_93 = arith.constant 5 : i32
    %230 = arith.addi %0, %c5_i32_93 : i32
    %231 = arith.index_cast %230 : i32 to index
    %232 = memref.load %arg2[%231] : memref<6xf32, #tpu.memory_space<smem>>
    %233 = vector.broadcast %229 : f32 to vector<224x224xf32>
    %234 = arith.mulf %226, %233 : vector<224x224xf32>
    %235 = vector.broadcast %232 : f32 to vector<224x224xf32>
    %236 = arith.addf %234, %235 : vector<224x224xf32>
    %237 = arith.truncf %236 : vector<224x224xf32> to vector<224x224xbf16>
    %c5_94 = arith.constant 5 : index
    %c0_95 = arith.constant 0 : index
    %c0_96 = arith.constant 0 : index
    %238 = vector.load %arg8[%c5_94, %c0_95, %c0_96] : memref<6x224x224xbf16, #tpu.memory_space<vmem>>, vector<1x224x224xbf16>
    %239 = vector.shape_cast %238 : vector<1x224x224xbf16> to vector<224x224xbf16>
    %240 = vector.shape_cast %237 : vector<224x224xbf16> to vector<1x224x224xbf16>
    tpu.vector_store %arg8[%c5_94, %c0_95, %c0_96], %240 {strides = array<i32>} : memref<6x224x224xbf16, #tpu.memory_space<vmem>>, vector<1x224x224xbf16>,
    %241 = vector.broadcast %229 : f32 to vector<224x224xf32>
    %242 = arith.mulf %224, %241 : vector<224x224xf32>
    %243 = vector.broadcast %232 : f32 to vector<224x224xf32>
    %244 = arith.addf %242, %243 : vector<224x224xf32>
    %245 = arith.truncf %244 : vector<224x224xf32> to vector<224x224xbf16>
    %c5_97 = arith.constant 5 : index
    %c0_98 = arith.constant 0 : index
    %c0_99 = arith.constant 0 : index
    %246 = vector.load %arg9[%c5_97, %c0_98, %c0_99] : memref<6x224x224xbf16, #tpu.memory_space<vmem>>, vector<1x224x224xbf16>
    %247 = vector.shape_cast %246 : vector<1x224x224xbf16> to vector<224x224xbf16>
    %248 = vector.shape_cast %245 : vector<224x224xbf16> to vector<1x224x224xbf16>
    tpu.vector_store %arg9[%c5_97, %c0_98, %c0_99], %248 {strides = array<i32>} : memref<6x224x224xbf16, #tpu.memory_space<vmem>>, vector<1x224x224xbf16>,
    %249 = vector.broadcast %229 : f32 to vector<96x96xf32>
    %250 = arith.mulf %225, %249 : vector<96x96xf32>
    %251 = vector.broadcast %232 : f32 to vector<96x96xf32>
    %252 = arith.addf %250, %251 : vector<96x96xf32>
    %253 = arith.truncf %252 : vector<96x96xf32> to vector<96x96xbf16>
    %c5_100 = arith.constant 5 : index
    %c0_101 = arith.constant 0 : index
    %c0_102 = arith.constant 0 : index
    %254 = vector.load %arg10[%c5_100, %c0_101, %c0_102] : memref<6x96x96xbf16, #tpu.memory_space<vmem>>, vector<1x96x96xbf16>
    %255 = vector.shape_cast %254 : vector<1x96x96xbf16> to vector<96x96xbf16>
    %256 = vector.shape_cast %253 : vector<96x96xbf16> to vector<1x96x96xbf16>
    tpu.vector_store %arg10[%c5_100, %c0_101, %c0_102], %256 {strides = array<i32>} : memref<6x96x96xbf16, #tpu.memory_space<vmem>>, vector<1x96x96xbf16>,
    return
  }
  func.func @transform_0(%arg0: i32, %arg1: memref<6xf32, #tpu.memory_space<smem>>, %arg2: memref<6xf32, #tpu.memory_space<smem>>) -> (i32, i32, i32) {
    %c0_i32 = arith.constant 0 : i32
    %c0_i32_0 = arith.constant 0 : i32
    %c0_i32_1 = arith.constant 0 : i32
    return %arg0, %c0_i32, %c0_i32_0 : i32, i32, i32
  }
  func.func @transform_1(%arg0: i32, %arg1: memref<6xf32, #tpu.memory_space<smem>>, %arg2: memref<6xf32, #tpu.memory_space<smem>>) -> (i32, i32) {
    %c0_i32 = arith.constant 0 : i32
    %c0_i32_0 = arith.constant 0 : i32
    %c0_i32_1 = arith.constant 0 : i32
    return %c0_i32, %c0_i32_0 : i32, i32
  }
  func.func @transform_2(%arg0: i32, %arg1: memref<6xf32, #tpu.memory_space<smem>>, %arg2: memref<6xf32, #tpu.memory_space<smem>>) -> (i32, i32) {
    %c0_i32 = arith.constant 0 : i32
    %c0_i32_0 = arith.constant 0 : i32
    %c0_i32_1 = arith.constant 0 : i32
    return %c0_i32, %c0_i32_0 : i32, i32
  }
  func.func @transform_3(%arg0: i32, %arg1: memref<6xf32, #tpu.memory_space<smem>>, %arg2: memref<6xf32, #tpu.memory_space<smem>>) -> (i32, i32) {
    %c0_i32 = arith.constant 0 : i32
    %c0_i32_0 = arith.constant 0 : i32
    %c0_i32_1 = arith.constant 0 : i32
    return %c0_i32, %c0_i32_0 : i32, i32
  }
  func.func @transform_4(%arg0: i32, %arg1: memref<6xf32, #tpu.memory_space<smem>>, %arg2: memref<6xf32, #tpu.memory_space<smem>>) -> (i32, i32) {
    %c0_i32 = arith.constant 0 : i32
    %c0_i32_0 = arith.constant 0 : i32
    %c0_i32_1 = arith.constant 0 : i32
    return %c0_i32, %c0_i32_0 : i32, i32
  }
  func.func @transform_5(%arg0: i32, %arg1: memref<6xf32, #tpu.memory_space<smem>>, %arg2: memref<6xf32, #tpu.memory_space<smem>>) -> (i32, i32, i32) {
    %c0_i32 = arith.constant 0 : i32
    %c0_i32_0 = arith.constant 0 : i32
    %c0_i32_1 = arith.constant 0 : i32
    return %arg0, %c0_i32, %c0_i32_0 : i32, i32, i32
  }
  func.func @transform_6(%arg0: i32, %arg1: memref<6xf32, #tpu.memory_space<smem>>, %arg2: memref<6xf32, #tpu.memory_space<smem>>) -> (i32, i32, i32) {
    %c0_i32 = arith.constant 0 : i32
    %c0_i32_0 = arith.constant 0 : i32
    %c0_i32_1 = arith.constant 0 : i32
    return %arg0, %c0_i32, %c0_i32_0 : i32, i32, i32
  }
  func.func @transform_7(%arg0: i32, %arg1: memref<6xf32, #tpu.memory_space<smem>>, %arg2: memref<6xf32, #tpu.memory_space<smem>>) -> (i32, i32, i32) {
    %c0_i32 = arith.constant 0 : i32
    %c0_i32_0 = arith.constant 0 : i32
    %c0_i32_1 = arith.constant 0 : i32
    return %arg0, %c0_i32, %c0_i32_0 : i32, i32, i32
  }
}

</mosaic_0001>

<llo_original>
// kernel: tile.10
$region0: #{tile.10}
  #allocation0 [shape = 's32[1]{0}', space=sflag, size = 0x4, scoped, tag = 'scoped memory for tile.10']
  %s0 = inlined_call_operand.vmem [shape: f32[3], index: 0, kind: input, shape index: {}]
  %s1 = inlined_call_operand.vmem [shape: f32[2,3], index: 1, kind: output, shape index: {}]
  // Predicated region
  $region2: #{tile.10} parent=0 // pred_check
    _
  $region3: #{tile.10} parent=0 // pred_check_branch
    %3 = sbr.rel (0) target = $region5
  $region4: #{tile.10} parent=0 // pred_region
    _
  $region5: #{tile.10} parent=0 // pred_fallthru
    _
  %v4 = vld [vmem:[%s0] ss:$0 sm:$0xff]
  %5 = vst [vmem:[%s1] sm:$0x3] %v4

// kernel: tile.11
$region0: #{tile.11}
  %s0 = inlined_call_operand.vmem [shape: f32[2,3], index: 0, kind: input, shape index: {}]
  %s1 = inlined_call_operand.vmem [shape: f32[6], index: 1, kind: output, shape index: {}]
  $region1: #{tile.11} parent=0
    #allocation0 [shape = 'u8[4096]{0}', space=vmem, size = 0x1000, scoped, tag = 'scoped mem for output reshape']
    #allocation1 [shape = 'u8[4096]{0}', space=vmem, size = 0x1000, scoped, tag = 'scoped mem for input reshape']
    %s3 = sshllo.u32 0, 2
    %v4 = vld [vmem:[%s0] sm:%s3]
    %5 = vst [vmem:[#allocation1] sm:%s3] %v4
    %v6 = vld [vmem:[#allocation1] sm:$0x1]
    %vm7 = vcmask 23552
    %8 = vst.msk [vmem:[#allocation0] sm:$0x1] %vm7, %v6
    %s9 = scalar_lea.vmem [#allocation1], 1
    %v10 = vld [vmem:[%s9] sm:$0x1]
    %11 = vrot.lane.b32.xlu0 %v10, 3
    %v12 = vpop.permute.xlu0 %11
    %vm13 = vcmask 48152
    %14 = vst.msk [vmem:[#allocation0] sm:$0x1] %vm13, %v12
    %s16 = sshllo.u32 0, 1
    %v18 = vld [vmem:[#allocation0] sm:%s16]
    %s19 = sshllo.u32 0, 1
    %20 = vst [vmem:[%s1] sm:%s19] %v18

// kernel: _forward_impl.1
$region0: #{_forward_impl.1}
  #allocation0 [shape = 'u32[]', space=smem, size = 0x4, offset = 0x4, fixed_abs, tag = 'smem constant byte address 0x4 - core index']
  #allocation1 [shape = 'u32[144,128]{1,0:T(1,128)}', space=vmem, size = 0x12000, scoped, tag = 'internal scratch']
  #allocation2 [shape = 's32[1]{0}', space=sflag, size = 0x4, scoped, tag = 'scoped memory for _forward_impl.1']
  #allocation3 [shape = 'u8[512]{0}', space=smem, size = 0x200, scoped, tag = 'prefetched SMEM operand 0']
  #allocation4 [shape = 'u8[512]{0}', space=smem, size = 0x200, scoped, tag = 'prefetched SMEM operand 1']
  %s0 = inlined_call_operand.vmem [shape: f32[6], index: 0, kind: input, shape index: {}]
  %s1 = inlined_call_operand.vmem [shape: f32[6], index: 1, kind: input, shape index: {}]
  %s2 = inlined_call_operand.vmem [shape: bf16[6,16,16], index: 2, kind: input, shape index: {}]
  %s3 = inlined_call_operand.hbm [shape: bf16[544,16], index: 3, kind: input, shape index: {}]
  %s4 = inlined_call_operand.vmem [shape: bf16[16,224], index: 4, kind: input, shape index: {}]
  %s5 = inlined_call_operand.vmem [shape: bf16[16,96], index: 5, kind: input, shape index: {}]
  %s6 = inlined_call_operand.vmem [shape: bf16[16,224], index: 6, kind: input, shape index: {}]
  %s7 = inlined_call_operand.hbm [shape: bf16[6,224,224], index: 7, kind: output, shape index: {0}]
  %s8 = inlined_call_operand.hbm [shape: bf16[6,224,224], index: 8, kind: output, shape index: {1}]
  %s9 = inlined_call_operand.hbm [shape: bf16[6,96,96], index: 9, kind: output, shape index: {2}]
  %10 = xla_tuple %s7, %s8, %s9
  %s11 = sld [smem:[#allocation0]]
  $region50: #{_forward_impl.1} parent=0
    _
  %s13 = ssub.s32 1, %s11
  %s14 = scalar_select 0, %s13, %s11
  %s15 = sshll.u32 %s0, 4
  %s16 = int_to_ptr.vmem [resolvable:$true] %s15
  %18 = dma.vmem_to_smem %s16, 16, [#allocation3], [#allocation2]
  %s19 = sshll.u32 %s1, 4
  %s20 = int_to_ptr.vmem [resolvable:$true] %s19
  %22 = dma.vmem_to_smem %s20, 16, [#allocation4], [#allocation2]
  %23 = dma.done [#allocation2], 32
  %24 = sfence
  $region1: #{_forward_impl.1} parent=0
    #allocation5 [shape = 'u8[139264]{0}', space=vmem, size = 0x22000, scoped, tag = 'input window, operand 3, single buffered']
    #allocation6 [shape = 's32[1]{0}', space=sflag, size = 0x4, scoped, tag = 'scoped memory for _forward_impl.1']
    #allocation7 [shape = 's32[1]{0}', space=sflag, size = 0x4, scoped, tag = 'scoped memory for _forward_impl.1']
    #allocation8 [shape = 'u8[688128]{0}', space=vmem, size = 0xa8000, scoped, tag = 'output window, operand 0, single buffered']
    #allocation9 [shape = 'u8[688128]{0}', space=vmem, size = 0xa8000, scoped, tag = 'output window, operand 1, single buffered']
    #allocation10 [shape = 's32[1]{0}', space=sflag, size = 0x4, scoped, tag = 'scoped memory for _forward_impl.1']
    #allocation11 [shape = 'u8[147456]{0}', space=vmem, size = 0x24000, scoped, tag = 'output window, operand 2, single buffered']
    %25 = vsyncpa [#allocation6], 0
    %26 = vsyncpa [#allocation7], 0
    %27 = vsyncpa [#allocation10], 0
    // Predicated region
    $region2: #{_forward_impl.1} parent=1 // pred_check
      _
    $region3: #{_forward_impl.1} parent=1 // pred_check_branch
      %29 = sbr.rel (0) target = $region5
    $region4: #{_forward_impl.1} parent=1 // pred_region
      _
    $region5: #{_forward_impl.1} parent=1 // pred_fallthru
      _
    // Predicated region
    $region6: #{_forward_impl.1} parent=1 // pred_check
      _
    $region7: #{_forward_impl.1} parent=1 // pred_check_branch
      %31 = sbr.rel (0) target = $region9
    $region8: #{_forward_impl.1} parent=1 // pred_region
      %s33 = ssub.s32 4352, 4352
      %34 = vsyncadd [#allocation6], %s33
      %s35 = sshll.u32 [#allocation5], 4
      %s36 = int_to_ptr.vmem [resolvable:$true] %s35
      %41 = dma.hbm_to_vmem [thread:$0]  %s3, 4352, %s36, [#allocation6], 64, 64, 4
    $region9: #{_forward_impl.1} parent=1 // pred_fallthru
      _
    // Predicated region
    $region10: #{_forward_impl.1} parent=1 // pred_check
      _
    $region11: #{_forward_impl.1} parent=1 // pred_check_branch
      %43 = sbr.rel (0) target = $region13
    $region12: #{_forward_impl.1} parent=1 // pred_region
      _
    $region13: #{_forward_impl.1} parent=1 // pred_fallthru
      _
    // Predicated region
    $region14: #{_forward_impl.1} parent=1 // pred_check
      _
    $region15: #{_forward_impl.1} parent=1 // pred_check_branch
      %45 = sbr.rel (0) target = $region17
    $region16: #{_forward_impl.1} parent=1 // pred_region
      _
    $region17: #{_forward_impl.1} parent=1 // pred_fallthru
      _
    // Predicated region
    $region18: #{_forward_impl.1} parent=1 // pred_check
      _
    $region19: #{_forward_impl.1} parent=1 // pred_check_branch
      %47 = sbr.rel (0) target = $region21
    $region20: #{_forward_impl.1} parent=1 // pred_region
      _
    $region21: #{_forward_impl.1} parent=1 // pred_fallthru
      _
    // Predicated region
    $region22: #{_forward_impl.1} parent=1 // pred_check
      _
    $region23: #{_forward_impl.1} parent=1 // pred_check_branch
      %49 = sbr.rel (0) target = $region25
    $region24: #{_forward_impl.1} parent=1 // pred_region
      %50 = dma.done [#allocation6], 4352
    $region25: #{_forward_impl.1} parent=1 // pred_fallthru
      _
    %s52 = smul.u32 0, 6
    %v53 = vld [vmem:[#allocation5] sm:$0xf]
    %v54 = vld [vmem:[#allocation5 + $0x4] sm:$0xf]
    %v55 = vld [vmem:[#allocation5 + $0x8] sm:$0xf]
    %v56 = vld [vmem:[#allocation5 + $0xc] sm:$0xf]
    %v57 = vld [vmem:[#allocation5 + $0x10] sm:$0xf]
    %v58 = vld [vmem:[#allocation5 + $0x14] sm:$0xf]
    %v59 = vld [vmem:[#allocation5 + $0x18] sm:$0xf]
    %v60 = vld [vmem:[#allocation5 + $0x1c] sm:$0xf]
    %v61 = vld [vmem:[#allocation5 + $0x20] sm:$0xf]
    %v62 = vld [vmem:[#allocation5 + $0x24] sm:$0xf]
    %v63 = vld [vmem:[#allocation5 + $0x28] sm:$0xf]
    %v64 = vld [vmem:[#allocation5 + $0x2c] sm:$0xf]
    %v65 = vld [vmem:[#allocation5 + $0x30] sm:$0xf]
    %v66 = vld [vmem:[#allocation5 + $0x34] sm:$0xf]
    %v67 = vld [vmem:[#allocation5 + $0x38] sm:$0xf]
    %v68 = vld [vmem:[#allocation5 + $0x3c] sm:$0xf]
    %v69 = vld [vmem:[#allocation5 + $0x40] sm:$0xf]
    %v70 = vld [vmem:[#allocation5 + $0x44] sm:$0xf]
    %v71 = vld [vmem:[#allocation5 + $0x48] sm:$0xf]
    %v72 = vld [vmem:[#allocation5 + $0x4c] sm:$0xf]
    %v73 = vld [vmem:[#allocation5 + $0x50] sm:$0xf]
    %v74 = vld [vmem:[#allocation5 + $0x54] sm:$0xf]
    %v75 = vld [vmem:[#allocation5 + $0x58] sm:$0xf]
    %v76 = vld [vmem:[#allocation5 + $0x5c] sm:$0xf]
    %v77 = vld [vmem:[#allocation5 + $0x60] sm:$0xf]
    %v78 = vld [vmem:[#allocation5 + $0x64] sm:$0xf]
    %v79 = vld [vmem:[#allocation5 + $0x68] sm:$0xf]
    %v80 = vld [vmem:[#allocation5 + $0x6c] sm:$0xf]
    %v81 = vld [vmem:[#allocation5 + $0x70] sm:$0xf]
    %v82 = vld [vmem:[#allocation5 + $0x74] sm:$0xf]
    %v83 = vld [vmem:[#allocation5 + $0x78] sm:$0xf]
    %v84 = vld [vmem:[#allocation5 + $0x7c] sm:$0xf]
    %v85 = vld [vmem:[#allocation5 + $0x80] sm:$0xf]
    %v86 = vld [vmem:[#allocation5 + $0x84] sm:$0xf]
    %v87 = vld [vmem:[#allocation5 + $0x88] sm:$0xf]
    %v88 = vld [vmem:[#allocation5 + $0x8c] sm:$0xf]
    %v89 = vld [vmem:[#allocation5 + $0x90] sm:$0xf]
    %v90 = vld [vmem:[#allocation5 + $0x94] sm:$0xf]
    %v91 = vld [vmem:[#allocation5 + $0x98] sm:$0xf]
    %v92 = vld [vmem:[#allocation5 + $0x9c] sm:$0xf]
    %v93 = vld [vmem:[#allocation5 + $0xa0] sm:$0xf]
    %v94 = vld [vmem:[#allocation5 + $0xa4] sm:$0xf]
    %v95 = vld [vmem:[#allocation5 + $0xa8] sm:$0xf]
    %v96 = vld [vmem:[#allocation5 + $0xac] sm:$0xf]
    %v97 = vld [vmem:[#allocation5 + $0xb0] sm:$0xf]
    %v98 = vld [vmem:[#allocation5 + $0xb4] sm:$0xf]
    %v99 = vld [vmem:[#allocation5 + $0xb8] sm:$0xf]
    %v100 = vld [vmem:[#allocation5 + $0xbc] sm:$0xf]
    %v101 = vld [vmem:[#allocation5 + $0xc0] sm:$0xf]
    %v102 = vld [vmem:[#allocation5 + $0xc4] sm:$0xf]
    %v103 = vld [vmem:[#allocation5 + $0xc8] sm:$0xf]
    %v104 = vld [vmem:[#allocation5 + $0xcc] sm:$0xf]
    %v105 = vld [vmem:[#allocation5 + $0xd0] sm:$0xf]
    %v106 = vld [vmem:[#allocation5 + $0xd4] sm:$0xf]
    %v107 = vld [vmem:[#allocation5 + $0xd8] sm:$0xf]
    %v108 = vld [vmem:[#allocation5 + $0xdc] sm:$0xf]
    %v109 = vld [vmem:[#allocation5 + $0xe0] sm:$0xf]
    %v110 = vld [vmem:[#allocation5 + $0xe4] sm:$0xf]
    %v111 = vld [vmem:[#allocation5 + $0xe8] sm:$0xf]
    %v112 = vld [vmem:[#allocation5 + $0xec] sm:$0xf]
    %v113 = vld [vmem:[#allocation5 + $0xf0] sm:$0xf]
    %v114 = vld [vmem:[#allocation5 + $0xf4] sm:$0xf]
    %v115 = vld [vmem:[#allocation5 + $0xf8] sm:$0xf]
    %v116 = vld [vmem:[#allocation5 + $0xfc] sm:$0xf]
    %v117 = vld [vmem:[#allocation5 + $0x100] sm:$0xf]
    %v118 = vld [vmem:[#allocation5 + $0x104] sm:$0xf]
    %v119 = vld [vmem:[#allocation5 + $0x108] sm:$0xf]
    %v120 = vld [vmem:[#allocation5 + $0x10c] sm:$0xf]
    %v121 = vld [vmem:[%s4] sm:$0xff]
    %v122 = vld [vmem:[%s4 + $0x8] sm:$0xff]
    %v123 = vld [vmem:[%s5] sm:$0xf]
    %v124 = vld [vmem:[%s5 + $0x4] sm:$0xf]
    %v125 = vld [vmem:[%s6] sm:$0xff]
    %v126 = vld [vmem:[%s6 + $0x8] sm:$0xff]
    %v127 = vld [vmem:[%s2] sm:$0xf]
    %v128 = vld [vmem:[%s2 + $0x4] sm:$0xf]
    %v197 = vunpack.c.l.b16 %v53
    %v198 = vunpack.c.l.b16 %v54
    %v199 = vunpack.c.l.b16 %v55
    %v200 = vunpack.c.l.b16 %v56
    %v201 = vunpack.c.l.b16 %v57
    %v202 = vunpack.c.l.b16 %v58
    %v203 = vunpack.c.l.b16 %v59
    %v204 = vunpack.c.l.b16 %v60
    %v205 = vunpack.c.l.b16 %v61
    %v206 = vunpack.c.l.b16 %v62
    %v207 = vunpack.c.l.b16 %v63
    %v208 = vunpack.c.l.b16 %v64
    %v209 = vunpack.c.l.b16 %v65
    %v210 = vunpack.c.l.b16 %v66
    %v211 = vunpack.c.l.b16 %v67
    %v212 = vunpack.c.l.b16 %v68
    %v213 = vunpack.c.l.b16 %v69
    %v214 = vunpack.c.l.b16 %v70
    %v215 = vunpack.c.l.b16 %v71
    %v216 = vunpack.c.l.b16 %v72
    %v217 = vunpack.c.l.b16 %v73
    %v218 = vunpack.c.l.b16 %v74
    %v219 = vunpack.c.l.b16 %v75
    %v220 = vunpack.c.l.b16 %v76
    %v221 = vunpack.c.l.b16 %v77
    %v222 = vunpack.c.l.b16 %v78
    %v223 = vunpack.c.l.b16 %v79
    %v224 = vunpack.c.l.b16 %v80
    %v225 = vunpack.c.l.b16 %v81
    %v226 = vunpack.c.l.b16 %v82
    %v227 = vunpack.c.l.b16 %v83
    %v228 = vunpack.c.l.b16 %v84
    %v229 = vunpack.c.l.b16 %v85
    %v230 = vunpack.c.l.b16 %v86
    %v231 = vunpack.c.l.b16 %v87
    %v232 = vunpack.c.l.b16 %v88
    %v233 = vunpack.c.l.b16 %v89
    %v234 = vunpack.c.l.b16 %v90
    %v235 = vunpack.c.l.b16 %v91
    %v236 = vunpack.c.l.b16 %v92
    %v237 = vunpack.c.l.b16 %v93
    %v238 = vunpack.c.l.b16 %v94
    %v239 = vunpack.c.l.b16 %v95
    %v240 = vunpack.c.l.b16 %v96
    %v241 = vunpack.c.l.b16 %v97
    %v242 = vunpack.c.l.b16 %v98
    %v243 = vunpack.c.l.b16 %v99
    %v244 = vunpack.c.l.b16 %v100
    %v245 = vunpack.c.l.b16 %v101
    %v246 = vunpack.c.l.b16 %v102
    %v247 = vunpack.c.l.b16 %v103
    %v248 = vunpack.c.l.b16 %v104
    %v249 = vunpack.c.l.b16 %v105
    %v250 = vunpack.c.l.b16 %v106
    %v251 = vunpack.c.l.b16 %v107
    %v252 = vunpack.c.l.b16 %v108
    %v253 = vunpack.c.l.b16 %v109
    %v254 = vunpack.c.l.b16 %v110
    %v255 = vunpack.c.l.b16 %v111
    %v256 = vunpack.c.l.b16 %v112
    %v257 = vunpack.c.l.b16 %v113
    %v258 = vunpack.c.l.b16 %v114
    %v259 = vunpack.c.l.b16 %v115
    %v260 = vunpack.c.l.b16 %v116
    %v261 = vunpack.c.l.b16 %v117
    %v262 = vunpack.c.l.b16 %v118
    %v263 = vunpack.c.l.b16 %v119
    %v264 = vunpack.c.l.b16 %v120
    %v265 = vpack.c.b16 %v198, %v197
    %v266 = vpack.c.b16 %v200, %v199
    %v267 = vpack.c.b16 %v202, %v201
    %v268 = vpack.c.b16 %v204, %v203
    %v269 = vpack.c.b16 %v206, %v205
    %v270 = vpack.c.b16 %v208, %v207
    %v271 = vpack.c.b16 %v210, %v209
    %v272 = vpack.c.b16 %v212, %v211
    %v273 = vpack.c.b16 %v214, %v213
    %v274 = vpack.c.b16 %v216, %v215
    %v275 = vpack.c.b16 %v218, %v217
    %v276 = vpack.c.b16 %v220, %v219
    %v277 = vpack.c.b16 %v222, %v221
    %v278 = vpack.c.b16 %v224, %v223
    %v279 = vpack.c.b16 %v226, %v225
    %v280 = vpack.c.b16 %v228, %v227
    %v281 = vpack.c.b16 %v230, %v229
    %v282 = vpack.c.b16 %v232, %v231
    %v283 = vpack.c.b16 %v234, %v233
    %v284 = vpack.c.b16 %v236, %v235
    %v285 = vpack.c.b16 %v238, %v237
    %v286 = vpack.c.b16 %v240, %v239
    %v287 = vpack.c.b16 %v242, %v241
    %v288 = vpack.c.b16 %v244, %v243
    %v289 = vpack.c.b16 %v246, %v245
    %v290 = vpack.c.b16 %v248, %v247
    %v291 = vpack.c.b16 %v250, %v249
    %v292 = vpack.c.b16 %v252, %v251
    %v293 = vpack.c.b16 %v254, %v253
    %v294 = vpack.c.b16 %v256, %v255
    %v295 = vpack.c.b16 %v258, %v257
    %v296 = vpack.c.b16 %v260, %v259
    %v297 = vpack.c.b16 %v262, %v261
    %v298 = vpack.c.b16 %v264, %v263
    %v301 = vunpack.c.l.b16 %v127
    %v302 = vunpack.c.l.b16 %v128
    %v303 = vpack.c.b16 %v302, %v301
    %vm305 = vcmask 130048
    %v307 = vsel %vm305, %v265, 0
    %v310 = vsel %vm305, %v266, 0
    %v313 = vsel %vm305, %v267, 0
    %v316 = vsel %vm305, %v268, 0
    %v319 = vsel %vm305, %v269, 0
    %v322 = vsel %vm305, %v270, 0
    %v325 = vsel %vm305, %v271, 0
    %v328 = vsel %vm305, %v272, 0
    %v331 = vsel %vm305, %v273, 0
    %v334 = vsel %vm305, %v274, 0
    %v337 = vsel %vm305, %v275, 0
    %v340 = vsel %vm305, %v276, 0
    %v343 = vsel %vm305, %v277, 0
    %v346 = vsel %vm305, %v278, 0
    %v349 = vsel %vm305, %v279, 0
    %v352 = vsel %vm305, %v280, 0
    %v355 = vsel %vm305, %v281, 0
    %v358 = vsel %vm305, %v282, 0
    %v361 = vsel %vm305, %v283, 0
    %v364 = vsel %vm305, %v284, 0
    %v367 = vsel %vm305, %v285, 0
    %v370 = vsel %vm305, %v286, 0
    %v373 = vsel %vm305, %v287, 0
    %v376 = vsel %vm305, %v288, 0
    %v379 = vsel %vm305, %v289, 0
    %v382 = vsel %vm305, %v290, 0
    %v385 = vsel %vm305, %v291, 0
    %v388 = vsel %vm305, %v292, 0
    %v391 = vsel %vm305, %v293, 0
    %v394 = vsel %vm305, %v294, 0
    %v397 = vsel %vm305, %v295, 0
    %v400 = vsel %vm305, %v296, 0
    %v403 = vsel %vm305, %v297, 0
    %v406 = vsel %vm305, %v298, 0
    %408 = vmatprep.subr.bf16.mxu0 0
    %409 = vmatpush1.bf16.msra.mxu0 %v303
    %410 = vmatprep.subr.bf16.mxu0 0
    %411 = vmatpush1.bf16.msra.mxu0 0
    %412 = vmatprep.subr.bf16.mxu0 0
    %413 = vmatpush1.bf16.msra.mxu0 0
    %414 = vmatprep.subr.bf16.mxu0 0
    %415 = vmatpush1.bf16.msra.mxu0 0
    %416 = vmatprep.subr.bf16.mxu0 0
    %417 = vmatpush1.bf16.msra.mxu0 0
    %418 = vmatprep.subr.bf16.mxu0 0
    %419 = vmatpush1.bf16.msra.mxu0 0
    %420 = vmatprep.subr.bf16.mxu0 0
    %421 = vmatpush1.bf16.msra.mxu0 0
    %422 = vmatprep.subr.bf16.mxu0 0
    %423 = vmatpush1.bf16.msra.mxu0 0
    %424 = vmatprep.subr.bf16.mxu0 0
    %425 = vmatpush1.bf16.msra.mxu0 0
    %426 = vmatprep.subr.bf16.mxu0 0
    %427 = vmatpush1.bf16.msra.mxu0 0
    %428 = vmatprep.subr.bf16.mxu0 0
    %429 = vmatpush1.bf16.msra.mxu0 0
    %430 = vmatprep.subr.bf16.mxu0 0
    %431 = vmatpush1.bf16.msra.mxu0 0
    %432 = vmatprep.subr.bf16.mxu0 0
    %433 = vmatpush1.bf16.msra.mxu0 0
    %434 = vmatprep.subr.bf16.mxu0 0
    %435 = vmatpush1.bf16.msra.mxu0 0
    %436 = vmatprep.subr.bf16.mxu0 0
    %437 = vmatpush1.bf16.msra.mxu0 0
    %438 = vmatprep.subr.bf16.mxu0 0
    %439 = vmatpush1.bf16.msra.mxu0 0
    %440 = vmatprep.mubr.bf16.mxu0 0
    %441 = vmatmul.mubr.bf16.gmra.mrb[0].mxu0 %v307
    %v442 = vpop.f32.mrb[0].mxu0
    %v443 = vadd.f32 0.0, %v442
    %v444 = vpop.f32.mrb[0].mxu0
    %v445 = vpop.f32.mrb[0].mxu0
    %v446 = vadd.f32 0.0, %v445
    %v447 = vpop.f32.mrb[0].mxu0
    %448 = vmatprep.mubr.bf16.mxu0 0
    %449 = vmatmul.mubr.bf16.gmra.mrb[0].mxu0 %v310
    %v450 = vpop.f32.mrb[0].mxu0
    %v451 = vadd.f32 0.0, %v450
    %v452 = vpop.f32.mrb[0].mxu0
    %v453 = vpop.f32.mrb[0].mxu0
    %v454 = vadd.f32 0.0, %v453
    %v455 = vpop.f32.mrb[0].mxu0
    %456 = vmatprep.mubr.bf16.mxu0 0
    %457 = vmatmul.mubr.bf16.gmra.mrb[0].mxu0 %v313
    %v458 = vpop.f32.mrb[0].mxu0
    %v459 = vadd.f32 0.0, %v458
    %v460 = vpop.f32.mrb[0].mxu0
    %v461 = vpop.f32.mrb[0].mxu0
    %v462 = vadd.f32 0.0, %v461
    %v463 = vpop.f32.mrb[0].mxu0
    %464 = vmatprep.mubr.bf16.mxu0 0
    %465 = vmatmul.mubr.bf16.gmra.mrb[0].mxu0 %v316
    %v466 = vpop.f32.mrb[0].mxu0
    %v467 = vadd.f32 0.0, %v466
    %v468 = vpop.f32.mrb[0].mxu0
    %v469 = vpop.f32.mrb[0].mxu0
    %v470 = vadd.f32 0.0, %v469
    %v471 = vpop.f32.mrb[0].mxu0
    %472 = vmatprep.mubr.bf16.mxu0 0
    %473 = vmatmul.mubr.bf16.gmra.mrb[0].mxu0 %v319
    %v474 = vpop.f32.mrb[0].mxu0
    %v475 = vadd.f32 0.0, %v474
    %v476 = vpop.f32.mrb[0].mxu0
    %v477 = vpop.f32.mrb[0].mxu0
    %v478 = vadd.f32 0.0, %v477
    %v479 = vpop.f32.mrb[0].mxu0
    %480 = vmatprep.mubr.bf16.mxu0 0
    %481 = vmatmul.mubr.bf16.gmra.mrb[0].mxu0 %v322
    %v482 = vpop.f32.mrb[0].mxu0
    %v483 = vadd.f32 0.0, %v482
    %v484 = vpop.f32.mrb[0].mxu0
    %v485 = vpop.f32.mrb[0].mxu0
    %v486 = vadd.f32 0.0, %v485
    %v487 = vpop.f32.mrb[0].mxu0
    %488 = vmatprep.mubr.bf16.mxu0 0
    %489 = vmatmul.mubr.bf16.gmra.mrb[0].mxu0 %v325
    %v490 = vpop.f32.mrb[0].mxu0
    %v491 = vadd.f32 0.0, %v490
    %v492 = vpop.f32.mrb[0].mxu0
    %v493 = vpop.f32.mrb[0].mxu0
    %v494 = vadd.f32 0.0, %v493
    %v495 = vpop.f32.mrb[0].mxu0
    %496 = vmatprep.mubr.bf16.mxu0 0
    %497 = vmatmul.mubr.bf16.gmra.mrb[0].mxu0 %v328
    %v498 = vpop.f32.mrb[0].mxu0
    %v499 = vadd.f32 0.0, %v498
    %v500 = vpop.f32.mrb[0].mxu0
    %v501 = vpop.f32.mrb[0].mxu0
    %v502 = vadd.f32 0.0, %v501
    %v503 = vpop.f32.mrb[0].mxu0
    %504 = vmatprep.mubr.bf16.mxu0 0
    %505 = vmatmul.mubr.bf16.gmra.mrb[0].mxu0 %v331
    %v506 = vpop.f32.mrb[0].mxu0
    %v507 = vadd.f32 0.0, %v506
    %v508 = vpop.f32.mrb[0].mxu0
    %v509 = vpop.f32.mrb[0].mxu0
    %v510 = vadd.f32 0.0, %v509
    %v511 = vpop.f32.mrb[0].mxu0
    %512 = vmatprep.mubr.bf16.mxu0 0
    %513 = vmatmul.mubr.bf16.gmra.mrb[0].mxu0 %v334
    %v514 = vpop.f32.mrb[0].mxu0
    %v515 = vadd.f32 0.0, %v514
    %v516 = vpop.f32.mrb[0].mxu0
    %v517 = vpop.f32.mrb[0].mxu0
    %v518 = vadd.f32 0.0, %v517
    %v519 = vpop.f32.mrb[0].mxu0
    %520 = vmatprep.mubr.bf16.mxu0 0
    %521 = vmatmul.mubr.bf16.gmra.mrb[0].mxu0 %v337
    %v522 = vpop.f32.mrb[0].mxu0
    %v523 = vadd.f32 0.0, %v522
    %v524 = vpop.f32.mrb[0].mxu0
    %v525 = vpop.f32.mrb[0].mxu0
    %v526 = vadd.f32 0.0, %v525
    %v527 = vpop.f32.mrb[0].mxu0
    %528 = vmatprep.mubr.bf16.mxu0 0
    %529 = vmatmul.mubr.bf16.gmra.mrb[0].mxu0 %v340
    %v530 = vpop.f32.mrb[0].mxu0
    %v531 = vadd.f32 0.0, %v530
    %v532 = vpop.f32.mrb[0].mxu0
    %v533 = vpop.f32.mrb[0].mxu0
    %v534 = vadd.f32 0.0, %v533
    %v535 = vpop.f32.mrb[0].mxu0
    %536 = vmatprep.mubr.bf16.mxu0 0
    %537 = vmatmul.mubr.bf16.gmra.mrb[0].mxu0 %v343
    %v538 = vpop.f32.mrb[0].mxu0
    %v539 = vadd.f32 0.0, %v538
    %v540 = vpop.f32.mrb[0].mxu0
    %v541 = vpop.f32.mrb[0].mxu0
    %v542 = vadd.f32 0.0, %v541
    %v543 = vpop.f32.mrb[0].mxu0
    %544 = vmatprep.mubr.bf16.mxu0 0
    %545 = vmatmul.mubr.bf16.gmra.mrb[0].mxu0 %v346
    %v546 = vpop.f32.mrb[0].mxu0
    %v547 = vadd.f32 0.0, %v546
    %v548 = vpop.f32.mrb[0].mxu0
    %v549 = vpop.f32.mrb[0].mxu0
    %v550 = vadd.f32 0.0, %v549
    %v551 = vpop.f32.mrb[0].mxu0
    %552 = vmatprep.mubr.bf16.mxu0 0
    %553 = vmatmul.mubr.bf16.gmra.mrb[0].mxu0 %v349
    %v554 = vpop.f32.mrb[0].mxu0
    %v555 = vadd.f32 0.0, %v554
    %v556 = vpop.f32.mrb[0].mxu0
    %v557 = vpop.f32.mrb[0].mxu0
    %v558 = vadd.f32 0.0, %v557
    %v559 = vpop.f32.mrb[0].mxu0
    %560 = vmatprep.mubr.bf16.mxu0 0
    %561 = vmatmul.mubr.bf16.gmra.mrb[0].mxu0 %v352
    %v562 = vpop.f32.mrb[0].mxu0
    %v563 = vadd.f32 0.0, %v562
    %v564 = vpop.f32.mrb[0].mxu0
    %v565 = vpop.f32.mrb[0].mxu0
    %v566 = vadd.f32 0.0, %v565
    %v567 = vpop.f32.mrb[0].mxu0
    %568 = vmatprep.mubr.bf16.mxu0 0
    %569 = vmatmul.mubr.bf16.gmra.mrb[0].mxu0 %v355
    %v570 = vpop.f32.mrb[0].mxu0
    %v571 = vadd.f32 0.0, %v570
    %v572 = vpop.f32.mrb[0].mxu0
    %v573 = vpop.f32.mrb[0].mxu0
    %v574 = vadd.f32 0.0, %v573
    %v575 = vpop.f32.mrb[0].mxu0
    %576 = vmatprep.mubr.bf16.mxu0 0
    %577 = vmatmul.mubr.bf16.gmra.mrb[0].mxu0 %v358
    %v578 = vpop.f32.mrb[0].mxu0
    %v579 = vadd.f32 0.0, %v578
    %v580 = vpop.f32.mrb[0].mxu0
    %v581 = vpop.f32.mrb[0].mxu0
    %v582 = vadd.f32 0.0, %v581
    %v583 = vpop.f32.mrb[0].mxu0
    %584 = vmatprep.mubr.bf16.mxu0 0
    %585 = vmatmul.mubr.bf16.gmra.mrb[0].mxu0 %v361
    %v586 = vpop.f32.mrb[0].mxu0
    %v587 = vadd.f32 0.0, %v586
    %v588 = vpop.f32.mrb[0].mxu0
    %v589 = vpop.f32.mrb[0].mxu0
    %v590 = vadd.f32 0.0, %v589
    %v591 = vpop.f32.mrb[0].mxu0
    %592 = vmatprep.mubr.bf16.mxu0 0
    %593 = vmatmul.mubr.bf16.gmra.mrb[0].mxu0 %v364
    %v594 = vpop.f32.mrb[0].mxu0
    %v595 = vadd.f32 0.0, %v594
    %v596 = vpop.f32.mrb[0].mxu0
    %v597 = vpop.f32.mrb[0].mxu0
    %v598 = vadd.f32 0.0, %v597
    %v599 = vpop.f32.mrb[0].mxu0
    %600 = vmatprep.mubr.bf16.mxu0 0
    %601 = vmatmul.mubr.bf16.gmra.mrb[0].mxu0 %v367
    %v602 = vpop.f32.mrb[0].mxu0
    %v603 = vadd.f32 0.0, %v602
    %v604 = vpop.f32.mrb[0].mxu0
    %v605 = vpop.f32.mrb[0].mxu0
    %v606 = vadd.f32 0.0, %v605
    %v607 = vpop.f32.mrb[0].mxu0
    %608 = vmatprep.mubr.bf16.mxu0 0
    %609 = vmatmul.mubr.bf16.gmra.mrb[0].mxu0 %v370
    %v610 = vpop.f32.mrb[0].mxu0
    %v611 = vadd.f32 0.0, %v610
    %v612 = vpop.f32.mrb[0].mxu0
    %v613 = vpop.f32.mrb[0].mxu0
    %v614 = vadd.f32 0.0, %v613
    %v615 = vpop.f32.mrb[0].mxu0
    %616 = vmatprep.mubr.bf16.mxu0 0
    %617 = vmatmul.mubr.bf16.gmra.mrb[0].mxu0 %v373
    %v618 = vpop.f32.mrb[0].mxu0
    %v619 = vadd.f32 0.0, %v618
    %v620 = vpop.f32.mrb[0].mxu0
    %v621 = vpop.f32.mrb[0].mxu0
    %v622 = vadd.f32 0.0, %v621
    %v623 = vpop.f32.mrb[0].mxu0
    %624 = vmatprep.mubr.bf16.mxu0 0
    %625 = vmatmul.mubr.bf16.gmra.mrb[0].mxu0 %v376
    %v626 = vpop.f32.mrb[0].mxu0
    %v627 = vadd.f32 0.0, %v626
    %v628 = vpop.f32.mrb[0].mxu0
    %v629 = vpop.f32.mrb[0].mxu0
    %v630 = vadd.f32 0.0, %v629
    %v631 = vpop.f32.mrb[0].mxu0
    %632 = vmatprep.mubr.bf16.mxu0 0
    %633 = vmatmul.mubr.bf16.gmra.mrb[0].mxu0 %v379
    %v634 = vpop.f32.mrb[0].mxu0
    %v635 = vadd.f32 0.0, %v634
    %v636 = vpop.f32.mrb[0].mxu0
    %v637 = vpop.f32.mrb[0].mxu0
    %v638 = vadd.f32 0.0, %v637
    %v639 = vpop.f32.mrb[0].mxu0
    %640 = vmatprep.mubr.bf16.mxu0 0
    %641 = vmatmul.mubr.bf16.gmra.mrb[0].mxu0 %v382
    %v642 = vpop.f32.mrb[0].mxu0
    %v643 = vadd.f32 0.0, %v642
    %v644 = vpop.f32.mrb[0].mxu0
    %v645 = vpop.f32.mrb[0].mxu0
    %v646 = vadd.f32 0.0, %v645
    %v647 = vpop.f32.mrb[0].mxu0
    %648 = vmatprep.mubr.bf16.mxu0 0
    %649 = vmatmul.mubr.bf16.gmra.mrb[0].mxu0 %v385
    %v650 = vpop.f32.mrb[0].mxu0
    %v651 = vadd.f32 0.0, %v650
    %v652 = vpop.f32.mrb[0].mxu0
    %v653 = vpop.f32.mrb[0].mxu0
    %v654 = vadd.f32 0.0, %v653
    %v655 = vpop.f32.mrb[0].mxu0
    %656 = vmatprep.mubr.bf16.mxu0 0
    %657 = vmatmul.mubr.bf16.gmra.mrb[0].mxu0 %v388
    %v658 = vpop.f32.mrb[0].mxu0
    %v659 = vadd.f32 0.0, %v658
    %v660 = vpop.f32.mrb[0].mxu0
    %v661 = vpop.f32.mrb[0].mxu0
    %v662 = vadd.f32 0.0, %v661
    %v663 = vpop.f32.mrb[0].mxu0
    %664 = vmatprep.mubr.bf16.mxu0 0
    %665 = vmatmul.mubr.bf16.gmra.mrb[0].mxu0 %v391
    %v666 = vpop.f32.mrb[0].mxu0
    %v667 = vadd.f32 0.0, %v666
    %v668 = vpop.f32.mrb[0].mxu0
    %v669 = vpop.f32.mrb[0].mxu0
    %v670 = vadd.f32 0.0, %v669
    %v671 = vpop.f32.mrb[0].mxu0
    %672 = vmatprep.mubr.bf16.mxu0 0
    %673 = vmatmul.mubr.bf16.gmra.mrb[0].mxu0 %v394
    %v674 = vpop.f32.mrb[0].mxu0
    %v675 = vadd.f32 0.0, %v674
    %v676 = vpop.f32.mrb[0].mxu0
    %v677 = vpop.f32.mrb[0].mxu0
    %v678 = vadd.f32 0.0, %v677
    %v679 = vpop.f32.mrb[0].mxu0
    %680 = vmatprep.mubr.bf16.mxu0 0
    %681 = vmatmul.mubr.bf16.gmra.mrb[0].mxu0 %v397
    %v682 = vpop.f32.mrb[0].mxu0
    %v683 = vadd.f32 0.0, %v682
    %v684 = vpop.f32.mrb[0].mxu0
    %v685 = vpop.f32.mrb[0].mxu0
    %v686 = vadd.f32 0.0, %v685
    %v687 = vpop.f32.mrb[0].mxu0
    %688 = vmatprep.mubr.bf16.mxu0 0
    %689 = vmatmul.mubr.bf16.gmra.mrb[0].mxu0 %v400
    %v690 = vpop.f32.mrb[0].mxu0
    %v691 = vadd.f32 0.0, %v690
    %v692 = vpop.f32.mrb[0].mxu0
    %v693 = vpop.f32.mrb[0].mxu0
    %v694 = vadd.f32 0.0, %v693
    %v695 = vpop.f32.mrb[0].mxu0
    %696 = vmatprep.mubr.bf16.mxu0 0
    %697 = vmatmul.mubr.bf16.gmra.mrb[0].mxu0 %v403
    %v698 = vpop.f32.mrb[0].mxu0
    %v699 = vadd.f32 0.0, %v698
    %v700 = vpop.f32.mrb[0].mxu0
    %v701 = vpop.f32.mrb[0].mxu0
    %v702 = vadd.f32 0.0, %v701
    %v703 = vpop.f32.mrb[0].mxu0
    %704 = vmatprep.mubr.bf16.mxu0 0
    %705 = vmatmul.mubr.bf16.gmra.mrb[0].mxu0 %v406
    %v706 = vpop.f32.mrb[0].mxu0
    %v707 = vadd.f32 0.0, %v706
    %v708 = vpop.f32.mrb[0].mxu0
    %v709 = vpop.f32.mrb[0].mxu0
    %v710 = vadd.f32 0.0, %v709
    %v711 = vpop.f32.mrb[0].mxu0
    %712 = vdwg.mxu0
    %v713 = vpack.c.bf16 %v446, %v443
    %v714 = vpack.c.bf16 %v454, %v451
    %v715 = vpack.c.bf16 %v462, %v459
    %v716 = vpack.c.bf16 %v470, %v467
    %v717 = vpack.c.bf16 %v478, %v475
    %v718 = vpack.c.bf16 %v486, %v483
    %v719 = vpack.c.bf16 %v494, %v491
    %v720 = vpack.c.bf16 %v502, %v499
    %v721 = vpack.c.bf16 %v510, %v507
    %v722 = vpack.c.bf16 %v518, %v515
    %v723 = vpack.c.bf16 %v526, %v523
    %v724 = vpack.c.bf16 %v534, %v531
    %v725 = vpack.c.bf16 %v542, %v539
    %v726 = vpack.c.bf16 %v550, %v547
    %v727 = vpack.c.bf16 %v558, %v555
    %v728 = vpack.c.bf16 %v566, %v563
    %v729 = vpack.c.bf16 %v574, %v571
    %v730 = vpack.c.bf16 %v582, %v579
    %v731 = vpack.c.bf16 %v590, %v587
    %v732 = vpack.c.bf16 %v598, %v595
    %v733 = vpack.c.bf16 %v606, %v603
    %v734 = vpack.c.bf16 %v614, %v611
    %v735 = vpack.c.bf16 %v622, %v619
    %v736 = vpack.c.bf16 %v630, %v627
    %v737 = vpack.c.bf16 %v638, %v635
    %v738 = vpack.c.bf16 %v646, %v643
    %v739 = vpack.c.bf16 %v654, %v651
    %v740 = vpack.c.bf16 %v662, %v659
    %v741 = vpack.c.bf16 %v670, %v667
    %v742 = vpack.c.bf16 %v678, %v675
    %v743 = vpack.c.bf16 %v686, %v683
    %v744 = vpack.c.bf16 %v694, %v691
    %v745 = vpack.c.bf16 %v702, %v699
    %v746 = vpack.c.bf16 %v710, %v707
    %v749 = vunpack.c.l.b16 %v121
    %v750 = vunpack.c.h.b16 %v121
    %v751 = vunpack.c.l.b16 %v122
    %v752 = vunpack.c.h.b16 %v122
    %v753 = vpack.c.b16 %v751, %v749
    %v754 = vpack.c.b16 %v752, %v750
    %v758 = vsel %vm305, %v713, 0
    %v761 = vsel %vm305, %v714, 0
    %v764 = vsel %vm305, %v715, 0
    %v767 = vsel %vm305, %v716, 0
    %v770 = vsel %vm305, %v717, 0
    %v773 = vsel %vm305, %v718, 0
    %v776 = vsel %vm305, %v719, 0
    %v779 = vsel %vm305, %v720, 0
    %v782 = vsel %vm305, %v721, 0
    %v785 = vsel %vm305, %v722, 0
    %v788 = vsel %vm305, %v723, 0
    %v791 = vsel %vm305, %v724, 0
    %v794 = vsel %vm305, %v725, 0
    %v797 = vsel %vm305, %v726, 0
    %799 = vmatprep.subr.bf16.mxu0 %v754
    %800 = vmatpush1.bf16.msra.mxu0 %v753
    %801 = vmatprep.subr.bf16.mxu0 0
    %802 = vmatpush1.bf16.msra.mxu0 0
    %803 = vmatprep.subr.bf16.mxu0 0
    %804 = vmatpush1.bf16.msra.mxu0 0
    %805 = vmatprep.subr.bf16.mxu0 0
    %806 = vmatpush1.bf16.msra.mxu0 0
    %807 = vmatprep.subr.bf16.mxu0 0
    %808 = vmatpush1.bf16.msra.mxu0 0
    %809 = vmatprep.subr.bf16.mxu0 0
    %810 = vmatpush1.bf16.msra.mxu0 0
    %811 = vmatprep.subr.bf16.mxu0 0
    %812 = vmatpush1.bf16.msra.mxu0 0
    %813 = vmatprep.subr.bf16.mxu0 0
    %814 = vmatpush1.bf16.msra.mxu0 0
    %815 = vmatprep.subr.bf16.mxu0 0
    %816 = vmatpush1.bf16.msra.mxu0 0
    %817 = vmatprep.subr.bf16.mxu0 0
    %818 = vmatpush1.bf16.msra.mxu0 0
    %819 = vmatprep.subr.bf16.mxu0 0
    %820 = vmatpush1.bf16.msra.mxu0 0
    %821 = vmatprep.subr.bf16.mxu0 0
    %822 = vmatpush1.bf16.msra.mxu0 0
    %823 = vmatprep.subr.bf16.mxu0 0
    %824 = vmatpush1.bf16.msra.mxu0 0
    %825 = vmatprep.subr.bf16.mxu0 0
    %826 = vmatpush1.bf16.msra.mxu0 0
    %827 = vmatprep.subr.bf16.mxu0 0
    %828 = vmatpush1.bf16.msra.mxu0 0
    %829 = vmatprep.subr.bf16.mxu0 0
    %830 = vmatpush1.bf16.msra.mxu0 0
    %831 = vmatprep.mubr.bf16.mxu0 0
    %832 = vmatmul.mubr.bf16.gmra.mrb[0].mxu0 %v758
    %v833 = vpop.f32.mrb[0].mxu0
    %v834 = vadd.f32 0.0, %v833
    %v835 = vpop.f32.mrb[0].mxu0
    %v836 = vadd.f32 0.0, %v835
    %v837 = vpop.f32.mrb[0].mxu0
    %v838 = vadd.f32 0.0, %v837
    %v839 = vpop.f32.mrb[0].mxu0
    %v840 = vadd.f32 0.0, %v839
    %841 = vmatprep.mubr.bf16.mxu0 0
    %842 = vmatmul.mubr.bf16.gmra.mrb[0].mxu0 %v761
    %v843 = vpop.f32.mrb[0].mxu0
    %v844 = vadd.f32 0.0, %v843
    %v845 = vpop.f32.mrb[0].mxu0
    %v846 = vadd.f32 0.0, %v845
    %v847 = vpop.f32.mrb[0].mxu0
    %v848 = vadd.f32 0.0, %v847
    %v849 = vpop.f32.mrb[0].mxu0
    %v850 = vadd.f32 0.0, %v849
    %851 = vmatprep.mubr.bf16.mxu0 0
    %852 = vmatmul.mubr.bf16.gmra.mrb[0].mxu0 %v764
    %v853 = vpop.f32.mrb[0].mxu0
    %v854 = vadd.f32 0.0, %v853
    %v855 = vpop.f32.mrb[0].mxu0
    %v856 = vadd.f32 0.0, %v855
    %v857 = vpop.f32.mrb[0].mxu0
    %v858 = vadd.f32 0.0, %v857
    %v859 = vpop.f32.mrb[0].mxu0
    %v860 = vadd.f32 0.0, %v859
    %861 = vmatprep.mubr.bf16.mxu0 0
    %862 = vmatmul.mubr.bf16.gmra.mrb[0].mxu0 %v767
    %v863 = vpop.f32.mrb[0].mxu0
    %v864 = vadd.f32 0.0, %v863
    %v865 = vpop.f32.mrb[0].mxu0
    %v866 = vadd.f32 0.0, %v865
    %v867 = vpop.f32.mrb[0].mxu0
    %v868 = vadd.f32 0.0, %v867
    %v869 = vpop.f32.mrb[0].mxu0
    %v870 = vadd.f32 0.0, %v869
    %871 = vmatprep.mubr.bf16.mxu0 0
    %872 = vmatmul.mubr.bf16.gmra.mrb[0].mxu0 %v770
    %v873 = vpop.f32.mrb[0].mxu0
    %v874 = vadd.f32 0.0, %v873
    %v875 = vpop.f32.mrb[0].mxu0
    %v876 = vadd.f32 0.0, %v875
    %v877 = vpop.f32.mrb[0].mxu0
    %v878 = vadd.f32 0.0, %v877
    %v879 = vpop.f32.mrb[0].mxu0
    %v880 = vadd.f32 0.0, %v879
    %881 = vmatprep.mubr.bf16.mxu0 0
    %882 = vmatmul.mubr.bf16.gmra.mrb[0].mxu0 %v773
    %v883 = vpop.f32.mrb[0].mxu0
    %v884 = vadd.f32 0.0, %v883
    %v885 = vpop.f32.mrb[0].mxu0
    %v886 = vadd.f32 0.0, %v885
    %v887 = vpop.f32.mrb[0].mxu0
    %v888 = vadd.f32 0.0, %v887
    %v889 = vpop.f32.mrb[0].mxu0
    %v890 = vadd.f32 0.0, %v889
    %891 = vmatprep.mubr.bf16.mxu0 0
    %892 = vmatmul.mubr.bf16.gmra.mrb[0].mxu0 %v776
    %v893 = vpop.f32.mrb[0].mxu0
    %v894 = vadd.f32 0.0, %v893
    %v895 = vpop.f32.mrb[0].mxu0
    %v896 = vadd.f32 0.0, %v895
    %v897 = vpop.f32.mrb[0].mxu0
    %v898 = vadd.f32 0.0, %v897
    %v899 = vpop.f32.mrb[0].mxu0
    %v900 = vadd.f32 0.0, %v899
    %901 = vmatprep.mubr.bf16.mxu0 0
    %902 = vmatmul.mubr.bf16.gmra.mrb[0].mxu0 %v779
    %v903 = vpop.f32.mrb[0].mxu0
    %v904 = vadd.f32 0.0, %v903
    %v905 = vpop.f32.mrb[0].mxu0
    %v906 = vadd.f32 0.0, %v905
    %v907 = vpop.f32.mrb[0].mxu0
    %v908 = vadd.f32 0.0, %v907
    %v909 = vpop.f32.mrb[0].mxu0
    %v910 = vadd.f32 0.0, %v909
    %911 = vmatprep.mubr.bf16.mxu0 0
    %912 = vmatmul.mubr.bf16.gmra.mrb[0].mxu0 %v782
    %v913 = vpop.f32.mrb[0].mxu0
    %v914 = vadd.f32 0.0, %v913
    %v915 = vpop.f32.mrb[0].mxu0
    %v916 = vadd.f32 0.0, %v915
    %v917 = vpop.f32.mrb[0].mxu0
    %v918 = vadd.f32 0.0, %v917
    %v919 = vpop.f32.mrb[0].mxu0
    %v920 = vadd.f32 0.0, %v919
    %921 = vmatprep.mubr.bf16.mxu0 0
    %922 = vmatmul.mubr.bf16.gmra.mrb[0].mxu0 %v785
    %v923 = vpop.f32.mrb[0].mxu0
    %v924 = vadd.f32 0.0, %v923
    %v925 = vpop.f32.mrb[0].mxu0
    %v926 = vadd.f32 0.0, %v925
    %v927 = vpop.f32.mrb[0].mxu0
    %v928 = vadd.f32 0.0, %v927
    %v929 = vpop.f32.mrb[0].mxu0
    %v930 = vadd.f32 0.0, %v929
    %931 = vmatprep.mubr.bf16.mxu0 0
    %932 = vmatmul.mubr.bf16.gmra.mrb[0].mxu0 %v788
    %v933 = vpop.f32.mrb[0].mxu0
    %v934 = vadd.f32 0.0, %v933
    %v935 = vpop.f32.mrb[0].mxu0
    %v936 = vadd.f32 0.0, %v935
    %v937 = vpop.f32.mrb[0].mxu0
    %v938 = vadd.f32 0.0, %v937
    %v939 = vpop.f32.mrb[0].mxu0
    %v940 = vadd.f32 0.0, %v939
    %941 = vmatprep.mubr.bf16.mxu0 0
    %942 = vmatmul.mubr.bf16.gmra.mrb[0].mxu0 %v791
    %v943 = vpop.f32.mrb[0].mxu0
    %v944 = vadd.f32 0.0, %v943
    %v945 = vpop.f32.mrb[0].mxu0
    %v946 = vadd.f32 0.0, %v945
    %v947 = vpop.f32.mrb[0].mxu0
    %v948 = vadd.f32 0.0, %v947
    %v949 = vpop.f32.mrb[0].mxu0
    %v950 = vadd.f32 0.0, %v949
    %951 = vmatprep.mubr.bf16.mxu0 0
    %952 = vmatmul.mubr.bf16.gmra.mrb[0].mxu0 %v794
    %v953 = vpop.f32.mrb[0].mxu0
    %v954 = vadd.f32 0.0, %v953
    %v955 = vpop.f32.mrb[0].mxu0
    %v956 = vadd.f32 0.0, %v955
    %v957 = vpop.f32.mrb[0].mxu0
    %v958 = vadd.f32 0.0, %v957
    %v959 = vpop.f32.mrb[0].mxu0
    %v960 = vadd.f32 0.0, %v959
    %961 = vmatprep.mubr.bf16.mxu0 0
    %962 = vmatmul.mubr.bf16.gmra.mrb[0].mxu0 %v797
    %v963 = vpop.f32.mrb[0].mxu0
    %v964 = vadd.f32 0.0, %v963
    %v965 = vpop.f32.mrb[0].mxu0
    %v966 = vadd.f32 0.0, %v965
    %v967 = vpop.f32.mrb[0].mxu0
    %v968 = vadd.f32 0.0, %v967
    %v969 = vpop.f32.mrb[0].mxu0
    %v970 = vadd.f32 0.0, %v969
    %971 = vdwg.mxu0
    %v974 = vunpack.c.l.b16 %v123
    %v975 = vunpack.c.l.b16 %v124
    %v976 = vpack.c.b16 %v975, %v974
    %v979 = vsel %vm305, %v741, 0
    %v982 = vsel %vm305, %v742, 0
    %v985 = vsel %vm305, %v743, 0
    %v988 = vsel %vm305, %v744, 0
    %v991 = vsel %vm305, %v745, 0
    %v994 = vsel %vm305, %v746, 0
    %996 = vmatprep.subr.bf16.mxu0 0
    %997 = vmatpush1.bf16.msra.mxu0 %v976
    %998 = vmatprep.subr.bf16.mxu0 0
    %999 = vmatpush1.bf16.msra.mxu0 0
    %1000 = vmatprep.subr.bf16.mxu0 0
    %1001 = vmatpush1.bf16.msra.mxu0 0
    %1002 = vmatprep.subr.bf16.mxu0 0
    %1003 = vmatpush1.bf16.msra.mxu0 0
    %1004 = vmatprep.subr.bf16.mxu0 0
    %1005 = vmatpush1.bf16.msra.mxu0 0
    %1006 = vmatprep.subr.bf16.mxu0 0
    %1007 = vmatpush1.bf16.msra.mxu0 0
    %1008 = vmatprep.subr.bf16.mxu0 0
    %1009 = vmatpush1.bf16.msra.mxu0 0
    %1010 = vmatprep.subr.bf16.mxu0 0
    %1011 = vmatpush1.bf16.msra.mxu0 0
    %1012 = vmatprep.subr.bf16.mxu0 0
    %1013 = vmatpush1.bf16.msra.mxu0 0
    %1014 = vmatprep.subr.bf16.mxu0 0
    %1015 = vmatpush1.bf16.msra.mxu0 0
    %1016 = vmatprep.subr.bf16.mxu0 0
    %1017 = vmatpush1.bf16.msra.mxu0 0
    %1018 = vmatprep.subr.bf16.mxu0 0
    %1019 = vmatpush1.bf16.msra.mxu0 0
    %1020 = vmatprep.subr.bf16.mxu0 0
    %1021 = vmatpush1.bf16.msra.mxu0 0
    %1022 = vmatprep.subr.bf16.mxu0 0
    %1023 = vmatpush1.bf16.msra.mxu0 0
    %1024 = vmatprep.subr.bf16.mxu0 0
    %1025 = vmatpush1.bf16.msra.mxu0 0
    %1026 = vmatprep.subr.bf16.mxu0 0
    %1027 = vmatpush1.bf16.msra.mxu0 0
    %1028 = vmatprep.mubr.bf16.mxu0 0
    %1029 = vmatmul.mubr.bf16.gmra.mrb[0].mxu0 %v979
    %v1030 = vpop.f32.mrb[0].mxu0
    %v1031 = vadd.f32 0.0, %v1030
    %v1032 = vpop.f32.mrb[0].mxu0
    %v1033 = vpop.f32.mrb[0].mxu0
    %v1034 = vadd.f32 0.0, %v1033
    %v1035 = vpop.f32.mrb[0].mxu0
    %1036 = vmatprep.mubr.bf16.mxu0 0
    %1037 = vmatmul.mubr.bf16.gmra.mrb[0].mxu0 %v982
    %v1038 = vpop.f32.mrb[0].mxu0
    %v1039 = vadd.f32 0.0, %v1038
    %v1040 = vpop.f32.mrb[0].mxu0
    %v1041 = vpop.f32.mrb[0].mxu0
    %v1042 = vadd.f32 0.0, %v1041
    %v1043 = vpop.f32.mrb[0].mxu0
    %1044 = vmatprep.mubr.bf16.mxu0 0
    %1045 = vmatmul.mubr.bf16.gmra.mrb[0].mxu0 %v985
    %v1046 = vpop.f32.mrb[0].mxu0
    %v1047 = vadd.f32 0.0, %v1046
    %v1048 = vpop.f32.mrb[0].mxu0
    %v1049 = vpop.f32.mrb[0].mxu0
    %v1050 = vadd.f32 0.0, %v1049
    %v1051 = vpop.f32.mrb[0].mxu0
    %1052 = vmatprep.mubr.bf16.mxu0 0
    %1053 = vmatmul.mubr.bf16.gmra.mrb[0].mxu0 %v988
    %v1054 = vpop.f32.mrb[0].mxu0
    %v1055 = vadd.f32 0.0, %v1054
    %v1056 = vpop.f32.mrb[0].mxu0
    %v1057 = vpop.f32.mrb[0].mxu0
    %v1058 = vadd.f32 0.0, %v1057
    %v1059 = vpop.f32.mrb[0].mxu0
    %1060 = vmatprep.mubr.bf16.mxu0 0
    %1061 = vmatmul.mubr.bf16.gmra.mrb[0].mxu0 %v991
    %v1062 = vpop.f32.mrb[0].mxu0
    %v1063 = vadd.f32 0.0, %v1062
    %v1064 = vpop.f32.mrb[0].mxu0
    %v1065 = vpop.f32.mrb[0].mxu0
    %v1066 = vadd.f32 0.0, %v1065
    %v1067 = vpop.f32.mrb[0].mxu0
    %1068 = vmatprep.mubr.bf16.mxu0 0
    %1069 = vmatmul.mubr.bf16.gmra.mrb[0].mxu0 %v994
    %v1070 = vpop.f32.mrb[0].mxu0
    %v1071 = vadd.f32 0.0, %v1070
    %v1072 = vpop.f32.mrb[0].mxu0
    %v1073 = vpop.f32.mrb[0].mxu0
    %v1074 = vadd.f32 0.0, %v1073
    %v1075 = vpop.f32.mrb[0].mxu0
    %1076 = vdwg.mxu0
    %v1079 = vunpack.c.l.b16 %v125
    %v1080 = vunpack.c.h.b16 %v125
    %v1081 = vunpack.c.l.b16 %v126
    %v1082 = vunpack.c.h.b16 %v126
    %v1083 = vpack.c.b16 %v1081, %v1079
    %v1084 = vpack.c.b16 %v1082, %v1080
    %v1088 = vsel %vm305, %v727, 0
    %v1091 = vsel %vm305, %v728, 0
    %v1094 = vsel %vm305, %v729, 0
    %v1097 = vsel %vm305, %v730, 0
    %v1100 = vsel %vm305, %v731, 0
    %v1103 = vsel %vm305, %v732, 0
    %v1106 = vsel %vm305, %v733, 0
    %v1109 = vsel %vm305, %v734, 0
    %v1112 = vsel %vm305, %v735, 0
    %v1115 = vsel %vm305, %v736, 0
    %v1118 = vsel %vm305, %v737, 0
    %v1121 = vsel %vm305, %v738, 0
    %v1124 = vsel %vm305, %v739, 0
    %v1127 = vsel %vm305, %v740, 0
    %1129 = vmatprep.subr.bf16.mxu0 %v1084
    %1130 = vmatpush1.bf16.msra.mxu0 %v1083
    %1131 = vmatprep.subr.bf16.mxu0 0
    %1132 = vmatpush1.bf16.msra.mxu0 0
    %1133 = vmatprep.subr.bf16.mxu0 0
    %1134 = vmatpush1.bf16.msra.mxu0 0
    %1135 = vmatprep.subr.bf16.mxu0 0
    %1136 = vmatpush1.bf16.msra.mxu0 0
    %1137 = vmatprep.subr.bf16.mxu0 0
    %1138 = vmatpush1.bf16.msra.mxu0 0
    %1139 = vmatprep.subr.bf16.mxu0 0
    %1140 = vmatpush1.bf16.msra.mxu0 0
    %1141 = vmatprep.subr.bf16.mxu0 0
    %1142 = vmatpush1.bf16.msra.mxu0 0
    %1143 = vmatprep.subr.bf16.mxu0 0
    %1144 = vmatpush1.bf16.msra.mxu0 0
    %1145 = vmatprep.subr.bf16.mxu0 0
    %1146 = vmatpush1.bf16.msra.mxu0 0
    %1147 = vmatprep.subr.bf16.mxu0 0
    %1148 = vmatpush1.bf16.msra.mxu0 0
    %1149 = vmatprep.subr.bf16.mxu0 0
    %1150 = vmatpush1.bf16.msra.mxu0 0
    %1151 = vmatprep.subr.bf16.mxu0 0
    %1152 = vmatpush1.bf16.msra.mxu0 0
    %1153 = vmatprep.subr.bf16.mxu0 0
    %1154 = vmatpush1.bf16.msra.mxu0 0
    %1155 = vmatprep.subr.bf16.mxu0 0
    %1156 = vmatpush1.bf16.msra.mxu0 0
    %1157 = vmatprep.subr.bf16.mxu0 0
    %1158 = vmatpush1.bf16.msra.mxu0 0
    %1159 = vmatprep.subr.bf16.mxu0 0
    %1160 = vmatpush1.bf16.msra.mxu0 0
    %1161 = vmatprep.mubr.bf16.mxu0 0
    %1162 = vmatmul.mubr.bf16.gmra.mrb[0].mxu0 %v1088
    %v1163 = vpop.f32.mrb[0].mxu0
    %v1164 = vadd.f32 0.0, %v1163
    %v1165 = vpop.f32.mrb[0].mxu0
    %v1166 = vadd.f32 0.0, %v1165
    %v1167 = vpop.f32.mrb[0].mxu0
    %v1168 = vadd.f32 0.0, %v1167
    %v1169 = vpop.f32.mrb[0].mxu0
    %v1170 = vadd.f32 0.0, %v1169
    %1171 = vmatprep.mubr.bf16.mxu0 0
    %1172 = vmatmul.mubr.bf16.gmra.mrb[0].mxu0 %v1091
    %v1173 = vpop.f32.mrb[0].mxu0
    %v1174 = vadd.f32 0.0, %v1173
    %v1175 = vpop.f32.mrb[0].mxu0
    %v1176 = vadd.f32 0.0, %v1175
    %v1177 = vpop.f32.mrb[0].mxu0
    %v1178 = vadd.f32 0.0, %v1177
    %v1179 = vpop.f32.mrb[0].mxu0
    %v1180 = vadd.f32 0.0, %v1179
    %1181 = vmatprep.mubr.bf16.mxu0 0
    %1182 = vmatmul.mubr.bf16.gmra.mrb[0].mxu0 %v1094
    %v1183 = vpop.f32.mrb[0].mxu0
    %v1184 = vadd.f32 0.0, %v1183
    %v1185 = vpop.f32.mrb[0].mxu0
    %v1186 = vadd.f32 0.0, %v1185
    %v1187 = vpop.f32.mrb[0].mxu0
    %v1188 = vadd.f32 0.0, %v1187
    %v1189 = vpop.f32.mrb[0].mxu0
    %v1190 = vadd.f32 0.0, %v1189
    %1191 = vmatprep.mubr.bf16.mxu0 0
    %1192 = vmatmul.mubr.bf16.gmra.mrb[0].mxu0 %v1097
    %v1193 = vpop.f32.mrb[0].mxu0
    %v1194 = vadd.f32 0.0, %v1193
    %v1195 = vpop.f32.mrb[0].mxu0
    %v1196 = vadd.f32 0.0, %v1195
    %v1197 = vpop.f32.mrb[0].mxu0
    %v1198 = vadd.f32 0.0, %v1197
    %v1199 = vpop.f32.mrb[0].mxu0
    %v1200 = vadd.f32 0.0, %v1199
    %1201 = vmatprep.mubr.bf16.mxu0 0
    %1202 = vmatmul.mubr.bf16.gmra.mrb[0].mxu0 %v1100
    %v1203 = vpop.f32.mrb[0].mxu0
    %v1204 = vadd.f32 0.0, %v1203
    %v1205 = vpop.f32.mrb[0].mxu0
    %v1206 = vadd.f32 0.0, %v1205
    %v1207 = vpop.f32.mrb[0].mxu0
    %v1208 = vadd.f32 0.0, %v1207
    %v1209 = vpop.f32.mrb[0].mxu0
    %v1210 = vadd.f32 0.0, %v1209
    %1211 = vmatprep.mubr.bf16.mxu0 0
    %1212 = vmatmul.mubr.bf16.gmra.mrb[0].mxu0 %v1103
    %v1213 = vpop.f32.mrb[0].mxu0
    %v1214 = vadd.f32 0.0, %v1213
    %v1215 = vpop.f32.mrb[0].mxu0
    %v1216 = vadd.f32 0.0, %v1215
    %v1217 = vpop.f32.mrb[0].mxu0
    %v1218 = vadd.f32 0.0, %v1217
    %v1219 = vpop.f32.mrb[0].mxu0
    %v1220 = vadd.f32 0.0, %v1219
    %1221 = vmatprep.mubr.bf16.mxu0 0
    %1222 = vmatmul.mubr.bf16.gmra.mrb[0].mxu0 %v1106
    %v1223 = vpop.f32.mrb[0].mxu0
    %v1224 = vadd.f32 0.0, %v1223
    %v1225 = vpop.f32.mrb[0].mxu0
    %v1226 = vadd.f32 0.0, %v1225
    %v1227 = vpop.f32.mrb[0].mxu0
    %v1228 = vadd.f32 0.0, %v1227
    %v1229 = vpop.f32.mrb[0].mxu0
    %v1230 = vadd.f32 0.0, %v1229
    %1231 = vmatprep.mubr.bf16.mxu0 0
    %1232 = vmatmul.mubr.bf16.gmra.mrb[0].mxu0 %v1109
    %v1233 = vpop.f32.mrb[0].mxu0
    %v1234 = vadd.f32 0.0, %v1233
    %v1235 = vpop.f32.mrb[0].mxu0
    %v1236 = vadd.f32 0.0, %v1235
    %v1237 = vpop.f32.mrb[0].mxu0
    %v1238 = vadd.f32 0.0, %v1237
    %v1239 = vpop.f32.mrb[0].mxu0
    %v1240 = vadd.f32 0.0, %v1239
    %1241 = vmatprep.mubr.bf16.mxu0 0
    %1242 = vmatmul.mubr.bf16.gmra.mrb[0].mxu0 %v1112
    %v1243 = vpop.f32.mrb[0].mxu0
    %v1244 = vadd.f32 0.0, %v1243
    %v1245 = vpop.f32.mrb[0].mxu0
    %v1246 = vadd.f32 0.0, %v1245
    %v1247 = vpop.f32.mrb[0].mxu0
    %v1248 = vadd.f32 0.0, %v1247
    %v1249 = vpop.f32.mrb[0].mxu0
    %v1250 = vadd.f32 0.0, %v1249
    %1251 = vmatprep.mubr.bf16.mxu0 0
    %1252 = vmatmul.mubr.bf16.gmra.mrb[0].mxu0 %v1115
    %v1253 = vpop.f32.mrb[0].mxu0
    %v1254 = vadd.f32 0.0, %v1253
    %v1255 = vpop.f32.mrb[0].mxu0
    %v1256 = vadd.f32 0.0, %v1255
    %v1257 = vpop.f32.mrb[0].mxu0
    %v1258 = vadd.f32 0.0, %v1257
    %v1259 = vpop.f32.mrb[0].mxu0
    %v1260 = vadd.f32 0.0, %v1259
    %1261 = vmatprep.mubr.bf16.mxu0 0
    %1262 = vmatmul.mubr.bf16.gmra.mrb[0].mxu0 %v1118
    %v1263 = vpop.f32.mrb[0].mxu0
    %v1264 = vadd.f32 0.0, %v1263
    %v1265 = vpop.f32.mrb[0].mxu0
    %v1266 = vadd.f32 0.0, %v1265
    %v1267 = vpop.f32.mrb[0].mxu0
    %v1268 = vadd.f32 0.0, %v1267
    %v1269 = vpop.f32.mrb[0].mxu0
    %v1270 = vadd.f32 0.0, %v1269
    %1271 = vmatprep.mubr.bf16.mxu0 0
    %1272 = vmatmul.mubr.bf16.gmra.mrb[0].mxu0 %v1121
    %v1273 = vpop.f32.mrb[0].mxu0
    %v1274 = vadd.f32 0.0, %v1273
    %v1275 = vpop.f32.mrb[0].mxu0
    %v1276 = vadd.f32 0.0, %v1275
    %v1277 = vpop.f32.mrb[0].mxu0
    %v1278 = vadd.f32 0.0, %v1277
    %v1279 = vpop.f32.mrb[0].mxu0
    %v1280 = vadd.f32 0.0, %v1279
    %1281 = vmatprep.mubr.bf16.mxu0 0
    %1282 = vmatmul.mubr.bf16.gmra.mrb[0].mxu0 %v1124
    %v1283 = vpop.f32.mrb[0].mxu0
    %v1284 = vadd.f32 0.0, %v1283
    %v1285 = vpop.f32.mrb[0].mxu0
    %v1286 = vadd.f32 0.0, %v1285
    %v1287 = vpop.f32.mrb[0].mxu0
    %v1288 = vadd.f32 0.0, %v1287
    %v1289 = vpop.f32.mrb[0].mxu0
    %v1290 = vadd.f32 0.0, %v1289
    %1291 = vmatprep.mubr.bf16.mxu0 0
    %1292 = vmatmul.mubr.bf16.gmra.mrb[0].mxu0 %v1127
    %v1293 = vpop.f32.mrb[0].mxu0
    %v1294 = vadd.f32 0.0, %v1293
    %v1295 = vpop.f32.mrb[0].mxu0
    %v1296 = vadd.f32 0.0, %v1295
    %v1297 = vpop.f32.mrb[0].mxu0
    %v1298 = vadd.f32 0.0, %v1297
    %v1299 = vpop.f32.mrb[0].mxu0
    %v1300 = vadd.f32 0.0, %v1299
    %1301 = vdwg.mxu0
    %s1302 = sld [smem:[#allocation3 + %s52]]
    %s1303 = sld [smem:[#allocation4 + %s52]]
    %v1304 = vstv %s1302
    %v1305 = vmul.f32 %v1164, %v1304
    %v1306 = vmul.f32 %v1166, %v1304
    %v1307 = vmul.f32 %v1168, %v1304
    %v1308 = vmul.f32 %v1170, %v1304
    %v1309 = vmul.f32 %v1174, %v1304
    %v1310 = vmul.f32 %v1176, %v1304
    %v1311 = vmul.f32 %v1178, %v1304
    %v1312 = vmul.f32 %v1180, %v1304
    %v1313 = vmul.f32 %v1184, %v1304
    %v1314 = vmul.f32 %v1186, %v1304
    %v1315 = vmul.f32 %v1188, %v1304
    %v1316 = vmul.f32 %v1190, %v1304
    %v1317 = vmul.f32 %v1194, %v1304
    %v1318 = vmul.f32 %v1196, %v1304
    %v1319 = vmul.f32 %v1198, %v1304
    %v1320 = vmul.f32 %v1200, %v1304
    %v1321 = vmul.f32 %v1204, %v1304
    %v1322 = vmul.f32 %v1206, %v1304
    %v1323 = vmul.f32 %v1208, %v1304
    %v1324 = vmul.f32 %v1210, %v1304
    %v1325 = vmul.f32 %v1214, %v1304
    %v1326 = vmul.f32 %v1216, %v1304
    %v1327 = vmul.f32 %v1218, %v1304
    %v1328 = vmul.f32 %v1220, %v1304
    %v1329 = vmul.f32 %v1224, %v1304
    %v1330 = vmul.f32 %v1226, %v1304
    %v1331 = vmul.f32 %v1228, %v1304
    %v1332 = vmul.f32 %v1230, %v1304
    %v1333 = vmul.f32 %v1234, %v1304
    %v1334 = vmul.f32 %v1236, %v1304
    %v1335 = vmul.f32 %v1238, %v1304
    %v1336 = vmul.f32 %v1240, %v1304
    %v1337 = vmul.f32 %v1244, %v1304
    %v1338 = vmul.f32 %v1246, %v1304
    %v1339 = vmul.f32 %v1248, %v1304
    %v1340 = vmul.f32 %v1250, %v1304
    %v1341 = vmul.f32 %v1254, %v1304
    %v1342 = vmul.f32 %v1256, %v1304
    %v1343 = vmul.f32 %v1258, %v1304
    %v1344 = vmul.f32 %v1260, %v1304
    %v1345 = vmul.f32 %v1264, %v1304
    %v1346 = vmul.f32 %v1266, %v1304
    %v1347 = vmul.f32 %v1268, %v1304
    %v1348 = vmul.f32 %v1270, %v1304
    %v1349 = vmul.f32 %v1274, %v1304
    %v1350 = vmul.f32 %v1276, %v1304
    %v1351 = vmul.f32 %v1278, %v1304
    %v1352 = vmul.f32 %v1280, %v1304
    %v1353 = vmul.f32 %v1284, %v1304
    %v1354 = vmul.f32 %v1286, %v1304
    %v1355 = vmul.f32 %v1288, %v1304
    %v1356 = vmul.f32 %v1290, %v1304
    %v1357 = vmul.f32 %v1294, %v1304
    %v1358 = vmul.f32 %v1296, %v1304
    %v1359 = vmul.f32 %v1298, %v1304
    %v1360 = vmul.f32 %v1300, %v1304
    %v1361 = vstv %s1303
    %v1362 = vadd.f32 %v1305, %v1361
    %v1363 = vadd.f32 %v1306, %v1361
    %v1364 = vadd.f32 %v1307, %v1361
    %v1365 = vadd.f32 %v1308, %v1361
    %v1366 = vadd.f32 %v1309, %v1361
    %v1367 = vadd.f32 %v1310, %v1361
    %v1368 = vadd.f32 %v1311, %v1361
    %v1369 = vadd.f32 %v1312, %v1361
    %v1370 = vadd.f32 %v1313, %v1361
    %v1371 = vadd.f32 %v1314, %v1361
    %v1372 = vadd.f32 %v1315, %v1361
    %v1373 = vadd.f32 %v1316, %v1361
    %v1374 = vadd.f32 %v1317, %v1361
    %v1375 = vadd.f32 %v1318, %v1361
    %v1376 = vadd.f32 %v1319, %v1361
    %v1377 = vadd.f32 %v1320, %v1361
    %v1378 = vadd.f32 %v1321, %v1361
    %v1379 = vadd.f32 %v1322, %v1361
    %v1380 = vadd.f32 %v1323, %v1361
    %v1381 = vadd.f32 %v1324, %v1361
    %v1382 = vadd.f32 %v1325, %v1361
    %v1383 = vadd.f32 %v1326, %v1361
    %v1384 = vadd.f32 %v1327, %v1361
    %v1385 = vadd.f32 %v1328, %v1361
    %v1386 = vadd.f32 %v1329, %v1361
    %v1387 = vadd.f32 %v1330, %v1361
    %v1388 = vadd.f32 %v1331, %v1361
    %v1389 = vadd.f32 %v1332, %v1361
    %v1390 = vadd.f32 %v1333, %v1361
    %v1391 = vadd.f32 %v1334, %v1361
    %v1392 = vadd.f32 %v1335, %v1361
    %v1393 = vadd.f32 %v1336, %v1361
    %v1394 = vadd.f32 %v1337, %v1361
    %v1395 = vadd.f32 %v1338, %v1361
    %v1396 = vadd.f32 %v1339, %v1361
    %v1397 = vadd.f32 %v1340, %v1361
    %v1398 = vadd.f32 %v1341, %v1361
    %v1399 = vadd.f32 %v1342, %v1361
    %v1400 = vadd.f32 %v1343, %v1361
    %v1401 = vadd.f32 %v1344, %v1361
    %v1402 = vadd.f32 %v1345, %v1361
    %v1403 = vadd.f32 %v1346, %v1361
    %v1404 = vadd.f32 %v1347, %v1361
    %v1405 = vadd.f32 %v1348, %v1361
    %v1406 = vadd.f32 %v1349, %v1361
    %v1407 = vadd.f32 %v1350, %v1361
    %v1408 = vadd.f32 %v1351, %v1361
    %v1409 = vadd.f32 %v1352, %v1361
    %v1410 = vadd.f32 %v1353, %v1361
    %v1411 = vadd.f32 %v1354, %v1361
    %v1412 = vadd.f32 %v1355, %v1361
    %v1413 = vadd.f32 %v1356, %v1361
    %v1414 = vadd.f32 %v1357, %v1361
    %v1415 = vadd.f32 %v1358, %v1361
    %v1416 = vadd.f32 %v1359, %v1361
    %v1417 = vadd.f32 %v1360, %v1361
    %v1418 = vpack.c.bf16 %v1364, %v1362
    %v1419 = vpack.c.bf16 %v1365, %v1363
    %v1420 = vpack.c.bf16 %v1368, %v1366
    %v1421 = vpack.c.bf16 %v1369, %v1367
    %v1422 = vpack.c.bf16 %v1372, %v1370
    %v1423 = vpack.c.bf16 %v1373, %v1371
    %v1424 = vpack.c.bf16 %v1376, %v1374
    %v1425 = vpack.c.bf16 %v1377, %v1375
    %v1426 = vpack.c.bf16 %v1380, %v1378
    %v1427 = vpack.c.bf16 %v1381, %v1379
    %v1428 = vpack.c.bf16 %v1384, %v1382
    %v1429 = vpack.c.bf16 %v1385, %v1383
    %v1430 = vpack.c.bf16 %v1388, %v1386
    %v1431 = vpack.c.bf16 %v1389, %v1387
    %v1432 = vpack.c.bf16 %v1392, %v1390
    %v1433 = vpack.c.bf16 %v1393, %v1391
    %v1434 = vpack.c.bf16 %v1396, %v1394
    %v1435 = vpack.c.bf16 %v1397, %v1395
    %v1436 = vpack.c.bf16 %v1400, %v1398
    %v1437 = vpack.c.bf16 %v1401, %v1399
    %v1438 = vpack.c.bf16 %v1404, %v1402
    %v1439 = vpack.c.bf16 %v1405, %v1403
    %v1440 = vpack.c.bf16 %v1408, %v1406
    %v1441 = vpack.c.bf16 %v1409, %v1407
    %v1442 = vpack.c.bf16 %v1412, %v1410
    %v1443 = vpack.c.bf16 %v1413, %v1411
    %v1444 = vpack.c.bf16 %v1416, %v1414
    %v1445 = vpack.c.bf16 %v1417, %v1415
    %v1474 = vunpack.c.l.b16 %v1418
    %v1475 = vunpack.c.l.b16 %v1419
    %v1476 = vunpack.c.h.b16 %v1418
    %v1477 = vunpack.c.h.b16 %v1419
    %v1478 = vunpack.c.l.b16 %v1420
    %v1479 = vunpack.c.l.b16 %v1421
    %v1480 = vunpack.c.h.b16 %v1420
    %v1481 = vunpack.c.h.b16 %v1421
    %v1482 = vunpack.c.l.b16 %v1422
    %v1483 = vunpack.c.l.b16 %v1423
    %v1484 = vunpack.c.h.b16 %v1422
    %v1485 = vunpack.c.h.b16 %v1423
    %v1486 = vunpack.c.l.b16 %v1424
    %v1487 = vunpack.c.l.b16 %v1425
    %v1488 = vunpack.c.h.b16 %v1424
    %v1489 = vunpack.c.h.b16 %v1425
    %v1490 = vunpack.c.l.b16 %v1426
    %v1491 = vunpack.c.l.b16 %v1427
    %v1492 = vunpack.c.h.b16 %v1426
    %v1493 = vunpack.c.h.b16 %v1427
    %v1494 = vunpack.c.l.b16 %v1428
    %v1495 = vunpack.c.l.b16 %v1429
    %v1496 = vunpack.c.h.b16 %v1428
    %v1497 = vunpack.c.h.b16 %v1429
    %v1498 = vunpack.c.l.b16 %v1430
    %v1499 = vunpack.c.l.b16 %v1431
    %v1500 = vunpack.c.h.b16 %v1430
    %v1501 = vunpack.c.h.b16 %v1431
    %v1502 = vunpack.c.l.b16 %v1432
    %v1503 = vunpack.c.l.b16 %v1433
    %v1504 = vunpack.c.h.b16 %v1432
    %v1505 = vunpack.c.h.b16 %v1433
    %v1506 = vunpack.c.l.b16 %v1434
    %v1507 = vunpack.c.l.b16 %v1435
    %v1508 = vunpack.c.h.b16 %v1434
    %v1509 = vunpack.c.h.b16 %v1435
    %v1510 = vunpack.c.l.b16 %v1436
    %v1511 = vunpack.c.l.b16 %v1437
    %v1512 = vunpack.c.h.b16 %v1436
    %v1513 = vunpack.c.h.b16 %v1437
    %v1514 = vunpack.c.l.b16 %v1438
    %v1515 = vunpack.c.l.b16 %v1439
    %v1516 = vunpack.c.h.b16 %v1438
    %v1517 = vunpack.c.h.b16 %v1439
    %v1518 = vunpack.c.l.b16 %v1440
    %v1519 = vunpack.c.l.b16 %v1441
    %v1520 = vunpack.c.h.b16 %v1440
    %v1521 = vunpack.c.h.b16 %v1441
    %v1522 = vunpack.c.l.b16 %v1442
    %v1523 = vunpack.c.l.b16 %v1443
    %v1524 = vunpack.c.h.b16 %v1442
    %v1525 = vunpack.c.h.b16 %v1443
    %v1526 = vunpack.c.l.b16 %v1444
    %v1527 = vunpack.c.l.b16 %v1445
    %v1528 = vunpack.c.h.b16 %v1444
    %v1529 = vunpack.c.h.b16 %v1445
    %v1530 = vpack.c.b16 %v1475, %v1474
    %v1531 = vpack.c.b16 %v1477, %v1476
    %v1532 = vpack.c.b16 %v1479, %v1478
    %v1533 = vpack.c.b16 %v1481, %v1480
    %v1534 = vpack.c.b16 %v1483, %v1482
    %v1535 = vpack.c.b16 %v1485, %v1484
    %v1536 = vpack.c.b16 %v1487, %v1486
    %v1537 = vpack.c.b16 %v1489, %v1488
    %v1538 = vpack.c.b16 %v1491, %v1490
    %v1539 = vpack.c.b16 %v1493, %v1492
    %v1540 = vpack.c.b16 %v1495, %v1494
    %v1541 = vpack.c.b16 %v1497, %v1496
    %v1542 = vpack.c.b16 %v1499, %v1498
    %v1543 = vpack.c.b16 %v1501, %v1500
    %v1544 = vpack.c.b16 %v1503, %v1502
    %v1545 = vpack.c.b16 %v1505, %v1504
    %v1546 = vpack.c.b16 %v1507, %v1506
    %v1547 = vpack.c.b16 %v1509, %v1508
    %v1548 = vpack.c.b16 %v1511, %v1510
    %v1549 = vpack.c.b16 %v1513, %v1512
    %v1550 = vpack.c.b16 %v1515, %v1514
    %v1551 = vpack.c.b16 %v1517, %v1516
    %v1552 = vpack.c.b16 %v1519, %v1518
    %v1553 = vpack.c.b16 %v1521, %v1520
    %v1554 = vpack.c.b16 %v1523, %v1522
    %v1555 = vpack.c.b16 %v1525, %v1524
    %v1556 = vpack.c.b16 %v1527, %v1526
    %v1557 = vpack.c.b16 %v1529, %v1528
    %vm1586 = vcmask 1043456
    %vm1587 = vcmask 785412
    %vm1588 = vmor %vm1587, %vm1586
    %1589 = vst.msk [vmem:[#allocation8] sm:$0xff] %vm1588, %v1530
    %1590 = vst.msk [vmem:[#allocation8 + $0x8] sm:$0xff] %vm1588, %v1531
    %1591 = vst.msk [vmem:[#allocation8 + $0x10] sm:$0xff] %vm1588, %v1532
    %1592 = vst.msk [vmem:[#allocation8 + $0x18] sm:$0xff] %vm1588, %v1533
    %1593 = vst.msk [vmem:[#allocation8 + $0x20] sm:$0xff] %vm1588, %v1534
    %1594 = vst.msk [vmem:[#allocation8 + $0x28] sm:$0xff] %vm1588, %v1535
    %1595 = vst.msk [vmem:[#allocation8 + $0x30] sm:$0xff] %vm1588, %v1536
    %1596 = vst.msk [vmem:[#allocation8 + $0x38] sm:$0xff] %vm1588, %v1537
    %1597 = vst.msk [vmem:[#allocation8 + $0x40] sm:$0xff] %vm1588, %v1538
    %1598 = vst.msk [vmem:[#allocation8 + $0x48] sm:$0xff] %vm1588, %v1539
    %1599 = vst.msk [vmem:[#allocation8 + $0x50] sm:$0xff] %vm1588, %v1540
    %1600 = vst.msk [vmem:[#allocation8 + $0x58] sm:$0xff] %vm1588, %v1541
    %1601 = vst.msk [vmem:[#allocation8 + $0x60] sm:$0xff] %vm1588, %v1542
    %1602 = vst.msk [vmem:[#allocation8 + $0x68] sm:$0xff] %vm1588, %v1543
    %1603 = vst.msk [vmem:[#allocation8 + $0x70] sm:$0xff] %vm1588, %v1544
    %1604 = vst.msk [vmem:[#allocation8 + $0x78] sm:$0xff] %vm1588, %v1545
    %1605 = vst.msk [vmem:[#allocation8 + $0x80] sm:$0xff] %vm1588, %v1546
    %1606 = vst.msk [vmem:[#allocation8 + $0x88] sm:$0xff] %vm1588, %v1547
    %1607 = vst.msk [vmem:[#allocation8 + $0x90] sm:$0xff] %vm1588, %v1548
    %1608 = vst.msk [vmem:[#allocation8 + $0x98] sm:$0xff] %vm1588, %v1549
    %1609 = vst.msk [vmem:[#allocation8 + $0xa0] sm:$0xff] %vm1588, %v1550
    %1610 = vst.msk [vmem:[#allocation8 + $0xa8] sm:$0xff] %vm1588, %v1551
    %1611 = vst.msk [vmem:[#allocation8 + $0xb0] sm:$0xff] %vm1588, %v1552
    %1612 = vst.msk [vmem:[#allocation8 + $0xb8] sm:$0xff] %vm1588, %v1553
    %1613 = vst.msk [vmem:[#allocation8 + $0xc0] sm:$0xff] %vm1588, %v1554
    %1614 = vst.msk [vmem:[#allocation8 + $0xc8] sm:$0xff] %vm1588, %v1555
    %1615 = vst.msk [vmem:[#allocation8 + $0xd0] sm:$0xff] %vm1588, %v1556
    %1616 = vst.msk [vmem:[#allocation8 + $0xd8] sm:$0xff] %vm1588, %v1557
    %v1617 = vmul.f32 %v834, %v1304
    %v1618 = vmul.f32 %v836, %v1304
    %v1619 = vmul.f32 %v838, %v1304
    %v1620 = vmul.f32 %v840, %v1304
    %v1621 = vmul.f32 %v844, %v1304
    %v1622 = vmul.f32 %v846, %v1304
    %v1623 = vmul.f32 %v848, %v1304
    %v1624 = vmul.f32 %v850, %v1304
    %v1625 = vmul.f32 %v854, %v1304
    %v1626 = vmul.f32 %v856, %v1304
    %v1627 = vmul.f32 %v858, %v1304
    %v1628 = vmul.f32 %v860, %v1304
    %v1629 = vmul.f32 %v864, %v1304
    %v1630 = vmul.f32 %v866, %v1304
    %v1631 = vmul.f32 %v868, %v1304
    %v1632 = vmul.f32 %v870, %v1304
    %v1633 = vmul.f32 %v874, %v1304
    %v1634 = vmul.f32 %v876, %v1304
    %v1635 = vmul.f32 %v878, %v1304
    %v1636 = vmul.f32 %v880, %v1304
    %v1637 = vmul.f32 %v884, %v1304
    %v1638 = vmul.f32 %v886, %v1304
    %v1639 = vmul.f32 %v888, %v1304
    %v1640 = vmul.f32 %v890, %v1304
    %v1641 = vmul.f32 %v894, %v1304
    %v1642 = vmul.f32 %v896, %v1304
    %v1643 = vmul.f32 %v898, %v1304
    %v1644 = vmul.f32 %v900, %v1304
    %v1645 = vmul.f32 %v904, %v1304
    %v1646 = vmul.f32 %v906, %v1304
    %v1647 = vmul.f32 %v908, %v1304
    %v1648 = vmul.f32 %v910, %v1304
    %v1649 = vmul.f32 %v914, %v1304
    %v1650 = vmul.f32 %v916, %v1304
    %v1651 = vmul.f32 %v918, %v1304
    %v1652 = vmul.f32 %v920, %v1304
    %v1653 = vmul.f32 %v924, %v1304
    %v1654 = vmul.f32 %v926, %v1304
    %v1655 = vmul.f32 %v928, %v1304
    %v1656 = vmul.f32 %v930, %v1304
    %v1657 = vmul.f32 %v934, %v1304
    %v1658 = vmul.f32 %v936, %v1304
    %v1659 = vmul.f32 %v938, %v1304
    %v1660 = vmul.f32 %v940, %v1304
    %v1661 = vmul.f32 %v944, %v1304
    %v1662 = vmul.f32 %v946, %v1304
    %v1663 = vmul.f32 %v948, %v1304
    %v1664 = vmul.f32 %v950, %v1304
    %v1665 = vmul.f32 %v954, %v1304
    %v1666 = vmul.f32 %v956, %v1304
    %v1667 = vmul.f32 %v958, %v1304
    %v1668 = vmul.f32 %v960, %v1304
    %v1669 = vmul.f32 %v964, %v1304
    %v1670 = vmul.f32 %v966, %v1304
    %v1671 = vmul.f32 %v968, %v1304
    %v1672 = vmul.f32 %v970, %v1304
    %v1673 = vadd.f32 %v1617, %v1361
    %v1674 = vadd.f32 %v1618, %v1361
    %v1675 = vadd.f32 %v1619, %v1361
    %v1676 = vadd.f32 %v1620, %v1361
    %v1677 = vadd.f32 %v1621, %v1361
    %v1678 = vadd.f32 %v1622, %v1361
    %v1679 = vadd.f32 %v1623, %v1361
    %v1680 = vadd.f32 %v1624, %v1361
    %v1681 = vadd.f32 %v1625, %v1361
    %v1682 = vadd.f32 %v1626, %v1361
    %v1683 = vadd.f32 %v1627, %v1361
    %v1684 = vadd.f32 %v1628, %v1361
    %v1685 = vadd.f32 %v1629, %v1361
    %v1686 = vadd.f32 %v1630, %v1361
    %v1687 = vadd.f32 %v1631, %v1361
    %v1688 = vadd.f32 %v1632, %v1361
    %v1689 = vadd.f32 %v1633, %v1361
    %v1690 = vadd.f32 %v1634, %v1361
    %v1691 = vadd.f32 %v1635, %v1361
    %v1692 = vadd.f32 %v1636, %v1361
    %v1693 = vadd.f32 %v1637, %v1361
    %v1694 = vadd.f32 %v1638, %v1361
    %v1695 = vadd.f32 %v1639, %v1361
    %v1696 = vadd.f32 %v1640, %v1361
    %v1697 = vadd.f32 %v1641, %v1361
    %v1698 = vadd.f32 %v1642, %v1361
    %v1699 = vadd.f32 %v1643, %v1361
    %v1700 = vadd.f32 %v1644, %v1361
    %v1701 = vadd.f32 %v1645, %v1361
    %v1702 = vadd.f32 %v1646, %v1361
    %v1703 = vadd.f32 %v1647, %v1361
    %v1704 = vadd.f32 %v1648, %v1361
    %v1705 = vadd.f32 %v1649, %v1361
    %v1706 = vadd.f32 %v1650, %v1361
    %v1707 = vadd.f32 %v1651, %v1361
    %v1708 = vadd.f32 %v1652, %v1361
    %v1709 = vadd.f32 %v1653, %v1361
    %v1710 = vadd.f32 %v1654, %v1361
    %v1711 = vadd.f32 %v1655, %v1361
    %v1712 = vadd.f32 %v1656, %v1361
    %v1713 = vadd.f32 %v1657, %v1361
    %v1714 = vadd.f32 %v1658, %v1361
    %v1715 = vadd.f32 %v1659, %v1361
    %v1716 = vadd.f32 %v1660, %v1361
    %v1717 = vadd.f32 %v1661, %v1361
    %v1718 = vadd.f32 %v1662, %v1361
    %v1719 = vadd.f32 %v1663, %v1361
    %v1720 = vadd.f32 %v1664, %v1361
    %v1721 = vadd.f32 %v1665, %v1361
    %v1722 = vadd.f32 %v1666, %v1361
    %v1723 = vadd.f32 %v1667, %v1361
    %v1724 = vadd.f32 %v1668, %v1361
    %v1725 = vadd.f32 %v1669, %v1361
    %v1726 = vadd.f32 %v1670, %v1361
    %v1727 = vadd.f32 %v1671, %v1361
    %v1728 = vadd.f32 %v1672, %v1361
    %v1729 = vpack.c.bf16 %v1675, %v1673
    %v1730 = vpack.c.bf16 %v1676, %v1674
    %v1731 = vpack.c.bf16 %v1679, %v1677
    %v1732 = vpack.c.bf16 %v1680, %v1678
    %v1733 = vpack.c.bf16 %v1683, %v1681
    %v1734 = vpack.c.bf16 %v1684, %v1682
    %v1735 = vpack.c.bf16 %v1687, %v1685
    %v1736 = vpack.c.bf16 %v1688, %v1686
    %v1737 = vpack.c.bf16 %v1691, %v1689
    %v1738 = vpack.c.bf16 %v1692, %v1690
    %v1739 = vpack.c.bf16 %v1695, %v1693
    %v1740 = vpack.c.bf16 %v1696, %v1694
    %v1741 = vpack.c.bf16 %v1699, %v1697
    %v1742 = vpack.c.bf16 %v1700, %v1698
    %v1743 = vpack.c.bf16 %v1703, %v1701
    %v1744 = vpack.c.bf16 %v1704, %v1702
    %v1745 = vpack.c.bf16 %v1707, %v1705
    %v1746 = vpack.c.bf16 %v1708, %v1706
    %v1747 = vpack.c.bf16 %v1711, %v1709
    %v1748 = vpack.c.bf16 %v1712, %v1710
    %v1749 = vpack.c.bf16 %v1715, %v1713
    %v1750 = vpack.c.bf16 %v1716, %v1714
    %v1751 = vpack.c.bf16 %v1719, %v1717
    %v1752 = vpack.c.bf16 %v1720, %v1718
    %v1753 = vpack.c.bf16 %v1723, %v1721
    %v1754 = vpack.c.bf16 %v1724, %v1722
    %v1755 = vpack.c.bf16 %v1727, %v1725
    %v1756 = vpack.c.bf16 %v1728, %v1726
    %v1785 = vunpack.c.l.b16 %v1729
    %v1786 = vunpack.c.l.b16 %v1730
    %v1787 = vunpack.c.h.b16 %v1729
    %v1788 = vunpack.c.h.b16 %v1730
    %v1789 = vunpack.c.l.b16 %v1731
    %v1790 = vunpack.c.l.b16 %v1732
    %v1791 = vunpack.c.h.b16 %v1731
    %v1792 = vunpack.c.h.b16 %v1732
    %v1793 = vunpack.c.l.b16 %v1733
    %v1794 = vunpack.c.l.b16 %v1734
    %v1795 = vunpack.c.h.b16 %v1733
    %v1796 = vunpack.c.h.b16 %v1734
    %v1797 = vunpack.c.l.b16 %v1735
    %v1798 = vunpack.c.l.b16 %v1736
    %v1799 = vunpack.c.h.b16 %v1735
    %v1800 = vunpack.c.h.b16 %v1736
    %v1801 = vunpack.c.l.b16 %v1737
    %v1802 = vunpack.c.l.b16 %v1738
    %v1803 = vunpack.c.h.b16 %v1737
    %v1804 = vunpack.c.h.b16 %v1738
    %v1805 = vunpack.c.l.b16 %v1739
    %v1806 = vunpack.c.l.b16 %v1740
    %v1807 = vunpack.c.h.b16 %v1739
    %v1808 = vunpack.c.h.b16 %v1740
    %v1809 = vunpack.c.l.b16 %v1741
    %v1810 = vunpack.c.l.b16 %v1742
    %v1811 = vunpack.c.h.b16 %v1741
    %v1812 = vunpack.c.h.b16 %v1742
    %v1813 = vunpack.c.l.b16 %v1743
    %v1814 = vunpack.c.l.b16 %v1744
    %v1815 = vunpack.c.h.b16 %v1743
    %v1816 = vunpack.c.h.b16 %v1744
    %v1817 = vunpack.c.l.b16 %v1745
    %v1818 = vunpack.c.l.b16 %v1746
    %v1819 = vunpack.c.h.b16 %v1745
    %v1820 = vunpack.c.h.b16 %v1746
    %v1821 = vunpack.c.l.b16 %v1747
    %v1822 = vunpack.c.l.b16 %v1748
    %v1823 = vunpack.c.h.b16 %v1747
    %v1824 = vunpack.c.h.b16 %v1748
    %v1825 = vunpack.c.l.b16 %v1749
    %v1826 = vunpack.c.l.b16 %v1750
    %v1827 = vunpack.c.h.b16 %v1749
    %v1828 = vunpack.c.h.b16 %v1750
    %v1829 = vunpack.c.l.b16 %v1751
    %v1830 = vunpack.c.l.b16 %v1752
    %v1831 = vunpack.c.h.b16 %v1751
    %v1832 = vunpack.c.h.b16 %v1752
    %v1833 = vunpack.c.l.b16 %v1753
    %v1834 = vunpack.c.l.b16 %v1754
    %v1835 = vunpack.c.h.b16 %v1753
    %v1836 = vunpack.c.h.b16 %v1754
    %v1837 = vunpack.c.l.b16 %v1755
    %v1838 = vunpack.c.l.b16 %v1756
    %v1839 = vunpack.c.h.b16 %v1755
    %v1840 = vunpack.c.h.b16 %v1756
    %v1841 = vpack.c.b16 %v1786, %v1785
    %v1842 = vpack.c.b16 %v1788, %v1787
    %v1843 = vpack.c.b16 %v1790, %v1789
    %v1844 = vpack.c.b16 %v1792, %v1791
    %v1845 = vpack.c.b16 %v1794, %v1793
    %v1846 = vpack.c.b16 %v1796, %v1795
    %v1847 = vpack.c.b16 %v1798, %v1797
    %v1848 = vpack.c.b16 %v1800, %v1799
    %v1849 = vpack.c.b16 %v1802, %v1801
    %v1850 = vpack.c.b16 %v1804, %v1803
    %v1851 = vpack.c.b16 %v1806, %v1805
    %v1852 = vpack.c.b16 %v1808, %v1807
    %v1853 = vpack.c.b16 %v1810, %v1809
    %v1854 = vpack.c.b16 %v1812, %v1811
    %v1855 = vpack.c.b16 %v1814, %v1813
    %v1856 = vpack.c.b16 %v1816, %v1815
    %v1857 = vpack.c.b16 %v1818, %v1817
    %v1858 = vpack.c.b16 %v1820, %v1819
    %v1859 = vpack.c.b16 %v1822, %v1821
    %v1860 = vpack.c.b16 %v1824, %v1823
    %v1861 = vpack.c.b16 %v1826, %v1825
    %v1862 = vpack.c.b16 %v1828, %v1827
    %v1863 = vpack.c.b16 %v1830, %v1829
    %v1864 = vpack.c.b16 %v1832, %v1831
    %v1865 = vpack.c.b16 %v1834, %v1833
    %v1866 = vpack.c.b16 %v1836, %v1835
    %v1867 = vpack.c.b16 %v1838, %v1837
    %v1868 = vpack.c.b16 %v1840, %v1839
    %1897 = vst.msk [vmem:[#allocation9] sm:$0xff] %vm1588, %v1841
    %1898 = vst.msk [vmem:[#allocation9 + $0x8] sm:$0xff] %vm1588, %v1842
    %1899 = vst.msk [vmem:[#allocation9 + $0x10] sm:$0xff] %vm1588, %v1843
    %1900 = vst.msk [vmem:[#allocation9 + $0x18] sm:$0xff] %vm1588, %v1844
    %1901 = vst.msk [vmem:[#allocation9 + $0x20] sm:$0xff] %vm1588, %v1845
    %1902 = vst.msk [vmem:[#allocation9 + $0x28] sm:$0xff] %vm1588, %v1846
    %1903 = vst.msk [vmem:[#allocation9 + $0x30] sm:$0xff] %vm1588, %v1847
    %1904 = vst.msk [vmem:[#allocation9 + $0x38] sm:$0xff] %vm1588, %v1848
    %1905 = vst.msk [vmem:[#allocation9 + $0x40] sm:$0xff] %vm1588, %v1849
    %1906 = vst.msk [vmem:[#allocation9 + $0x48] sm:$0xff] %vm1588, %v1850
    %1907 = vst.msk [vmem:[#allocation9 + $0x50] sm:$0xff] %vm1588, %v1851
    %1908 = vst.msk [vmem:[#allocation9 + $0x58] sm:$0xff] %vm1588, %v1852
    %1909 = vst.msk [vmem:[#allocation9 + $0x60] sm:$0xff] %vm1588, %v1853
    %1910 = vst.msk [vmem:[#allocation9 + $0x68] sm:$0xff] %vm1588, %v1854
    %1911 = vst.msk [vmem:[#allocation9 + $0x70] sm:$0xff] %vm1588, %v1855
    %1912 = vst.msk [vmem:[#allocation9 + $0x78] sm:$0xff] %vm1588, %v1856
    %1913 = vst.msk [vmem:[#allocation9 + $0x80] sm:$0xff] %vm1588, %v1857
    %1914 = vst.msk [vmem:[#allocation9 + $0x88] sm:$0xff] %vm1588, %v1858
    %1915 = vst.msk [vmem:[#allocation9 + $0x90] sm:$0xff] %vm1588, %v1859
    %1916 = vst.msk [vmem:[#allocation9 + $0x98] sm:$0xff] %vm1588, %v1860
    %1917 = vst.msk [vmem:[#allocation9 + $0xa0] sm:$0xff] %vm1588, %v1861
    %1918 = vst.msk [vmem:[#allocation9 + $0xa8] sm:$0xff] %vm1588, %v1862
    %1919 = vst.msk [vmem:[#allocation9 + $0xb0] sm:$0xff] %vm1588, %v1863
    %1920 = vst.msk [vmem:[#allocation9 + $0xb8] sm:$0xff] %vm1588, %v1864
    %1921 = vst.msk [vmem:[#allocation9 + $0xc0] sm:$0xff] %vm1588, %v1865
    %1922 = vst.msk [vmem:[#allocation9 + $0xc8] sm:$0xff] %vm1588, %v1866
    %1923 = vst.msk [vmem:[#allocation9 + $0xd0] sm:$0xff] %vm1588, %v1867
    %1924 = vst.msk [vmem:[#allocation9 + $0xd8] sm:$0xff] %vm1588, %v1868
    %v1925 = vmul.f32 %v1031, %v1304
    %v1926 = vmul.f32 %v1034, %v1304
    %v1927 = vmul.f32 %v1039, %v1304
    %v1928 = vmul.f32 %v1042, %v1304
    %v1929 = vmul.f32 %v1047, %v1304
    %v1930 = vmul.f32 %v1050, %v1304
    %v1931 = vmul.f32 %v1055, %v1304
    %v1932 = vmul.f32 %v1058, %v1304
    %v1933 = vmul.f32 %v1063, %v1304
    %v1934 = vmul.f32 %v1066, %v1304
    %v1935 = vmul.f32 %v1071, %v1304
    %v1936 = vmul.f32 %v1074, %v1304
    %v1937 = vadd.f32 %v1925, %v1361
    %v1938 = vadd.f32 %v1926, %v1361
    %v1939 = vadd.f32 %v1927, %v1361
    %v1940 = vadd.f32 %v1928, %v1361
    %v1941 = vadd.f32 %v1929, %v1361
    %v1942 = vadd.f32 %v1930, %v1361
    %v1943 = vadd.f32 %v1931, %v1361
    %v1944 = vadd.f32 %v1932, %v1361
    %v1945 = vadd.f32 %v1933, %v1361
    %v1946 = vadd.f32 %v1934, %v1361
    %v1947 = vadd.f32 %v1935, %v1361
    %v1948 = vadd.f32 %v1936, %v1361
    %v1949 = vpack.c.bf16 %v1938, %v1937
    %v1950 = vpack.c.bf16 %v1940, %v1939
    %v1951 = vpack.c.bf16 %v1942, %v1941
    %v1952 = vpack.c.bf16 %v1944, %v1943
    %v1953 = vpack.c.bf16 %v1946, %v1945
    %v1954 = vpack.c.bf16 %v1948, %v1947
    %v1961 = vunpack.c.l.b16 %v1949
    %v1962 = vunpack.c.h.b16 %v1949
    %v1963 = vunpack.c.l.b16 %v1950
    %v1964 = vunpack.c.h.b16 %v1950
    %v1965 = vunpack.c.l.b16 %v1951
    %v1966 = vunpack.c.h.b16 %v1951
    %v1967 = vunpack.c.l.b16 %v1952
    %v1968 = vunpack.c.h.b16 %v1952
    %v1969 = vunpack.c.l.b16 %v1953
    %v1970 = vunpack.c.h.b16 %v1953
    %v1971 = vunpack.c.l.b16 %v1954
    %v1972 = vunpack.c.h.b16 %v1954
    %v1973 = vpack.c.b16 %v1961, %v1961
    %v1974 = vpack.c.b16 %v1962, %v1962
    %v1975 = vpack.c.b16 %v1963, %v1963
    %v1976 = vpack.c.b16 %v1964, %v1964
    %v1977 = vpack.c.b16 %v1965, %v1965
    %v1978 = vpack.c.b16 %v1966, %v1966
    %v1979 = vpack.c.b16 %v1967, %v1967
    %v1980 = vpack.c.b16 %v1968, %v1968
    %v1981 = vpack.c.b16 %v1969, %v1969
    %v1982 = vpack.c.b16 %v1970, %v1970
    %v1983 = vpack.c.b16 %v1971, %v1971
    %v1984 = vpack.c.b16 %v1972, %v1972
    %vm1997 = vcmask 781312
    %1998 = vst.msk [vmem:[#allocation11] sm:$0xf] %vm1997, %v1973
    %1999 = vst.msk [vmem:[#allocation11 + $0x4] sm:$0xf] %vm1997, %v1974
    %2000 = vst.msk [vmem:[#allocation11 + $0x8] sm:$0xf] %vm1997, %v1975
    %2001 = vst.msk [vmem:[#allocation11 + $0xc] sm:$0xf] %vm1997, %v1976
    %2002 = vst.msk [vmem:[#allocation11 + $0x10] sm:$0xf] %vm1997, %v1977
    %2003 = vst.msk [vmem:[#allocation11 + $0x14] sm:$0xf] %vm1997, %v1978
    %2004 = vst.msk [vmem:[#allocation11 + $0x18] sm:$0xf] %vm1997, %v1979
    %2005 = vst.msk [vmem:[#allocation11 + $0x1c] sm:$0xf] %vm1997, %v1980
    %2006 = vst.msk [vmem:[#allocation11 + $0x20] sm:$0xf] %vm1997, %v1981
    %2007 = vst.msk [vmem:[#allocation11 + $0x24] sm:$0xf] %vm1997, %v1982
    %2008 = vst.msk [vmem:[#allocation11 + $0x28] sm:$0xf] %vm1997, %v1983
    %2009 = vst.msk [vmem:[#allocation11 + $0x2c] sm:$0xf] %vm1997, %v1984
    %s2010 = scalar_lea.vmem %s2, 8
    %v2011 = vld [vmem:[%s2010] sm:$0xf]
    %v2012 = vld [vmem:[%s2010 + $0x4] sm:$0xf]
    %v2015 = vunpack.c.l.b16 %v2011
    %v2016 = vunpack.c.l.b16 %v2012
    %v2017 = vpack.c.b16 %v2016, %v2015
    %2019 = vmatprep.subr.bf16.mxu0 0
    %2020 = vmatpush1.bf16.msra.mxu0 %v2017
    %2021 = vmatprep.subr.bf16.mxu0 0
    %2022 = vmatpush1.bf16.msra.mxu0 0
    %2023 = vmatprep.subr.bf16.mxu0 0
    %2024 = vmatpush1.bf16.msra.mxu0 0
    %2025 = vmatprep.subr.bf16.mxu0 0
    %2026 = vmatpush1.bf16.msra.mxu0 0
    %2027 = vmatprep.subr.bf16.mxu0 0
    %2028 = vmatpush1.bf16.msra.mxu0 0
    %2029 = vmatprep.subr.bf16.mxu0 0
    %2030 = vmatpush1.bf16.msra.mxu0 0
    %2031 = vmatprep.subr.bf16.mxu0 0
    %2032 = vmatpush1.bf16.msra.mxu0 0
    %2033 = vmatprep.subr.bf16.mxu0 0
    %2034 = vmatpush1.bf16.msra.mxu0 0
    %2035 = vmatprep.subr.bf16.mxu0 0
    %2036 = vmatpush1.bf16.msra.mxu0 0
    %2037 = vmatprep.subr.bf16.mxu0 0
    %2038 = vmatpush1.bf16.msra.mxu0 0
    %2039 = vmatprep.subr.bf16.mxu0 0
    %2040 = vmatpush1.bf16.msra.mxu0 0
    %2041 = vmatprep.subr.bf16.mxu0 0
    %2042 = vmatpush1.bf16.msra.mxu0 0
    %2043 = vmatprep.subr.bf16.mxu0 0
    %2044 = vmatpush1.bf16.msra.mxu0 0
    %2045 = vmatprep.subr.bf16.mxu0 0
    %2046 = vmatpush1.bf16.msra.mxu0 0
    %2047 = vmatprep.subr.bf16.mxu0 0
    %2048 = vmatpush1.bf16.msra.mxu0 0
    %2049 = vmatprep.subr.bf16.mxu0 0
    %2050 = vmatpush1.bf16.msra.mxu0 0
    %2051 = vmatprep.mubr.bf16.mxu0 0
    %2052 = vmatmul.mubr.bf16.gmra.mrb[0].mxu0 %v307
    %v2053 = vpop.f32.mrb[0].mxu0
    %v2054 = vadd.f32 0.0, %v2053
    %v2055 = vpop.f32.mrb[0].mxu0
    %v2056 = vpop.f32.mrb[0].mxu0
    %v2057 = vadd.f32 0.0, %v2056
    %v2058 = vpop.f32.mrb[0].mxu0
    %2059 = vmatprep.mubr.bf16.mxu0 0
    %2060 = vmatmul.mubr.bf16.gmra.mrb[0].mxu0 %v310
    %v2061 = vpop.f32.mrb[0].mxu0
    %v2062 = vadd.f32 0.0, %v2061
    %v2063 = vpop.f32.mrb[0].mxu0
    %v2064 = vpop.f32.mrb[0].mxu0
    %v2065 = vadd.f32 0.0, %v2064
    %v2066 = vpop.f32.mrb[0].mxu0
    %2067 = vmatprep.mubr.bf16.mxu0 0
    %2068 = vmatmul.mubr.bf16.gmra.mrb[0].mxu0 %v313
    %v2069 = vpop.f32.mrb[0].mxu0
    %v2070 = vadd.f32 0.0, %v2069
    %v2071 = vpop.f32.mrb[0].mxu0
    %v2072 = vpop.f32.mrb[0].mxu0
    %v2073 = vadd.f32 0.0, %v2072
    %v2074 = vpop.f32.mrb[0].mxu0
    %2075 = vmatprep.mubr.bf16.mxu0 0
    %2076 = vmatmul.mubr.bf16.gmra.mrb[0].mxu0 %v316
    %v2077 = vpop.f32.mrb[0].mxu0
    %v2078 = vadd.f32 0.0, %v2077
    %v2079 = vpop.f32.mrb[0].mxu0
    %v2080 = vpop.f32.mrb[0].mxu0
    %v2081 = vadd.f32 0.0, %v2080
    %v2082 = vpop.f32.mrb[0].mxu0
    %2083 = vmatprep.mubr.bf16.mxu0 0
    %2084 = vmatmul.mubr.bf16.gmra.mrb[0].mxu0 %v319
    %v2085 = vpop.f32.mrb[0].mxu0
    %v2086 = vadd.f32 0.0, %v2085
    %v2087 = vpop.f32.mrb[0].mxu0
    %v2088 = vpop.f32.mrb[0].mxu0
    %v2089 = vadd.f32 0.0, %v2088
    %v2090 = vpop.f32.mrb[0].mxu0
    %2091 = vmatprep.mubr.bf16.mxu0 0
    %2092 = vmatmul.mubr.bf16.gmra.mrb[0].mxu0 %v322
    %v2093 = vpop.f32.mrb[0].mxu0
    %v2094 = vadd.f32 0.0, %v2093
    %v2095 = vpop.f32.mrb[0].mxu0
    %v2096 = vpop.f32.mrb[0].mxu0
    %v2097 = vadd.f32 0.0, %v2096
    %v2098 = vpop.f32.mrb[0].mxu0
    %2099 = vmatprep.mubr.bf16.mxu0 0
    %2100 = vmatmul.mubr.bf16.gmra.mrb[0].mxu0 %v325
    %v2101 = vpop.f32.mrb[0].mxu0
    %v2102 = vadd.f32 0.0, %v2101
    %v2103 = vpop.f32.mrb[0].mxu0
    %v2104 = vpop.f32.mrb[0].mxu0
    %v2105 = vadd.f32 0.0, %v2104
    %v2106 = vpop.f32.mrb[0].mxu0
    %2107 = vmatprep.mubr.bf16.mxu0 0
    %2108 = vmatmul.mubr.bf16.gmra.mrb[0].mxu0 %v328
    %v2109 = vpop.f32.mrb[0].mxu0
    %v2110 = vadd.f32 0.0, %v2109
    %v2111 = vpop.f32.mrb[0].mxu0
    %v2112 = vpop.f32.mrb[0].mxu0
    %v2113 = vadd.f32 0.0, %v2112
    %v2114 = vpop.f32.mrb[0].mxu0
    %2115 = vmatprep.mubr.bf16.mxu0 0
    %2116 = vmatmul.mubr.bf16.gmra.mrb[0].mxu0 %v331
    %v2117 = vpop.f32.mrb[0].mxu0
    %v2118 = vadd.f32 0.0, %v2117
    %v2119 = vpop.f32.mrb[0].mxu0
    %v2120 = vpop.f32.mrb[0].mxu0
    %v2121 = vadd.f32 0.0, %v2120
    %v2122 = vpop.f32.mrb[0].mxu0
    %2123 = vmatprep.mubr.bf16.mxu0 0
    %2124 = vmatmul.mubr.bf16.gmra.mrb[0].mxu0 %v334
    %v2125 = vpop.f32.mrb[0].mxu0
    %v2126 = vadd.f32 0.0, %v2125
    %v2127 = vpop.f32.mrb[0].mxu0
    %v2128 = vpop.f32.mrb[0].mxu0
    %v2129 = vadd.f32 0.0, %v2128
    %v2130 = vpop.f32.mrb[0].mxu0
    %2131 = vmatprep.mubr.bf16.mxu0 0
    %2132 = vmatmul.mubr.bf16.gmra.mrb[0].mxu0 %v337
    %v2133 = vpop.f32.mrb[0].mxu0
    %v2134 = vadd.f32 0.0, %v2133
    %v2135 = vpop.f32.mrb[0].mxu0
    %v2136 = vpop.f32.mrb[0].mxu0
    %v2137 = vadd.f32 0.0, %v2136
    %v2138 = vpop.f32.mrb[0].mxu0
    %2139 = vmatprep.mubr.bf16.mxu0 0
    %2140 = vmatmul.mubr.bf16.gmra.mrb[0].mxu0 %v340
    %v2141 = vpop.f32.mrb[0].mxu0
    %v2142 = vadd.f32 0.0, %v2141
    %v2143 = vpop.f32.mrb[0].mxu0
    %v2144 = vpop.f32.mrb[0].mxu0
    %v2145 = vadd.f32 0.0, %v2144
    %v2146 = vpop.f32.mrb[0].mxu0
    %2147 = vmatprep.mubr.bf16.mxu0 0
    %2148 = vmatmul.mubr.bf16.gmra.mrb[0].mxu0 %v343
    %v2149 = vpop.f32.mrb[0].mxu0
    %v2150 = vadd.f32 0.0, %v2149
    %v2151 = vpop.f32.mrb[0].mxu0
    %v2152 = vpop.f32.mrb[0].mxu0
    %v2153 = vadd.f32 0.0, %v2152
    %v2154 = vpop.f32.mrb[0].mxu0
    %2155 = vmatprep.mubr.bf16.mxu0 0
    %2156 = vmatmul.mubr.bf16.gmra.mrb[0].mxu0 %v346
    %v2157 = vpop.f32.mrb[0].mxu0
    %v2158 = vadd.f32 0.0, %v2157
    %v2159 = vpop.f32.mrb[0].mxu0
    %v2160 = vpop.f32.mrb[0].mxu0
    %v2161 = vadd.f32 0.0, %v2160
    %v2162 = vpop.f32.mrb[0].mxu0
    %2163 = vmatprep.mubr.bf16.mxu0 0
    %2164 = vmatmul.mubr.bf16.gmra.mrb[0].mxu0 %v349
    %v2165 = vpop.f32.mrb[0].mxu0
    %v2166 = vadd.f32 0.0, %v2165
    %v2167 = vpop.f32.mrb[0].mxu0
    %v2168 = vpop.f32.mrb[0].mxu0
    %v2169 = vadd.f32 0.0, %v2168
    %v2170 = vpop.f32.mrb[0].mxu0
    %2171 = vmatprep.mubr.bf16.mxu0 0
    %2172 = vmatmul.mubr.bf16.gmra.mrb[0].mxu0 %v352
    %v2173 = vpop.f32.mrb[0].mxu0
    %v2174 = vadd.f32 0.0, %v2173
    %v2175 = vpop.f32.mrb[0].mxu0
    %v2176 = vpop.f32.mrb[0].mxu0
    %v2177 = vadd.f32 0.0, %v2176
    %v2178 = vpop.f32.mrb[0].mxu0
    %2179 = vmatprep.mubr.bf16.mxu0 0
    %2180 = vmatmul.mubr.bf16.gmra.mrb[0].mxu0 %v355
    %v2181 = vpop.f32.mrb[0].mxu0
    %v2182 = vadd.f32 0.0, %v2181
    %v2183 = vpop.f32.mrb[0].mxu0
    %v2184 = vpop.f32.mrb[0].mxu0
    %v2185 = vadd.f32 0.0, %v2184
    %v2186 = vpop.f32.mrb[0].mxu0
    %2187 = vmatprep.mubr.bf16.mxu0 0
    %2188 = vmatmul.mubr.bf16.gmra.mrb[0].mxu0 %v358
    %v2189 = vpop.f32.mrb[0].mxu0
    %v2190 = vadd.f32 0.0, %v2189
    %v2191 = vpop.f32.mrb[0].mxu0
    %v2192 = vpop.f32.mrb[0].mxu0
    %v2193 = vadd.f32 0.0, %v2192
    %v2194 = vpop.f32.mrb[0].mxu0
    %2195 = vmatprep.mubr.bf16.mxu0 0
    %2196 = vmatmul.mubr.bf16.gmra.mrb[0].mxu0 %v361
    %v2197 = vpop.f32.mrb[0].mxu0
    %v2198 = vadd.f32 0.0, %v2197
    %v2199 = vpop.f32.mrb[0].mxu0
    %v2200 = vpop.f32.mrb[0].mxu0
    %v2201 = vadd.f32 0.0, %v2200
    %v2202 = vpop.f32.mrb[0].mxu0
    %2203 = vmatprep.mubr.bf16.mxu0 0
    %2204 = vmatmul.mubr.bf16.gmra.mrb[0].mxu0 %v364
    %v2205 = vpop.f32.mrb[0].mxu0
    %v2206 = vadd.f32 0.0, %v2205
    %v2207 = vpop.f32.mrb[0].mxu0
    %v2208 = vpop.f32.mrb[0].mxu0
    %v2209 = vadd.f32 0.0, %v2208
    %v2210 = vpop.f32.mrb[0].mxu0
    %2211 = vmatprep.mubr.bf16.mxu0 0
    %2212 = vmatmul.mubr.bf16.gmra.mrb[0].mxu0 %v367
    %v2213 = vpop.f32.mrb[0].mxu0
    %v2214 = vadd.f32 0.0, %v2213
    %v2215 = vpop.f32.mrb[0].mxu0
    %v2216 = vpop.f32.mrb[0].mxu0
    %v2217 = vadd.f32 0.0, %v2216
    %v2218 = vpop.f32.mrb[0].mxu0
    %2219 = vmatprep.mubr.bf16.mxu0 0
    %2220 = vmatmul.mubr.bf16.gmra.mrb[0].mxu0 %v370
    %v2221 = vpop.f32.mrb[0].mxu0
    %v2222 = vadd.f32 0.0, %v2221
    %v2223 = vpop.f32.mrb[0].mxu0
    %v2224 = vpop.f32.mrb[0].mxu0
    %v2225 = vadd.f32 0.0, %v2224
    %v2226 = vpop.f32.mrb[0].mxu0
    %2227 = vmatprep.mubr.bf16.mxu0 0
    %2228 = vmatmul.mubr.bf16.gmra.mrb[0].mxu0 %v373
    %v2229 = vpop.f32.mrb[0].mxu0
    %v2230 = vadd.f32 0.0, %v2229
    %v2231 = vpop.f32.mrb[0].mxu0
    %v2232 = vpop.f32.mrb[0].mxu0
    %v2233 = vadd.f32 0.0, %v2232
    %v2234 = vpop.f32.mrb[0].mxu0
    %2235 = vmatprep.mubr.bf16.mxu0 0
    %2236 = vmatmul.mubr.bf16.gmra.mrb[0].mxu0 %v376
    %v2237 = vpop.f32.mrb[0].mxu0
    %v2238 = vadd.f32 0.0, %v2237
    %v2239 = vpop.f32.mrb[0].mxu0
    %v2240 = vpop.f32.mrb[0].mxu0
    %v2241 = vadd.f32 0.0, %v2240
    %v2242 = vpop.f32.mrb[0].mxu0
    %2243 = vmatprep.mubr.bf16.mxu0 0
    %2244 = vmatmul.mubr.bf16.gmra.mrb[0].mxu0 %v379
    %v2245 = vpop.f32.mrb[0].mxu0
    %v2246 = vadd.f32 0.0, %v2245
    %v2247 = vpop.f32.mrb[0].mxu0
    %v2248 = vpop.f32.mrb[0].mxu0
    %v2249 = vadd.f32 0.0, %v2248
    %v2250 = vpop.f32.mrb[0].mxu0
    %2251 = vmatprep.mubr.bf16.mxu0 0
    %2252 = vmatmul.mubr.bf16.gmra.mrb[0].mxu0 %v382
    %v2253 = vpop.f32.mrb[0].mxu0
    %v2254 = vadd.f32 0.0, %v2253
    %v2255 = vpop.f32.mrb[0].mxu0
    %v2256 = vpop.f32.mrb[0].mxu0
    %v2257 = vadd.f32 0.0, %v2256
    %v2258 = vpop.f32.mrb[0].mxu0
    %2259 = vmatprep.mubr.bf16.mxu0 0
    %2260 = vmatmul.mubr.bf16.gmra.mrb[0].mxu0 %v385
    %v2261 = vpop.f32.mrb[0].mxu0
    %v2262 = vadd.f32 0.0, %v2261
    %v2263 = vpop.f32.mrb[0].mxu0
    %v2264 = vpop.f32.mrb[0].mxu0
    %v2265 = vadd.f32 0.0, %v2264
    %v2266 = vpop.f32.mrb[0].mxu0
    %2267 = vmatprep.mubr.bf16.mxu0 0
    %2268 = vmatmul.mubr.bf16.gmra.mrb[0].mxu0 %v388
    %v2269 = vpop.f32.mrb[0].mxu0
    %v2270 = vadd.f32 0.0, %v2269
    %v2271 = vpop.f32.mrb[0].mxu0
    %v2272 = vpop.f32.mrb[0].mxu0
    %v2273 = vadd.f32 0.0, %v2272
    %v2274 = vpop.f32.mrb[0].mxu0
    %2275 = vmatprep.mubr.bf16.mxu0 0
    %2276 = vmatmul.mubr.bf16.gmra.mrb[0].mxu0 %v391
    %v2277 = vpop.f32.mrb[0].mxu0
    %v2278 = vadd.f32 0.0, %v2277
    %v2279 = vpop.f32.mrb[0].mxu0
    %v2280 = vpop.f32.mrb[0].mxu0
    %v2281 = vadd.f32 0.0, %v2280
    %v2282 = vpop.f32.mrb[0].mxu0
    %2283 = vmatprep.mubr.bf16.mxu0 0
    %2284 = vmatmul.mubr.bf16.gmra.mrb[0].mxu0 %v394
    %v2285 = vpop.f32.mrb[0].mxu0
    %v2286 = vadd.f32 0.0, %v2285
    %v2287 = vpop.f32.mrb[0].mxu0
    %v2288 = vpop.f32.mrb[0].mxu0
    %v2289 = vadd.f32 0.0, %v2288
    %v2290 = vpop.f32.mrb[0].mxu0
    %2291 = vmatprep.mubr.bf16.mxu0 0
    %2292 = vmatmul.mubr.bf16.gmra.mrb[0].mxu0 %v397
    %v2293 = vpop.f32.mrb[0].mxu0
    %v2294 = vadd.f32 0.0, %v2293
    %v2295 = vpop.f32.mrb[0].mxu0
    %v2296 = vpop.f32.mrb[0].mxu0
    %v2297 = vadd.f32 0.0, %v2296
    %v2298 = vpop.f32.mrb[0].mxu0
    %2299 = vmatprep.mubr.bf16.mxu0 0
    %2300 = vmatmul.mubr.bf16.gmra.mrb[0].mxu0 %v400
    %v2301 = vpop.f32.mrb[0].mxu0
    %v2302 = vadd.f32 0.0, %v2301
    %v2303 = vpop.f32.mrb[0].mxu0
    %v2304 = vpop.f32.mrb[0].mxu0
    %v2305 = vadd.f32 0.0, %v2304
    %v2306 = vpop.f32.mrb[0].mxu0
    %2307 = vmatprep.mubr.bf16.mxu0 0
    %2308 = vmatmul.mubr.bf16.gmra.mrb[0].mxu0 %v403
    %v2309 = vpop.f32.mrb[0].mxu0
    %v2310 = vadd.f32 0.0, %v2309
    %v2311 = vpop.f32.mrb[0].mxu0
    %v2312 = vpop.f32.mrb[0].mxu0
    %v2313 = vadd.f32 0.0, %v2312
    %v2314 = vpop.f32.mrb[0].mxu0
    %2315 = vmatprep.mubr.bf16.mxu0 0
    %2316 = vmatmul.mubr.bf16.gmra.mrb[0].mxu0 %v406
    %v2317 = vpop.f32.mrb[0].mxu0
    %v2318 = vadd.f32 0.0, %v2317
    %v2319 = vpop.f32.mrb[0].mxu0
    %v2320 = vpop.f32.mrb[0].mxu0
    %v2321 = vadd.f32 0.0, %v2320
    %v2322 = vpop.f32.mrb[0].mxu0
    %2323 = vdwg.mxu0
    %v2324 = vpack.c.bf16 %v2057, %v2054
    %v2325 = vpack.c.bf16 %v2065, %v2062
    %v2326 = vpack.c.bf16 %v2073, %v2070
    %v2327 = vpack.c.bf16 %v2081, %v2078
    %v2328 = vpack.c.bf16 %v2089, %v2086
    %v2329 = vpack.c.bf16 %v2097, %v2094
    %v2330 = vpack.c.bf16 %v2105, %v2102
    %v2331 = vpack.c.bf16 %v2113, %v2110
    %v2332 = vpack.c.bf16 %v2121, %v2118
    %v2333 = vpack.c.bf16 %v2129, %v2126
    %v2334 = vpack.c.bf16 %v2137, %v2134
    %v2335 = vpack.c.bf16 %v2145, %v2142
    %v2336 = vpack.c.bf16 %v2153, %v2150
    %v2337 = vpack.c.bf16 %v2161, %v2158
    %v2338 = vpack.c.bf16 %v2169, %v2166
    %v2339 = vpack.c.bf16 %v2177, %v2174
    %v2340 = vpack.c.bf16 %v2185, %v2182
    %v2341 = vpack.c.bf16 %v2193, %v2190
    %v2342 = vpack.c.bf16 %v2201, %v2198
    %v2343 = vpack.c.bf16 %v2209, %v2206
    %v2344 = vpack.c.bf16 %v2217, %v2214
    %v2345 = vpack.c.bf16 %v2225, %v2222
    %v2346 = vpack.c.bf16 %v2233, %v2230
    %v2347 = vpack.c.bf16 %v2241, %v2238
    %v2348 = vpack.c.bf16 %v2249, %v2246
    %v2349 = vpack.c.bf16 %v2257, %v2254
    %v2350 = vpack.c.bf16 %v2265, %v2262
    %v2351 = vpack.c.bf16 %v2273, %v2270
    %v2352 = vpack.c.bf16 %v2281, %v2278
    %v2353 = vpack.c.bf16 %v2289, %v2286
    %v2354 = vpack.c.bf16 %v2297, %v2294
    %v2355 = vpack.c.bf16 %v2305, %v2302
    %v2356 = vpack.c.bf16 %v2313, %v2310
    %v2357 = vpack.c.bf16 %v2321, %v2318
    %v2359 = vsel %vm305, %v2324, 0
    %v2362 = vsel %vm305, %v2325, 0
    %v2365 = vsel %vm305, %v2326, 0
    %v2368 = vsel %vm305, %v2327, 0
    %v2371 = vsel %vm305, %v2328, 0
    %v2374 = vsel %vm305, %v2329, 0
    %v2377 = vsel %vm305, %v2330, 0
    %v2380 = vsel %vm305, %v2331, 0
    %v2383 = vsel %vm305, %v2332, 0
    %v2386 = vsel %vm305, %v2333, 0
    %v2389 = vsel %vm305, %v2334, 0
    %v2392 = vsel %vm305, %v2335, 0
    %v2395 = vsel %vm305, %v2336, 0
    %v2398 = vsel %vm305, %v2337, 0
    %2400 = vmatprep.subr.bf16.mxu0 %v754
    %2401 = vmatpush1.bf16.msra.mxu0 %v753
    %2402 = vmatprep.subr.bf16.mxu0 0
    %2403 = vmatpush1.bf16.msra.mxu0 0
    %2404 = vmatprep.subr.bf16.mxu0 0
    %2405 = vmatpush1.bf16.msra.mxu0 0
    %2406 = vmatprep.subr.bf16.mxu0 0
    %2407 = vmatpush1.bf16.msra.mxu0 0
    %2408 = vmatprep.subr.bf16.mxu0 0
    %2409 = vmatpush1.bf16.msra.mxu0 0
    %2410 = vmatprep.subr.bf16.mxu0 0
    %2411 = vmatpush1.bf16.msra.mxu0 0
    %2412 = vmatprep.subr.bf16.mxu0 0
    %2413 = vmatpush1.bf16.msra.mxu0 0
    %2414 = vmatprep.subr.bf16.mxu0 0
    %2415 = vmatpush1.bf16.msra.mxu0 0
    %2416 = vmatprep.subr.bf16.mxu0 0
    %2417 = vmatpush1.bf16.msra.mxu0 0
    %2418 = vmatprep.subr.bf16.mxu0 0
    %2419 = vmatpush1.bf16.msra.mxu0 0
    %2420 = vmatprep.subr.bf16.mxu0 0
    %2421 = vmatpush1.bf16.msra.mxu0 0
    %2422 = vmatprep.subr.bf16.mxu0 0
    %2423 = vmatpush1.bf16.msra.mxu0 0
    %2424 = vmatprep.subr.bf16.mxu0 0
    %2425 = vmatpush1.bf16.msra.mxu0 0
    %2426 = vmatprep.subr.bf16.mxu0 0
    %2427 = vmatpush1.bf16.msra.mxu0 0
    %2428 = vmatprep.subr.bf16.mxu0 0
    %2429 = vmatpush1.bf16.msra.mxu0 0
    %2430 = vmatprep.subr.bf16.mxu0 0
    %2431 = vmatpush1.bf16.msra.mxu0 0
    %2432 = vmatprep.mubr.bf16.mxu0 0
    %2433 = vmatmul.mubr.bf16.gmra.mrb[0].mxu0 %v2359
    %v2434 = vpop.f32.mrb[0].mxu0
    %v2435 = vadd.f32 0.0, %v2434
    %v2436 = vpop.f32.mrb[0].mxu0
    %v2437 = vadd.f32 0.0, %v2436
    %v2438 = vpop.f32.mrb[0].mxu0
    %v2439 = vadd.f32 0.0, %v2438
    %v2440 = vpop.f32.mrb[0].mxu0
    %v2441 = vadd.f32 0.0, %v2440
    %2442 = vmatprep.mubr.bf16.mxu0 0
    %2443 = vmatmul.mubr.bf16.gmra.mrb[0].mxu0 %v2362
    %v2444 = vpop.f32.mrb[0].mxu0
    %v2445 = vadd.f32 0.0, %v2444
    %v2446 = vpop.f32.mrb[0].mxu0
    %v2447 = vadd.f32 0.0, %v2446
    %v2448 = vpop.f32.mrb[0].mxu0
    %v2449 = vadd.f32 0.0, %v2448
    %v2450 = vpop.f32.mrb[0].mxu0
    %v2451 = vadd.f32 0.0, %v2450
    %2452 = vmatprep.mubr.bf16.mxu0 0
    %2453 = vmatmul.mubr.bf16.gmra.mrb[0].mxu0 %v2365
    %v2454 = vpop.f32.mrb[0].mxu0
    %v2455 = vadd.f32 0.0, %v2454
    %v2456 = vpop.f32.mrb[0].mxu0
    %v2457 = vadd.f32 0.0, %v2456
    %v2458 = vpop.f32.mrb[0].mxu0
    %v2459 = vadd.f32 0.0, %v2458
    %v2460 = vpop.f32.mrb[0].mxu0
    %v2461 = vadd.f32 0.0, %v2460
    %2462 = vmatprep.mubr.bf16.mxu0 0
    %2463 = vmatmul.mubr.bf16.gmra.mrb[0].mxu0 %v2368
    %v2464 = vpop.f32.mrb[0].mxu0
    %v2465 = vadd.f32 0.0, %v2464
    %v2466 = vpop.f32.mrb[0].mxu0
    %v2467 = vadd.f32 0.0, %v2466
    %v2468 = vpop.f32.mrb[0].mxu0
    %v2469 = vadd.f32 0.0, %v2468
    %v2470 = vpop.f32.mrb[0].mxu0
    %v2471 = vadd.f32 0.0, %v2470
    %2472 = vmatprep.mubr.bf16.mxu0 0
    %2473 = vmatmul.mubr.bf16.gmra.mrb[0].mxu0 %v2371
    %v2474 = vpop.f32.mrb[0].mxu0
    %v2475 = vadd.f32 0.0, %v2474
    %v2476 = vpop.f32.mrb[0].mxu0
    %v2477 = vadd.f32 0.0, %v2476
    %v2478 = vpop.f32.mrb[0].mxu0
    %v2479 = vadd.f32 0.0, %v2478
    %v2480 = vpop.f32.mrb[0].mxu0
    %v2481 = vadd.f32 0.0, %v2480
    %2482 = vmatprep.mubr.bf16.mxu0 0
    %2483 = vmatmul.mubr.bf16.gmra.mrb[0].mxu0 %v2374
    %v2484 = vpop.f32.mrb[0].mxu0
    %v2485 = vadd.f32 0.0, %v2484
    %v2486 = vpop.f32.mrb[0].mxu0
    %v2487 = vadd.f32 0.0, %v2486
    %v2488 = vpop.f32.mrb[0].mxu0
    %v2489 = vadd.f32 0.0, %v2488
    %v2490 = vpop.f32.mrb[0].mxu0
    %v2491 = vadd.f32 0.0, %v2490
    %2492 = vmatprep.mubr.bf16.mxu0 0
    %2493 = vmatmul.mubr.bf16.gmra.mrb[0].mxu0 %v2377
    %v2494 = vpop.f32.mrb[0].mxu0
    %v2495 = vadd.f32 0.0, %v2494
    %v2496 = vpop.f32.mrb[0].mxu0
    %v2497 = vadd.f32 0.0, %v2496
    %v2498 = vpop.f32.mrb[0].mxu0
    %v2499 = vadd.f32 0.0, %v2498
    %v2500 = vpop.f32.mrb[0].mxu0
    %v2501 = vadd.f32 0.0, %v2500
    %2502 = vmatprep.mubr.bf16.mxu0 0
    %2503 = vmatmul.mubr.bf16.gmra.mrb[0].mxu0 %v2380
    %v2504 = vpop.f32.mrb[0].mxu0
    %v2505 = vadd.f32 0.0, %v2504
    %v2506 = vpop.f32.mrb[0].mxu0
    %v2507 = vadd.f32 0.0, %v2506
    %v2508 = vpop.f32.mrb[0].mxu0
    %v2509 = vadd.f32 0.0, %v2508
    %v2510 = vpop.f32.mrb[0].mxu0
    %v2511 = vadd.f32 0.0, %v2510
    %2512 = vmatprep.mubr.bf16.mxu0 0
    %2513 = vmatmul.mubr.bf16.gmra.mrb[0].mxu0 %v2383
    %v2514 = vpop.f32.mrb[0].mxu0
    %v2515 = vadd.f32 0.0, %v2514
    %v2516 = vpop.f32.mrb[0].mxu0
    %v2517 = vadd.f32 0.0, %v2516
    %v2518 = vpop.f32.mrb[0].mxu0
    %v2519 = vadd.f32 0.0, %v2518
    %v2520 = vpop.f32.mrb[0].mxu0
    %v2521 = vadd.f32 0.0, %v2520
    %2522 = vmatprep.mubr.bf16.mxu0 0
    %2523 = vmatmul.mubr.bf16.gmra.mrb[0].mxu0 %v2386
    %v2524 = vpop.f32.mrb[0].mxu0
    %v2525 = vadd.f32 0.0, %v2524
    %v2526 = vpop.f32.mrb[0].mxu0
    %v2527 = vadd.f32 0.0, %v2526
    %v2528 = vpop.f32.mrb[0].mxu0
    %v2529 = vadd.f32 0.0, %v2528
    %v2530 = vpop.f32.mrb[0].mxu0
    %v2531 = vadd.f32 0.0, %v2530
    %2532 = vmatprep.mubr.bf16.mxu0 0
    %2533 = vmatmul.mubr.bf16.gmra.mrb[0].mxu0 %v2389
    %v2534 = vpop.f32.mrb[0].mxu0
    %v2535 = vadd.f32 0.0, %v2534
    %v2536 = vpop.f32.mrb[0].mxu0
    %v2537 = vadd.f32 0.0, %v2536
    %v2538 = vpop.f32.mrb[0].mxu0
    %v2539 = vadd.f32 0.0, %v2538
    %v2540 = vpop.f32.mrb[0].mxu0
    %v2541 = vadd.f32 0.0, %v2540
    %2542 = vmatprep.mubr.bf16.mxu0 0
    %2543 = vmatmul.mubr.bf16.gmra.mrb[0].mxu0 %v2392
    %v2544 = vpop.f32.mrb[0].mxu0
    %v2545 = vadd.f32 0.0, %v2544
    %v2546 = vpop.f32.mrb[0].mxu0
    %v2547 = vadd.f32 0.0, %v2546
    %v2548 = vpop.f32.mrb[0].mxu0
    %v2549 = vadd.f32 0.0, %v2548
    %v2550 = vpop.f32.mrb[0].mxu0
    %v2551 = vadd.f32 0.0, %v2550
    %2552 = vmatprep.mubr.bf16.mxu0 0
    %2553 = vmatmul.mubr.bf16.gmra.mrb[0].mxu0 %v2395
    %v2554 = vpop.f32.mrb[0].mxu0
    %v2555 = vadd.f32 0.0, %v2554
    %v2556 = vpop.f32.mrb[0].mxu0
    %v2557 = vadd.f32 0.0, %v2556
    %v2558 = vpop.f32.mrb[0].mxu0
    %v2559 = vadd.f32 0.0, %v2558
    %v2560 = vpop.f32.mrb[0].mxu0
    %v2561 = vadd.f32 0.0, %v2560
    %2562 = vmatprep.mubr.bf16.mxu0 0
    %2563 = vmatmul.mubr.bf16.gmra.mrb[0].mxu0 %v2398
    %v2564 = vpop.f32.mrb[0].mxu0
    %v2565 = vadd.f32 0.0, %v2564
    %v2566 = vpop.f32.mrb[0].mxu0
    %v2567 = vadd.f32 0.0, %v2566
    %v2568 = vpop.f32.mrb[0].mxu0
    %v2569 = vadd.f32 0.0, %v2568
    %v2570 = vpop.f32.mrb[0].mxu0
    %v2571 = vadd.f32 0.0, %v2570
    %2572 = vdwg.mxu0
    %v2574 = vsel %vm305, %v2352, 0
    %v2577 = vsel %vm305, %v2353, 0
    %v2580 = vsel %vm305, %v2354, 0
    %v2583 = vsel %vm305, %v2355, 0
    %v2586 = vsel %vm305, %v2356, 0
    %v2589 = vsel %vm305, %v2357, 0
    %2591 = vmatprep.subr.bf16.mxu0 0
    %2592 = vmatpush1.bf16.msra.mxu0 %v976
    %2593 = vmatprep.subr.bf16.mxu0 0
    %2594 = vmatpush1.bf16.msra.mxu0 0
    %2595 = vmatprep.subr.bf16.mxu0 0
    %2596 = vmatpush1.bf16.msra.mxu0 0
    %2597 = vmatprep.subr.bf16.mxu0 0
    %2598 = vmatpush1.bf16.msra.mxu0 0
    %2599 = vmatprep.subr.bf16.mxu0 0
    %2600 = vmatpush1.bf16.msra.mxu0 0
    %2601 = vmatprep.subr.bf16.mxu0 0
    %2602 = vmatpush1.bf16.msra.mxu0 0
    %2603 = vmatprep.subr.bf16.mxu0 0
    %2604 = vmatpush1.bf16.msra.mxu0 0
    %2605 = vmatprep.subr.bf16.mxu0 0
    %2606 = vmatpush1.bf16.msra.mxu0 0
    %2607 = vmatprep.subr.bf16.mxu0 0
    %2608 = vmatpush1.bf16.msra.mxu0 0
    %2609 = vmatprep.subr.bf16.mxu0 0
    %2610 = vmatpush1.bf16.msra.mxu0 0
    %2611 = vmatprep.subr.bf16.mxu0 0
    %2612 = vmatpush1.bf16.msra.mxu0 0
    %2613 = vmatprep.subr.bf16.mxu0 0
    %2614 = vmatpush1.bf16.msra.mxu0 0
    %2615 = vmatprep.subr.bf16.mxu0 0
    %2616 = vmatpush1.bf16.msra.mxu0 0
    %2617 = vmatprep.subr.bf16.mxu0 0
    %2618 = vmatpush1.bf16.msra.mxu0 0
    %2619 = vmatprep.subr.bf16.mxu0 0
    %2620 = vmatpush1.bf16.msra.mxu0 0
    %2621 = vmatprep.subr.bf16.mxu0 0
    %2622 = vmatpush1.bf16.msra.mxu0 0
    %2623 = vmatprep.mubr.bf16.mxu0 0
    %2624 = vmatmul.mubr.bf16.gmra.mrb[0].mxu0 %v2574
    %v2625 = vpop.f32.mrb[0].mxu0
    %v2626 = vadd.f32 0.0, %v2625
    %v2627 = vpop.f32.mrb[0].mxu0
    %v2628 = vpop.f32.mrb[0].mxu0
    %v2629 = vadd.f32 0.0, %v2628
    %v2630 = vpop.f32.mrb[0].mxu0
    %2631 = vmatprep.mubr.bf16.mxu0 0
    %2632 = vmatmul.mubr.bf16.gmra.mrb[0].mxu0 %v2577
    %v2633 = vpop.f32.mrb[0].mxu0
    %v2634 = vadd.f32 0.0, %v2633
    %v2635 = vpop.f32.mrb[0].mxu0
    %v2636 = vpop.f32.mrb[0].mxu0
    %v2637 = vadd.f32 0.0, %v2636
    %v2638 = vpop.f32.mrb[0].mxu0
    %2639 = vmatprep.mubr.bf16.mxu0 0
    %2640 = vmatmul.mubr.bf16.gmra.mrb[0].mxu0 %v2580
    %v2641 = vpop.f32.mrb[0].mxu0
    %v2642 = vadd.f32 0.0, %v2641
    %v2643 = vpop.f32.mrb[0].mxu0
    %v2644 = vpop.f32.mrb[0].mxu0
    %v2645 = vadd.f32 0.0, %v2644
    %v2646 = vpop.f32.mrb[0].mxu0
    %2647 = vmatprep.mubr.bf16.mxu0 0
    %2648 = vmatmul.mubr.bf16.gmra.mrb[0].mxu0 %v2583
    %v2649 = vpop.f32.mrb[0].mxu0
    %v2650 = vadd.f32 0.0, %v2649
    %v2651 = vpop.f32.mrb[0].mxu0
    %v2652 = vpop.f32.mrb[0].mxu0
    %v2653 = vadd.f32 0.0, %v2652
    %v2654 = vpop.f32.mrb[0].mxu0
    %2655 = vmatprep.mubr.bf16.mxu0 0
    %2656 = vmatmul.mubr.bf16.gmra.mrb[0].mxu0 %v2586
    %v2657 = vpop.f32.mrb[0].mxu0
    %v2658 = vadd.f32 0.0, %v2657
    %v2659 = vpop.f32.mrb[0].mxu0
    %v2660 = vpop.f32.mrb[0].mxu0
    %v2661 = vadd.f32 0.0, %v2660
    %v2662 = vpop.f32.mrb[0].mxu0
    %2663 = vmatprep.mubr.bf16.mxu0 0
    %2664 = vmatmul.mubr.bf16.gmra.mrb[0].mxu0 %v2589
    %v2665 = vpop.f32.mrb[0].mxu0
    %v2666 = vadd.f32 0.0, %v2665
    %v2667 = vpop.f32.mrb[0].mxu0
    %v2668 = vpop.f32.mrb[0].mxu0
    %v2669 = vadd.f32 0.0, %v2668
    %v2670 = vpop.f32.mrb[0].mxu0
    %2671 = vdwg.mxu0
    %v2673 = vsel %vm305, %v2338, 0
    %v2676 = vsel %vm305, %v2339, 0
    %v2679 = vsel %vm305, %v2340, 0
    %v2682 = vsel %vm305, %v2341, 0
    %v2685 = vsel %vm305, %v2342, 0
    %v2688 = vsel %vm305, %v2343, 0
    %v2691 = vsel %vm305, %v2344, 0
    %v2694 = vsel %vm305, %v2345, 0
    %v2697 = vsel %vm305, %v2346, 0
    %v2700 = vsel %vm305, %v2347, 0
    %v2703 = vsel %vm305, %v2348, 0
    %v2706 = vsel %vm305, %v2349, 0
    %v2709 = vsel %vm305, %v2350, 0
    %v2712 = vsel %vm305, %v2351, 0
    %2714 = vmatprep.subr.bf16.mxu0 %v1084
    %2715 = vmatpush1.bf16.msra.mxu0 %v1083
    %2716 = vmatprep.subr.bf16.mxu0 0
    %2717 = vmatpush1.bf16.msra.mxu0 0
    %2718 = vmatprep.subr.bf16.mxu0 0
    %2719 = vmatpush1.bf16.msra.mxu0 0
    %2720 = vmatprep.subr.bf16.mxu0 0
    %2721 = vmatpush1.bf16.msra.mxu0 0
    %2722 = vmatprep.subr.bf16.mxu0 0
    %2723 = vmatpush1.bf16.msra.mxu0 0
    %2724 = vmatprep.subr.bf16.mxu0 0
    %2725 = vmatpush1.bf16.msra.mxu0 0
    %2726 = vmatprep.subr.bf16.mxu0 0
    %2727 = vmatpush1.bf16.msra.mxu0 0
    %2728 = vmatprep.subr.bf16.mxu0 0
    %2729 = vmatpush1.bf16.msra.mxu0 0
    %2730 = vmatprep.subr.bf16.mxu0 0
    %2731 = vmatpush1.bf16.msra.mxu0 0
    %2732 = vmatprep.subr.bf16.mxu0 0
    %2733 = vmatpush1.bf16.msra.mxu0 0
    %2734 = vmatprep.subr.bf16.mxu0 0
    %2735 = vmatpush1.bf16.msra.mxu0 0
    %2736 = vmatprep.subr.bf16.mxu0 0
    %2737 = vmatpush1.bf16.msra.mxu0 0
    %2738 = vmatprep.subr.bf16.mxu0 0
    %2739 = vmatpush1.bf16.msra.mxu0 0
    %2740 = vmatprep.subr.bf16.mxu0 0
    %2741 = vmatpush1.bf16.msra.mxu0 0
    %2742 = vmatprep.subr.bf16.mxu0 0
    %2743 = vmatpush1.bf16.msra.mxu0 0
    %2744 = vmatprep.subr.bf16.mxu0 0
    %2745 = vmatpush1.bf16.msra.mxu0 0
    %2746 = vmatprep.mubr.bf16.mxu0 0
    %2747 = vmatmul.mubr.bf16.gmra.mrb[0].mxu0 %v2673
    %v2748 = vpop.f32.mrb[0].mxu0
    %v2749 = vadd.f32 0.0, %v2748
    %v2750 = vpop.f32.mrb[0].mxu0
    %v2751 = vadd.f32 0.0, %v2750
    %v2752 = vpop.f32.mrb[0].mxu0
    %v2753 = vadd.f32 0.0, %v2752
    %v2754 = vpop.f32.mrb[0].mxu0
    %v2755 = vadd.f32 0.0, %v2754
    %2756 = vmatprep.mubr.bf16.mxu0 0
    %2757 = vmatmul.mubr.bf16.gmra.mrb[0].mxu0 %v2676
    %v2758 = vpop.f32.mrb[0].mxu0
    %v2759 = vadd.f32 0.0, %v2758
    %v2760 = vpop.f32.mrb[0].mxu0
    %v2761 = vadd.f32 0.0, %v2760
    %v2762 = vpop.f32.mrb[0].mxu0
    %v2763 = vadd.f32 0.0, %v2762
    %v2764 = vpop.f32.mrb[0].mxu0
    %v2765 = vadd.f32 0.0, %v2764
    %2766 = vmatprep.mubr.bf16.mxu0 0
    %2767 = vmatmul.mubr.bf16.gmra.mrb[0].mxu0 %v2679
    %v2768 = vpop.f32.mrb[0].mxu0
    %v2769 = vadd.f32 0.0, %v2768
    %v2770 = vpop.f32.mrb[0].mxu0
    %v2771 = vadd.f32 0.0, %v2770
    %v2772 = vpop.f32.mrb[0].mxu0
    %v2773 = vadd.f32 0.0, %v2772
    %v2774 = vpop.f32.mrb[0].mxu0
    %v2775 = vadd.f32 0.0, %v2774
    %2776 = vmatprep.mubr.bf16.mxu0 0
    %2777 = vmatmul.mubr.bf16.gmra.mrb[0].mxu0 %v2682
    %v2778 = vpop.f32.mrb[0].mxu0
    %v2779 = vadd.f32 0.0, %v2778
    %v2780 = vpop.f32.mrb[0].mxu0
    %v2781 = vadd.f32 0.0, %v2780
    %v2782 = vpop.f32.mrb[0].mxu0
    %v2783 = vadd.f32 0.0, %v2782
    %v2784 = vpop.f32.mrb[0].mxu0
    %v2785 = vadd.f32 0.0, %v2784
    %2786 = vmatprep.mubr.bf16.mxu0 0
    %2787 = vmatmul.mubr.bf16.gmra.mrb[0].mxu0 %v2685
    %v2788 = vpop.f32.mrb[0].mxu0
    %v2789 = vadd.f32 0.0, %v2788
    %v2790 = vpop.f32.mrb[0].mxu0
    %v2791 = vadd.f32 0.0, %v2790
    %v2792 = vpop.f32.mrb[0].mxu0
    %v2793 = vadd.f32 0.0, %v2792
    %v2794 = vpop.f32.mrb[0].mxu0
    %v2795 = vadd.f32 0.0, %v2794
    %2796 = vmatprep.mubr.bf16.mxu0 0
    %2797 = vmatmul.mubr.bf16.gmra.mrb[0].mxu0 %v2688
    %v2798 = vpop.f32.mrb[0].mxu0
    %v2799 = vadd.f32 0.0, %v2798
    %v2800 = vpop.f32.mrb[0].mxu0
    %v2801 = vadd.f32 0.0, %v2800
    %v2802 = vpop.f32.mrb[0].mxu0
    %v2803 = vadd.f32 0.0, %v2802
    %v2804 = vpop.f32.mrb[0].mxu0
    %v2805 = vadd.f32 0.0, %v2804
    %2806 = vmatprep.mubr.bf16.mxu0 0
    %2807 = vmatmul.mubr.bf16.gmra.mrb[0].mxu0 %v2691
    %v2808 = vpop.f32.mrb[0].mxu0
    %v2809 = vadd.f32 0.0, %v2808
    %v2810 = vpop.f32.mrb[0].mxu0
    %v2811 = vadd.f32 0.0, %v2810
    %v2812 = vpop.f32.mrb[0].mxu0
    %v2813 = vadd.f32 0.0, %v2812
    %v2814 = vpop.f32.mrb[0].mxu0
    %v2815 = vadd.f32 0.0, %v2814
    %2816 = vmatprep.mubr.bf16.mxu0 0
    %2817 = vmatmul.mubr.bf16.gmra.mrb[0].mxu0 %v2694
    %v2818 = vpop.f32.mrb[0].mxu0
    %v2819 = vadd.f32 0.0, %v2818
    %v2820 = vpop.f32.mrb[0].mxu0
    %v2821 = vadd.f32 0.0, %v2820
    %v2822 = vpop.f32.mrb[0].mxu0
    %v2823 = vadd.f32 0.0, %v2822
    %v2824 = vpop.f32.mrb[0].mxu0
    %v2825 = vadd.f32 0.0, %v2824
    %2826 = vmatprep.mubr.bf16.mxu0 0
    %2827 = vmatmul.mubr.bf16.gmra.mrb[0].mxu0 %v2697
    %v2828 = vpop.f32.mrb[0].mxu0
    %v2829 = vadd.f32 0.0, %v2828
    %v2830 = vpop.f32.mrb[0].mxu0
    %v2831 = vadd.f32 0.0, %v2830
    %v2832 = vpop.f32.mrb[0].mxu0
    %v2833 = vadd.f32 0.0, %v2832
    %v2834 = vpop.f32.mrb[0].mxu0
    %v2835 = vadd.f32 0.0, %v2834
    %2836 = vmatprep.mubr.bf16.mxu0 0
    %2837 = vmatmul.mubr.bf16.gmra.mrb[0].mxu0 %v2700
    %v2838 = vpop.f32.mrb[0].mxu0
    %v2839 = vadd.f32 0.0, %v2838
    %v2840 = vpop.f32.mrb[0].mxu0
    %v2841 = vadd.f32 0.0, %v2840
    %v2842 = vpop.f32.mrb[0].mxu0
    %v2843 = vadd.f32 0.0, %v2842
    %v2844 = vpop.f32.mrb[0].mxu0
    %v2845 = vadd.f32 0.0, %v2844
    %2846 = vmatprep.mubr.bf16.mxu0 0
    %2847 = vmatmul.mubr.bf16.gmra.mrb[0].mxu0 %v2703
    %v2848 = vpop.f32.mrb[0].mxu0
    %v2849 = vadd.f32 0.0, %v2848
    %v2850 = vpop.f32.mrb[0].mxu0
    %v2851 = vadd.f32 0.0, %v2850
    %v2852 = vpop.f32.mrb[0].mxu0
    %v2853 = vadd.f32 0.0, %v2852
    %v2854 = vpop.f32.mrb[0].mxu0
    %v2855 = vadd.f32 0.0, %v2854
    %2856 = vmatprep.mubr.bf16.mxu0 0
    %2857 = vmatmul.mubr.bf16.gmra.mrb[0].mxu0 %v2706
    %v2858 = vpop.f32.mrb[0].mxu0
    %v2859 = vadd.f32 0.0, %v2858
    %v2860 = vpop.f32.mrb[0].mxu0
    %v2861 = vadd.f32 0.0, %v2860
    %v2862 = vpop.f32.mrb[0].mxu0
    %v2863 = vadd.f32 0.0, %v2862
    %v2864 = vpop.f32.mrb[0].mxu0
    %v2865 = vadd.f32 0.0, %v2864
    %2866 = vmatprep.mubr.bf16.mxu0 0
    %2867 = vmatmul.mubr.bf16.gmra.mrb[0].mxu0 %v2709
    %v2868 = vpop.f32.mrb[0].mxu0
    %v2869 = vadd.f32 0.0, %v2868
    %v2870 = vpop.f32.mrb[0].mxu0
    %v2871 = vadd.f32 0.0, %v2870
    %v2872 = vpop.f32.mrb[0].mxu0
    %v2873 = vadd.f32 0.0, %v2872
    %v2874 = vpop.f32.mrb[0].mxu0
    %v2875 = vadd.f32 0.0, %v2874
    %2876 = vmatprep.mubr.bf16.mxu0 0
    %2877 = vmatmul.mubr.bf16.gmra.mrb[0].mxu0 %v2712
    %v2878 = vpop.f32.mrb[0].mxu0
    %v2879 = vadd.f32 0.0, %v2878
    %v2880 = vpop.f32.mrb[0].mxu0
    %v2881 = vadd.f32 0.0, %v2880
    %v2882 = vpop.f32.mrb[0].mxu0
    %v2883 = vadd.f32 0.0, %v2882
    %v2884 = vpop.f32.mrb[0].mxu0
    %v2885 = vadd.f32 0.0, %v2884
    %2886 = vdwg.mxu0
    %s2887 = sadd.s32 %s52, 1
    %s2888 = sld [smem:[#allocation3 + %s2887]]
    %s2889 = sld [smem:[#allocation4 + %s2887]]
    %v2890 = vstv %s2888
    %v2891 = vmul.f32 %v2749, %v2890
    %v2892 = vmul.f32 %v2751, %v2890
    %v2893 = vmul.f32 %v2753, %v2890
    %v2894 = vmul.f32 %v2755, %v2890
    %v2895 = vmul.f32 %v2759, %v2890
    %v2896 = vmul.f32 %v2761, %v2890
    %v2897 = vmul.f32 %v2763, %v2890
    %v2898 = vmul.f32 %v2765, %v2890
    %v2899 = vmul.f32 %v2769, %v2890
    %v2900 = vmul.f32 %v2771, %v2890
    %v2901 = vmul.f32 %v2773, %v2890
    %v2902 = vmul.f32 %v2775, %v2890
    %v2903 = vmul.f32 %v2779, %v2890
    %v2904 = vmul.f32 %v2781, %v2890
    %v2905 = vmul.f32 %v2783, %v2890
    %v2906 = vmul.f32 %v2785, %v2890
    %v2907 = vmul.f32 %v2789, %v2890
    %v2908 = vmul.f32 %v2791, %v2890
    %v2909 = vmul.f32 %v2793, %v2890
    %v2910 = vmul.f32 %v2795, %v2890
    %v2911 = vmul.f32 %v2799, %v2890
    %v2912 = vmul.f32 %v2801, %v2890
    %v2913 = vmul.f32 %v2803, %v2890
    %v2914 = vmul.f32 %v2805, %v2890
    %v2915 = vmul.f32 %v2809, %v2890
    %v2916 = vmul.f32 %v2811, %v2890
    %v2917 = vmul.f32 %v2813, %v2890
    %v2918 = vmul.f32 %v2815, %v2890
    %v2919 = vmul.f32 %v2819, %v2890
    %v2920 = vmul.f32 %v2821, %v2890
    %v2921 = vmul.f32 %v2823, %v2890
    %v2922 = vmul.f32 %v2825, %v2890
    %v2923 = vmul.f32 %v2829, %v2890
    %v2924 = vmul.f32 %v2831, %v2890
    %v2925 = vmul.f32 %v2833, %v2890
    %v2926 = vmul.f32 %v2835, %v2890
    %v2927 = vmul.f32 %v2839, %v2890
    %v2928 = vmul.f32 %v2841, %v2890
    %v2929 = vmul.f32 %v2843, %v2890
    %v2930 = vmul.f32 %v2845, %v2890
    %v2931 = vmul.f32 %v2849, %v2890
    %v2932 = vmul.f32 %v2851, %v2890
    %v2933 = vmul.f32 %v2853, %v2890
    %v2934 = vmul.f32 %v2855, %v2890
    %v2935 = vmul.f32 %v2859, %v2890
    %v2936 = vmul.f32 %v2861, %v2890
    %v2937 = vmul.f32 %v2863, %v2890
    %v2938 = vmul.f32 %v2865, %v2890
    %v2939 = vmul.f32 %v2869, %v2890
    %v2940 = vmul.f32 %v2871, %v2890
    %v2941 = vmul.f32 %v2873, %v2890
    %v2942 = vmul.f32 %v2875, %v2890
    %v2943 = vmul.f32 %v2879, %v2890
    %v2944 = vmul.f32 %v2881, %v2890
    %v2945 = vmul.f32 %v2883, %v2890
    %v2946 = vmul.f32 %v2885, %v2890
    %v2947 = vstv %s2889
    %v2948 = vadd.f32 %v2891, %v2947
    %v2949 = vadd.f32 %v2892, %v2947
    %v2950 = vadd.f32 %v2893, %v2947
    %v2951 = vadd.f32 %v2894, %v2947
    %v2952 = vadd.f32 %v2895, %v2947
    %v2953 = vadd.f32 %v2896, %v2947
    %v2954 = vadd.f32 %v2897, %v2947
    %v2955 = vadd.f32 %v2898, %v2947
    %v2956 = vadd.f32 %v2899, %v2947
    %v2957 = vadd.f32 %v2900, %v2947
    %v2958 = vadd.f32 %v2901, %v2947
    %v2959 = vadd.f32 %v2902, %v2947
    %v2960 = vadd.f32 %v2903, %v2947
    %v2961 = vadd.f32 %v2904, %v2947
    %v2962 = vadd.f32 %v2905, %v2947
    %v2963 = vadd.f32 %v2906, %v2947
    %v2964 = vadd.f32 %v2907, %v2947
    %v2965 = vadd.f32 %v2908, %v2947
    %v2966 = vadd.f32 %v2909, %v2947
    %v2967 = vadd.f32 %v2910, %v2947
    %v2968 = vadd.f32 %v2911, %v2947
    %v2969 = vadd.f32 %v2912, %v2947
    %v2970 = vadd.f32 %v2913, %v2947
    %v2971 = vadd.f32 %v2914, %v2947
    %v2972 = vadd.f32 %v2915, %v2947
    %v2973 = vadd.f32 %v2916, %v2947
    %v2974 = vadd.f32 %v2917, %v2947
    %v2975 = vadd.f32 %v2918, %v2947
    %v2976 = vadd.f32 %v2919, %v2947
    %v2977 = vadd.f32 %v2920, %v2947
    %v2978 = vadd.f32 %v2921, %v2947
    %v2979 = vadd.f32 %v2922, %v2947
    %v2980 = vadd.f32 %v2923, %v2947
    %v2981 = vadd.f32 %v2924, %v2947
    %v2982 = vadd.f32 %v2925, %v2947
    %v2983 = vadd.f32 %v2926, %v2947
    %v2984 = vadd.f32 %v2927, %v2947
    %v2985 = vadd.f32 %v2928, %v2947
    %v2986 = vadd.f32 %v2929, %v2947
    %v2987 = vadd.f32 %v2930, %v2947
    %v2988 = vadd.f32 %v2931, %v2947
    %v2989 = vadd.f32 %v2932, %v2947
    %v2990 = vadd.f32 %v2933, %v2947
    %v2991 = vadd.f32 %v2934, %v2947
    %v2992 = vadd.f32 %v2935, %v2947
    %v2993 = vadd.f32 %v2936, %v2947
    %v2994 = vadd.f32 %v2937, %v2947
    %v2995 = vadd.f32 %v2938, %v2947
    %v2996 = vadd.f32 %v2939, %v2947
    %v2997 = vadd.f32 %v2940, %v2947
    %v2998 = vadd.f32 %v2941, %v2947
    %v2999 = vadd.f32 %v2942, %v2947
    %v3000 = vadd.f32 %v2943, %v2947
    %v3001 = vadd.f32 %v2944, %v2947
    %v3002 = vadd.f32 %v2945, %v2947
    %v3003 = vadd.f32 %v2946, %v2947
    %v3004 = vpack.c.bf16 %v2950, %v2948
    %v3005 = vpack.c.bf16 %v2951, %v2949
    %v3006 = vpack.c.bf16 %v2954, %v2952
    %v3007 = vpack.c.bf16 %v2955, %v2953
    %v3008 = vpack.c.bf16 %v2958, %v2956
    %v3009 = vpack.c.bf16 %v2959, %v2957
    %v3010 = vpack.c.bf16 %v2962, %v2960
    %v3011 = vpack.c.bf16 %v2963, %v2961
    %v3012 = vpack.c.bf16 %v2966, %v2964
    %v3013 = vpack.c.bf16 %v2967, %v2965
    %v3014 = vpack.c.bf16 %v2970, %v2968
    %v3015 = vpack.c.bf16 %v2971, %v2969
    %v3016 = vpack.c.bf16 %v2974, %v2972
    %v3017 = vpack.c.bf16 %v2975, %v2973
    %v3018 = vpack.c.bf16 %v2978, %v2976
    %v3019 = vpack.c.bf16 %v2979, %v2977
    %v3020 = vpack.c.bf16 %v2982, %v2980
    %v3021 = vpack.c.bf16 %v2983, %v2981
    %v3022 = vpack.c.bf16 %v2986, %v2984
    %v3023 = vpack.c.bf16 %v2987, %v2985
    %v3024 = vpack.c.bf16 %v2990, %v2988
    %v3025 = vpack.c.bf16 %v2991, %v2989
    %v3026 = vpack.c.bf16 %v2994, %v2992
    %v3027 = vpack.c.bf16 %v2995, %v2993
    %v3028 = vpack.c.bf16 %v2998, %v2996
    %v3029 = vpack.c.bf16 %v2999, %v2997
    %v3030 = vpack.c.bf16 %v3002, %v3000
    %v3031 = vpack.c.bf16 %v3003, %v3001
    %v3060 = vunpack.c.l.b16 %v3004
    %v3061 = vunpack.c.l.b16 %v3005
    %v3062 = vunpack.c.h.b16 %v3004
    %v3063 = vunpack.c.h.b16 %v3005
    %v3064 = vunpack.c.l.b16 %v3006
    %v3065 = vunpack.c.l.b16 %v3007
    %v3066 = vunpack.c.h.b16 %v3006
    %v3067 = vunpack.c.h.b16 %v3007
    %v3068 = vunpack.c.l.b16 %v3008
    %v3069 = vunpack.c.l.b16 %v3009
    %v3070 = vunpack.c.h.b16 %v3008
    %v3071 = vunpack.c.h.b16 %v3009
    %v3072 = vunpack.c.l.b16 %v3010
    %v3073 = vunpack.c.l.b16 %v3011
    %v3074 = vunpack.c.h.b16 %v3010
    %v3075 = vunpack.c.h.b16 %v3011
    %v3076 = vunpack.c.l.b16 %v3012
    %v3077 = vunpack.c.l.b16 %v3013
    %v3078 = vunpack.c.h.b16 %v3012
    %v3079 = vunpack.c.h.b16 %v3013
    %v3080 = vunpack.c.l.b16 %v3014
    %v3081 = vunpack.c.l.b16 %v3015
    %v3082 = vunpack.c.h.b16 %v3014
    %v3083 = vunpack.c.h.b16 %v3015
    %v3084 = vunpack.c.l.b16 %v3016
    %v3085 = vunpack.c.l.b16 %v3017
    %v3086 = vunpack.c.h.b16 %v3016
    %v3087 = vunpack.c.h.b16 %v3017
    %v3088 = vunpack.c.l.b16 %v3018
    %v3089 = vunpack.c.l.b16 %v3019
    %v3090 = vunpack.c.h.b16 %v3018
    %v3091 = vunpack.c.h.b16 %v3019
    %v3092 = vunpack.c.l.b16 %v3020
    %v3093 = vunpack.c.l.b16 %v3021
    %v3094 = vunpack.c.h.b16 %v3020
    %v3095 = vunpack.c.h.b16 %v3021
    %v3096 = vunpack.c.l.b16 %v3022
    %v3097 = vunpack.c.l.b16 %v3023
    %v3098 = vunpack.c.h.b16 %v3022
    %v3099 = vunpack.c.h.b16 %v3023
    %v3100 = vunpack.c.l.b16 %v3024
    %v3101 = vunpack.c.l.b16 %v3025
    %v3102 = vunpack.c.h.b16 %v3024
    %v3103 = vunpack.c.h.b16 %v3025
    %v3104 = vunpack.c.l.b16 %v3026
    %v3105 = vunpack.c.l.b16 %v3027
    %v3106 = vunpack.c.h.b16 %v3026
    %v3107 = vunpack.c.h.b16 %v3027
    %v3108 = vunpack.c.l.b16 %v3028
    %v3109 = vunpack.c.l.b16 %v3029
    %v3110 = vunpack.c.h.b16 %v3028
    %v3111 = vunpack.c.h.b16 %v3029
    %v3112 = vunpack.c.l.b16 %v3030
    %v3113 = vunpack.c.l.b16 %v3031
    %v3114 = vunpack.c.h.b16 %v3030
    %v3115 = vunpack.c.h.b16 %v3031
    %v3116 = vpack.c.b16 %v3061, %v3060
    %v3117 = vpack.c.b16 %v3063, %v3062
    %v3118 = vpack.c.b16 %v3065, %v3064
    %v3119 = vpack.c.b16 %v3067, %v3066
    %v3120 = vpack.c.b16 %v3069, %v3068
    %v3121 = vpack.c.b16 %v3071, %v3070
    %v3122 = vpack.c.b16 %v3073, %v3072
    %v3123 = vpack.c.b16 %v3075, %v3074
    %v3124 = vpack.c.b16 %v3077, %v3076
    %v3125 = vpack.c.b16 %v3079, %v3078
    %v3126 = vpack.c.b16 %v3081, %v3080
    %v3127 = vpack.c.b16 %v3083, %v3082
    %v3128 = vpack.c.b16 %v3085, %v3084
    %v3129 = vpack.c.b16 %v3087, %v3086
    %v3130 = vpack.c.b16 %v3089, %v3088
    %v3131 = vpack.c.b16 %v3091, %v3090
    %v3132 = vpack.c.b16 %v3093, %v3092
    %v3133 = vpack.c.b16 %v3095, %v3094
    %v3134 = vpack.c.b16 %v3097, %v3096
    %v3135 = vpack.c.b16 %v3099, %v3098
    %v3136 = vpack.c.b16 %v3101, %v3100
    %v3137 = vpack.c.b16 %v3103, %v3102
    %v3138 = vpack.c.b16 %v3105, %v3104
    %v3139 = vpack.c.b16 %v3107, %v3106
    %v3140 = vpack.c.b16 %v3109, %v3108
    %v3141 = vpack.c.b16 %v3111, %v3110
    %v3142 = vpack.c.b16 %v3113, %v3112
    %v3143 = vpack.c.b16 %v3115, %v3114
    %s3172 = scalar_lea.vmem [#allocation8], 224
    %3173 = vst.msk [vmem:[%s3172] sm:$0xff] %vm1588, %v3116
    %3174 = vst.msk [vmem:[%s3172 + $0x8] sm:$0xff] %vm1588, %v3117
    %3175 = vst.msk [vmem:[%s3172 + $0x10] sm:$0xff] %vm1588, %v3118
    %3176 = vst.msk [vmem:[%s3172 + $0x18] sm:$0xff] %vm1588, %v3119
    %3177 = vst.msk [vmem:[%s3172 + $0x20] sm:$0xff] %vm1588, %v3120
    %3178 = vst.msk [vmem:[%s3172 + $0x28] sm:$0xff] %vm1588, %v3121
    %3179 = vst.msk [vmem:[%s3172 + $0x30] sm:$0xff] %vm1588, %v3122
    %3180 = vst.msk [vmem:[%s3172 + $0x38] sm:$0xff] %vm1588, %v3123
    %3181 = vst.msk [vmem:[%s3172 + $0x40] sm:$0xff] %vm1588, %v3124
    %3182 = vst.msk [vmem:[%s3172 + $0x48] sm:$0xff] %vm1588, %v3125
    %3183 = vst.msk [vmem:[%s3172 + $0x50] sm:$0xff] %vm1588, %v3126
    %3184 = vst.msk [vmem:[%s3172 + $0x58] sm:$0xff] %vm1588, %v3127
    %3185 = vst.msk [vmem:[%s3172 + $0x60] sm:$0xff] %vm1588, %v3128
    %3186 = vst.msk [vmem:[%s3172 + $0x68] sm:$0xff] %vm1588, %v3129
    %3187 = vst.msk [vmem:[%s3172 + $0x70] sm:$0xff] %vm1588, %v3130
    %3188 = vst.msk [vmem:[%s3172 + $0x78] sm:$0xff] %vm1588, %v3131
    %3189 = vst.msk [vmem:[%s3172 + $0x80] sm:$0xff] %vm1588, %v3132
    %3190 = vst.msk [vmem:[%s3172 + $0x88] sm:$0xff] %vm1588, %v3133
    %3191 = vst.msk [vmem:[%s3172 + $0x90] sm:$0xff] %vm1588, %v3134
    %3192 = vst.msk [vmem:[%s3172 + $0x98] sm:$0xff] %vm1588, %v3135
    %3193 = vst.msk [vmem:[%s3172 + $0xa0] sm:$0xff] %vm1588, %v3136
    %3194 = vst.msk [vmem:[%s3172 + $0xa8] sm:$0xff] %vm1588, %v3137
    %3195 = vst.msk [vmem:[%s3172 + $0xb0] sm:$0xff] %vm1588, %v3138
    %3196 = vst.msk [vmem:[%s3172 + $0xb8] sm:$0xff] %vm1588, %v3139
    %3197 = vst.msk [vmem:[%s3172 + $0xc0] sm:$0xff] %vm1588, %v3140
    %3198 = vst.msk [vmem:[%s3172 + $0xc8] sm:$0xff] %vm1588, %v3141
    %3199 = vst.msk [vmem:[%s3172 + $0xd0] sm:$0xff] %vm1588, %v3142
    %3200 = vst.msk [vmem:[%s3172 + $0xd8] sm:$0xff] %vm1588, %v3143
    %v3201 = vmul.f32 %v2435, %v2890
    %v3202 = vmul.f32 %v2437, %v2890
    %v3203 = vmul.f32 %v2439, %v2890
    %v3204 = vmul.f32 %v2441, %v2890
    %v3205 = vmul.f32 %v2445, %v2890
    %v3206 = vmul.f32 %v2447, %v2890
    %v3207 = vmul.f32 %v2449, %v2890
    %v3208 = vmul.f32 %v2451, %v2890
    %v3209 = vmul.f32 %v2455, %v2890
    %v3210 = vmul.f32 %v2457, %v2890
    %v3211 = vmul.f32 %v2459, %v2890
    %v3212 = vmul.f32 %v2461, %v2890
    %v3213 = vmul.f32 %v2465, %v2890
    %v3214 = vmul.f32 %v2467, %v2890
    %v3215 = vmul.f32 %v2469, %v2890
    %v3216 = vmul.f32 %v2471, %v2890
    %v3217 = vmul.f32 %v2475, %v2890
    %v3218 = vmul.f32 %v2477, %v2890
    %v3219 = vmul.f32 %v2479, %v2890
    %v3220 = vmul.f32 %v2481, %v2890
    %v3221 = vmul.f32 %v2485, %v2890
    %v3222 = vmul.f32 %v2487, %v2890
    %v3223 = vmul.f32 %v2489, %v2890
    %v3224 = vmul.f32 %v2491, %v2890
    %v3225 = vmul.f32 %v2495, %v2890
    %v3226 = vmul.f32 %v2497, %v2890
    %v3227 = vmul.f32 %v2499, %v2890
    %v3228 = vmul.f32 %v2501, %v2890
    %v3229 = vmul.f32 %v2505, %v2890
    %v3230 = vmul.f32 %v2507, %v2890
    %v3231 = vmul.f32 %v2509, %v2890
    %v3232 = vmul.f32 %v2511, %v2890
    %v3233 = vmul.f32 %v2515, %v2890
    %v3234 = vmul.f32 %v2517, %v2890
    %v3235 = vmul.f32 %v2519, %v2890
    %v3236 = vmul.f32 %v2521, %v2890
    %v3237 = vmul.f32 %v2525, %v2890
    %v3238 = vmul.f32 %v2527, %v2890
    %v3239 = vmul.f32 %v2529, %v2890
    %v3240 = vmul.f32 %v2531, %v2890
    %v3241 = vmul.f32 %v2535, %v2890
    %v3242 = vmul.f32 %v2537, %v2890
    %v3243 = vmul.f32 %v2539, %v2890
    %v3244 = vmul.f32 %v2541, %v2890
    %v3245 = vmul.f32 %v2545, %v2890
    %v3246 = vmul.f32 %v2547, %v2890
    %v3247 = vmul.f32 %v2549, %v2890
    %v3248 = vmul.f32 %v2551, %v2890
    %v3249 = vmul.f32 %v2555, %v2890
    %v3250 = vmul.f32 %v2557, %v2890
    %v3251 = vmul.f32 %v2559, %v2890
    %v3252 = vmul.f32 %v2561, %v2890
    %v3253 = vmul.f32 %v2565, %v2890
    %v3254 = vmul.f32 %v2567, %v2890
    %v3255 = vmul.f32 %v2569, %v2890
    %v3256 = vmul.f32 %v2571, %v2890
    %v3257 = vadd.f32 %v3201, %v2947
    %v3258 = vadd.f32 %v3202, %v2947
    %v3259 = vadd.f32 %v3203, %v2947
    %v3260 = vadd.f32 %v3204, %v2947
    %v3261 = vadd.f32 %v3205, %v2947
    %v3262 = vadd.f32 %v3206, %v2947
    %v3263 = vadd.f32 %v3207, %v2947
    %v3264 = vadd.f32 %v3208, %v2947
    %v3265 = vadd.f32 %v3209, %v2947
    %v3266 = vadd.f32 %v3210, %v2947
    %v3267 = vadd.f32 %v3211, %v2947
    %v3268 = vadd.f32 %v3212, %v2947
    %v3269 = vadd.f32 %v3213, %v2947
    %v3270 = vadd.f32 %v3214, %v2947
    %v3271 = vadd.f32 %v3215, %v2947
    %v3272 = vadd.f32 %v3216, %v2947
    %v3273 = vadd.f32 %v3217, %v2947
    %v3274 = vadd.f32 %v3218, %v2947
    %v3275 = vadd.f32 %v3219, %v2947
    %v3276 = vadd.f32 %v3220, %v2947
    %v3277 = vadd.f32 %v3221, %v2947
    %v3278 = vadd.f32 %v3222, %v2947
    %v3279 = vadd.f32 %v3223, %v2947
    %v3280 = vadd.f32 %v3224, %v2947
    %v3281 = vadd.f32 %v3225, %v2947
    %v3282 = vadd.f32 %v3226, %v2947
    %v3283 = vadd.f32 %v3227, %v2947
    %v3284 = vadd.f32 %v3228, %v2947
    %v3285 = vadd.f32 %v3229, %v2947
    %v3286 = vadd.f32 %v3230, %v2947
    %v3287 = vadd.f32 %v3231, %v2947
    %v3288 = vadd.f32 %v3232, %v2947
    %v3289 = vadd.f32 %v3233, %v2947
    %v3290 = vadd.f32 %v3234, %v2947
    %v3291 = vadd.f32 %v3235, %v2947
    %v3292 = vadd.f32 %v3236, %v2947
    %v3293 = vadd.f32 %v3237, %v2947
    %v3294 = vadd.f32 %v3238, %v2947
    %v3295 = vadd.f32 %v3239, %v2947
    %v3296 = vadd.f32 %v3240, %v2947
    %v3297 = vadd.f32 %v3241, %v2947
    %v3298 = vadd.f32 %v3242, %v2947
    %v3299 = vadd.f32 %v3243, %v2947
    %v3300 = vadd.f32 %v3244, %v2947
    %v3301 = vadd.f32 %v3245, %v2947
    %v3302 = vadd.f32 %v3246, %v2947
    %v3303 = vadd.f32 %v3247, %v2947
    %v3304 = vadd.f32 %v3248, %v2947
    %v3305 = vadd.f32 %v3249, %v2947
    %v3306 = vadd.f32 %v3250, %v2947
    %v3307 = vadd.f32 %v3251, %v2947
    %v3308 = vadd.f32 %v3252, %v2947
    %v3309 = vadd.f32 %v3253, %v2947
    %v3310 = vadd.f32 %v3254, %v2947
    %v3311 = vadd.f32 %v3255, %v2947
    %v3312 = vadd.f32 %v3256, %v2947
    %v3313 = vpack.c.bf16 %v3259, %v3257
    %v3314 = vpack.c.bf16 %v3260, %v3258
    %v3315 = vpack.c.bf16 %v3263, %v3261
    %v3316 = vpack.c.bf16 %v3264, %v3262
    %v3317 = vpack.c.bf16 %v3267, %v3265
    %v3318 = vpack.c.bf16 %v3268, %v3266
    %v3319 = vpack.c.bf16 %v3271, %v3269
    %v3320 = vpack.c.bf16 %v3272, %v3270
    %v3321 = vpack.c.bf16 %v3275, %v3273
    %v3322 = vpack.c.bf16 %v3276, %v3274
    %v3323 = vpack.c.bf16 %v3279, %v3277
    %v3324 = vpack.c.bf16 %v3280, %v3278
    %v3325 = vpack.c.bf16 %v3283, %v3281
    %v3326 = vpack.c.bf16 %v3284, %v3282
    %v3327 = vpack.c.bf16 %v3287, %v3285
    %v3328 = vpack.c.bf16 %v3288, %v3286
    %v3329 = vpack.c.bf16 %v3291, %v3289
    %v3330 = vpack.c.bf16 %v3292, %v3290
    %v3331 = vpack.c.bf16 %v3295, %v3293
    %v3332 = vpack.c.bf16 %v3296, %v3294
    %v3333 = vpack.c.bf16 %v3299, %v3297
    %v3334 = vpack.c.bf16 %v3300, %v3298
    %v3335 = vpack.c.bf16 %v3303, %v3301
    %v3336 = vpack.c.bf16 %v3304, %v3302
    %v3337 = vpack.c.bf16 %v3307, %v3305
    %v3338 = vpack.c.bf16 %v3308, %v3306
    %v3339 = vpack.c.bf16 %v3311, %v3309
    %v3340 = vpack.c.bf16 %v3312, %v3310
    %v3369 = vunpack.c.l.b16 %v3313
    %v3370 = vunpack.c.l.b16 %v3314
    %v3371 = vunpack.c.h.b16 %v3313
    %v3372 = vunpack.c.h.b16 %v3314
    %v3373 = vunpack.c.l.b16 %v3315
    %v3374 = vunpack.c.l.b16 %v3316
    %v3375 = vunpack.c.h.b16 %v3315
    %v3376 = vunpack.c.h.b16 %v3316
    %v3377 = vunpack.c.l.b16 %v3317
    %v3378 = vunpack.c.l.b16 %v3318
    %v3379 = vunpack.c.h.b16 %v3317
    %v3380 = vunpack.c.h.b16 %v3318
    %v3381 = vunpack.c.l.b16 %v3319
    %v3382 = vunpack.c.l.b16 %v3320
    %v3383 = vunpack.c.h.b16 %v3319
    %v3384 = vunpack.c.h.b16 %v3320
    %v3385 = vunpack.c.l.b16 %v3321
    %v3386 = vunpack.c.l.b16 %v3322
    %v3387 = vunpack.c.h.b16 %v3321
    %v3388 = vunpack.c.h.b16 %v3322
    %v3389 = vunpack.c.l.b16 %v3323
    %v3390 = vunpack.c.l.b16 %v3324
    %v3391 = vunpack.c.h.b16 %v3323
    %v3392 = vunpack.c.h.b16 %v3324
    %v3393 = vunpack.c.l.b16 %v3325
    %v3394 = vunpack.c.l.b16 %v3326
    %v3395 = vunpack.c.h.b16 %v3325
    %v3396 = vunpack.c.h.b16 %v3326
    %v3397 = vunpack.c.l.b16 %v3327
    %v3398 = vunpack.c.l.b16 %v3328
    %v3399 = vunpack.c.h.b16 %v3327
    %v3400 = vunpack.c.h.b16 %v3328
    %v3401 = vunpack.c.l.b16 %v3329
    %v3402 = vunpack.c.l.b16 %v3330
    %v3403 = vunpack.c.h.b16 %v3329
    %v3404 = vunpack.c.h.b16 %v3330
    %v3405 = vunpack.c.l.b16 %v3331
    %v3406 = vunpack.c.l.b16 %v3332
    %v3407 = vunpack.c.h.b16 %v3331
    %v3408 = vunpack.c.h.b16 %v3332
    %v3409 = vunpack.c.l.b16 %v3333
    %v3410 = vunpack.c.l.b16 %v3334
    %v3411 = vunpack.c.h.b16 %v3333
    %v3412 = vunpack.c.h.b16 %v3334
    %v3413 = vunpack.c.l.b16 %v3335
    %v3414 = vunpack.c.l.b16 %v3336
    %v3415 = vunpack.c.h.b16 %v3335
    %v3416 = vunpack.c.h.b16 %v3336
    %v3417 = vunpack.c.l.b16 %v3337
    %v3418 = vunpack.c.l.b16 %v3338
    %v3419 = vunpack.c.h.b16 %v3337
    %v3420 = vunpack.c.h.b16 %v3338
    %v3421 = vunpack.c.l.b16 %v3339
    %v3422 = vunpack.c.l.b16 %v3340
    %v3423 = vunpack.c.h.b16 %v3339
    %v3424 = vunpack.c.h.b16 %v3340
    %v3425 = vpack.c.b16 %v3370, %v3369
    %v3426 = vpack.c.b16 %v3372, %v3371
    %v3427 = vpack.c.b16 %v3374, %v3373
    %v3428 = vpack.c.b16 %v3376, %v3375
    %v3429 = vpack.c.b16 %v3378, %v3377
    %v3430 = vpack.c.b16 %v3380, %v3379
    %v3431 = vpack.c.b16 %v3382, %v3381
    %v3432 = vpack.c.b16 %v3384, %v3383
    %v3433 = vpack.c.b16 %v3386, %v3385
    %v3434 = vpack.c.b16 %v3388, %v3387
    %v3435 = vpack.c.b16 %v3390, %v3389
    %v3436 = vpack.c.b16 %v3392, %v3391
    %v3437 = vpack.c.b16 %v3394, %v3393
    %v3438 = vpack.c.b16 %v3396, %v3395
    %v3439 = vpack.c.b16 %v3398, %v3397
    %v3440 = vpack.c.b16 %v3400, %v3399
    %v3441 = vpack.c.b16 %v3402, %v3401
    %v3442 = vpack.c.b16 %v3404, %v3403
    %v3443 = vpack.c.b16 %v3406, %v3405
    %v3444 = vpack.c.b16 %v3408, %v3407
    %v3445 = vpack.c.b16 %v3410, %v3409
    %v3446 = vpack.c.b16 %v3412, %v3411
    %v3447 = vpack.c.b16 %v3414, %v3413
    %v3448 = vpack.c.b16 %v3416, %v3415
    %v3449 = vpack.c.b16 %v3418, %v3417
    %v3450 = vpack.c.b16 %v3420, %v3419
    %v3451 = vpack.c.b16 %v3422, %v3421
    %v3452 = vpack.c.b16 %v3424, %v3423
    %s3481 = scalar_lea.vmem [#allocation9], 224
    %3482 = vst.msk [vmem:[%s3481] sm:$0xff] %vm1588, %v3425
    %3483 = vst.msk [vmem:[%s3481 + $0x8] sm:$0xff] %vm1588, %v3426
    %3484 = vst.msk [vmem:[%s3481 + $0x10] sm:$0xff] %vm1588, %v3427
    %3485 = vst.msk [vmem:[%s3481 + $0x18] sm:$0xff] %vm1588, %v3428
    %3486 = vst.msk [vmem:[%s3481 + $0x20] sm:$0xff] %vm1588, %v3429
    %3487 = vst.msk [vmem:[%s3481 + $0x28] sm:$0xff] %vm1588, %v3430
    %3488 = vst.msk [vmem:[%s3481 + $0x30] sm:$0xff] %vm1588, %v3431
    %3489 = vst.msk [vmem:[%s3481 + $0x38] sm:$0xff] %vm1588, %v3432
    %3490 = vst.msk [vmem:[%s3481 + $0x40] sm:$0xff] %vm1588, %v3433
    %3491 = vst.msk [vmem:[%s3481 + $0x48] sm:$0xff] %vm1588, %v3434
    %3492 = vst.msk [vmem:[%s3481 + $0x50] sm:$0xff] %vm1588, %v3435
    %3493 = vst.msk [vmem:[%s3481 + $0x58] sm:$0xff] %vm1588, %v3436
    %3494 = vst.msk [vmem:[%s3481 + $0x60] sm:$0xff] %vm1588, %v3437
    %3495 = vst.msk [vmem:[%s3481 + $0x68] sm:$0xff] %vm1588, %v3438
    %3496 = vst.msk [vmem:[%s3481 + $0x70] sm:$0xff] %vm1588, %v3439
    %3497 = vst.msk [vmem:[%s3481 + $0x78] sm:$0xff] %vm1588, %v3440
    %3498 = vst.msk [vmem:[%s3481 + $0x80] sm:$0xff] %vm1588, %v3441
    %3499 = vst.msk [vmem:[%s3481 + $0x88] sm:$0xff] %vm1588, %v3442
    %3500 = vst.msk [vmem:[%s3481 + $0x90] sm:$0xff] %vm1588, %v3443
    %3501 = vst.msk [vmem:[%s3481 + $0x98] sm:$0xff] %vm1588, %v3444
    %3502 = vst.msk [vmem:[%s3481 + $0xa0] sm:$0xff] %vm1588, %v3445
    %3503 = vst.msk [vmem:[%s3481 + $0xa8] sm:$0xff] %vm1588, %v3446
    %3504 = vst.msk [vmem:[%s3481 + $0xb0] sm:$0xff] %vm1588, %v3447
    %3505 = vst.msk [vmem:[%s3481 + $0xb8] sm:$0xff] %vm1588, %v3448
    %3506 = vst.msk [vmem:[%s3481 + $0xc0] sm:$0xff] %vm1588, %v3449
    %3507 = vst.msk [vmem:[%s3481 + $0xc8] sm:$0xff] %vm1588, %v3450
    %3508 = vst.msk [vmem:[%s3481 + $0xd0] sm:$0xff] %vm1588, %v3451
    %3509 = vst.msk [vmem:[%s3481 + $0xd8] sm:$0xff] %vm1588, %v3452
    %v3510 = vmul.f32 %v2626, %v2890
    %v3511 = vmul.f32 %v2629, %v2890
    %v3512 = vmul.f32 %v2634, %v2890
    %v3513 = vmul.f32 %v2637, %v2890
    %v3514 = vmul.f32 %v2642, %v2890
    %v3515 = vmul.f32 %v2645, %v2890
    %v3516 = vmul.f32 %v2650, %v2890
    %v3517 = vmul.f32 %v2653, %v2890
    %v3518 = vmul.f32 %v2658, %v2890
    %v3519 = vmul.f32 %v2661, %v2890
    %v3520 = vmul.f32 %v2666, %v2890
    %v3521 = vmul.f32 %v2669, %v2890
    %v3522 = vadd.f32 %v3510, %v2947
    %v3523 = vadd.f32 %v3511, %v2947
    %v3524 = vadd.f32 %v3512, %v2947
    %v3525 = vadd.f32 %v3513, %v2947
    %v3526 = vadd.f32 %v3514, %v2947
    %v3527 = vadd.f32 %v3515, %v2947
    %v3528 = vadd.f32 %v3516, %v2947
    %v3529 = vadd.f32 %v3517, %v2947
    %v3530 = vadd.f32 %v3518, %v2947
    %v3531 = vadd.f32 %v3519, %v2947
    %v3532 = vadd.f32 %v3520, %v2947
    %v3533 = vadd.f32 %v3521, %v2947
    %v3534 = vpack.c.bf16 %v3523, %v3522
    %v3535 = vpack.c.bf16 %v3525, %v3524
    %v3536 = vpack.c.bf16 %v3527, %v3526
    %v3537 = vpack.c.bf16 %v3529, %v3528
    %v3538 = vpack.c.bf16 %v3531, %v3530
    %v3539 = vpack.c.bf16 %v3533, %v3532
    %v3546 = vunpack.c.l.b16 %v3534
    %v3547 = vunpack.c.h.b16 %v3534
    %v3548 = vunpack.c.l.b16 %v3535
    %v3549 = vunpack.c.h.b16 %v3535
    %v3550 = vunpack.c.l.b16 %v3536
    %v3551 = vunpack.c.h.b16 %v3536
    %v3552 = vunpack.c.l.b16 %v3537
    %v3553 = vunpack.c.h.b16 %v3537
    %v3554 = vunpack.c.l.b16 %v3538
    %v3555 = vunpack.c.h.b16 %v3538
    %v3556 = vunpack.c.l.b16 %v3539
    %v3557 = vunpack.c.h.b16 %v3539
    %v3558 = vpack.c.b16 %v3546, %v3546
    %v3559 = vpack.c.b16 %v3547, %v3547
    %v3560 = vpack.c.b16 %v3548, %v3548
    %v3561 = vpack.c.b16 %v3549, %v3549
    %v3562 = vpack.c.b16 %v3550, %v3550
    %v3563 = vpack.c.b16 %v3551, %v3551
    %v3564 = vpack.c.b16 %v3552, %v3552
    %v3565 = vpack.c.b16 %v3553, %v3553
    %v3566 = vpack.c.b16 %v3554, %v3554
    %v3567 = vpack.c.b16 %v3555, %v3555
    %v3568 = vpack.c.b16 %v3556, %v3556
    %v3569 = vpack.c.b16 %v3557, %v3557
    %s3582 = scalar_lea.vmem [#allocation11], 48
    %3583 = vst.msk [vmem:[%s3582] sm:$0xf] %vm1997, %v3558
    %3584 = vst.msk [vmem:[%s3582 + $0x4] sm:$0xf] %vm1997, %v3559
    %3585 = vst.msk [vmem:[%s3582 + $0x8] sm:$0xf] %vm1997, %v3560
    %3586 = vst.msk [vmem:[%s3582 + $0xc] sm:$0xf] %vm1997, %v3561
    %3587 = vst.msk [vmem:[%s3582 + $0x10] sm:$0xf] %vm1997, %v3562
    %3588 = vst.msk [vmem:[%s3582 + $0x14] sm:$0xf] %vm1997, %v3563
    %3589 = vst.msk [vmem:[%s3582 + $0x18] sm:$0xf] %vm1997, %v3564
    %3590 = vst.msk [vmem:[%s3582 + $0x1c] sm:$0xf] %vm1997, %v3565
    %3591 = vst.msk [vmem:[%s3582 + $0x20] sm:$0xf] %vm1997, %v3566
    %3592 = vst.msk [vmem:[%s3582 + $0x24] sm:$0xf] %vm1997, %v3567
    %3593 = vst.msk [vmem:[%s3582 + $0x28] sm:$0xf] %vm1997, %v3568
    %3594 = vst.msk [vmem:[%s3582 + $0x2c] sm:$0xf] %vm1997, %v3569
    %s3595 = scalar_lea.vmem %s2, 16
    %v3596 = vld [vmem:[%s3595] sm:$0xf]
    %v3597 = vld [vmem:[%s3595 + $0x4] sm:$0xf]
    %v3600 = vunpack.c.l.b16 %v3596
    %v3601 = vunpack.c.l.b16 %v3597
    %v3602 = vpack.c.b16 %v3601, %v3600
    %3604 = vmatprep.subr.bf16.mxu0 0
    %3605 = vmatpush1.bf16.msra.mxu0 %v3602
    %3606 = vmatprep.subr.bf16.mxu0 0
    %3607 = vmatpush1.bf16.msra.mxu0 0
    %3608 = vmatprep.subr.bf16.mxu0 0
    %3609 = vmatpush1.bf16.msra.mxu0 0
    %3610 = vmatprep.subr.bf16.mxu0 0
    %3611 = vmatpush1.bf16.msra.mxu0 0
    %3612 = vmatprep.subr.bf16.mxu0 0
    %3613 = vmatpush1.bf16.msra.mxu0 0
    %3614 = vmatprep.subr.bf16.mxu0 0
    %3615 = vmatpush1.bf16.msra.mxu0 0
    %3616 = vmatprep.subr.bf16.mxu0 0
    %3617 = vmatpush1.bf16.msra.mxu0 0
    %3618 = vmatprep.subr.bf16.mxu0 0
    %3619 = vmatpush1.bf16.msra.mxu0 0
    %3620 = vmatprep.subr.bf16.mxu0 0
    %3621 = vmatpush1.bf16.msra.mxu0 0
    %3622 = vmatprep.subr.bf16.mxu0 0
    %3623 = vmatpush1.bf16.msra.mxu0 0
    %3624 = vmatprep.subr.bf16.mxu0 0
    %3625 = vmatpush1.bf16.msra.mxu0 0
    %3626 = vmatprep.subr.bf16.mxu0 0
    %3627 = vmatpush1.bf16.msra.mxu0 0
    %3628 = vmatprep.subr.bf16.mxu0 0
    %3629 = vmatpush1.bf16.msra.mxu0 0
    %3630 = vmatprep.subr.bf16.mxu0 0
    %3631 = vmatpush1.bf16.msra.mxu0 0
    %3632 = vmatprep.subr.bf16.mxu0 0
    %3633 = vmatpush1.bf16.msra.mxu0 0
    %3634 = vmatprep.subr.bf16.mxu0 0
    %3635 = vmatpush1.bf16.msra.mxu0 0
    %3636 = vmatprep.mubr.bf16.mxu0 0
    %3637 = vmatmul.mubr.bf16.gmra.mrb[0].mxu0 %v307
    %v3638 = vpop.f32.mrb[0].mxu0
    %v3639 = vadd.f32 0.0, %v3638
    %v3640 = vpop.f32.mrb[0].mxu0
    %v3641 = vpop.f32.mrb[0].mxu0
    %v3642 = vadd.f32 0.0, %v3641
    %v3643 = vpop.f32.mrb[0].mxu0
    %3644 = vmatprep.mubr.bf16.mxu0 0
    %3645 = vmatmul.mubr.bf16.gmra.mrb[0].mxu0 %v310
    %v3646 = vpop.f32.mrb[0].mxu0
    %v3647 = vadd.f32 0.0, %v3646
    %v3648 = vpop.f32.mrb[0].mxu0
    %v3649 = vpop.f32.mrb[0].mxu0
    %v3650 = vadd.f32 0.0, %v3649
    %v3651 = vpop.f32.mrb[0].mxu0
    %3652 = vmatprep.mubr.bf16.mxu0 0
    %3653 = vmatmul.mubr.bf16.gmra.mrb[0].mxu0 %v313
    %v3654 = vpop.f32.mrb[0].mxu0
    %v3655 = vadd.f32 0.0, %v3654
    %v3656 = vpop.f32.mrb[0].mxu0
    %v3657 = vpop.f32.mrb[0].mxu0
    %v3658 = vadd.f32 0.0, %v3657
    %v3659 = vpop.f32.mrb[0].mxu0
    %3660 = vmatprep.mubr.bf16.mxu0 0
    %3661 = vmatmul.mubr.bf16.gmra.mrb[0].mxu0 %v316
    %v3662 = vpop.f32.mrb[0].mxu0
    %v3663 = vadd.f32 0.0, %v3662
    %v3664 = vpop.f32.mrb[0].mxu0
    %v3665 = vpop.f32.mrb[0].mxu0
    %v3666 = vadd.f32 0.0, %v3665
    %v3667 = vpop.f32.mrb[0].mxu0
    %3668 = vmatprep.mubr.bf16.mxu0 0
    %3669 = vmatmul.mubr.bf16.gmra.mrb[0].mxu0 %v319
    %v3670 = vpop.f32.mrb[0].mxu0
    %v3671 = vadd.f32 0.0, %v3670
    %v3672 = vpop.f32.mrb[0].mxu0
    %v3673 = vpop.f32.mrb[0].mxu0
    %v3674 = vadd.f32 0.0, %v3673
    %v3675 = vpop.f32.mrb[0].mxu0
    %3676 = vmatprep.mubr.bf16.mxu0 0
    %3677 = vmatmul.mubr.bf16.gmra.mrb[0].mxu0 %v322
    %v3678 = vpop.f32.mrb[0].mxu0
    %v3679 = vadd.f32 0.0, %v3678
    %v3680 = vpop.f32.mrb[0].mxu0
    %v3681 = vpop.f32.mrb[0].mxu0
    %v3682 = vadd.f32 0.0, %v3681
    %v3683 = vpop.f32.mrb[0].mxu0
    %3684 = vmatprep.mubr.bf16.mxu0 0
    %3685 = vmatmul.mubr.bf16.gmra.mrb[0].mxu0 %v325
    %v3686 = vpop.f32.mrb[0].mxu0
    %v3687 = vadd.f32 0.0, %v3686
    %v3688 = vpop.f32.mrb[0].mxu0
    %v3689 = vpop.f32.mrb[0].mxu0
    %v3690 = vadd.f32 0.0, %v3689
    %v3691 = vpop.f32.mrb[0].mxu0
    %3692 = vmatprep.mubr.bf16.mxu0 0
    %3693 = vmatmul.mubr.bf16.gmra.mrb[0].mxu0 %v328
    %v3694 = vpop.f32.mrb[0].mxu0
    %v3695 = vadd.f32 0.0, %v3694
    %v3696 = vpop.f32.mrb[0].mxu0
    %v3697 = vpop.f32.mrb[0].mxu0
    %v3698 = vadd.f32 0.0, %v3697
    %v3699 = vpop.f32.mrb[0].mxu0
    %3700 = vmatprep.mubr.bf16.mxu0 0
    %3701 = vmatmul.mubr.bf16.gmra.mrb[0].mxu0 %v331
    %v3702 = vpop.f32.mrb[0].mxu0
    %v3703 = vadd.f32 0.0, %v3702
    %v3704 = vpop.f32.mrb[0].mxu0
    %v3705 = vpop.f32.mrb[0].mxu0
    %v3706 = vadd.f32 0.0, %v3705
    %v3707 = vpop.f32.mrb[0].mxu0
    %3708 = vmatprep.mubr.bf16.mxu0 0
    %3709 = vmatmul.mubr.bf16.gmra.mrb[0].mxu0 %v334
    %v3710 = vpop.f32.mrb[0].mxu0
    %v3711 = vadd.f32 0.0, %v3710
    %v3712 = vpop.f32.mrb[0].mxu0
    %v3713 = vpop.f32.mrb[0].mxu0
    %v3714 = vadd.f32 0.0, %v3713
    %v3715 = vpop.f32.mrb[0].mxu0
    %3716 = vmatprep.mubr.bf16.mxu0 0
    %3717 = vmatmul.mubr.bf16.gmra.mrb[0].mxu0 %v337
    %v3718 = vpop.f32.mrb[0].mxu0
    %v3719 = vadd.f32 0.0, %v3718
    %v3720 = vpop.f32.mrb[0].mxu0
    %v3721 = vpop.f32.mrb[0].mxu0
    %v3722 = vadd.f32 0.0, %v3721
    %v3723 = vpop.f32.mrb[0].mxu0
    %3724 = vmatprep.mubr.bf16.mxu0 0
    %3725 = vmatmul.mubr.bf16.gmra.mrb[0].mxu0 %v340
    %v3726 = vpop.f32.mrb[0].mxu0
    %v3727 = vadd.f32 0.0, %v3726
    %v3728 = vpop.f32.mrb[0].mxu0
    %v3729 = vpop.f32.mrb[0].mxu0
    %v3730 = vadd.f32 0.0, %v3729
    %v3731 = vpop.f32.mrb[0].mxu0
    %3732 = vmatprep.mubr.bf16.mxu0 0
    %3733 = vmatmul.mubr.bf16.gmra.mrb[0].mxu0 %v343
    %v3734 = vpop.f32.mrb[0].mxu0
    %v3735 = vadd.f32 0.0, %v3734
    %v3736 = vpop.f32.mrb[0].mxu0
    %v3737 = vpop.f32.mrb[0].mxu0
    %v3738 = vadd.f32 0.0, %v3737
    %v3739 = vpop.f32.mrb[0].mxu0
    %3740 = vmatprep.mubr.bf16.mxu0 0
    %3741 = vmatmul.mubr.bf16.gmra.mrb[0].mxu0 %v346
    %v3742 = vpop.f32.mrb[0].mxu0
    %v3743 = vadd.f32 0.0, %v3742
    %v3744 = vpop.f32.mrb[0].mxu0
    %v3745 = vpop.f32.mrb[0].mxu0
    %v3746 = vadd.f32 0.0, %v3745
    %v3747 = vpop.f32.mrb[0].mxu0
    %3748 = vmatprep.mubr.bf16.mxu0 0
    %3749 = vmatmul.mubr.bf16.gmra.mrb[0].mxu0 %v349
    %v3750 = vpop.f32.mrb[0].mxu0
    %v3751 = vadd.f32 0.0, %v3750
    %v3752 = vpop.f32.mrb[0].mxu0
    %v3753 = vpop.f32.mrb[0].mxu0
    %v3754 = vadd.f32 0.0, %v3753
    %v3755 = vpop.f32.mrb[0].mxu0
    %3756 = vmatprep.mubr.bf16.mxu0 0
    %3757 = vmatmul.mubr.bf16.gmra.mrb[0].mxu0 %v352
    %v3758 = vpop.f32.mrb[0].mxu0
    %v3759 = vadd.f32 0.0, %v3758
    %v3760 = vpop.f32.mrb[0].mxu0
    %v3761 = vpop.f32.mrb[0].mxu0
    %v3762 = vadd.f32 0.0, %v3761
    %v3763 = vpop.f32.mrb[0].mxu0
    %3764 = vmatprep.mubr.bf16.mxu0 0
    %3765 = vmatmul.mubr.bf16.gmra.mrb[0].mxu0 %v355
    %v3766 = vpop.f32.mrb[0].mxu0
    %v3767 = vadd.f32 0.0, %v3766
    %v3768 = vpop.f32.mrb[0].mxu0
    %v3769 = vpop.f32.mrb[0].mxu0
    %v3770 = vadd.f32 0.0, %v3769
    %v3771 = vpop.f32.mrb[0].mxu0
    %3772 = vmatprep.mubr.bf16.mxu0 0
    %3773 = vmatmul.mubr.bf16.gmra.mrb[0].mxu0 %v358
    %v3774 = vpop.f32.mrb[0].mxu0
    %v3775 = vadd.f32 0.0, %v3774
    %v3776 = vpop.f32.mrb[0].mxu0
    %v3777 = vpop.f32.mrb[0].mxu0
    %v3778 = vadd.f32 0.0, %v3777
    %v3779 = vpop.f32.mrb[0].mxu0
    %3780 = vmatprep.mubr.bf16.mxu0 0
    %3781 = vmatmul.mubr.bf16.gmra.mrb[0].mxu0 %v361
    %v3782 = vpop.f32.mrb[0].mxu0
    %v3783 = vadd.f32 0.0, %v3782
    %v3784 = vpop.f32.mrb[0].mxu0
    %v3785 = vpop.f32.mrb[0].mxu0
    %v3786 = vadd.f32 0.0, %v3785
    %v3787 = vpop.f32.mrb[0].mxu0
    %3788 = vmatprep.mubr.bf16.mxu0 0
    %3789 = vmatmul.mubr.bf16.gmra.mrb[0].mxu0 %v364
    %v3790 = vpop.f32.mrb[0].mxu0
    %v3791 = vadd.f32 0.0, %v3790
    %v3792 = vpop.f32.mrb[0].mxu0
    %v3793 = vpop.f32.mrb[0].mxu0
    %v3794 = vadd.f32 0.0, %v3793
    %v3795 = vpop.f32.mrb[0].mxu0
    %3796 = vmatprep.mubr.bf16.mxu0 0
    %3797 = vmatmul.mubr.bf16.gmra.mrb[0].mxu0 %v367
    %v3798 = vpop.f32.mrb[0].mxu0
    %v3799 = vadd.f32 0.0, %v3798
    %v3800 = vpop.f32.mrb[0].mxu0
    %v3801 = vpop.f32.mrb[0].mxu0
    %v3802 = vadd.f32 0.0, %v3801
    %v3803 = vpop.f32.mrb[0].mxu0
    %3804 = vmatprep.mubr.bf16.mxu0 0
    %3805 = vmatmul.mubr.bf16.gmra.mrb[0].mxu0 %v370
    %v3806 = vpop.f32.mrb[0].mxu0
    %v3807 = vadd.f32 0.0, %v3806
    %v3808 = vpop.f32.mrb[0].mxu0
    %v3809 = vpop.f32.mrb[0].mxu0
    %v3810 = vadd.f32 0.0, %v3809
    %v3811 = vpop.f32.mrb[0].mxu0
    %3812 = vmatprep.mubr.bf16.mxu0 0
    %3813 = vmatmul.mubr.bf16.gmra.mrb[0].mxu0 %v373
    %v3814 = vpop.f32.mrb[0].mxu0
    %v3815 = vadd.f32 0.0, %v3814
    %v3816 = vpop.f32.mrb[0].mxu0
    %v3817 = vpop.f32.mrb[0].mxu0
    %v3818 = vadd.f32 0.0, %v3817
    %v3819 = vpop.f32.mrb[0].mxu0
    %3820 = vmatprep.mubr.bf16.mxu0 0
    %3821 = vmatmul.mubr.bf16.gmra.mrb[0].mxu0 %v376
    %v3822 = vpop.f32.mrb[0].mxu0
    %v3823 = vadd.f32 0.0, %v3822
    %v3824 = vpop.f32.mrb[0].mxu0
    %v3825 = vpop.f32.mrb[0].mxu0
    %v3826 = vadd.f32 0.0, %v3825
    %v3827 = vpop.f32.mrb[0].mxu0
    %3828 = vmatprep.mubr.bf16.mxu0 0
    %3829 = vmatmul.mubr.bf16.gmra.mrb[0].mxu0 %v379
    %v3830 = vpop.f32.mrb[0].mxu0
    %v3831 = vadd.f32 0.0, %v3830
    %v3832 = vpop.f32.mrb[0].mxu0
    %v3833 = vpop.f32.mrb[0].mxu0
    %v3834 = vadd.f32 0.0, %v3833
    %v3835 = vpop.f32.mrb[0].mxu0
    %3836 = vmatprep.mubr.bf16.mxu0 0
    %3837 = vmatmul.mubr.bf16.gmra.mrb[0].mxu0 %v382
    %v3838 = vpop.f32.mrb[0].mxu0
    %v3839 = vadd.f32 0.0, %v3838
    %v3840 = vpop.f32.mrb[0].mxu0
    %v3841 = vpop.f32.mrb[0].mxu0
    %v3842 = vadd.f32 0.0, %v3841
    %v3843 = vpop.f32.mrb[0].mxu0
    %3844 = vmatprep.mubr.bf16.mxu0 0
    %3845 = vmatmul.mubr.bf16.gmra.mrb[0].mxu0 %v385
    %v3846 = vpop.f32.mrb[0].mxu0
    %v3847 = vadd.f32 0.0, %v3846
    %v3848 = vpop.f32.mrb[0].mxu0
    %v3849 = vpop.f32.mrb[0].mxu0
    %v3850 = vadd.f32 0.0, %v3849
    %v3851 = vpop.f32.mrb[0].mxu0
    %3852 = vmatprep.mubr.bf16.mxu0 0
    %3853 = vmatmul.mubr.bf16.gmra.mrb[0].mxu0 %v388
    %v3854 = vpop.f32.mrb[0].mxu0
    %v3855 = vadd.f32 0.0, %v3854
    %v3856 = vpop.f32.mrb[0].mxu0
    %v3857 = vpop.f32.mrb[0].mxu0
    %v3858 = vadd.f32 0.0, %v3857
    %v3859 = vpop.f32.mrb[0].mxu0
    %3860 = vmatprep.mubr.bf16.mxu0 0
    %3861 = vmatmul.mubr.bf16.gmra.mrb[0].mxu0 %v391
    %v3862 = vpop.f32.mrb[0].mxu0
    %v3863 = vadd.f32 0.0, %v3862
    %v3864 = vpop.f32.mrb[0].mxu0
    %v3865 = vpop.f32.mrb[0].mxu0
    %v3866 = vadd.f32 0.0, %v3865
    %v3867 = vpop.f32.mrb[0].mxu0
    %3868 = vmatprep.mubr.bf16.mxu0 0
    %3869 = vmatmul.mubr.bf16.gmra.mrb[0].mxu0 %v394
    %v3870 = vpop.f32.mrb[0].mxu0
    %v3871 = vadd.f32 0.0, %v3870
    %v3872 = vpop.f32.mrb[0].mxu0
    %v3873 = vpop.f32.mrb[0].mxu0
    %v3874 = vadd.f32 0.0, %v3873
    %v3875 = vpop.f32.mrb[0].mxu0
    %3876 = vmatprep.mubr.bf16.mxu0 0
    %3877 = vmatmul.mubr.bf16.gmra.mrb[0].mxu0 %v397
    %v3878 = vpop.f32.mrb[0].mxu0
    %v3879 = vadd.f32 0.0, %v3878
    %v3880 = vpop.f32.mrb[0].mxu0
    %v3881 = vpop.f32.mrb[0].mxu0
    %v3882 = vadd.f32 0.0, %v3881
    %v3883 = vpop.f32.mrb[0].mxu0
    %3884 = vmatprep.mubr.bf16.mxu0 0
    %3885 = vmatmul.mubr.bf16.gmra.mrb[0].mxu0 %v400
    %v3886 = vpop.f32.mrb[0].mxu0
    %v3887 = vadd.f32 0.0, %v3886
    %v3888 = vpop.f32.mrb[0].mxu0
    %v3889 = vpop.f32.mrb[0].mxu0
    %v3890 = vadd.f32 0.0, %v3889
    %v3891 = vpop.f32.mrb[0].mxu0
    %3892 = vmatprep.mubr.bf16.mxu0 0
    %3893 = vmatmul.mubr.bf16.gmra.mrb[0].mxu0 %v403
    %v3894 = vpop.f32.mrb[0].mxu0
    %v3895 = vadd.f32 0.0, %v3894
    %v3896 = vpop.f32.mrb[0].mxu0
    %v3897 = vpop.f32.mrb[0].mxu0
    %v3898 = vadd.f32 0.0, %v3897
    %v3899 = vpop.f32.mrb[0].mxu0
    %3900 = vmatprep.mubr.bf16.mxu0 0
    %3901 = vmatmul.mubr.bf16.gmra.mrb[0].mxu0 %v406
    %v3902 = vpop.f32.mrb[0].mxu0
    %v3903 = vadd.f32 0.0, %v3902
    %v3904 = vpop.f32.mrb[0].mxu0
    %v3905 = vpop.f32.mrb[0].mxu0
    %v3906 = vadd.f32 0.0, %v3905
    %v3907 = vpop.f32.mrb[0].mxu0
    %3908 = vdwg.mxu0
    %v3909 = vpack.c.bf16 %v3642, %v3639
    %v3910 = vpack.c.bf16 %v3650, %v3647
    %v3911 = vpack.c.bf16 %v3658, %v3655
    %v3912 = vpack.c.bf16 %v3666, %v3663
    %v3913 = vpack.c.bf16 %v3674, %v3671
    %v3914 = vpack.c.bf16 %v3682, %v3679
    %v3915 = vpack.c.bf16 %v3690, %v3687
    %v3916 = vpack.c.bf16 %v3698, %v3695
    %v3917 = vpack.c.bf16 %v3706, %v3703
    %v3918 = vpack.c.bf16 %v3714, %v3711
    %v3919 = vpack.c.bf16 %v3722, %v3719
    %v3920 = vpack.c.bf16 %v3730, %v3727
    %v3921 = vpack.c.bf16 %v3738, %v3735
    %v3922 = vpack.c.bf16 %v3746, %v3743
    %v3923 = vpack.c.bf16 %v3754, %v3751
    %v3924 = vpack.c.bf16 %v3762, %v3759
    %v3925 = vpack.c.bf16 %v3770, %v3767
    %v3926 = vpack.c.bf16 %v3778, %v3775
    %v3927 = vpack.c.bf16 %v3786, %v3783
    %v3928 = vpack.c.bf16 %v3794, %v3791
    %v3929 = vpack.c.bf16 %v3802, %v3799
    %v3930 = vpack.c.bf16 %v3810, %v3807
    %v3931 = vpack.c.bf16 %v3818, %v3815
    %v3932 = vpack.c.bf16 %v3826, %v3823
    %v3933 = vpack.c.bf16 %v3834, %v3831
    %v3934 = vpack.c.bf16 %v3842, %v3839
    %v3935 = vpack.c.bf16 %v3850, %v3847
    %v3936 = vpack.c.bf16 %v3858, %v3855
    %v3937 = vpack.c.bf16 %v3866, %v3863
    %v3938 = vpack.c.bf16 %v3874, %v3871
    %v3939 = vpack.c.bf16 %v3882, %v3879
    %v3940 = vpack.c.bf16 %v3890, %v3887
    %v3941 = vpack.c.bf16 %v3898, %v3895
    %v3942 = vpack.c.bf16 %v3906, %v3903
    %v3944 = vsel %vm305, %v3909, 0
    %v3947 = vsel %vm305, %v3910, 0
    %v3950 = vsel %vm305, %v3911, 0
    %v3953 = vsel %vm305, %v3912, 0
    %v3956 = vsel %vm305, %v3913, 0
    %v3959 = vsel %vm305, %v3914, 0
    %v3962 = vsel %vm305, %v3915, 0
    %v3965 = vsel %vm305, %v3916, 0
    %v3968 = vsel %vm305, %v3917, 0
    %v3971 = vsel %vm305, %v3918, 0
    %v3974 = vsel %vm305, %v3919, 0
    %v3977 = vsel %vm305, %v3920, 0
    %v3980 = vsel %vm305, %v3921, 0
    %v3983 = vsel %vm305, %v3922, 0
    %3985 = vmatprep.subr.bf16.mxu0 %v754
    %3986 = vmatpush1.bf16.msra.mxu0 %v753
    %3987 = vmatprep.subr.bf16.mxu0 0
    %3988 = vmatpush1.bf16.msra.mxu0 0
    %3989 = vmatprep.subr.bf16.mxu0 0
    %3990 = vmatpush1.bf16.msra.mxu0 0
    %3991 = vmatprep.subr.bf16.mxu0 0
    %3992 = vmatpush1.bf16.msra.mxu0 0
    %3993 = vmatprep.subr.bf16.mxu0 0
    %3994 = vmatpush1.bf16.msra.mxu0 0
    %3995 = vmatprep.subr.bf16.mxu0 0
    %3996 = vmatpush1.bf16.msra.mxu0 0
    %3997 = vmatprep.subr.bf16.mxu0 0
    %3998 = vmatpush1.bf16.msra.mxu0 0
    %3999 = vmatprep.subr.bf16.mxu0 0
    %4000 = vmatpush1.bf16.msra.mxu0 0
    %4001 = vmatprep.subr.bf16.mxu0 0
    %4002 = vmatpush1.bf16.msra.mxu0 0
    %4003 = vmatprep.subr.bf16.mxu0 0
    %4004 = vmatpush1.bf16.msra.mxu0 0
    %4005 = vmatprep.subr.bf16.mxu0 0
    %4006 = vmatpush1.bf16.msra.mxu0 0
    %4007 = vmatprep.subr.bf16.mxu0 0
    %4008 = vmatpush1.bf16.msra.mxu0 0
    %4009 = vmatprep.subr.bf16.mxu0 0
    %4010 = vmatpush1.bf16.msra.mxu0 0
    %4011 = vmatprep.subr.bf16.mxu0 0
    %4012 = vmatpush1.bf16.msra.mxu0 0
    %4013 = vmatprep.subr.bf16.mxu0 0
    %4014 = vmatpush1.bf16.msra.mxu0 0
    %4015 = vmatprep.subr.bf16.mxu0 0
    %4016 = vmatpush1.bf16.msra.mxu0 0
    %4017 = vmatprep.mubr.bf16.mxu0 0
    %4018 = vmatmul.mubr.bf16.gmra.mrb[0].mxu0 %v3944
    %v4019 = vpop.f32.mrb[0].mxu0
    %v4020 = vadd.f32 0.0, %v4019
    %v4021 = vpop.f32.mrb[0].mxu0
    %v4022 = vadd.f32 0.0, %v4021
    %v4023 = vpop.f32.mrb[0].mxu0
    %v4024 = vadd.f32 0.0, %v4023
    %v4025 = vpop.f32.mrb[0].mxu0
    %v4026 = vadd.f32 0.0, %v4025
    %4027 = vmatprep.mubr.bf16.mxu0 0
    %4028 = vmatmul.mubr.bf16.gmra.mrb[0].mxu0 %v3947
    %v4029 = vpop.f32.mrb[0].mxu0
    %v4030 = vadd.f32 0.0, %v4029
    %v4031 = vpop.f32.mrb[0].mxu0
    %v4032 = vadd.f32 0.0, %v4031
    %v4033 = vpop.f32.mrb[0].mxu0
    %v4034 = vadd.f32 0.0, %v4033
    %v4035 = vpop.f32.mrb[0].mxu0
    %v4036 = vadd.f32 0.0, %v4035
    %4037 = vmatprep.mubr.bf16.mxu0 0
    %4038 = vmatmul.mubr.bf16.gmra.mrb[0].mxu0 %v3950
    %v4039 = vpop.f32.mrb[0].mxu0
    %v4040 = vadd.f32 0.0, %v4039
    %v4041 = vpop.f32.mrb[0].mxu0
    %v4042 = vadd.f32 0.0, %v4041
    %v4043 = vpop.f32.mrb[0].mxu0
    %v4044 = vadd.f32 0.0, %v4043
    %v4045 = vpop.f32.mrb[0].mxu0
    %v4046 = vadd.f32 0.0, %v4045
    %4047 = vmatprep.mubr.bf16.mxu0 0
    %4048 = vmatmul.mubr.bf16.gmra.mrb[0].mxu0 %v3953
    %v4049 = vpop.f32.mrb[0].mxu0
    %v4050 = vadd.f32 0.0, %v4049
    %v4051 = vpop.f32.mrb[0].mxu0
    %v4052 = vadd.f32 0.0, %v4051
    %v4053 = vpop.f32.mrb[0].mxu0
    %v4054 = vadd.f32 0.0, %v4053
    %v4055 = vpop.f32.mrb[0].mxu0
    %v4056 = vadd.f32 0.0, %v4055
    %4057 = vmatprep.mubr.bf16.mxu0 0
    %4058 = vmatmul.mubr.bf16.gmra.mrb[0].mxu0 %v3956
    %v4059 = vpop.f32.mrb[0].mxu0
    %v4060 = vadd.f32 0.0, %v4059
    %v4061 = vpop.f32.mrb[0].mxu0
    %v4062 = vadd.f32 0.0, %v4061
    %v4063 = vpop.f32.mrb[0].mxu0
    %v4064 = vadd.f32 0.0, %v4063
    %v4065 = vpop.f32.mrb[0].mxu0
    %v4066 = vadd.f32 0.0, %v4065
    %4067 = vmatprep.mubr.bf16.mxu0 0
    %4068 = vmatmul.mubr.bf16.gmra.mrb[0].mxu0 %v3959
    %v4069 = vpop.f32.mrb[0].mxu0
    %v4070 = vadd.f32 0.0, %v4069
    %v4071 = vpop.f32.mrb[0].mxu0
    %v4072 = vadd.f32 0.0, %v4071
    %v4073 = vpop.f32.mrb[0].mxu0
    %v4074 = vadd.f32 0.0, %v4073
    %v4075 = vpop.f32.mrb[0].mxu0
    %v4076 = vadd.f32 0.0, %v4075
    %4077 = vmatprep.mubr.bf16.mxu0 0
    %4078 = vmatmul.mubr.bf16.gmra.mrb[0].mxu0 %v3962
    %v4079 = vpop.f32.mrb[0].mxu0
    %v4080 = vadd.f32 0.0, %v4079
    %v4081 = vpop.f32.mrb[0].mxu0
    %v4082 = vadd.f32 0.0, %v4081
    %v4083 = vpop.f32.mrb[0].mxu0
    %v4084 = vadd.f32 0.0, %v4083
    %v4085 = vpop.f32.mrb[0].mxu0
    %v4086 = vadd.f32 0.0, %v4085
    %4087 = vmatprep.mubr.bf16.mxu0 0
    %4088 = vmatmul.mubr.bf16.gmra.mrb[0].mxu0 %v3965
    %v4089 = vpop.f32.mrb[0].mxu0
    %v4090 = vadd.f32 0.0, %v4089
    %v4091 = vpop.f32.mrb[0].mxu0
    %v4092 = vadd.f32 0.0, %v4091
    %v4093 = vpop.f32.mrb[0].mxu0
    %v4094 = vadd.f32 0.0, %v4093
    %v4095 = vpop.f32.mrb[0].mxu0
    %v4096 = vadd.f32 0.0, %v4095
    %4097 = vmatprep.mubr.bf16.mxu0 0
    %4098 = vmatmul.mubr.bf16.gmra.mrb[0].mxu0 %v3968
    %v4099 = vpop.f32.mrb[0].mxu0
    %v4100 = vadd.f32 0.0, %v4099
    %v4101 = vpop.f32.mrb[0].mxu0
    %v4102 = vadd.f32 0.0, %v4101
    %v4103 = vpop.f32.mrb[0].mxu0
    %v4104 = vadd.f32 0.0, %v4103
    %v4105 = vpop.f32.mrb[0].mxu0
    %v4106 = vadd.f32 0.0, %v4105
    %4107 = vmatprep.mubr.bf16.mxu0 0
    %4108 = vmatmul.mubr.bf16.gmra.mrb[0].mxu0 %v3971
    %v4109 = vpop.f32.mrb[0].mxu0
    %v4110 = vadd.f32 0.0, %v4109
    %v4111 = vpop.f32.mrb[0].mxu0
    %v4112 = vadd.f32 0.0, %v4111
    %v4113 = vpop.f32.mrb[0].mxu0
    %v4114 = vadd.f32 0.0, %v4113
    %v4115 = vpop.f32.mrb[0].mxu0
    %v4116 = vadd.f32 0.0, %v4115
    %4117 = vmatprep.mubr.bf16.mxu0 0
    %4118 = vmatmul.mubr.bf16.gmra.mrb[0].mxu0 %v3974
    %v4119 = vpop.f32.mrb[0].mxu0
    %v4120 = vadd.f32 0.0, %v4119
    %v4121 = vpop.f32.mrb[0].mxu0
    %v4122 = vadd.f32 0.0, %v4121
    %v4123 = vpop.f32.mrb[0].mxu0
    %v4124 = vadd.f32 0.0, %v4123
    %v4125 = vpop.f32.mrb[0].mxu0
    %v4126 = vadd.f32 0.0, %v4125
    %4127 = vmatprep.mubr.bf16.mxu0 0
    %4128 = vmatmul.mubr.bf16.gmra.mrb[0].mxu0 %v3977
    %v4129 = vpop.f32.mrb[0].mxu0
    %v4130 = vadd.f32 0.0, %v4129
    %v4131 = vpop.f32.mrb[0].mxu0
    %v4132 = vadd.f32 0.0, %v4131
    %v4133 = vpop.f32.mrb[0].mxu0
    %v4134 = vadd.f32 0.0, %v4133
    %v4135 = vpop.f32.mrb[0].mxu0
    %v4136 = vadd.f32 0.0, %v4135
    %4137 = vmatprep.mubr.bf16.mxu0 0
    %4138 = vmatmul.mubr.bf16.gmra.mrb[0].mxu0 %v3980
    %v4139 = vpop.f32.mrb[0].mxu0
    %v4140 = vadd.f32 0.0, %v4139
    %v4141 = vpop.f32.mrb[0].mxu0
    %v4142 = vadd.f32 0.0, %v4141
    %v4143 = vpop.f32.mrb[0].mxu0
    %v4144 = vadd.f32 0.0, %v4143
    %v4145 = vpop.f32.mrb[0].mxu0
    %v4146 = vadd.f32 0.0, %v4145
    %4147 = vmatprep.mubr.bf16.mxu0 0
    %4148 = vmatmul.mubr.bf16.gmra.mrb[0].mxu0 %v3983
    %v4149 = vpop.f32.mrb[0].mxu0
    %v4150 = vadd.f32 0.0, %v4149
    %v4151 = vpop.f32.mrb[0].mxu0
    %v4152 = vadd.f32 0.0, %v4151
    %v4153 = vpop.f32.mrb[0].mxu0
    %v4154 = vadd.f32 0.0, %v4153
    %v4155 = vpop.f32.mrb[0].mxu0
    %v4156 = vadd.f32 0.0, %v4155
    %4157 = vdwg.mxu0
    %v4159 = vsel %vm305, %v3937, 0
    %v4162 = vsel %vm305, %v3938, 0
    %v4165 = vsel %vm305, %v3939, 0
    %v4168 = vsel %vm305, %v3940, 0
    %v4171 = vsel %vm305, %v3941, 0
    %v4174 = vsel %vm305, %v3942, 0
    %4176 = vmatprep.subr.bf16.mxu0 0
    %4177 = vmatpush1.bf16.msra.mxu0 %v976
    %4178 = vmatprep.subr.bf16.mxu0 0
    %4179 = vmatpush1.bf16.msra.mxu0 0
    %4180 = vmatprep.subr.bf16.mxu0 0
    %4181 = vmatpush1.bf16.msra.mxu0 0
    %4182 = vmatprep.subr.bf16.mxu0 0
    %4183 = vmatpush1.bf16.msra.mxu0 0
    %4184 = vmatprep.subr.bf16.mxu0 0
    %4185 = vmatpush1.bf16.msra.mxu0 0
    %4186 = vmatprep.subr.bf16.mxu0 0
    %4187 = vmatpush1.bf16.msra.mxu0 0
    %4188 = vmatprep.subr.bf16.mxu0 0
    %4189 = vmatpush1.bf16.msra.mxu0 0
    %4190 = vmatprep.subr.bf16.mxu0 0
    %4191 = vmatpush1.bf16.msra.mxu0 0
    %4192 = vmatprep.subr.bf16.mxu0 0
    %4193 = vmatpush1.bf16.msra.mxu0 0
    %4194 = vmatprep.subr.bf16.mxu0 0
    %4195 = vmatpush1.bf16.msra.mxu0 0
    %4196 = vmatprep.subr.bf16.mxu0 0
    %4197 = vmatpush1.bf16.msra.mxu0 0
    %4198 = vmatprep.subr.bf16.mxu0 0
    %4199 = vmatpush1.bf16.msra.mxu0 0
    %4200 = vmatprep.subr.bf16.mxu0 0
    %4201 = vmatpush1.bf16.msra.mxu0 0
    %4202 = vmatprep.subr.bf16.mxu0 0
    %4203 = vmatpush1.bf16.msra.mxu0 0
    %4204 = vmatprep.subr.bf16.mxu0 0
    %4205 = vmatpush1.bf16.msra.mxu0 0
    %4206 = vmatprep.subr.bf16.mxu0 0
    %4207 = vmatpush1.bf16.msra.mxu0 0
    %4208 = vmatprep.mubr.bf16.mxu0 0
    %4209 = vmatmul.mubr.bf16.gmra.mrb[0].mxu0 %v4159
    %v4210 = vpop.f32.mrb[0].mxu0
    %v4211 = vadd.f32 0.0, %v4210
    %v4212 = vpop.f32.mrb[0].mxu0
    %v4213 = vpop.f32.mrb[0].mxu0
    %v4214 = vadd.f32 0.0, %v4213
    %v4215 = vpop.f32.mrb[0].mxu0
    %4216 = vmatprep.mubr.bf16.mxu0 0
    %4217 = vmatmul.mubr.bf16.gmra.mrb[0].mxu0 %v4162
    %v4218 = vpop.f32.mrb[0].mxu0
    %v4219 = vadd.f32 0.0, %v4218
    %v4220 = vpop.f32.mrb[0].mxu0
    %v4221 = vpop.f32.mrb[0].mxu0
    %v4222 = vadd.f32 0.0, %v4221
    %v4223 = vpop.f32.mrb[0].mxu0
    %4224 = vmatprep.mubr.bf16.mxu0 0
    %4225 = vmatmul.mubr.bf16.gmra.mrb[0].mxu0 %v4165
    %v4226 = vpop.f32.mrb[0].mxu0
    %v4227 = vadd.f32 0.0, %v4226
    %v4228 = vpop.f32.mrb[0].mxu0
    %v4229 = vpop.f32.mrb[0].mxu0
    %v4230 = vadd.f32 0.0, %v4229
    %v4231 = vpop.f32.mrb[0].mxu0
    %4232 = vmatprep.mubr.bf16.mxu0 0
    %4233 = vmatmul.mubr.bf16.gmra.mrb[0].mxu0 %v4168
    %v4234 = vpop.f32.mrb[0].mxu0
    %v4235 = vadd.f32 0.0, %v4234
    %v4236 = vpop.f32.mrb[0].mxu0
    %v4237 = vpop.f32.mrb[0].mxu0
    %v4238 = vadd.f32 0.0, %v4237
    %v4239 = vpop.f32.mrb[0].mxu0
    %4240 = vmatprep.mubr.bf16.mxu0 0
    %4241 = vmatmul.mubr.bf16.gmra.mrb[0].mxu0 %v4171
    %v4242 = vpop.f32.mrb[0].mxu0
    %v4243 = vadd.f32 0.0, %v4242
    %v4244 = vpop.f32.mrb[0].mxu0
    %v4245 = vpop.f32.mrb[0].mxu0
    %v4246 = vadd.f32 0.0, %v4245
    %v4247 = vpop.f32.mrb[0].mxu0
    %4248 = vmatprep.mubr.bf16.mxu0 0
    %4249 = vmatmul.mubr.bf16.gmra.mrb[0].mxu0 %v4174
    %v4250 = vpop.f32.mrb[0].mxu0
    %v4251 = vadd.f32 0.0, %v4250
    %v4252 = vpop.f32.mrb[0].mxu0
    %v4253 = vpop.f32.mrb[0].mxu0
    %v4254 = vadd.f32 0.0, %v4253
    %v4255 = vpop.f32.mrb[0].mxu0
    %4256 = vdwg.mxu0
    %v4258 = vsel %vm305, %v3923, 0
    %v4261 = vsel %vm305, %v3924, 0
    %v4264 = vsel %vm305, %v3925, 0
    %v4267 = vsel %vm305, %v3926, 0
    %v4270 = vsel %vm305, %v3927, 0
    %v4273 = vsel %vm305, %v3928, 0
    %v4276 = vsel %vm305, %v3929, 0
    %v4279 = vsel %vm305, %v3930, 0
    %v4282 = vsel %vm305, %v3931, 0
    %v4285 = vsel %vm305, %v3932, 0
    %v4288 = vsel %vm305, %v3933, 0
    %v4291 = vsel %vm305, %v3934, 0
    %v4294 = vsel %vm305, %v3935, 0
    %v4297 = vsel %vm305, %v3936, 0
    %4299 = vmatprep.subr.bf16.mxu0 %v1084
    %4300 = vmatpush1.bf16.msra.mxu0 %v1083
    %4301 = vmatprep.subr.bf16.mxu0 0
    %4302 = vmatpush1.bf16.msra.mxu0 0
    %4303 = vmatprep.subr.bf16.mxu0 0
    %4304 = vmatpush1.bf16.msra.mxu0 0
    %4305 = vmatprep.subr.bf16.mxu0 0
    %4306 = vmatpush1.bf16.msra.mxu0 0
    %4307 = vmatprep.subr.bf16.mxu0 0
    %4308 = vmatpush1.bf16.msra.mxu0 0
    %4309 = vmatprep.subr.bf16.mxu0 0
    %4310 = vmatpush1.bf16.msra.mxu0 0
    %4311 = vmatprep.subr.bf16.mxu0 0
    %4312 = vmatpush1.bf16.msra.mxu0 0
    %4313 = vmatprep.subr.bf16.mxu0 0
    %4314 = vmatpush1.bf16.msra.mxu0 0
    %4315 = vmatprep.subr.bf16.mxu0 0
    %4316 = vmatpush1.bf16.msra.mxu0 0
    %4317 = vmatprep.subr.bf16.mxu0 0
    %4318 = vmatpush1.bf16.msra.mxu0 0
    %4319 = vmatprep.subr.bf16.mxu0 0
    %4320 = vmatpush1.bf16.msra.mxu0 0
    %4321 = vmatprep.subr.bf16.mxu0 0
    %4322 = vmatpush1.bf16.msra.mxu0 0
    %4323 = vmatprep.subr.bf16.mxu0 0
    %4324 = vmatpush1.bf16.msra.mxu0 0
    %4325 = vmatprep.subr.bf16.mxu0 0
    %4326 = vmatpush1.bf16.msra.mxu0 0
    %4327 = vmatprep.subr.bf16.mxu0 0
    %4328 = vmatpush1.bf16.msra.mxu0 0
    %4329 = vmatprep.subr.bf16.mxu0 0
    %4330 = vmatpush1.bf16.msra.mxu0 0
    %4331 = vmatprep.mubr.bf16.mxu0 0
    %4332 = vmatmul.mubr.bf16.gmra.mrb[0].mxu0 %v4258
    %v4333 = vpop.f32.mrb[0].mxu0
    %v4334 = vadd.f32 0.0, %v4333
    %v4335 = vpop.f32.mrb[0].mxu0
    %v4336 = vadd.f32 0.0, %v4335
    %v4337 = vpop.f32.mrb[0].mxu0
    %v4338 = vadd.f32 0.0, %v4337
    %v4339 = vpop.f32.mrb[0].mxu0
    %v4340 = vadd.f32 0.0, %v4339
    %4341 = vmatprep.mubr.bf16.mxu0 0
    %4342 = vmatmul.mubr.bf16.gmra.mrb[0].mxu0 %v4261
    %v4343 = vpop.f32.mrb[0].mxu0
    %v4344 = vadd.f32 0.0, %v4343
    %v4345 = vpop.f32.mrb[0].mxu0
    %v4346 = vadd.f32 0.0, %v4345
    %v4347 = vpop.f32.mrb[0].mxu0
    %v4348 = vadd.f32 0.0, %v4347
    %v4349 = vpop.f32.mrb[0].mxu0
    %v4350 = vadd.f32 0.0, %v4349
    %4351 = vmatprep.mubr.bf16.mxu0 0
    %4352 = vmatmul.mubr.bf16.gmra.mrb[0].mxu0 %v4264
    %v4353 = vpop.f32.mrb[0].mxu0
    %v4354 = vadd.f32 0.0, %v4353
    %v4355 = vpop.f32.mrb[0].mxu0
    %v4356 = vadd.f32 0.0, %v4355
    %v4357 = vpop.f32.mrb[0].mxu0
    %v4358 = vadd.f32 0.0, %v4357
    %v4359 = vpop.f32.mrb[0].mxu0
    %v4360 = vadd.f32 0.0, %v4359
    %4361 = vmatprep.mubr.bf16.mxu0 0
    %4362 = vmatmul.mubr.bf16.gmra.mrb[0].mxu0 %v4267
    %v4363 = vpop.f32.mrb[0].mxu0
    %v4364 = vadd.f32 0.0, %v4363
    %v4365 = vpop.f32.mrb[0].mxu0
    %v4366 = vadd.f32 0.0, %v4365
    %v4367 = vpop.f32.mrb[0].mxu0
    %v4368 = vadd.f32 0.0, %v4367
    %v4369 = vpop.f32.mrb[0].mxu0
    %v4370 = vadd.f32 0.0, %v4369
    %4371 = vmatprep.mubr.bf16.mxu0 0
    %4372 = vmatmul.mubr.bf16.gmra.mrb[0].mxu0 %v4270
    %v4373 = vpop.f32.mrb[0].mxu0
    %v4374 = vadd.f32 0.0, %v4373
    %v4375 = vpop.f32.mrb[0].mxu0
    %v4376 = vadd.f32 0.0, %v4375
    %v4377 = vpop.f32.mrb[0].mxu0
    %v4378 = vadd.f32 0.0, %v4377
    %v4379 = vpop.f32.mrb[0].mxu0
    %v4380 = vadd.f32 0.0, %v4379
    %4381 = vmatprep.mubr.bf16.mxu0 0
    %4382 = vmatmul.mubr.bf16.gmra.mrb[0].mxu0 %v4273
    %v4383 = vpop.f32.mrb[0].mxu0
    %v4384 = vadd.f32 0.0, %v4383
    %v4385 = vpop.f32.mrb[0].mxu0
    %v4386 = vadd.f32 0.0, %v4385
    %v4387 = vpop.f32.mrb[0].mxu0
    %v4388 = vadd.f32 0.0, %v4387
    %v4389 = vpop.f32.mrb[0].mxu0
    %v4390 = vadd.f32 0.0, %v4389
    %4391 = vmatprep.mubr.bf16.mxu0 0
    %4392 = vmatmul.mubr.bf16.gmra.mrb[0].mxu0 %v4276
    %v4393 = vpop.f32.mrb[0].mxu0
    %v4394 = vadd.f32 0.0, %v4393
    %v4395 = vpop.f32.mrb[0].mxu0
    %v4396 = vadd.f32 0.0, %v4395
    %v4397 = vpop.f32.mrb[0].mxu0
    %v4398 = vadd.f32 0.0, %v4397
    %v4399 = vpop.f32.mrb[0].mxu0
    %v4400 = vadd.f32 0.0, %v4399
    %4401 = vmatprep.mubr.bf16.mxu0 0
    %4402 = vmatmul.mubr.bf16.gmra.mrb[0].mxu0 %v4279
    %v4403 = vpop.f32.mrb[0].mxu0
    %v4404 = vadd.f32 0.0, %v4403
    %v4405 = vpop.f32.mrb[0].mxu0
    %v4406 = vadd.f32 0.0, %v4405
    %v4407 = vpop.f32.mrb[0].mxu0
    %v4408 = vadd.f32 0.0, %v4407
    %v4409 = vpop.f32.mrb[0].mxu0
    %v4410 = vadd.f32 0.0, %v4409
    %4411 = vmatprep.mubr.bf16.mxu0 0
    %4412 = vmatmul.mubr.bf16.gmra.mrb[0].mxu0 %v4282
    %v4413 = vpop.f32.mrb[0].mxu0
    %v4414 = vadd.f32 0.0, %v4413
    %v4415 = vpop.f32.mrb[0].mxu0
    %v4416 = vadd.f32 0.0, %v4415
    %v4417 = vpop.f32.mrb[0].mxu0
    %v4418 = vadd.f32 0.0, %v4417
    %v4419 = vpop.f32.mrb[0].mxu0
    %v4420 = vadd.f32 0.0, %v4419
    %4421 = vmatprep.mubr.bf16.mxu0 0
    %4422 = vmatmul.mubr.bf16.gmra.mrb[0].mxu0 %v4285
    %v4423 = vpop.f32.mrb[0].mxu0
    %v4424 = vadd.f32 0.0, %v4423
    %v4425 = vpop.f32.mrb[0].mxu0
    %v4426 = vadd.f32 0.0, %v4425
    %v4427 = vpop.f32.mrb[0].mxu0
    %v4428 = vadd.f32 0.0, %v4427
    %v4429 = vpop.f32.mrb[0].mxu0
    %v4430 = vadd.f32 0.0, %v4429
    %4431 = vmatprep.mubr.bf16.mxu0 0
    %4432 = vmatmul.mubr.bf16.gmra.mrb[0].mxu0 %v4288
    %v4433 = vpop.f32.mrb[0].mxu0
    %v4434 = vadd.f32 0.0, %v4433
    %v4435 = vpop.f32.mrb[0].mxu0
    %v4436 = vadd.f32 0.0, %v4435
    %v4437 = vpop.f32.mrb[0].mxu0
    %v4438 = vadd.f32 0.0, %v4437
    %v4439 = vpop.f32.mrb[0].mxu0
    %v4440 = vadd.f32 0.0, %v4439
    %4441 = vmatprep.mubr.bf16.mxu0 0
    %4442 = vmatmul.mubr.bf16.gmra.mrb[0].mxu0 %v4291
    %v4443 = vpop.f32.mrb[0].mxu0
    %v4444 = vadd.f32 0.0, %v4443
    %v4445 = vpop.f32.mrb[0].mxu0
    %v4446 = vadd.f32 0.0, %v4445
    %v4447 = vpop.f32.mrb[0].mxu0
    %v4448 = vadd.f32 0.0, %v4447
    %v4449 = vpop.f32.mrb[0].mxu0
    %v4450 = vadd.f32 0.0, %v4449
    %4451 = vmatprep.mubr.bf16.mxu0 0
    %4452 = vmatmul.mubr.bf16.gmra.mrb[0].mxu0 %v4294
    %v4453 = vpop.f32.mrb[0].mxu0
    %v4454 = vadd.f32 0.0, %v4453
    %v4455 = vpop.f32.mrb[0].mxu0
    %v4456 = vadd.f32 0.0, %v4455
    %v4457 = vpop.f32.mrb[0].mxu0
    %v4458 = vadd.f32 0.0, %v4457
    %v4459 = vpop.f32.mrb[0].mxu0
    %v4460 = vadd.f32 0.0, %v4459
    %4461 = vmatprep.mubr.bf16.mxu0 0
    %4462 = vmatmul.mubr.bf16.gmra.mrb[0].mxu0 %v4297
    %v4463 = vpop.f32.mrb[0].mxu0
    %v4464 = vadd.f32 0.0, %v4463
    %v4465 = vpop.f32.mrb[0].mxu0
    %v4466 = vadd.f32 0.0, %v4465
    %v4467 = vpop.f32.mrb[0].mxu0
    %v4468 = vadd.f32 0.0, %v4467
    %v4469 = vpop.f32.mrb[0].mxu0
    %v4470 = vadd.f32 0.0, %v4469
    %4471 = vdwg.mxu0
    %s4472 = sadd.s32 %s52, 2
    %s4473 = sld [smem:[#allocation3 + %s4472]]
    %s4474 = sld [smem:[#allocation4 + %s4472]]
    %v4475 = vstv %s4473
    %v4476 = vmul.f32 %v4334, %v4475
    %v4477 = vmul.f32 %v4336, %v4475
    %v4478 = vmul.f32 %v4338, %v4475
    %v4479 = vmul.f32 %v4340, %v4475
    %v4480 = vmul.f32 %v4344, %v4475
    %v4481 = vmul.f32 %v4346, %v4475
    %v4482 = vmul.f32 %v4348, %v4475
    %v4483 = vmul.f32 %v4350, %v4475
    %v4484 = vmul.f32 %v4354, %v4475
    %v4485 = vmul.f32 %v4356, %v4475
    %v4486 = vmul.f32 %v4358, %v4475
    %v4487 = vmul.f32 %v4360, %v4475
    %v4488 = vmul.f32 %v4364, %v4475
    %v4489 = vmul.f32 %v4366, %v4475
    %v4490 = vmul.f32 %v4368, %v4475
    %v4491 = vmul.f32 %v4370, %v4475
    %v4492 = vmul.f32 %v4374, %v4475
    %v4493 = vmul.f32 %v4376, %v4475
    %v4494 = vmul.f32 %v4378, %v4475
    %v4495 = vmul.f32 %v4380, %v4475
    %v4496 = vmul.f32 %v4384, %v4475
    %v4497 = vmul.f32 %v4386, %v4475
    %v4498 = vmul.f32 %v4388, %v4475
    %v4499 = vmul.f32 %v4390, %v4475
    %v4500 = vmul.f32 %v4394, %v4475
    %v4501 = vmul.f32 %v4396, %v4475
    %v4502 = vmul.f32 %v4398, %v4475
    %v4503 = vmul.f32 %v4400, %v4475
    %v4504 = vmul.f32 %v4404, %v4475
    %v4505 = vmul.f32 %v4406, %v4475
    %v4506 = vmul.f32 %v4408, %v4475
    %v4507 = vmul.f32 %v4410, %v4475
    %v4508 = vmul.f32 %v4414, %v4475
    %v4509 = vmul.f32 %v4416, %v4475
    %v4510 = vmul.f32 %v4418, %v4475
    %v4511 = vmul.f32 %v4420, %v4475
    %v4512 = vmul.f32 %v4424, %v4475
    %v4513 = vmul.f32 %v4426, %v4475
    %v4514 = vmul.f32 %v4428, %v4475
    %v4515 = vmul.f32 %v4430, %v4475
    %v4516 = vmul.f32 %v4434, %v4475
    %v4517 = vmul.f32 %v4436, %v4475
    %v4518 = vmul.f32 %v4438, %v4475
    %v4519 = vmul.f32 %v4440, %v4475
    %v4520 = vmul.f32 %v4444, %v4475
    %v4521 = vmul.f32 %v4446, %v4475
    %v4522 = vmul.f32 %v4448, %v4475
    %v4523 = vmul.f32 %v4450, %v4475
    %v4524 = vmul.f32 %v4454, %v4475
    %v4525 = vmul.f32 %v4456, %v4475
    %v4526 = vmul.f32 %v4458, %v4475
    %v4527 = vmul.f32 %v4460, %v4475
    %v4528 = vmul.f32 %v4464, %v4475
    %v4529 = vmul.f32 %v4466, %v4475
    %v4530 = vmul.f32 %v4468, %v4475
    %v4531 = vmul.f32 %v4470, %v4475
    %v4532 = vstv %s4474
    %v4533 = vadd.f32 %v4476, %v4532
    %v4534 = vadd.f32 %v4477, %v4532
    %v4535 = vadd.f32 %v4478, %v4532
    %v4536 = vadd.f32 %v4479, %v4532
    %v4537 = vadd.f32 %v4480, %v4532
    %v4538 = vadd.f32 %v4481, %v4532
    %v4539 = vadd.f32 %v4482, %v4532
    %v4540 = vadd.f32 %v4483, %v4532
    %v4541 = vadd.f32 %v4484, %v4532
    %v4542 = vadd.f32 %v4485, %v4532
    %v4543 = vadd.f32 %v4486, %v4532
    %v4544 = vadd.f32 %v4487, %v4532
    %v4545 = vadd.f32 %v4488, %v4532
    %v4546 = vadd.f32 %v4489, %v4532
    %v4547 = vadd.f32 %v4490, %v4532
    %v4548 = vadd.f32 %v4491, %v4532
    %v4549 = vadd.f32 %v4492, %v4532
    %v4550 = vadd.f32 %v4493, %v4532
    %v4551 = vadd.f32 %v4494, %v4532
    %v4552 = vadd.f32 %v4495, %v4532
    %v4553 = vadd.f32 %v4496, %v4532
    %v4554 = vadd.f32 %v4497, %v4532
    %v4555 = vadd.f32 %v4498, %v4532
    %v4556 = vadd.f32 %v4499, %v4532
    %v4557 = vadd.f32 %v4500, %v4532
    %v4558 = vadd.f32 %v4501, %v4532
    %v4559 = vadd.f32 %v4502, %v4532
    %v4560 = vadd.f32 %v4503, %v4532
    %v4561 = vadd.f32 %v4504, %v4532
    %v4562 = vadd.f32 %v4505, %v4532
    %v4563 = vadd.f32 %v4506, %v4532
    %v4564 = vadd.f32 %v4507, %v4532
    %v4565 = vadd.f32 %v4508, %v4532
    %v4566 = vadd.f32 %v4509, %v4532
    %v4567 = vadd.f32 %v4510, %v4532
    %v4568 = vadd.f32 %v4511, %v4532
    %v4569 = vadd.f32 %v4512, %v4532
    %v4570 = vadd.f32 %v4513, %v4532
    %v4571 = vadd.f32 %v4514, %v4532
    %v4572 = vadd.f32 %v4515, %v4532
    %v4573 = vadd.f32 %v4516, %v4532
    %v4574 = vadd.f32 %v4517, %v4532
    %v4575 = vadd.f32 %v4518, %v4532
    %v4576 = vadd.f32 %v4519, %v4532
    %v4577 = vadd.f32 %v4520, %v4532
    %v4578 = vadd.f32 %v4521, %v4532
    %v4579 = vadd.f32 %v4522, %v4532
    %v4580 = vadd.f32 %v4523, %v4532
    %v4581 = vadd.f32 %v4524, %v4532
    %v4582 = vadd.f32 %v4525, %v4532
    %v4583 = vadd.f32 %v4526, %v4532
    %v4584 = vadd.f32 %v4527, %v4532
    %v4585 = vadd.f32 %v4528, %v4532
    %v4586 = vadd.f32 %v4529, %v4532
    %v4587 = vadd.f32 %v4530, %v4532
    %v4588 = vadd.f32 %v4531, %v4532
    %v4589 = vpack.c.bf16 %v4535, %v4533
    %v4590 = vpack.c.bf16 %v4536, %v4534
    %v4591 = vpack.c.bf16 %v4539, %v4537
    %v4592 = vpack.c.bf16 %v4540, %v4538
    %v4593 = vpack.c.bf16 %v4543, %v4541
    %v4594 = vpack.c.bf16 %v4544, %v4542
    %v4595 = vpack.c.bf16 %v4547, %v4545
    %v4596 = vpack.c.bf16 %v4548, %v4546
    %v4597 = vpack.c.bf16 %v4551, %v4549
    %v4598 = vpack.c.bf16 %v4552, %v4550
    %v4599 = vpack.c.bf16 %v4555, %v4553
    %v4600 = vpack.c.bf16 %v4556, %v4554
    %v4601 = vpack.c.bf16 %v4559, %v4557
    %v4602 = vpack.c.bf16 %v4560, %v4558
    %v4603 = vpack.c.bf16 %v4563, %v4561
    %v4604 = vpack.c.bf16 %v4564, %v4562
    %v4605 = vpack.c.bf16 %v4567, %v4565
    %v4606 = vpack.c.bf16 %v4568, %v4566
    %v4607 = vpack.c.bf16 %v4571, %v4569
    %v4608 = vpack.c.bf16 %v4572, %v4570
    %v4609 = vpack.c.bf16 %v4575, %v4573
    %v4610 = vpack.c.bf16 %v4576, %v4574
    %v4611 = vpack.c.bf16 %v4579, %v4577
    %v4612 = vpack.c.bf16 %v4580, %v4578
    %v4613 = vpack.c.bf16 %v4583, %v4581
    %v4614 = vpack.c.bf16 %v4584, %v4582
    %v4615 = vpack.c.bf16 %v4587, %v4585
    %v4616 = vpack.c.bf16 %v4588, %v4586
    %v4645 = vunpack.c.l.b16 %v4589
    %v4646 = vunpack.c.l.b16 %v4590
    %v4647 = vunpack.c.h.b16 %v4589
    %v4648 = vunpack.c.h.b16 %v4590
    %v4649 = vunpack.c.l.b16 %v4591
    %v4650 = vunpack.c.l.b16 %v4592
    %v4651 = vunpack.c.h.b16 %v4591
    %v4652 = vunpack.c.h.b16 %v4592
    %v4653 = vunpack.c.l.b16 %v4593
    %v4654 = vunpack.c.l.b16 %v4594
    %v4655 = vunpack.c.h.b16 %v4593
    %v4656 = vunpack.c.h.b16 %v4594
    %v4657 = vunpack.c.l.b16 %v4595
    %v4658 = vunpack.c.l.b16 %v4596
    %v4659 = vunpack.c.h.b16 %v4595
    %v4660 = vunpack.c.h.b16 %v4596
    %v4661 = vunpack.c.l.b16 %v4597
    %v4662 = vunpack.c.l.b16 %v4598
    %v4663 = vunpack.c.h.b16 %v4597
    %v4664 = vunpack.c.h.b16 %v4598
    %v4665 = vunpack.c.l.b16 %v4599
    %v4666 = vunpack.c.l.b16 %v4600
    %v4667 = vunpack.c.h.b16 %v4599
    %v4668 = vunpack.c.h.b16 %v4600
    %v4669 = vunpack.c.l.b16 %v4601
    %v4670 = vunpack.c.l.b16 %v4602
    %v4671 = vunpack.c.h.b16 %v4601
    %v4672 = vunpack.c.h.b16 %v4602
    %v4673 = vunpack.c.l.b16 %v4603
    %v4674 = vunpack.c.l.b16 %v4604
    %v4675 = vunpack.c.h.b16 %v4603
    %v4676 = vunpack.c.h.b16 %v4604
    %v4677 = vunpack.c.l.b16 %v4605
    %v4678 = vunpack.c.l.b16 %v4606
    %v4679 = vunpack.c.h.b16 %v4605
    %v4680 = vunpack.c.h.b16 %v4606
    %v4681 = vunpack.c.l.b16 %v4607
    %v4682 = vunpack.c.l.b16 %v4608
    %v4683 = vunpack.c.h.b16 %v4607
    %v4684 = vunpack.c.h.b16 %v4608
    %v4685 = vunpack.c.l.b16 %v4609
    %v4686 = vunpack.c.l.b16 %v4610
    %v4687 = vunpack.c.h.b16 %v4609
    %v4688 = vunpack.c.h.b16 %v4610
    %v4689 = vunpack.c.l.b16 %v4611
    %v4690 = vunpack.c.l.b16 %v4612
    %v4691 = vunpack.c.h.b16 %v4611
    %v4692 = vunpack.c.h.b16 %v4612
    %v4693 = vunpack.c.l.b16 %v4613
    %v4694 = vunpack.c.l.b16 %v4614
    %v4695 = vunpack.c.h.b16 %v4613
    %v4696 = vunpack.c.h.b16 %v4614
    %v4697 = vunpack.c.l.b16 %v4615
    %v4698 = vunpack.c.l.b16 %v4616
    %v4699 = vunpack.c.h.b16 %v4615
    %v4700 = vunpack.c.h.b16 %v4616
    %v4701 = vpack.c.b16 %v4646, %v4645
    %v4702 = vpack.c.b16 %v4648, %v4647
    %v4703 = vpack.c.b16 %v4650, %v4649
    %v4704 = vpack.c.b16 %v4652, %v4651
    %v4705 = vpack.c.b16 %v4654, %v4653
    %v4706 = vpack.c.b16 %v4656, %v4655
    %v4707 = vpack.c.b16 %v4658, %v4657
    %v4708 = vpack.c.b16 %v4660, %v4659
    %v4709 = vpack.c.b16 %v4662, %v4661
    %v4710 = vpack.c.b16 %v4664, %v4663
    %v4711 = vpack.c.b16 %v4666, %v4665
    %v4712 = vpack.c.b16 %v4668, %v4667
    %v4713 = vpack.c.b16 %v4670, %v4669
    %v4714 = vpack.c.b16 %v4672, %v4671
    %v4715 = vpack.c.b16 %v4674, %v4673
    %v4716 = vpack.c.b16 %v4676, %v4675
    %v4717 = vpack.c.b16 %v4678, %v4677
    %v4718 = vpack.c.b16 %v4680, %v4679
    %v4719 = vpack.c.b16 %v4682, %v4681
    %v4720 = vpack.c.b16 %v4684, %v4683
    %v4721 = vpack.c.b16 %v4686, %v4685
    %v4722 = vpack.c.b16 %v4688, %v4687
    %v4723 = vpack.c.b16 %v4690, %v4689
    %v4724 = vpack.c.b16 %v4692, %v4691
    %v4725 = vpack.c.b16 %v4694, %v4693
    %v4726 = vpack.c.b16 %v4696, %v4695
    %v4727 = vpack.c.b16 %v4698, %v4697
    %v4728 = vpack.c.b16 %v4700, %v4699
    %s4757 = scalar_lea.vmem [#allocation8], 448
    %4758 = vst.msk [vmem:[%s4757] sm:$0xff] %vm1588, %v4701
    %4759 = vst.msk [vmem:[%s4757 + $0x8] sm:$0xff] %vm1588, %v4702
    %4760 = vst.msk [vmem:[%s4757 + $0x10] sm:$0xff] %vm1588, %v4703
    %4761 = vst.msk [vmem:[%s4757 + $0x18] sm:$0xff] %vm1588, %v4704
    %4762 = vst.msk [vmem:[%s4757 + $0x20] sm:$0xff] %vm1588, %v4705
    %4763 = vst.msk [vmem:[%s4757 + $0x28] sm:$0xff] %vm1588, %v4706
    %4764 = vst.msk [vmem:[%s4757 + $0x30] sm:$0xff] %vm1588, %v4707
    %4765 = vst.msk [vmem:[%s4757 + $0x38] sm:$0xff] %vm1588, %v4708
    %4766 = vst.msk [vmem:[%s4757 + $0x40] sm:$0xff] %vm1588, %v4709
    %4767 = vst.msk [vmem:[%s4757 + $0x48] sm:$0xff] %vm1588, %v4710
    %4768 = vst.msk [vmem:[%s4757 + $0x50] sm:$0xff] %vm1588, %v4711
    %4769 = vst.msk [vmem:[%s4757 + $0x58] sm:$0xff] %vm1588, %v4712
    %4770 = vst.msk [vmem:[%s4757 + $0x60] sm:$0xff] %vm1588, %v4713
    %4771 = vst.msk [vmem:[%s4757 + $0x68] sm:$0xff] %vm1588, %v4714
    %4772 = vst.msk [vmem:[%s4757 + $0x70] sm:$0xff] %vm1588, %v4715
    %4773 = vst.msk [vmem:[%s4757 + $0x78] sm:$0xff] %vm1588, %v4716
    %4774 = vst.msk [vmem:[%s4757 + $0x80] sm:$0xff] %vm1588, %v4717
    %4775 = vst.msk [vmem:[%s4757 + $0x88] sm:$0xff] %vm1588, %v4718
    %4776 = vst.msk [vmem:[%s4757 + $0x90] sm:$0xff] %vm1588, %v4719
    %4777 = vst.msk [vmem:[%s4757 + $0x98] sm:$0xff] %vm1588, %v4720
    %4778 = vst.msk [vmem:[%s4757 + $0xa0] sm:$0xff] %vm1588, %v4721
    %4779 = vst.msk [vmem:[%s4757 + $0xa8] sm:$0xff] %vm1588, %v4722
    %4780 = vst.msk [vmem:[%s4757 + $0xb0] sm:$0xff] %vm1588, %v4723
    %4781 = vst.msk [vmem:[%s4757 + $0xb8] sm:$0xff] %vm1588, %v4724
    %4782 = vst.msk [vmem:[%s4757 + $0xc0] sm:$0xff] %vm1588, %v4725
    %4783 = vst.msk [vmem:[%s4757 + $0xc8] sm:$0xff] %vm1588, %v4726
    %4784 = vst.msk [vmem:[%s4757 + $0xd0] sm:$0xff] %vm1588, %v4727
    %4785 = vst.msk [vmem:[%s4757 + $0xd8] sm:$0xff] %vm1588, %v4728
    %v4786 = vmul.f32 %v4020, %v4475
    %v4787 = vmul.f32 %v4022, %v4475
    %v4788 = vmul.f32 %v4024, %v4475
    %v4789 = vmul.f32 %v4026, %v4475
    %v4790 = vmul.f32 %v4030, %v4475
    %v4791 = vmul.f32 %v4032, %v4475
    %v4792 = vmul.f32 %v4034, %v4475
    %v4793 = vmul.f32 %v4036, %v4475
    %v4794 = vmul.f32 %v4040, %v4475
    %v4795 = vmul.f32 %v4042, %v4475
    %v4796 = vmul.f32 %v4044, %v4475
    %v4797 = vmul.f32 %v4046, %v4475
    %v4798 = vmul.f32 %v4050, %v4475
    %v4799 = vmul.f32 %v4052, %v4475
    %v4800 = vmul.f32 %v4054, %v4475
    %v4801 = vmul.f32 %v4056, %v4475
    %v4802 = vmul.f32 %v4060, %v4475
    %v4803 = vmul.f32 %v4062, %v4475
    %v4804 = vmul.f32 %v4064, %v4475
    %v4805 = vmul.f32 %v4066, %v4475
    %v4806 = vmul.f32 %v4070, %v4475
    %v4807 = vmul.f32 %v4072, %v4475
    %v4808 = vmul.f32 %v4074, %v4475
    %v4809 = vmul.f32 %v4076, %v4475
    %v4810 = vmul.f32 %v4080, %v4475
    %v4811 = vmul.f32 %v4082, %v4475
    %v4812 = vmul.f32 %v4084, %v4475
    %v4813 = vmul.f32 %v4086, %v4475
    %v4814 = vmul.f32 %v4090, %v4475
    %v4815 = vmul.f32 %v4092, %v4475
    %v4816 = vmul.f32 %v4094, %v4475
    %v4817 = vmul.f32 %v4096, %v4475
    %v4818 = vmul.f32 %v4100, %v4475
    %v4819 = vmul.f32 %v4102, %v4475
    %v4820 = vmul.f32 %v4104, %v4475
    %v4821 = vmul.f32 %v4106, %v4475
    %v4822 = vmul.f32 %v4110, %v4475
    %v4823 = vmul.f32 %v4112, %v4475
    %v4824 = vmul.f32 %v4114, %v4475
    %v4825 = vmul.f32 %v4116, %v4475
    %v4826 = vmul.f32 %v4120, %v4475
    %v4827 = vmul.f32 %v4122, %v4475
    %v4828 = vmul.f32 %v4124, %v4475
    %v4829 = vmul.f32 %v4126, %v4475
    %v4830 = vmul.f32 %v4130, %v4475
    %v4831 = vmul.f32 %v4132, %v4475
    %v4832 = vmul.f32 %v4134, %v4475
    %v4833 = vmul.f32 %v4136, %v4475
    %v4834 = vmul.f32 %v4140, %v4475
    %v4835 = vmul.f32 %v4142, %v4475
    %v4836 = vmul.f32 %v4144, %v4475
    %v4837 = vmul.f32 %v4146, %v4475
    %v4838 = vmul.f32 %v4150, %v4475
    %v4839 = vmul.f32 %v4152, %v4475
    %v4840 = vmul.f32 %v4154, %v4475
    %v4841 = vmul.f32 %v4156, %v4475
    %v4842 = vadd.f32 %v4786, %v4532
    %v4843 = vadd.f32 %v4787, %v4532
    %v4844 = vadd.f32 %v4788, %v4532
    %v4845 = vadd.f32 %v4789, %v4532
    %v4846 = vadd.f32 %v4790, %v4532
    %v4847 = vadd.f32 %v4791, %v4532
    %v4848 = vadd.f32 %v4792, %v4532
    %v4849 = vadd.f32 %v4793, %v4532
    %v4850 = vadd.f32 %v4794, %v4532
    %v4851 = vadd.f32 %v4795, %v4532
    %v4852 = vadd.f32 %v4796, %v4532
    %v4853 = vadd.f32 %v4797, %v4532
    %v4854 = vadd.f32 %v4798, %v4532
    %v4855 = vadd.f32 %v4799, %v4532
    %v4856 = vadd.f32 %v4800, %v4532
    %v4857 = vadd.f32 %v4801, %v4532
    %v4858 = vadd.f32 %v4802, %v4532
    %v4859 = vadd.f32 %v4803, %v4532
    %v4860 = vadd.f32 %v4804, %v4532
    %v4861 = vadd.f32 %v4805, %v4532
    %v4862 = vadd.f32 %v4806, %v4532
    %v4863 = vadd.f32 %v4807, %v4532
    %v4864 = vadd.f32 %v4808, %v4532
    %v4865 = vadd.f32 %v4809, %v4532
    %v4866 = vadd.f32 %v4810, %v4532
    %v4867 = vadd.f32 %v4811, %v4532
    %v4868 = vadd.f32 %v4812, %v4532
    %v4869 = vadd.f32 %v4813, %v4532
    %v4870 = vadd.f32 %v4814, %v4532
    %v4871 = vadd.f32 %v4815, %v4532
    %v4872 = vadd.f32 %v4816, %v4532
    %v4873 = vadd.f32 %v4817, %v4532
    %v4874 = vadd.f32 %v4818, %v4532
    %v4875 = vadd.f32 %v4819, %v4532
    %v4876 = vadd.f32 %v4820, %v4532
    %v4877 = vadd.f32 %v4821, %v4532
    %v4878 = vadd.f32 %v4822, %v4532
    %v4879 = vadd.f32 %v4823, %v4532
    %v4880 = vadd.f32 %v4824, %v4532
    %v4881 = vadd.f32 %v4825, %v4532
    %v4882 = vadd.f32 %v4826, %v4532
    %v4883 = vadd.f32 %v4827, %v4532
    %v4884 = vadd.f32 %v4828, %v4532
    %v4885 = vadd.f32 %v4829, %v4532
    %v4886 = vadd.f32 %v4830, %v4532
    %v4887 = vadd.f32 %v4831, %v4532
    %v4888 = vadd.f32 %v4832, %v4532
    %v4889 = vadd.f32 %v4833, %v4532
    %v4890 = vadd.f32 %v4834, %v4532
    %v4891 = vadd.f32 %v4835, %v4532
    %v4892 = vadd.f32 %v4836, %v4532
    %v4893 = vadd.f32 %v4837, %v4532
    %v4894 = vadd.f32 %v4838, %v4532
    %v4895 = vadd.f32 %v4839, %v4532
    %v4896 = vadd.f32 %v4840, %v4532
    %v4897 = vadd.f32 %v4841, %v4532
    %v4898 = vpack.c.bf16 %v4844, %v4842
    %v4899 = vpack.c.bf16 %v4845, %v4843
    %v4900 = vpack.c.bf16 %v4848, %v4846
    %v4901 = vpack.c.bf16 %v4849, %v4847
    %v4902 = vpack.c.bf16 %v4852, %v4850
    %v4903 = vpack.c.bf16 %v4853, %v4851
    %v4904 = vpack.c.bf16 %v4856, %v4854
    %v4905 = vpack.c.bf16 %v4857, %v4855
    %v4906 = vpack.c.bf16 %v4860, %v4858
    %v4907 = vpack.c.bf16 %v4861, %v4859
    %v4908 = vpack.c.bf16 %v4864, %v4862
    %v4909 = vpack.c.bf16 %v4865, %v4863
    %v4910 = vpack.c.bf16 %v4868, %v4866
    %v4911 = vpack.c.bf16 %v4869, %v4867
    %v4912 = vpack.c.bf16 %v4872, %v4870
    %v4913 = vpack.c.bf16 %v4873, %v4871
    %v4914 = vpack.c.bf16 %v4876, %v4874
    %v4915 = vpack.c.bf16 %v4877, %v4875
    %v4916 = vpack.c.bf16 %v4880, %v4878
    %v4917 = vpack.c.bf16 %v4881, %v4879
    %v4918 = vpack.c.bf16 %v4884, %v4882
    %v4919 = vpack.c.bf16 %v4885, %v4883
    %v4920 = vpack.c.bf16 %v4888, %v4886
    %v4921 = vpack.c.bf16 %v4889, %v4887
    %v4922 = vpack.c.bf16 %v4892, %v4890
    %v4923 = vpack.c.bf16 %v4893, %v4891
    %v4924 = vpack.c.bf16 %v4896, %v4894
    %v4925 = vpack.c.bf16 %v4897, %v4895
    %v4954 = vunpack.c.l.b16 %v4898
    %v4955 = vunpack.c.l.b16 %v4899
    %v4956 = vunpack.c.h.b16 %v4898
    %v4957 = vunpack.c.h.b16 %v4899
    %v4958 = vunpack.c.l.b16 %v4900
    %v4959 = vunpack.c.l.b16 %v4901
    %v4960 = vunpack.c.h.b16 %v4900
    %v4961 = vunpack.c.h.b16 %v4901
    %v4962 = vunpack.c.l.b16 %v4902
    %v4963 = vunpack.c.l.b16 %v4903
    %v4964 = vunpack.c.h.b16 %v4902
    %v4965 = vunpack.c.h.b16 %v4903
    %v4966 = vunpack.c.l.b16 %v4904
    %v4967 = vunpack.c.l.b16 %v4905
    %v4968 = vunpack.c.h.b16 %v4904
    %v4969 = vunpack.c.h.b16 %v4905
    %v4970 = vunpack.c.l.b16 %v4906
    %v4971 = vunpack.c.l.b16 %v4907
    %v4972 = vunpack.c.h.b16 %v4906
    %v4973 = vunpack.c.h.b16 %v4907
    %v4974 = vunpack.c.l.b16 %v4908
    %v4975 = vunpack.c.l.b16 %v4909
    %v4976 = vunpack.c.h.b16 %v4908
    %v4977 = vunpack.c.h.b16 %v4909
    %v4978 = vunpack.c.l.b16 %v4910
    %v4979 = vunpack.c.l.b16 %v4911
    %v4980 = vunpack.c.h.b16 %v4910
    %v4981 = vunpack.c.h.b16 %v4911
    %v4982 = vunpack.c.l.b16 %v4912
    %v4983 = vunpack.c.l.b16 %v4913
    %v4984 = vunpack.c.h.b16 %v4912
    %v4985 = vunpack.c.h.b16 %v4913
    %v4986 = vunpack.c.l.b16 %v4914
    %v4987 = vunpack.c.l.b16 %v4915
    %v4988 = vunpack.c.h.b16 %v4914
    %v4989 = vunpack.c.h.b16 %v4915
    %v4990 = vunpack.c.l.b16 %v4916
    %v4991 = vunpack.c.l.b16 %v4917
    %v4992 = vunpack.c.h.b16 %v4916
    %v4993 = vunpack.c.h.b16 %v4917
    %v4994 = vunpack.c.l.b16 %v4918
    %v4995 = vunpack.c.l.b16 %v4919
    %v4996 = vunpack.c.h.b16 %v4918
    %v4997 = vunpack.c.h.b16 %v4919
    %v4998 = vunpack.c.l.b16 %v4920
    %v4999 = vunpack.c.l.b16 %v4921
    %v5000 = vunpack.c.h.b16 %v4920
    %v5001 = vunpack.c.h.b16 %v4921
    %v5002 = vunpack.c.l.b16 %v4922
    %v5003 = vunpack.c.l.b16 %v4923
    %v5004 = vunpack.c.h.b16 %v4922
    %v5005 = vunpack.c.h.b16 %v4923
    %v5006 = vunpack.c.l.b16 %v4924
    %v5007 = vunpack.c.l.b16 %v4925
    %v5008 = vunpack.c.h.b16 %v4924
    %v5009 = vunpack.c.h.b16 %v4925
    %v5010 = vpack.c.b16 %v4955, %v4954
    %v5011 = vpack.c.b16 %v4957, %v4956
    %v5012 = vpack.c.b16 %v4959, %v4958
    %v5013 = vpack.c.b16 %v4961, %v4960
    %v5014 = vpack.c.b16 %v4963, %v4962
    %v5015 = vpack.c.b16 %v4965, %v4964
    %v5016 = vpack.c.b16 %v4967, %v4966
    %v5017 = vpack.c.b16 %v4969, %v4968
    %v5018 = vpack.c.b16 %v4971, %v4970
    %v5019 = vpack.c.b16 %v4973, %v4972
    %v5020 = vpack.c.b16 %v4975, %v4974
    %v5021 = vpack.c.b16 %v4977, %v4976
    %v5022 = vpack.c.b16 %v4979, %v4978
    %v5023 = vpack.c.b16 %v4981, %v4980
    %v5024 = vpack.c.b16 %v4983, %v4982
    %v5025 = vpack.c.b16 %v4985, %v4984
    %v5026 = vpack.c.b16 %v4987, %v4986
    %v5027 = vpack.c.b16 %v4989, %v4988
    %v5028 = vpack.c.b16 %v4991, %v4990
    %v5029 = vpack.c.b16 %v4993, %v4992
    %v5030 = vpack.c.b16 %v4995, %v4994
    %v5031 = vpack.c.b16 %v4997, %v4996
    %v5032 = vpack.c.b16 %v4999, %v4998
    %v5033 = vpack.c.b16 %v5001, %v5000
    %v5034 = vpack.c.b16 %v5003, %v5002
    %v5035 = vpack.c.b16 %v5005, %v5004
    %v5036 = vpack.c.b16 %v5007, %v5006
    %v5037 = vpack.c.b16 %v5009, %v5008
    %s5066 = scalar_lea.vmem [#allocation9], 448
    %5067 = vst.msk [vmem:[%s5066] sm:$0xff] %vm1588, %v5010
    %5068 = vst.msk [vmem:[%s5066 + $0x8] sm:$0xff] %vm1588, %v5011
    %5069 = vst.msk [vmem:[%s5066 + $0x10] sm:$0xff] %vm1588, %v5012
    %5070 = vst.msk [vmem:[%s5066 + $0x18] sm:$0xff] %vm1588, %v5013
    %5071 = vst.msk [vmem:[%s5066 + $0x20] sm:$0xff] %vm1588, %v5014
    %5072 = vst.msk [vmem:[%s5066 + $0x28] sm:$0xff] %vm1588, %v5015
    %5073 = vst.msk [vmem:[%s5066 + $0x30] sm:$0xff] %vm1588, %v5016
    %5074 = vst.msk [vmem:[%s5066 + $0x38] sm:$0xff] %vm1588, %v5017
    %5075 = vst.msk [vmem:[%s5066 + $0x40] sm:$0xff] %vm1588, %v5018
    %5076 = vst.msk [vmem:[%s5066 + $0x48] sm:$0xff] %vm1588, %v5019
    %5077 = vst.msk [vmem:[%s5066 + $0x50] sm:$0xff] %vm1588, %v5020
    %5078 = vst.msk [vmem:[%s5066 + $0x58] sm:$0xff] %vm1588, %v5021
    %5079 = vst.msk [vmem:[%s5066 + $0x60] sm:$0xff] %vm1588, %v5022
    %5080 = vst.msk [vmem:[%s5066 + $0x68] sm:$0xff] %vm1588, %v5023
    %5081 = vst.msk [vmem:[%s5066 + $0x70] sm:$0xff] %vm1588, %v5024
    %5082 = vst.msk [vmem:[%s5066 + $0x78] sm:$0xff] %vm1588, %v5025
    %5083 = vst.msk [vmem:[%s5066 + $0x80] sm:$0xff] %vm1588, %v5026
    %5084 = vst.msk [vmem:[%s5066 + $0x88] sm:$0xff] %vm1588, %v5027
    %5085 = vst.msk [vmem:[%s5066 + $0x90] sm:$0xff] %vm1588, %v5028
    %5086 = vst.msk [vmem:[%s5066 + $0x98] sm:$0xff] %vm1588, %v5029
    %5087 = vst.msk [vmem:[%s5066 + $0xa0] sm:$0xff] %vm1588, %v5030
    %5088 = vst.msk [vmem:[%s5066 + $0xa8] sm:$0xff] %vm1588, %v5031
    %5089 = vst.msk [vmem:[%s5066 + $0xb0] sm:$0xff] %vm1588, %v5032
    %5090 = vst.msk [vmem:[%s5066 + $0xb8] sm:$0xff] %vm1588, %v5033
    %5091 = vst.msk [vmem:[%s5066 + $0xc0] sm:$0xff] %vm1588, %v5034
    %5092 = vst.msk [vmem:[%s5066 + $0xc8] sm:$0xff] %vm1588, %v5035
    %5093 = vst.msk [vmem:[%s5066 + $0xd0] sm:$0xff] %vm1588, %v5036
    %5094 = vst.msk [vmem:[%s5066 + $0xd8] sm:$0xff] %vm1588, %v5037
    %v5095 = vmul.f32 %v4211, %v4475
    %v5096 = vmul.f32 %v4214, %v4475
    %v5097 = vmul.f32 %v4219, %v4475
    %v5098 = vmul.f32 %v4222, %v4475
    %v5099 = vmul.f32 %v4227, %v4475
    %v5100 = vmul.f32 %v4230, %v4475
    %v5101 = vmul.f32 %v4235, %v4475
    %v5102 = vmul.f32 %v4238, %v4475
    %v5103 = vmul.f32 %v4243, %v4475
    %v5104 = vmul.f32 %v4246, %v4475
    %v5105 = vmul.f32 %v4251, %v4475
    %v5106 = vmul.f32 %v4254, %v4475
    %v5107 = vadd.f32 %v5095, %v4532
    %v5108 = vadd.f32 %v5096, %v4532
    %v5109 = vadd.f32 %v5097, %v4532
    %v5110 = vadd.f32 %v5098, %v4532
    %v5111 = vadd.f32 %v5099, %v4532
    %v5112 = vadd.f32 %v5100, %v4532
    %v5113 = vadd.f32 %v5101, %v4532
    %v5114 = vadd.f32 %v5102, %v4532
    %v5115 = vadd.f32 %v5103, %v4532
    %v5116 = vadd.f32 %v5104, %v4532
    %v5117 = vadd.f32 %v5105, %v4532
    %v5118 = vadd.f32 %v5106, %v4532
    %v5119 = vpack.c.bf16 %v5108, %v5107
    %v5120 = vpack.c.bf16 %v5110, %v5109
    %v5121 = vpack.c.bf16 %v5112, %v5111
    %v5122 = vpack.c.bf16 %v5114, %v5113
    %v5123 = vpack.c.bf16 %v5116, %v5115
    %v5124 = vpack.c.bf16 %v5118, %v5117
    %v5131 = vunpack.c.l.b16 %v5119
    %v5132 = vunpack.c.h.b16 %v5119
    %v5133 = vunpack.c.l.b16 %v5120
    %v5134 = vunpack.c.h.b16 %v5120
    %v5135 = vunpack.c.l.b16 %v5121
    %v5136 = vunpack.c.h.b16 %v5121
    %v5137 = vunpack.c.l.b16 %v5122
    %v5138 = vunpack.c.h.b16 %v5122
    %v5139 = vunpack.c.l.b16 %v5123
    %v5140 = vunpack.c.h.b16 %v5123
    %v5141 = vunpack.c.l.b16 %v5124
    %v5142 = vunpack.c.h.b16 %v5124
    %v5143 = vpack.c.b16 %v5131, %v5131
    %v5144 = vpack.c.b16 %v5132, %v5132
    %v5145 = vpack.c.b16 %v5133, %v5133
    %v5146 = vpack.c.b16 %v5134, %v5134
    %v5147 = vpack.c.b16 %v5135, %v5135
    %v5148 = vpack.c.b16 %v5136, %v5136
    %v5149 = vpack.c.b16 %v5137, %v5137
    %v5150 = vpack.c.b16 %v5138, %v5138
    %v5151 = vpack.c.b16 %v5139, %v5139
    %v5152 = vpack.c.b16 %v5140, %v5140
    %v5153 = vpack.c.b16 %v5141, %v5141
    %v5154 = vpack.c.b16 %v5142, %v5142
    %s5167 = scalar_lea.vmem [#allocation11], 96
    %5168 = vst.msk [vmem:[%s5167] sm:$0xf] %vm1997, %v5143
    %5169 = vst.msk [vmem:[%s5167 + $0x4] sm:$0xf] %vm1997, %v5144
    %5170 = vst.msk [vmem:[%s5167 + $0x8] sm:$0xf] %vm1997, %v5145
    %5171 = vst.msk [vmem:[%s5167 + $0xc] sm:$0xf] %vm1997, %v5146
    %5172 = vst.msk [vmem:[%s5167 + $0x10] sm:$0xf] %vm1997, %v5147
    %5173 = vst.msk [vmem:[%s5167 + $0x14] sm:$0xf] %vm1997, %v5148
    %5174 = vst.msk [vmem:[%s5167 + $0x18] sm:$0xf] %vm1997, %v5149
    %5175 = vst.msk [vmem:[%s5167 + $0x1c] sm:$0xf] %vm1997, %v5150
    %5176 = vst.msk [vmem:[%s5167 + $0x20] sm:$0xf] %vm1997, %v5151
    %5177 = vst.msk [vmem:[%s5167 + $0x24] sm:$0xf] %vm1997, %v5152
    %5178 = vst.msk [vmem:[%s5167 + $0x28] sm:$0xf] %vm1997, %v5153
    %5179 = vst.msk [vmem:[%s5167 + $0x2c] sm:$0xf] %vm1997, %v5154
    %s5180 = scalar_lea.vmem %s2, 24
    %v5181 = vld [vmem:[%s5180] sm:$0xf]
    %v5182 = vld [vmem:[%s5180 + $0x4] sm:$0xf]
    %v5185 = vunpack.c.l.b16 %v5181
    %v5186 = vunpack.c.l.b16 %v5182
    %v5187 = vpack.c.b16 %v5186, %v5185
    %5189 = vmatprep.subr.bf16.mxu0 0
    %5190 = vmatpush1.bf16.msra.mxu0 %v5187
    %5191 = vmatprep.subr.bf16.mxu0 0
    %5192 = vmatpush1.bf16.msra.mxu0 0
    %5193 = vmatprep.subr.bf16.mxu0 0
    %5194 = vmatpush1.bf16.msra.mxu0 0
    %5195 = vmatprep.subr.bf16.mxu0 0
    %5196 = vmatpush1.bf16.msra.mxu0 0
    %5197 = vmatprep.subr.bf16.mxu0 0
    %5198 = vmatpush1.bf16.msra.mxu0 0
    %5199 = vmatprep.subr.bf16.mxu0 0
    %5200 = vmatpush1.bf16.msra.mxu0 0
    %5201 = vmatprep.subr.bf16.mxu0 0
    %5202 = vmatpush1.bf16.msra.mxu0 0
    %5203 = vmatprep.subr.bf16.mxu0 0
    %5204 = vmatpush1.bf16.msra.mxu0 0
    %5205 = vmatprep.subr.bf16.mxu0 0
    %5206 = vmatpush1.bf16.msra.mxu0 0
    %5207 = vmatprep.subr.bf16.mxu0 0
    %5208 = vmatpush1.bf16.msra.mxu0 0
    %5209 = vmatprep.subr.bf16.mxu0 0
    %5210 = vmatpush1.bf16.msra.mxu0 0
    %5211 = vmatprep.subr.bf16.mxu0 0
    %5212 = vmatpush1.bf16.msra.mxu0 0
    %5213 = vmatprep.subr.bf16.mxu0 0
    %5214 = vmatpush1.bf16.msra.mxu0 0
    %5215 = vmatprep.subr.bf16.mxu0 0
    %5216 = vmatpush1.bf16.msra.mxu0 0
    %5217 = vmatprep.subr.bf16.mxu0 0
    %5218 = vmatpush1.bf16.msra.mxu0 0
    %5219 = vmatprep.subr.bf16.mxu0 0
    %5220 = vmatpush1.bf16.msra.mxu0 0
    %5221 = vmatprep.mubr.bf16.mxu0 0
    %5222 = vmatmul.mubr.bf16.gmra.mrb[0].mxu0 %v307
    %v5223 = vpop.f32.mrb[0].mxu0
    %v5224 = vadd.f32 0.0, %v5223
    %v5225 = vpop.f32.mrb[0].mxu0
    %v5226 = vpop.f32.mrb[0].mxu0
    %v5227 = vadd.f32 0.0, %v5226
    %v5228 = vpop.f32.mrb[0].mxu0
    %5229 = vmatprep.mubr.bf16.mxu0 0
    %5230 = vmatmul.mubr.bf16.gmra.mrb[0].mxu0 %v310
    %v5231 = vpop.f32.mrb[0].mxu0
    %v5232 = vadd.f32 0.0, %v5231
    %v5233 = vpop.f32.mrb[0].mxu0
    %v5234 = vpop.f32.mrb[0].mxu0
    %v5235 = vadd.f32 0.0, %v5234
    %v5236 = vpop.f32.mrb[0].mxu0
    %5237 = vmatprep.mubr.bf16.mxu0 0
    %5238 = vmatmul.mubr.bf16.gmra.mrb[0].mxu0 %v313
    %v5239 = vpop.f32.mrb[0].mxu0
    %v5240 = vadd.f32 0.0, %v5239
    %v5241 = vpop.f32.mrb[0].mxu0
    %v5242 = vpop.f32.mrb[0].mxu0
    %v5243 = vadd.f32 0.0, %v5242
    %v5244 = vpop.f32.mrb[0].mxu0
    %5245 = vmatprep.mubr.bf16.mxu0 0
    %5246 = vmatmul.mubr.bf16.gmra.mrb[0].mxu0 %v316
    %v5247 = vpop.f32.mrb[0].mxu0
    %v5248 = vadd.f32 0.0, %v5247
    %v5249 = vpop.f32.mrb[0].mxu0
    %v5250 = vpop.f32.mrb[0].mxu0
    %v5251 = vadd.f32 0.0, %v5250
    %v5252 = vpop.f32.mrb[0].mxu0
    %5253 = vmatprep.mubr.bf16.mxu0 0
    %5254 = vmatmul.mubr.bf16.gmra.mrb[0].mxu0 %v319
    %v5255 = vpop.f32.mrb[0].mxu0
    %v5256 = vadd.f32 0.0, %v5255
    %v5257 = vpop.f32.mrb[0].mxu0
    %v5258 = vpop.f32.mrb[0].mxu0
    %v5259 = vadd.f32 0.0, %v5258
    %v5260 = vpop.f32.mrb[0].mxu0
    %5261 = vmatprep.mubr.bf16.mxu0 0
    %5262 = vmatmul.mubr.bf16.gmra.mrb[0].mxu0 %v322
    %v5263 = vpop.f32.mrb[0].mxu0
    %v5264 = vadd.f32 0.0, %v5263
    %v5265 = vpop.f32.mrb[0].mxu0
    %v5266 = vpop.f32.mrb[0].mxu0
    %v5267 = vadd.f32 0.0, %v5266
    %v5268 = vpop.f32.mrb[0].mxu0
    %5269 = vmatprep.mubr.bf16.mxu0 0
    %5270 = vmatmul.mubr.bf16.gmra.mrb[0].mxu0 %v325
    %v5271 = vpop.f32.mrb[0].mxu0
    %v5272 = vadd.f32 0.0, %v5271
    %v5273 = vpop.f32.mrb[0].mxu0
    %v5274 = vpop.f32.mrb[0].mxu0
    %v5275 = vadd.f32 0.0, %v5274
    %v5276 = vpop.f32.mrb[0].mxu0
    %5277 = vmatprep.mubr.bf16.mxu0 0
    %5278 = vmatmul.mubr.bf16.gmra.mrb[0].mxu0 %v328
    %v5279 = vpop.f32.mrb[0].mxu0
    %v5280 = vadd.f32 0.0, %v5279
    %v5281 = vpop.f32.mrb[0].mxu0
    %v5282 = vpop.f32.mrb[0].mxu0
    %v5283 = vadd.f32 0.0, %v5282
    %v5284 = vpop.f32.mrb[0].mxu0
    %5285 = vmatprep.mubr.bf16.mxu0 0
    %5286 = vmatmul.mubr.bf16.gmra.mrb[0].mxu0 %v331
    %v5287 = vpop.f32.mrb[0].mxu0
    %v5288 = vadd.f32 0.0, %v5287
    %v5289 = vpop.f32.mrb[0].mxu0
    %v5290 = vpop.f32.mrb[0].mxu0
    %v5291 = vadd.f32 0.0, %v5290
    %v5292 = vpop.f32.mrb[0].mxu0
    %5293 = vmatprep.mubr.bf16.mxu0 0
    %5294 = vmatmul.mubr.bf16.gmra.mrb[0].mxu0 %v334
    %v5295 = vpop.f32.mrb[0].mxu0
    %v5296 = vadd.f32 0.0, %v5295
    %v5297 = vpop.f32.mrb[0].mxu0
    %v5298 = vpop.f32.mrb[0].mxu0
    %v5299 = vadd.f32 0.0, %v5298
    %v5300 = vpop.f32.mrb[0].mxu0
    %5301 = vmatprep.mubr.bf16.mxu0 0
    %5302 = vmatmul.mubr.bf16.gmra.mrb[0].mxu0 %v337
    %v5303 = vpop.f32.mrb[0].mxu0
    %v5304 = vadd.f32 0.0, %v5303
    %v5305 = vpop.f32.mrb[0].mxu0
    %v5306 = vpop.f32.mrb[0].mxu0
    %v5307 = vadd.f32 0.0, %v5306
    %v5308 = vpop.f32.mrb[0].mxu0
    %5309 = vmatprep.mubr.bf16.mxu0 0
    %5310 = vmatmul.mubr.bf16.gmra.mrb[0].mxu0 %v340
    %v5311 = vpop.f32.mrb[0].mxu0
    %v5312 = vadd.f32 0.0, %v5311
    %v5313 = vpop.f32.mrb[0].mxu0
    %v5314 = vpop.f32.mrb[0].mxu0
    %v5315 = vadd.f32 0.0, %v5314
    %v5316 = vpop.f32.mrb[0].mxu0
    %5317 = vmatprep.mubr.bf16.mxu0 0
    %5318 = vmatmul.mubr.bf16.gmra.mrb[0].mxu0 %v343
    %v5319 = vpop.f32.mrb[0].mxu0
    %v5320 = vadd.f32 0.0, %v5319
    %v5321 = vpop.f32.mrb[0].mxu0
    %v5322 = vpop.f32.mrb[0].mxu0
    %v5323 = vadd.f32 0.0, %v5322
    %v5324 = vpop.f32.mrb[0].mxu0
    %5325 = vmatprep.mubr.bf16.mxu0 0
    %5326 = vmatmul.mubr.bf16.gmra.mrb[0].mxu0 %v346
    %v5327 = vpop.f32.mrb[0].mxu0
    %v5328 = vadd.f32 0.0, %v5327
    %v5329 = vpop.f32.mrb[0].mxu0
    %v5330 = vpop.f32.mrb[0].mxu0
    %v5331 = vadd.f32 0.0, %v5330
    %v5332 = vpop.f32.mrb[0].mxu0
    %5333 = vmatprep.mubr.bf16.mxu0 0
    %5334 = vmatmul.mubr.bf16.gmra.mrb[0].mxu0 %v349
    %v5335 = vpop.f32.mrb[0].mxu0
    %v5336 = vadd.f32 0.0, %v5335
    %v5337 = vpop.f32.mrb[0].mxu0
    %v5338 = vpop.f32.mrb[0].mxu0
    %v5339 = vadd.f32 0.0, %v5338
    %v5340 = vpop.f32.mrb[0].mxu0
    %5341 = vmatprep.mubr.bf16.mxu0 0
    %5342 = vmatmul.mubr.bf16.gmra.mrb[0].mxu0 %v352
    %v5343 = vpop.f32.mrb[0].mxu0
    %v5344 = vadd.f32 0.0, %v5343
    %v5345 = vpop.f32.mrb[0].mxu0
    %v5346 = vpop.f32.mrb[0].mxu0
    %v5347 = vadd.f32 0.0, %v5346
    %v5348 = vpop.f32.mrb[0].mxu0
    %5349 = vmatprep.mubr.bf16.mxu0 0
    %5350 = vmatmul.mubr.bf16.gmra.mrb[0].mxu0 %v355
    %v5351 = vpop.f32.mrb[0].mxu0
    %v5352 = vadd.f32 0.0, %v5351
    %v5353 = vpop.f32.mrb[0].mxu0
    %v5354 = vpop.f32.mrb[0].mxu0
    %v5355 = vadd.f32 0.0, %v5354
    %v5356 = vpop.f32.mrb[0].mxu0
    %5357 = vmatprep.mubr.bf16.mxu0 0
    %5358 = vmatmul.mubr.bf16.gmra.mrb[0].mxu0 %v358
    %v5359 = vpop.f32.mrb[0].mxu0
    %v5360 = vadd.f32 0.0, %v5359
    %v5361 = vpop.f32.mrb[0].mxu0
    %v5362 = vpop.f32.mrb[0].mxu0
    %v5363 = vadd.f32 0.0, %v5362
    %v5364 = vpop.f32.mrb[0].mxu0
    %5365 = vmatprep.mubr.bf16.mxu0 0
    %5366 = vmatmul.mubr.bf16.gmra.mrb[0].mxu0 %v361
    %v5367 = vpop.f32.mrb[0].mxu0
    %v5368 = vadd.f32 0.0, %v5367
    %v5369 = vpop.f32.mrb[0].mxu0
    %v5370 = vpop.f32.mrb[0].mxu0
    %v5371 = vadd.f32 0.0, %v5370
    %v5372 = vpop.f32.mrb[0].mxu0
    %5373 = vmatprep.mubr.bf16.mxu0 0
    %5374 = vmatmul.mubr.bf16.gmra.mrb[0].mxu0 %v364
    %v5375 = vpop.f32.mrb[0].mxu0
    %v5376 = vadd.f32 0.0, %v5375
    %v5377 = vpop.f32.mrb[0].mxu0
    %v5378 = vpop.f32.mrb[0].mxu0
    %v5379 = vadd.f32 0.0, %v5378
    %v5380 = vpop.f32.mrb[0].mxu0
    %5381 = vmatprep.mubr.bf16.mxu0 0
    %5382 = vmatmul.mubr.bf16.gmra.mrb[0].mxu0 %v367
    %v5383 = vpop.f32.mrb[0].mxu0
    %v5384 = vadd.f32 0.0, %v5383
    %v5385 = vpop.f32.mrb[0].mxu0
    %v5386 = vpop.f32.mrb[0].mxu0
    %v5387 = vadd.f32 0.0, %v5386
    %v5388 = vpop.f32.mrb[0].mxu0
    %5389 = vmatprep.mubr.bf16.mxu0 0
    %5390 = vmatmul.mubr.bf16.gmra.mrb[0].mxu0 %v370
    %v5391 = vpop.f32.mrb[0].mxu0
    %v5392 = vadd.f32 0.0, %v5391
    %v5393 = vpop.f32.mrb[0].mxu0
    %v5394 = vpop.f32.mrb[0].mxu0
    %v5395 = vadd.f32 0.0, %v5394
    %v5396 = vpop.f32.mrb[0].mxu0
    %5397 = vmatprep.mubr.bf16.mxu0 0
    %5398 = vmatmul.mubr.bf16.gmra.mrb[0].mxu0 %v373
    %v5399 = vpop.f32.mrb[0].mxu0
    %v5400 = vadd.f32 0.0, %v5399
    %v5401 = vpop.f32.mrb[0].mxu0
    %v5402 = vpop.f32.mrb[0].mxu0
    %v5403 = vadd.f32 0.0, %v5402
    %v5404 = vpop.f32.mrb[0].mxu0
    %5405 = vmatprep.mubr.bf16.mxu0 0
    %5406 = vmatmul.mubr.bf16.gmra.mrb[0].mxu0 %v376
    %v5407 = vpop.f32.mrb[0].mxu0
    %v5408 = vadd.f32 0.0, %v5407
    %v5409 = vpop.f32.mrb[0].mxu0
    %v5410 = vpop.f32.mrb[0].mxu0
    %v5411 = vadd.f32 0.0, %v5410
    %v5412 = vpop.f32.mrb[0].mxu0
    %5413 = vmatprep.mubr.bf16.mxu0 0
    %5414 = vmatmul.mubr.bf16.gmra.mrb[0].mxu0 %v379
    %v5415 = vpop.f32.mrb[0].mxu0
    %v5416 = vadd.f32 0.0, %v5415
    %v5417 = vpop.f32.mrb[0].mxu0
    %v5418 = vpop.f32.mrb[0].mxu0
    %v5419 = vadd.f32 0.0, %v5418
    %v5420 = vpop.f32.mrb[0].mxu0
    %5421 = vmatprep.mubr.bf16.mxu0 0
    %5422 = vmatmul.mubr.bf16.gmra.mrb[0].mxu0 %v382
    %v5423 = vpop.f32.mrb[0].mxu0
    %v5424 = vadd.f32 0.0, %v5423
    %v5425 = vpop.f32.mrb[0].mxu0
    %v5426 = vpop.f32.mrb[0].mxu0
    %v5427 = vadd.f32 0.0, %v5426
    %v5428 = vpop.f32.mrb[0].mxu0
    %5429 = vmatprep.mubr.bf16.mxu0 0
    %5430 = vmatmul.mubr.bf16.gmra.mrb[0].mxu0 %v385
    %v5431 = vpop.f32.mrb[0].mxu0
    %v5432 = vadd.f32 0.0, %v5431
    %v5433 = vpop.f32.mrb[0].mxu0
    %v5434 = vpop.f32.mrb[0].mxu0
    %v5435 = vadd.f32 0.0, %v5434
    %v5436 = vpop.f32.mrb[0].mxu0
    %5437 = vmatprep.mubr.bf16.mxu0 0
    %5438 = vmatmul.mubr.bf16.gmra.mrb[0].mxu0 %v388
    %v5439 = vpop.f32.mrb[0].mxu0
    %v5440 = vadd.f32 0.0, %v5439
    %v5441 = vpop.f32.mrb[0].mxu0
    %v5442 = vpop.f32.mrb[0].mxu0
    %v5443 = vadd.f32 0.0, %v5442
    %v5444 = vpop.f32.mrb[0].mxu0
    %5445 = vmatprep.mubr.bf16.mxu0 0
    %5446 = vmatmul.mubr.bf16.gmra.mrb[0].mxu0 %v391
    %v5447 = vpop.f32.mrb[0].mxu0
    %v5448 = vadd.f32 0.0, %v5447
    %v5449 = vpop.f32.mrb[0].mxu0
    %v5450 = vpop.f32.mrb[0].mxu0
    %v5451 = vadd.f32 0.0, %v5450
    %v5452 = vpop.f32.mrb[0].mxu0
    %5453 = vmatprep.mubr.bf16.mxu0 0
    %5454 = vmatmul.mubr.bf16.gmra.mrb[0].mxu0 %v394
    %v5455 = vpop.f32.mrb[0].mxu0
    %v5456 = vadd.f32 0.0, %v5455
    %v5457 = vpop.f32.mrb[0].mxu0
    %v5458 = vpop.f32.mrb[0].mxu0
    %v5459 = vadd.f32 0.0, %v5458
    %v5460 = vpop.f32.mrb[0].mxu0
    %5461 = vmatprep.mubr.bf16.mxu0 0
    %5462 = vmatmul.mubr.bf16.gmra.mrb[0].mxu0 %v397
    %v5463 = vpop.f32.mrb[0].mxu0
    %v5464 = vadd.f32 0.0, %v5463
    %v5465 = vpop.f32.mrb[0].mxu0
    %v5466 = vpop.f32.mrb[0].mxu0
    %v5467 = vadd.f32 0.0, %v5466
    %v5468 = vpop.f32.mrb[0].mxu0
    %5469 = vmatprep.mubr.bf16.mxu0 0
    %5470 = vmatmul.mubr.bf16.gmra.mrb[0].mxu0 %v400
    %v5471 = vpop.f32.mrb[0].mxu0
    %v5472 = vadd.f32 0.0, %v5471
    %v5473 = vpop.f32.mrb[0].mxu0
    %v5474 = vpop.f32.mrb[0].mxu0
    %v5475 = vadd.f32 0.0, %v5474
    %v5476 = vpop.f32.mrb[0].mxu0
    %5477 = vmatprep.mubr.bf16.mxu0 0
    %5478 = vmatmul.mubr.bf16.gmra.mrb[0].mxu0 %v403
    %v5479 = vpop.f32.mrb[0].mxu0
    %v5480 = vadd.f32 0.0, %v5479
    %v5481 = vpop.f32.mrb[0].mxu0
    %v5482 = vpop.f32.mrb[0].mxu0
    %v5483 = vadd.f32 0.0, %v5482
    %v5484 = vpop.f32.mrb[0].mxu0
    %5485 = vmatprep.mubr.bf16.mxu0 0
    %5486 = vmatmul.mubr.bf16.gmra.mrb[0].mxu0 %v406
    %v5487 = vpop.f32.mrb[0].mxu0
    %v5488 = vadd.f32 0.0, %v5487
    %v5489 = vpop.f32.mrb[0].mxu0
    %v5490 = vpop.f32.mrb[0].mxu0
    %v5491 = vadd.f32 0.0, %v5490
    %v5492 = vpop.f32.mrb[0].mxu0
    %5493 = vdwg.mxu0
    %v5494 = vpack.c.bf16 %v5227, %v5224
    %v5495 = vpack.c.bf16 %v5235, %v5232
    %v5496 = vpack.c.bf16 %v5243, %v5240
    %v5497 = vpack.c.bf16 %v5251, %v5248
    %v5498 = vpack.c.bf16 %v5259, %v5256
    %v5499 = vpack.c.bf16 %v5267, %v5264
    %v5500 = vpack.c.bf16 %v5275, %v5272
    %v5501 = vpack.c.bf16 %v5283, %v5280
    %v5502 = vpack.c.bf16 %v5291, %v5288
    %v5503 = vpack.c.bf16 %v5299, %v5296
    %v5504 = vpack.c.bf16 %v5307, %v5304
    %v5505 = vpack.c.bf16 %v5315, %v5312
    %v5506 = vpack.c.bf16 %v5323, %v5320
    %v5507 = vpack.c.bf16 %v5331, %v5328
    %v5508 = vpack.c.bf16 %v5339, %v5336
    %v5509 = vpack.c.bf16 %v5347, %v5344
    %v5510 = vpack.c.bf16 %v5355, %v5352
    %v5511 = vpack.c.bf16 %v5363, %v5360
    %v5512 = vpack.c.bf16 %v5371, %v5368
    %v5513 = vpack.c.bf16 %v5379, %v5376
    %v5514 = vpack.c.bf16 %v5387, %v5384
    %v5515 = vpack.c.bf16 %v5395, %v5392
    %v5516 = vpack.c.bf16 %v5403, %v5400
    %v5517 = vpack.c.bf16 %v5411, %v5408
    %v5518 = vpack.c.bf16 %v5419, %v5416
    %v5519 = vpack.c.bf16 %v5427, %v5424
    %v5520 = vpack.c.bf16 %v5435, %v5432
    %v5521 = vpack.c.bf16 %v5443, %v5440
    %v5522 = vpack.c.bf16 %v5451, %v5448
    %v5523 = vpack.c.bf16 %v5459, %v5456
    %v5524 = vpack.c.bf16 %v5467, %v5464
    %v5525 = vpack.c.bf16 %v5475, %v5472
    %v5526 = vpack.c.bf16 %v5483, %v5480
    %v5527 = vpack.c.bf16 %v5491, %v5488
    %v5529 = vsel %vm305, %v5494, 0
    %v5532 = vsel %vm305, %v5495, 0
    %v5535 = vsel %vm305, %v5496, 0
    %v5538 = vsel %vm305, %v5497, 0
    %v5541 = vsel %vm305, %v5498, 0
    %v5544 = vsel %vm305, %v5499, 0
    %v5547 = vsel %vm305, %v5500, 0
    %v5550 = vsel %vm305, %v5501, 0
    %v5553 = vsel %vm305, %v5502, 0
    %v5556 = vsel %vm305, %v5503, 0
    %v5559 = vsel %vm305, %v5504, 0
    %v5562 = vsel %vm305, %v5505, 0
    %v5565 = vsel %vm305, %v5506, 0
    %v5568 = vsel %vm305, %v5507, 0
    %5570 = vmatprep.subr.bf16.mxu0 %v754
    %5571 = vmatpush1.bf16.msra.mxu0 %v753
    %5572 = vmatprep.subr.bf16.mxu0 0
    %5573 = vmatpush1.bf16.msra.mxu0 0
    %5574 = vmatprep.subr.bf16.mxu0 0
    %5575 = vmatpush1.bf16.msra.mxu0 0
    %5576 = vmatprep.subr.bf16.mxu0 0
    %5577 = vmatpush1.bf16.msra.mxu0 0
    %5578 = vmatprep.subr.bf16.mxu0 0
    %5579 = vmatpush1.bf16.msra.mxu0 0
    %5580 = vmatprep.subr.bf16.mxu0 0
    %5581 = vmatpush1.bf16.msra.mxu0 0
    %5582 = vmatprep.subr.bf16.mxu0 0
    %5583 = vmatpush1.bf16.msra.mxu0 0
    %5584 = vmatprep.subr.bf16.mxu0 0
    %5585 = vmatpush1.bf16.msra.mxu0 0
    %5586 = vmatprep.subr.bf16.mxu0 0
    %5587 = vmatpush1.bf16.msra.mxu0 0
    %5588 = vmatprep.subr.bf16.mxu0 0
    %5589 = vmatpush1.bf16.msra.mxu0 0
    %5590 = vmatprep.subr.bf16.mxu0 0
    %5591 = vmatpush1.bf16.msra.mxu0 0
    %5592 = vmatprep.subr.bf16.mxu0 0
    %5593 = vmatpush1.bf16.msra.mxu0 0
    %5594 = vmatprep.subr.bf16.mxu0 0
    %5595 = vmatpush1.bf16.msra.mxu0 0
    %5596 = vmatprep.subr.bf16.mxu0 0
    %5597 = vmatpush1.bf16.msra.mxu0 0
    %5598 = vmatprep.subr.bf16.mxu0 0
    %5599 = vmatpush1.bf16.msra.mxu0 0
    %5600 = vmatprep.subr.bf16.mxu0 0
    %5601 = vmatpush1.bf16.msra.mxu0 0
    %5602 = vmatprep.mubr.bf16.mxu0 0
    %5603 = vmatmul.mubr.bf16.gmra.mrb[0].mxu0 %v5529
    %v5604 = vpop.f32.mrb[0].mxu0
    %v5605 = vadd.f32 0.0, %v5604
    %v5606 = vpop.f32.mrb[0].mxu0
    %v5607 = vadd.f32 0.0, %v5606
    %v5608 = vpop.f32.mrb[0].mxu0
    %v5609 = vadd.f32 0.0, %v5608
    %v5610 = vpop.f32.mrb[0].mxu0
    %v5611 = vadd.f32 0.0, %v5610
    %5612 = vmatprep.mubr.bf16.mxu0 0
    %5613 = vmatmul.mubr.bf16.gmra.mrb[0].mxu0 %v5532
    %v5614 = vpop.f32.mrb[0].mxu0
    %v5615 = vadd.f32 0.0, %v5614
    %v5616 = vpop.f32.mrb[0].mxu0
    %v5617 = vadd.f32 0.0, %v5616
    %v5618 = vpop.f32.mrb[0].mxu0
    %v5619 = vadd.f32 0.0, %v5618
    %v5620 = vpop.f32.mrb[0].mxu0
    %v5621 = vadd.f32 0.0, %v5620
    %5622 = vmatprep.mubr.bf16.mxu0 0
    %5623 = vmatmul.mubr.bf16.gmra.mrb[0].mxu0 %v5535
    %v5624 = vpop.f32.mrb[0].mxu0
    %v5625 = vadd.f32 0.0, %v5624
    %v5626 = vpop.f32.mrb[0].mxu0
    %v5627 = vadd.f32 0.0, %v5626
    %v5628 = vpop.f32.mrb[0].mxu0
    %v5629 = vadd.f32 0.0, %v5628
    %v5630 = vpop.f32.mrb[0].mxu0
    %v5631 = vadd.f32 0.0, %v5630
    %5632 = vmatprep.mubr.bf16.mxu0 0
    %5633 = vmatmul.mubr.bf16.gmra.mrb[0].mxu0 %v5538
    %v5634 = vpop.f32.mrb[0].mxu0
    %v5635 = vadd.f32 0.0, %v5634
    %v5636 = vpop.f32.mrb[0].mxu0
    %v5637 = vadd.f32 0.0, %v5636
    %v5638 = vpop.f32.mrb[0].mxu0
    %v5639 = vadd.f32 0.0, %v5638
    %v5640 = vpop.f32.mrb[0].mxu0
    %v5641 = vadd.f32 0.0, %v5640
    %5642 = vmatprep.mubr.bf16.mxu0 0
    %5643 = vmatmul.mubr.bf16.gmra.mrb[0].mxu0 %v5541
    %v5644 = vpop.f32.mrb[0].mxu0
    %v5645 = vadd.f32 0.0, %v5644
    %v5646 = vpop.f32.mrb[0].mxu0
    %v5647 = vadd.f32 0.0, %v5646
    %v5648 = vpop.f32.mrb[0].mxu0
    %v5649 = vadd.f32 0.0, %v5648
    %v5650 = vpop.f32.mrb[0].mxu0
    %v5651 = vadd.f32 0.0, %v5650
    %5652 = vmatprep.mubr.bf16.mxu0 0
    %5653 = vmatmul.mubr.bf16.gmra.mrb[0].mxu0 %v5544
    %v5654 = vpop.f32.mrb[0].mxu0
    %v5655 = vadd.f32 0.0, %v5654
    %v5656 = vpop.f32.mrb[0].mxu0
    %v5657 = vadd.f32 0.0, %v5656
    %v5658 = vpop.f32.mrb[0].mxu0
    %v5659 = vadd.f32 0.0, %v5658
    %v5660 = vpop.f32.mrb[0].mxu0
    %v5661 = vadd.f32 0.0, %v5660
    %5662 = vmatprep.mubr.bf16.mxu0 0
    %5663 = vmatmul.mubr.bf16.gmra.mrb[0].mxu0 %v5547
    %v5664 = vpop.f32.mrb[0].mxu0
    %v5665 = vadd.f32 0.0, %v5664
    %v5666 = vpop.f32.mrb[0].mxu0
    %v5667 = vadd.f32 0.0, %v5666
    %v5668 = vpop.f32.mrb[0].mxu0
    %v5669 = vadd.f32 0.0, %v5668
    %v5670 = vpop.f32.mrb[0].mxu0
    %v5671 = vadd.f32 0.0, %v5670
    %5672 = vmatprep.mubr.bf16.mxu0 0
    %5673 = vmatmul.mubr.bf16.gmra.mrb[0].mxu0 %v5550
    %v5674 = vpop.f32.mrb[0].mxu0
    %v5675 = vadd.f32 0.0, %v5674
    %v5676 = vpop.f32.mrb[0].mxu0
    %v5677 = vadd.f32 0.0, %v5676
    %v5678 = vpop.f32.mrb[0].mxu0
    %v5679 = vadd.f32 0.0, %v5678
    %v5680 = vpop.f32.mrb[0].mxu0
    %v5681 = vadd.f32 0.0, %v5680
    %5682 = vmatprep.mubr.bf16.mxu0 0
    %5683 = vmatmul.mubr.bf16.gmra.mrb[0].mxu0 %v5553
    %v5684 = vpop.f32.mrb[0].mxu0
    %v5685 = vadd.f32 0.0, %v5684
    %v5686 = vpop.f32.mrb[0].mxu0
    %v5687 = vadd.f32 0.0, %v5686
    %v5688 = vpop.f32.mrb[0].mxu0
    %v5689 = vadd.f32 0.0, %v5688
    %v5690 = vpop.f32.mrb[0].mxu0
    %v5691 = vadd.f32 0.0, %v5690
    %5692 = vmatprep.mubr.bf16.mxu0 0
    %5693 = vmatmul.mubr.bf16.gmra.mrb[0].mxu0 %v5556
    %v5694 = vpop.f32.mrb[0].mxu0
    %v5695 = vadd.f32 0.0, %v5694
    %v5696 = vpop.f32.mrb[0].mxu0
    %v5697 = vadd.f32 0.0, %v5696
    %v5698 = vpop.f32.mrb[0].mxu0
    %v5699 = vadd.f32 0.0, %v5698
    %v5700 = vpop.f32.mrb[0].mxu0
    %v5701 = vadd.f32 0.0, %v5700
    %5702 = vmatprep.mubr.bf16.mxu0 0
    %5703 = vmatmul.mubr.bf16.gmra.mrb[0].mxu0 %v5559
    %v5704 = vpop.f32.mrb[0].mxu0
    %v5705 = vadd.f32 0.0, %v5704
    %v5706 = vpop.f32.mrb[0].mxu0
    %v5707 = vadd.f32 0.0, %v5706
    %v5708 = vpop.f32.mrb[0].mxu0
    %v5709 = vadd.f32 0.0, %v5708
    %v5710 = vpop.f32.mrb[0].mxu0
    %v5711 = vadd.f32 0.0, %v5710
    %5712 = vmatprep.mubr.bf16.mxu0 0
    %5713 = vmatmul.mubr.bf16.gmra.mrb[0].mxu0 %v5562
    %v5714 = vpop.f32.mrb[0].mxu0
    %v5715 = vadd.f32 0.0, %v5714
    %v5716 = vpop.f32.mrb[0].mxu0
    %v5717 = vadd.f32 0.0, %v5716
    %v5718 = vpop.f32.mrb[0].mxu0
    %v5719 = vadd.f32 0.0, %v5718
    %v5720 = vpop.f32.mrb[0].mxu0
    %v5721 = vadd.f32 0.0, %v5720
    %5722 = vmatprep.mubr.bf16.mxu0 0
    %5723 = vmatmul.mubr.bf16.gmra.mrb[0].mxu0 %v5565
    %v5724 = vpop.f32.mrb[0].mxu0
    %v5725 = vadd.f32 0.0, %v5724
    %v5726 = vpop.f32.mrb[0].mxu0
    %v5727 = vadd.f32 0.0, %v5726
    %v5728 = vpop.f32.mrb[0].mxu0
    %v5729 = vadd.f32 0.0, %v5728
    %v5730 = vpop.f32.mrb[0].mxu0
    %v5731 = vadd.f32 0.0, %v5730
    %5732 = vmatprep.mubr.bf16.mxu0 0
    %5733 = vmatmul.mubr.bf16.gmra.mrb[0].mxu0 %v5568
    %v5734 = vpop.f32.mrb[0].mxu0
    %v5735 = vadd.f32 0.0, %v5734
    %v5736 = vpop.f32.mrb[0].mxu0
    %v5737 = vadd.f32 0.0, %v5736
    %v5738 = vpop.f32.mrb[0].mxu0
    %v5739 = vadd.f32 0.0, %v5738
    %v5740 = vpop.f32.mrb[0].mxu0
    %v5741 = vadd.f32 0.0, %v5740
    %5742 = vdwg.mxu0
    %v5744 = vsel %vm305, %v5522, 0
    %v5747 = vsel %vm305, %v5523, 0
    %v5750 = vsel %vm305, %v5524, 0
    %v5753 = vsel %vm305, %v5525, 0
    %v5756 = vsel %vm305, %v5526, 0
    %v5759 = vsel %vm305, %v5527, 0
    %5761 = vmatprep.subr.bf16.mxu0 0
    %5762 = vmatpush1.bf16.msra.mxu0 %v976
    %5763 = vmatprep.subr.bf16.mxu0 0
    %5764 = vmatpush1.bf16.msra.mxu0 0
    %5765 = vmatprep.subr.bf16.mxu0 0
    %5766 = vmatpush1.bf16.msra.mxu0 0
    %5767 = vmatprep.subr.bf16.mxu0 0
    %5768 = vmatpush1.bf16.msra.mxu0 0
    %5769 = vmatprep.subr.bf16.mxu0 0
    %5770 = vmatpush1.bf16.msra.mxu0 0
    %5771 = vmatprep.subr.bf16.mxu0 0
    %5772 = vmatpush1.bf16.msra.mxu0 0
    %5773 = vmatprep.subr.bf16.mxu0 0
    %5774 = vmatpush1.bf16.msra.mxu0 0
    %5775 = vmatprep.subr.bf16.mxu0 0
    %5776 = vmatpush1.bf16.msra.mxu0 0
    %5777 = vmatprep.subr.bf16.mxu0 0
    %5778 = vmatpush1.bf16.msra.mxu0 0
    %5779 = vmatprep.subr.bf16.mxu0 0
    %5780 = vmatpush1.bf16.msra.mxu0 0
    %5781 = vmatprep.subr.bf16.mxu0 0
    %5782 = vmatpush1.bf16.msra.mxu0 0
    %5783 = vmatprep.subr.bf16.mxu0 0
    %5784 = vmatpush1.bf16.msra.mxu0 0
    %5785 = vmatprep.subr.bf16.mxu0 0
    %5786 = vmatpush1.bf16.msra.mxu0 0
    %5787 = vmatprep.subr.bf16.mxu0 0
    %5788 = vmatpush1.bf16.msra.mxu0 0
    %5789 = vmatprep.subr.bf16.mxu0 0
    %5790 = vmatpush1.bf16.msra.mxu0 0
    %5791 = vmatprep.subr.bf16.mxu0 0
    %5792 = vmatpush1.bf16.msra.mxu0 0
    %5793 = vmatprep.mubr.bf16.mxu0 0
    %5794 = vmatmul.mubr.bf16.gmra.mrb[0].mxu0 %v5744
    %v5795 = vpop.f32.mrb[0].mxu0
    %v5796 = vadd.f32 0.0, %v5795
    %v5797 = vpop.f32.mrb[0].mxu0
    %v5798 = vpop.f32.mrb[0].mxu0
    %v5799 = vadd.f32 0.0, %v5798
    %v5800 = vpop.f32.mrb[0].mxu0
    %5801 = vmatprep.mubr.bf16.mxu0 0
    %5802 = vmatmul.mubr.bf16.gmra.mrb[0].mxu0 %v5747
    %v5803 = vpop.f32.mrb[0].mxu0
    %v5804 = vadd.f32 0.0, %v5803
    %v5805 = vpop.f32.mrb[0].mxu0
    %v5806 = vpop.f32.mrb[0].mxu0
    %v5807 = vadd.f32 0.0, %v5806
    %v5808 = vpop.f32.mrb[0].mxu0
    %5809 = vmatprep.mubr.bf16.mxu0 0
    %5810 = vmatmul.mubr.bf16.gmra.mrb[0].mxu0 %v5750
    %v5811 = vpop.f32.mrb[0].mxu0
    %v5812 = vadd.f32 0.0, %v5811
    %v5813 = vpop.f32.mrb[0].mxu0
    %v5814 = vpop.f32.mrb[0].mxu0
    %v5815 = vadd.f32 0.0, %v5814
    %v5816 = vpop.f32.mrb[0].mxu0
    %5817 = vmatprep.mubr.bf16.mxu0 0
    %5818 = vmatmul.mubr.bf16.gmra.mrb[0].mxu0 %v5753
    %v5819 = vpop.f32.mrb[0].mxu0
    %v5820 = vadd.f32 0.0, %v5819
    %v5821 = vpop.f32.mrb[0].mxu0
    %v5822 = vpop.f32.mrb[0].mxu0
    %v5823 = vadd.f32 0.0, %v5822
    %v5824 = vpop.f32.mrb[0].mxu0
    %5825 = vmatprep.mubr.bf16.mxu0 0
    %5826 = vmatmul.mubr.bf16.gmra.mrb[0].mxu0 %v5756
    %v5827 = vpop.f32.mrb[0].mxu0
    %v5828 = vadd.f32 0.0, %v5827
    %v5829 = vpop.f32.mrb[0].mxu0
    %v5830 = vpop.f32.mrb[0].mxu0
    %v5831 = vadd.f32 0.0, %v5830
    %v5832 = vpop.f32.mrb[0].mxu0
    %5833 = vmatprep.mubr.bf16.mxu0 0
    %5834 = vmatmul.mubr.bf16.gmra.mrb[0].mxu0 %v5759
    %v5835 = vpop.f32.mrb[0].mxu0
    %v5836 = vadd.f32 0.0, %v5835
    %v5837 = vpop.f32.mrb[0].mxu0
    %v5838 = vpop.f32.mrb[0].mxu0
    %v5839 = vadd.f32 0.0, %v5838
    %v5840 = vpop.f32.mrb[0].mxu0
    %5841 = vdwg.mxu0
    %v5843 = vsel %vm305, %v5508, 0
    %v5846 = vsel %vm305, %v5509, 0
    %v5849 = vsel %vm305, %v5510, 0
    %v5852 = vsel %vm305, %v5511, 0
    %v5855 = vsel %vm305, %v5512, 0
    %v5858 = vsel %vm305, %v5513, 0
    %v5861 = vsel %vm305, %v5514, 0
    %v5864 = vsel %vm305, %v5515, 0
    %v5867 = vsel %vm305, %v5516, 0
    %v5870 = vsel %vm305, %v5517, 0
    %v5873 = vsel %vm305, %v5518, 0
    %v5876 = vsel %vm305, %v5519, 0
    %v5879 = vsel %vm305, %v5520, 0
    %v5882 = vsel %vm305, %v5521, 0
    %5884 = vmatprep.subr.bf16.mxu0 %v1084
    %5885 = vmatpush1.bf16.msra.mxu0 %v1083
    %5886 = vmatprep.subr.bf16.mxu0 0
    %5887 = vmatpush1.bf16.msra.mxu0 0
    %5888 = vmatprep.subr.bf16.mxu0 0
    %5889 = vmatpush1.bf16.msra.mxu0 0
    %5890 = vmatprep.subr.bf16.mxu0 0
    %5891 = vmatpush1.bf16.msra.mxu0 0
    %5892 = vmatprep.subr.bf16.mxu0 0
    %5893 = vmatpush1.bf16.msra.mxu0 0
    %5894 = vmatprep.subr.bf16.mxu0 0
    %5895 = vmatpush1.bf16.msra.mxu0 0
    %5896 = vmatprep.subr.bf16.mxu0 0
    %5897 = vmatpush1.bf16.msra.mxu0 0
    %5898 = vmatprep.subr.bf16.mxu0 0
    %5899 = vmatpush1.bf16.msra.mxu0 0
    %5900 = vmatprep.subr.bf16.mxu0 0
    %5901 = vmatpush1.bf16.msra.mxu0 0
    %5902 = vmatprep.subr.bf16.mxu0 0
    %5903 = vmatpush1.bf16.msra.mxu0 0
    %5904 = vmatprep.subr.bf16.mxu0 0
    %5905 = vmatpush1.bf16.msra.mxu0 0
    %5906 = vmatprep.subr.bf16.mxu0 0
    %5907 = vmatpush1.bf16.msra.mxu0 0
    %5908 = vmatprep.subr.bf16.mxu0 0
    %5909 = vmatpush1.bf16.msra.mxu0 0
    %5910 = vmatprep.subr.bf16.mxu0 0
    %5911 = vmatpush1.bf16.msra.mxu0 0
    %5912 = vmatprep.subr.bf16.mxu0 0
    %5913 = vmatpush1.bf16.msra.mxu0 0
    %5914 = vmatprep.subr.bf16.mxu0 0
    %5915 = vmatpush1.bf16.msra.mxu0 0
    %5916 = vmatprep.mubr.bf16.mxu0 0
    %5917 = vmatmul.mubr.bf16.gmra.mrb[0].mxu0 %v5843
    %v5918 = vpop.f32.mrb[0].mxu0
    %v5919 = vadd.f32 0.0, %v5918
    %v5920 = vpop.f32.mrb[0].mxu0
    %v5921 = vadd.f32 0.0, %v5920
    %v5922 = vpop.f32.mrb[0].mxu0
    %v5923 = vadd.f32 0.0, %v5922
    %v5924 = vpop.f32.mrb[0].mxu0
    %v5925 = vadd.f32 0.0, %v5924
    %5926 = vmatprep.mubr.bf16.mxu0 0
    %5927 = vmatmul.mubr.bf16.gmra.mrb[0].mxu0 %v5846
    %v5928 = vpop.f32.mrb[0].mxu0
    %v5929 = vadd.f32 0.0, %v5928
    %v5930 = vpop.f32.mrb[0].mxu0
    %v5931 = vadd.f32 0.0, %v5930
    %v5932 = vpop.f32.mrb[0].mxu0
    %v5933 = vadd.f32 0.0, %v5932
    %v5934 = vpop.f32.mrb[0].mxu0
    %v5935 = vadd.f32 0.0, %v5934
    %5936 = vmatprep.mubr.bf16.mxu0 0
    %5937 = vmatmul.mubr.bf16.gmra.mrb[0].mxu0 %v5849
    %v5938 = vpop.f32.mrb[0].mxu0
    %v5939 = vadd.f32 0.0, %v5938
    %v5940 = vpop.f32.mrb[0].mxu0
    %v5941 = vadd.f32 0.0, %v5940
    %v5942 = vpop.f32.mrb[0].mxu0
    %v5943 = vadd.f32 0.0, %v5942
    %v5944 = vpop.f32.mrb[0].mxu0
    %v5945 = vadd.f32 0.0, %v5944
    %5946 = vmatprep.mubr.bf16.mxu0 0
    %5947 = vmatmul.mubr.bf16.gmra.mrb[0].mxu0 %v5852
    %v5948 = vpop.f32.mrb[0].mxu0
    %v5949 = vadd.f32 0.0, %v5948
    %v5950 = vpop.f32.mrb[0].mxu0
    %v5951 = vadd.f32 0.0, %v5950
    %v5952 = vpop.f32.mrb[0].mxu0
    %v5953 = vadd.f32 0.0, %v5952
    %v5954 = vpop.f32.mrb[0].mxu0
    %v5955 = vadd.f32 0.0, %v5954
    %5956 = vmatprep.mubr.bf16.mxu0 0
    %5957 = vmatmul.mubr.bf16.gmra.mrb[0].mxu0 %v5855
    %v5958 = vpop.f32.mrb[0].mxu0
    %v5959 = vadd.f32 0.0, %v5958
    %v5960 = vpop.f32.mrb[0].mxu0
    %v5961 = vadd.f32 0.0, %v5960
    %v5962 = vpop.f32.mrb[0].mxu0
    %v5963 = vadd.f32 0.0, %v5962
    %v5964 = vpop.f32.mrb[0].mxu0
    %v5965 = vadd.f32 0.0, %v5964
    %5966 = vmatprep.mubr.bf16.mxu0 0
    %5967 = vmatmul.mubr.bf16.gmra.mrb[0].mxu0 %v5858
    %v5968 = vpop.f32.mrb[0].mxu0
    %v5969 = vadd.f32 0.0, %v5968
    %v5970 = vpop.f32.mrb[0].mxu0
    %v5971 = vadd.f32 0.0, %v5970
    %v5972 = vpop.f32.mrb[0].mxu0
    %v5973 = vadd.f32 0.0, %v5972
    %v5974 = vpop.f32.mrb[0].mxu0
    %v5975 = vadd.f32 0.0, %v5974
    %5976 = vmatprep.mubr.bf16.mxu0 0
    %5977 = vmatmul.mubr.bf16.gmra.mrb[0].mxu0 %v5861
    %v5978 = vpop.f32.mrb[0].mxu0
    %v5979 = vadd.f32 0.0, %v5978
    %v5980 = vpop.f32.mrb[0].mxu0
    %v5981 = vadd.f32 0.0, %v5980
    %v5982 = vpop.f32.mrb[0].mxu0
    %v5983 = vadd.f32 0.0, %v5982
    %v5984 = vpop.f32.mrb[0].mxu0
    %v5985 = vadd.f32 0.0, %v5984
    %5986 = vmatprep.mubr.bf16.mxu0 0
    %5987 = vmatmul.mubr.bf16.gmra.mrb[0].mxu0 %v5864
    %v5988 = vpop.f32.mrb[0].mxu0
    %v5989 = vadd.f32 0.0, %v5988
    %v5990 = vpop.f32.mrb[0].mxu0
    %v5991 = vadd.f32 0.0, %v5990
    %v5992 = vpop.f32.mrb[0].mxu0
    %v5993 = vadd.f32 0.0, %v5992
    %v5994 = vpop.f32.mrb[0].mxu0
    %v5995 = vadd.f32 0.0, %v5994
    %5996 = vmatprep.mubr.bf16.mxu0 0
    %5997 = vmatmul.mubr.bf16.gmra.mrb[0].mxu0 %v5867
    %v5998 = vpop.f32.mrb[0].mxu0
    %v5999 = vadd.f32 0.0, %v5998
    %v6000 = vpop.f32.mrb[0].mxu0
    %v6001 = vadd.f32 0.0, %v6000
    %v6002 = vpop.f32.mrb[0].mxu0
    %v6003 = vadd.f32 0.0, %v6002
    %v6004 = vpop.f32.mrb[0].mxu0
    %v6005 = vadd.f32 0.0, %v6004
    %6006 = vmatprep.mubr.bf16.mxu0 0
    %6007 = vmatmul.mubr.bf16.gmra.mrb[0].mxu0 %v5870
    %v6008 = vpop.f32.mrb[0].mxu0
    %v6009 = vadd.f32 0.0, %v6008
    %v6010 = vpop.f32.mrb[0].mxu0
    %v6011 = vadd.f32 0.0, %v6010
    %v6012 = vpop.f32.mrb[0].mxu0
    %v6013 = vadd.f32 0.0, %v6012
    %v6014 = vpop.f32.mrb[0].mxu0
    %v6015 = vadd.f32 0.0, %v6014
    %6016 = vmatprep.mubr.bf16.mxu0 0
    %6017 = vmatmul.mubr.bf16.gmra.mrb[0].mxu0 %v5873
    %v6018 = vpop.f32.mrb[0].mxu0
    %v6019 = vadd.f32 0.0, %v6018
    %v6020 = vpop.f32.mrb[0].mxu0
    %v6021 = vadd.f32 0.0, %v6020
    %v6022 = vpop.f32.mrb[0].mxu0
    %v6023 = vadd.f32 0.0, %v6022
    %v6024 = vpop.f32.mrb[0].mxu0
    %v6025 = vadd.f32 0.0, %v6024
    %6026 = vmatprep.mubr.bf16.mxu0 0
    %6027 = vmatmul.mubr.bf16.gmra.mrb[0].mxu0 %v5876
    %v6028 = vpop.f32.mrb[0].mxu0
    %v6029 = vadd.f32 0.0, %v6028
    %v6030 = vpop.f32.mrb[0].mxu0
    %v6031 = vadd.f32 0.0, %v6030
    %v6032 = vpop.f32.mrb[0].mxu0
    %v6033 = vadd.f32 0.0, %v6032
    %v6034 = vpop.f32.mrb[0].mxu0
    %v6035 = vadd.f32 0.0, %v6034
    %6036 = vmatprep.mubr.bf16.mxu0 0
    %6037 = vmatmul.mubr.bf16.gmra.mrb[0].mxu0 %v5879
    %v6038 = vpop.f32.mrb[0].mxu0
    %v6039 = vadd.f32 0.0, %v6038
    %v6040 = vpop.f32.mrb[0].mxu0
    %v6041 = vadd.f32 0.0, %v6040
    %v6042 = vpop.f32.mrb[0].mxu0
    %v6043 = vadd.f32 0.0, %v6042
    %v6044 = vpop.f32.mrb[0].mxu0
    %v6045 = vadd.f32 0.0, %v6044
    %6046 = vmatprep.mubr.bf16.mxu0 0
    %6047 = vmatmul.mubr.bf16.gmra.mrb[0].mxu0 %v5882
    %v6048 = vpop.f32.mrb[0].mxu0
    %v6049 = vadd.f32 0.0, %v6048
    %v6050 = vpop.f32.mrb[0].mxu0
    %v6051 = vadd.f32 0.0, %v6050
    %v6052 = vpop.f32.mrb[0].mxu0
    %v6053 = vadd.f32 0.0, %v6052
    %v6054 = vpop.f32.mrb[0].mxu0
    %v6055 = vadd.f32 0.0, %v6054
    %6056 = vdwg.mxu0
    %s6057 = sadd.s32 %s52, 3
    %s6058 = sld [smem:[#allocation3 + %s6057]]
    %s6059 = sld [smem:[#allocation4 + %s6057]]
    %v6060 = vstv %s6058
    %v6061 = vmul.f32 %v5919, %v6060
    %v6062 = vmul.f32 %v5921, %v6060
    %v6063 = vmul.f32 %v5923, %v6060
    %v6064 = vmul.f32 %v5925, %v6060
    %v6065 = vmul.f32 %v5929, %v6060
    %v6066 = vmul.f32 %v5931, %v6060
    %v6067 = vmul.f32 %v5933, %v6060
    %v6068 = vmul.f32 %v5935, %v6060
    %v6069 = vmul.f32 %v5939, %v6060
    %v6070 = vmul.f32 %v5941, %v6060
    %v6071 = vmul.f32 %v5943, %v6060
    %v6072 = vmul.f32 %v5945, %v6060
    %v6073 = vmul.f32 %v5949, %v6060
    %v6074 = vmul.f32 %v5951, %v6060
    %v6075 = vmul.f32 %v5953, %v6060
    %v6076 = vmul.f32 %v5955, %v6060
    %v6077 = vmul.f32 %v5959, %v6060
    %v6078 = vmul.f32 %v5961, %v6060
    %v6079 = vmul.f32 %v5963, %v6060
    %v6080 = vmul.f32 %v5965, %v6060
    %v6081 = vmul.f32 %v5969, %v6060
    %v6082 = vmul.f32 %v5971, %v6060
    %v6083 = vmul.f32 %v5973, %v6060
    %v6084 = vmul.f32 %v5975, %v6060
    %v6085 = vmul.f32 %v5979, %v6060
    %v6086 = vmul.f32 %v5981, %v6060
    %v6087 = vmul.f32 %v5983, %v6060
    %v6088 = vmul.f32 %v5985, %v6060
    %v6089 = vmul.f32 %v5989, %v6060
    %v6090 = vmul.f32 %v5991, %v6060
    %v6091 = vmul.f32 %v5993, %v6060
    %v6092 = vmul.f32 %v5995, %v6060
    %v6093 = vmul.f32 %v5999, %v6060
    %v6094 = vmul.f32 %v6001, %v6060
    %v6095 = vmul.f32 %v6003, %v6060
    %v6096 = vmul.f32 %v6005, %v6060
    %v6097 = vmul.f32 %v6009, %v6060
    %v6098 = vmul.f32 %v6011, %v6060
    %v6099 = vmul.f32 %v6013, %v6060
    %v6100 = vmul.f32 %v6015, %v6060
    %v6101 = vmul.f32 %v6019, %v6060
    %v6102 = vmul.f32 %v6021, %v6060
    %v6103 = vmul.f32 %v6023, %v6060
    %v6104 = vmul.f32 %v6025, %v6060
    %v6105 = vmul.f32 %v6029, %v6060
    %v6106 = vmul.f32 %v6031, %v6060
    %v6107 = vmul.f32 %v6033, %v6060
    %v6108 = vmul.f32 %v6035, %v6060
    %v6109 = vmul.f32 %v6039, %v6060
    %v6110 = vmul.f32 %v6041, %v6060
    %v6111 = vmul.f32 %v6043, %v6060
    %v6112 = vmul.f32 %v6045, %v6060
    %v6113 = vmul.f32 %v6049, %v6060
    %v6114 = vmul.f32 %v6051, %v6060
    %v6115 = vmul.f32 %v6053, %v6060
    %v6116 = vmul.f32 %v6055, %v6060
    %v6117 = vstv %s6059
    %v6118 = vadd.f32 %v6061, %v6117
    %v6119 = vadd.f32 %v6062, %v6117
    %v6120 = vadd.f32 %v6063, %v6117
    %v6121 = vadd.f32 %v6064, %v6117
    %v6122 = vadd.f32 %v6065, %v6117
    %v6123 = vadd.f32 %v6066, %v6117
    %v6124 = vadd.f32 %v6067, %v6117
    %v6125 = vadd.f32 %v6068, %v6117
    %v6126 = vadd.f32 %v6069, %v6117
    %v6127 = vadd.f32 %v6070, %v6117
    %v6128 = vadd.f32 %v6071, %v6117
    %v6129 = vadd.f32 %v6072, %v6117
    %v6130 = vadd.f32 %v6073, %v6117
    %v6131 = vadd.f32 %v6074, %v6117
    %v6132 = vadd.f32 %v6075, %v6117
    %v6133 = vadd.f32 %v6076, %v6117
    %v6134 = vadd.f32 %v6077, %v6117
    %v6135 = vadd.f32 %v6078, %v6117
    %v6136 = vadd.f32 %v6079, %v6117
    %v6137 = vadd.f32 %v6080, %v6117
    %v6138 = vadd.f32 %v6081, %v6117
    %v6139 = vadd.f32 %v6082, %v6117
    %v6140 = vadd.f32 %v6083, %v6117
    %v6141 = vadd.f32 %v6084, %v6117
    %v6142 = vadd.f32 %v6085, %v6117
    %v6143 = vadd.f32 %v6086, %v6117
    %v6144 = vadd.f32 %v6087, %v6117
    %v6145 = vadd.f32 %v6088, %v6117
    %v6146 = vadd.f32 %v6089, %v6117
    %v6147 = vadd.f32 %v6090, %v6117
    %v6148 = vadd.f32 %v6091, %v6117
    %v6149 = vadd.f32 %v6092, %v6117
    %v6150 = vadd.f32 %v6093, %v6117
    %v6151 = vadd.f32 %v6094, %v6117
    %v6152 = vadd.f32 %v6095, %v6117
    %v6153 = vadd.f32 %v6096, %v6117
    %v6154 = vadd.f32 %v6097, %v6117
    %v6155 = vadd.f32 %v6098, %v6117
    %v6156 = vadd.f32 %v6099, %v6117
    %v6157 = vadd.f32 %v6100, %v6117
    %v6158 = vadd.f32 %v6101, %v6117
    %v6159 = vadd.f32 %v6102, %v6117
    %v6160 = vadd.f32 %v6103, %v6117
    %v6161 = vadd.f32 %v6104, %v6117
    %v6162 = vadd.f32 %v6105, %v6117
    %v6163 = vadd.f32 %v6106, %v6117
    %v6164 = vadd.f32 %v6107, %v6117
    %v6165 = vadd.f32 %v6108, %v6117
    %v6166 = vadd.f32 %v6109, %v6117
    %v6167 = vadd.f32 %v6110, %v6117
    %v6168 = vadd.f32 %v6111, %v6117
    %v6169 = vadd.f32 %v6112, %v6117
    %v6170 = vadd.f32 %v6113, %v6117
    %v6171 = vadd.f32 %v6114, %v6117
    %v6172 = vadd.f32 %v6115, %v6117
    %v6173 = vadd.f32 %v6116, %v6117
    %v6174 = vpack.c.bf16 %v6120, %v6118
    %v6175 = vpack.c.bf16 %v6121, %v6119
    %v6176 = vpack.c.bf16 %v6124, %v6122
    %v6177 = vpack.c.bf16 %v6125, %v6123
    %v6178 = vpack.c.bf16 %v6128, %v6126
    %v6179 = vpack.c.bf16 %v6129, %v6127
    %v6180 = vpack.c.bf16 %v6132, %v6130
    %v6181 = vpack.c.bf16 %v6133, %v6131
    %v6182 = vpack.c.bf16 %v6136, %v6134
    %v6183 = vpack.c.bf16 %v6137, %v6135
    %v6184 = vpack.c.bf16 %v6140, %v6138
    %v6185 = vpack.c.bf16 %v6141, %v6139
    %v6186 = vpack.c.bf16 %v6144, %v6142
    %v6187 = vpack.c.bf16 %v6145, %v6143
    %v6188 = vpack.c.bf16 %v6148, %v6146
    %v6189 = vpack.c.bf16 %v6149, %v6147
    %v6190 = vpack.c.bf16 %v6152, %v6150
    %v6191 = vpack.c.bf16 %v6153, %v6151
    %v6192 = vpack.c.bf16 %v6156, %v6154
    %v6193 = vpack.c.bf16 %v6157, %v6155
    %v6194 = vpack.c.bf16 %v6160, %v6158
    %v6195 = vpack.c.bf16 %v6161, %v6159
    %v6196 = vpack.c.bf16 %v6164, %v6162
    %v6197 = vpack.c.bf16 %v6165, %v6163
    %v6198 = vpack.c.bf16 %v6168, %v6166
    %v6199 = vpack.c.bf16 %v6169, %v6167
    %v6200 = vpack.c.bf16 %v6172, %v6170
    %v6201 = vpack.c.bf16 %v6173, %v6171
    %v6230 = vunpack.c.l.b16 %v6174
    %v6231 = vunpack.c.l.b16 %v6175
    %v6232 = vunpack.c.h.b16 %v6174
    %v6233 = vunpack.c.h.b16 %v6175
    %v6234 = vunpack.c.l.b16 %v6176
    %v6235 = vunpack.c.l.b16 %v6177
    %v6236 = vunpack.c.h.b16 %v6176
    %v6237 = vunpack.c.h.b16 %v6177
    %v6238 = vunpack.c.l.b16 %v6178
    %v6239 = vunpack.c.l.b16 %v6179
    %v6240 = vunpack.c.h.b16 %v6178
    %v6241 = vunpack.c.h.b16 %v6179
    %v6242 = vunpack.c.l.b16 %v6180
    %v6243 = vunpack.c.l.b16 %v6181
    %v6244 = vunpack.c.h.b16 %v6180
    %v6245 = vunpack.c.h.b16 %v6181
    %v6246 = vunpack.c.l.b16 %v6182
    %v6247 = vunpack.c.l.b16 %v6183
    %v6248 = vunpack.c.h.b16 %v6182
    %v6249 = vunpack.c.h.b16 %v6183
    %v6250 = vunpack.c.l.b16 %v6184
    %v6251 = vunpack.c.l.b16 %v6185
    %v6252 = vunpack.c.h.b16 %v6184
    %v6253 = vunpack.c.h.b16 %v6185
    %v6254 = vunpack.c.l.b16 %v6186
    %v6255 = vunpack.c.l.b16 %v6187
    %v6256 = vunpack.c.h.b16 %v6186
    %v6257 = vunpack.c.h.b16 %v6187
    %v6258 = vunpack.c.l.b16 %v6188
    %v6259 = vunpack.c.l.b16 %v6189
    %v6260 = vunpack.c.h.b16 %v6188
    %v6261 = vunpack.c.h.b16 %v6189
    %v6262 = vunpack.c.l.b16 %v6190
    %v6263 = vunpack.c.l.b16 %v6191
    %v6264 = vunpack.c.h.b16 %v6190
    %v6265 = vunpack.c.h.b16 %v6191
    %v6266 = vunpack.c.l.b16 %v6192
    %v6267 = vunpack.c.l.b16 %v6193
    %v6268 = vunpack.c.h.b16 %v6192
    %v6269 = vunpack.c.h.b16 %v6193
    %v6270 = vunpack.c.l.b16 %v6194
    %v6271 = vunpack.c.l.b16 %v6195
    %v6272 = vunpack.c.h.b16 %v6194
    %v6273 = vunpack.c.h.b16 %v6195
    %v6274 = vunpack.c.l.b16 %v6196
    %v6275 = vunpack.c.l.b16 %v6197
    %v6276 = vunpack.c.h.b16 %v6196
    %v6277 = vunpack.c.h.b16 %v6197
    %v6278 = vunpack.c.l.b16 %v6198
    %v6279 = vunpack.c.l.b16 %v6199
    %v6280 = vunpack.c.h.b16 %v6198
    %v6281 = vunpack.c.h.b16 %v6199
    %v6282 = vunpack.c.l.b16 %v6200
    %v6283 = vunpack.c.l.b16 %v6201
    %v6284 = vunpack.c.h.b16 %v6200
    %v6285 = vunpack.c.h.b16 %v6201
    %v6286 = vpack.c.b16 %v6231, %v6230
    %v6287 = vpack.c.b16 %v6233, %v6232
    %v6288 = vpack.c.b16 %v6235, %v6234
    %v6289 = vpack.c.b16 %v6237, %v6236
    %v6290 = vpack.c.b16 %v6239, %v6238
    %v6291 = vpack.c.b16 %v6241, %v6240
    %v6292 = vpack.c.b16 %v6243, %v6242
    %v6293 = vpack.c.b16 %v6245, %v6244
    %v6294 = vpack.c.b16 %v6247, %v6246
    %v6295 = vpack.c.b16 %v6249, %v6248
    %v6296 = vpack.c.b16 %v6251, %v6250
    %v6297 = vpack.c.b16 %v6253, %v6252
    %v6298 = vpack.c.b16 %v6255, %v6254
    %v6299 = vpack.c.b16 %v6257, %v6256
    %v6300 = vpack.c.b16 %v6259, %v6258
    %v6301 = vpack.c.b16 %v6261, %v6260
    %v6302 = vpack.c.b16 %v6263, %v6262
    %v6303 = vpack.c.b16 %v6265, %v6264
    %v6304 = vpack.c.b16 %v6267, %v6266
    %v6305 = vpack.c.b16 %v6269, %v6268
    %v6306 = vpack.c.b16 %v6271, %v6270
    %v6307 = vpack.c.b16 %v6273, %v6272
    %v6308 = vpack.c.b16 %v6275, %v6274
    %v6309 = vpack.c.b16 %v6277, %v6276
    %v6310 = vpack.c.b16 %v6279, %v6278
    %v6311 = vpack.c.b16 %v6281, %v6280
    %v6312 = vpack.c.b16 %v6283, %v6282
    %v6313 = vpack.c.b16 %v6285, %v6284
    %s6342 = scalar_lea.vmem [#allocation8], 672
    %6343 = vst.msk [vmem:[%s6342] sm:$0xff] %vm1588, %v6286
    %6344 = vst.msk [vmem:[%s6342 + $0x8] sm:$0xff] %vm1588, %v6287
    %6345 = vst.msk [vmem:[%s6342 + $0x10] sm:$0xff] %vm1588, %v6288
    %6346 = vst.msk [vmem:[%s6342 + $0x18] sm:$0xff] %vm1588, %v6289
    %6347 = vst.msk [vmem:[%s6342 + $0x20] sm:$0xff] %vm1588, %v6290
    %6348 = vst.msk [vmem:[%s6342 + $0x28] sm:$0xff] %vm1588, %v6291
    %6349 = vst.msk [vmem:[%s6342 + $0x30] sm:$0xff] %vm1588, %v6292
    %6350 = vst.msk [vmem:[%s6342 + $0x38] sm:$0xff] %vm1588, %v6293
    %6351 = vst.msk [vmem:[%s6342 + $0x40] sm:$0xff] %vm1588, %v6294
    %6352 = vst.msk [vmem:[%s6342 + $0x48] sm:$0xff] %vm1588, %v6295
    %6353 = vst.msk [vmem:[%s6342 + $0x50] sm:$0xff] %vm1588, %v6296
    %6354 = vst.msk [vmem:[%s6342 + $0x58] sm:$0xff] %vm1588, %v6297
    %6355 = vst.msk [vmem:[%s6342 + $0x60] sm:$0xff] %vm1588, %v6298
    %6356 = vst.msk [vmem:[%s6342 + $0x68] sm:$0xff] %vm1588, %v6299
    %6357 = vst.msk [vmem:[%s6342 + $0x70] sm:$0xff] %vm1588, %v6300
    %6358 = vst.msk [vmem:[%s6342 + $0x78] sm:$0xff] %vm1588, %v6301
    %6359 = vst.msk [vmem:[%s6342 + $0x80] sm:$0xff] %vm1588, %v6302
    %6360 = vst.msk [vmem:[%s6342 + $0x88] sm:$0xff] %vm1588, %v6303
    %6361 = vst.msk [vmem:[%s6342 + $0x90] sm:$0xff] %vm1588, %v6304
    %6362 = vst.msk [vmem:[%s6342 + $0x98] sm:$0xff] %vm1588, %v6305
    %6363 = vst.msk [vmem:[%s6342 + $0xa0] sm:$0xff] %vm1588, %v6306
    %6364 = vst.msk [vmem:[%s6342 + $0xa8] sm:$0xff] %vm1588, %v6307
    %6365 = vst.msk [vmem:[%s6342 + $0xb0] sm:$0xff] %vm1588, %v6308
    %6366 = vst.msk [vmem:[%s6342 + $0xb8] sm:$0xff] %vm1588, %v6309
    %6367 = vst.msk [vmem:[%s6342 + $0xc0] sm:$0xff] %vm1588, %v6310
    %6368 = vst.msk [vmem:[%s6342 + $0xc8] sm:$0xff] %vm1588, %v6311
    %6369 = vst.msk [vmem:[%s6342 + $0xd0] sm:$0xff] %vm1588, %v6312
    %6370 = vst.msk [vmem:[%s6342 + $0xd8] sm:$0xff] %vm1588, %v6313
    %v6371 = vmul.f32 %v5605, %v6060
    %v6372 = vmul.f32 %v5607, %v6060
    %v6373 = vmul.f32 %v5609, %v6060
    %v6374 = vmul.f32 %v5611, %v6060
    %v6375 = vmul.f32 %v5615, %v6060
    %v6376 = vmul.f32 %v5617, %v6060
    %v6377 = vmul.f32 %v5619, %v6060
    %v6378 = vmul.f32 %v5621, %v6060
    %v6379 = vmul.f32 %v5625, %v6060
    %v6380 = vmul.f32 %v5627, %v6060
    %v6381 = vmul.f32 %v5629, %v6060
    %v6382 = vmul.f32 %v5631, %v6060
    %v6383 = vmul.f32 %v5635, %v6060
    %v6384 = vmul.f32 %v5637, %v6060
    %v6385 = vmul.f32 %v5639, %v6060
    %v6386 = vmul.f32 %v5641, %v6060
    %v6387 = vmul.f32 %v5645, %v6060
    %v6388 = vmul.f32 %v5647, %v6060
    %v6389 = vmul.f32 %v5649, %v6060
    %v6390 = vmul.f32 %v5651, %v6060
    %v6391 = vmul.f32 %v5655, %v6060
    %v6392 = vmul.f32 %v5657, %v6060
    %v6393 = vmul.f32 %v5659, %v6060
    %v6394 = vmul.f32 %v5661, %v6060
    %v6395 = vmul.f32 %v5665, %v6060
    %v6396 = vmul.f32 %v5667, %v6060
    %v6397 = vmul.f32 %v5669, %v6060
    %v6398 = vmul.f32 %v5671, %v6060
    %v6399 = vmul.f32 %v5675, %v6060
    %v6400 = vmul.f32 %v5677, %v6060
    %v6401 = vmul.f32 %v5679, %v6060
    %v6402 = vmul.f32 %v5681, %v6060
    %v6403 = vmul.f32 %v5685, %v6060
    %v6404 = vmul.f32 %v5687, %v6060
    %v6405 = vmul.f32 %v5689, %v6060
    %v6406 = vmul.f32 %v5691, %v6060
    %v6407 = vmul.f32 %v5695, %v6060
    %v6408 = vmul.f32 %v5697, %v6060
    %v6409 = vmul.f32 %v5699, %v6060
    %v6410 = vmul.f32 %v5701, %v6060
    %v6411 = vmul.f32 %v5705, %v6060
    %v6412 = vmul.f32 %v5707, %v6060
    %v6413 = vmul.f32 %v5709, %v6060
    %v6414 = vmul.f32 %v5711, %v6060
    %v6415 = vmul.f32 %v5715, %v6060
    %v6416 = vmul.f32 %v5717, %v6060
    %v6417 = vmul.f32 %v5719, %v6060
    %v6418 = vmul.f32 %v5721, %v6060
    %v6419 = vmul.f32 %v5725, %v6060
    %v6420 = vmul.f32 %v5727, %v6060
    %v6421 = vmul.f32 %v5729, %v6060
    %v6422 = vmul.f32 %v5731, %v6060
    %v6423 = vmul.f32 %v5735, %v6060
    %v6424 = vmul.f32 %v5737, %v6060
    %v6425 = vmul.f32 %v5739, %v6060
    %v6426 = vmul.f32 %v5741, %v6060
    %v6427 = vadd.f32 %v6371, %v6117
    %v6428 = vadd.f32 %v6372, %v6117
    %v6429 = vadd.f32 %v6373, %v6117
    %v6430 = vadd.f32 %v6374, %v6117
    %v6431 = vadd.f32 %v6375, %v6117
    %v6432 = vadd.f32 %v6376, %v6117
    %v6433 = vadd.f32 %v6377, %v6117
    %v6434 = vadd.f32 %v6378, %v6117
    %v6435 = vadd.f32 %v6379, %v6117
    %v6436 = vadd.f32 %v6380, %v6117
    %v6437 = vadd.f32 %v6381, %v6117
    %v6438 = vadd.f32 %v6382, %v6117
    %v6439 = vadd.f32 %v6383, %v6117
    %v6440 = vadd.f32 %v6384, %v6117
    %v6441 = vadd.f32 %v6385, %v6117
    %v6442 = vadd.f32 %v6386, %v6117
    %v6443 = vadd.f32 %v6387, %v6117
    %v6444 = vadd.f32 %v6388, %v6117
    %v6445 = vadd.f32 %v6389, %v6117
    %v6446 = vadd.f32 %v6390, %v6117
    %v6447 = vadd.f32 %v6391, %v6117
    %v6448 = vadd.f32 %v6392, %v6117
    %v6449 = vadd.f32 %v6393, %v6117
    %v6450 = vadd.f32 %v6394, %v6117
    %v6451 = vadd.f32 %v6395, %v6117
    %v6452 = vadd.f32 %v6396, %v6117
    %v6453 = vadd.f32 %v6397, %v6117
    %v6454 = vadd.f32 %v6398, %v6117
    %v6455 = vadd.f32 %v6399, %v6117
    %v6456 = vadd.f32 %v6400, %v6117
    %v6457 = vadd.f32 %v6401, %v6117
    %v6458 = vadd.f32 %v6402, %v6117
    %v6459 = vadd.f32 %v6403, %v6117
    %v6460 = vadd.f32 %v6404, %v6117
    %v6461 = vadd.f32 %v6405, %v6117
    %v6462 = vadd.f32 %v6406, %v6117
    %v6463 = vadd.f32 %v6407, %v6117
    %v6464 = vadd.f32 %v6408, %v6117
    %v6465 = vadd.f32 %v6409, %v6117
    %v6466 = vadd.f32 %v6410, %v6117
    %v6467 = vadd.f32 %v6411, %v6117
    %v6468 = vadd.f32 %v6412, %v6117
    %v6469 = vadd.f32 %v6413, %v6117
    %v6470 = vadd.f32 %v6414, %v6117
    %v6471 = vadd.f32 %v6415, %v6117
    %v6472 = vadd.f32 %v6416, %v6117
    %v6473 = vadd.f32 %v6417, %v6117
    %v6474 = vadd.f32 %v6418, %v6117
    %v6475 = vadd.f32 %v6419, %v6117
    %v6476 = vadd.f32 %v6420, %v6117
    %v6477 = vadd.f32 %v6421, %v6117
    %v6478 = vadd.f32 %v6422, %v6117
    %v6479 = vadd.f32 %v6423, %v6117
    %v6480 = vadd.f32 %v6424, %v6117
    %v6481 = vadd.f32 %v6425, %v6117
    %v6482 = vadd.f32 %v6426, %v6117
    %v6483 = vpack.c.bf16 %v6429, %v6427
    %v6484 = vpack.c.bf16 %v6430, %v6428
    %v6485 = vpack.c.bf16 %v6433, %v6431
    %v6486 = vpack.c.bf16 %v6434, %v6432
    %v6487 = vpack.c.bf16 %v6437, %v6435
    %v6488 = vpack.c.bf16 %v6438, %v6436
    %v6489 = vpack.c.bf16 %v6441, %v6439
    %v6490 = vpack.c.bf16 %v6442, %v6440
    %v6491 = vpack.c.bf16 %v6445, %v6443
    %v6492 = vpack.c.bf16 %v6446, %v6444
    %v6493 = vpack.c.bf16 %v6449, %v6447
    %v6494 = vpack.c.bf16 %v6450, %v6448
    %v6495 = vpack.c.bf16 %v6453, %v6451
    %v6496 = vpack.c.bf16 %v6454, %v6452
    %v6497 = vpack.c.bf16 %v6457, %v6455
    %v6498 = vpack.c.bf16 %v6458, %v6456
    %v6499 = vpack.c.bf16 %v6461, %v6459
    %v6500 = vpack.c.bf16 %v6462, %v6460
    %v6501 = vpack.c.bf16 %v6465, %v6463
    %v6502 = vpack.c.bf16 %v6466, %v6464
    %v6503 = vpack.c.bf16 %v6469, %v6467
    %v6504 = vpack.c.bf16 %v6470, %v6468
    %v6505 = vpack.c.bf16 %v6473, %v6471
    %v6506 = vpack.c.bf16 %v6474, %v6472
    %v6507 = vpack.c.bf16 %v6477, %v6475
    %v6508 = vpack.c.bf16 %v6478, %v6476
    %v6509 = vpack.c.bf16 %v6481, %v6479
    %v6510 = vpack.c.bf16 %v6482, %v6480
    %v6539 = vunpack.c.l.b16 %v6483
    %v6540 = vunpack.c.l.b16 %v6484
    %v6541 = vunpack.c.h.b16 %v6483
    %v6542 = vunpack.c.h.b16 %v6484
    %v6543 = vunpack.c.l.b16 %v6485
    %v6544 = vunpack.c.l.b16 %v6486
    %v6545 = vunpack.c.h.b16 %v6485
    %v6546 = vunpack.c.h.b16 %v6486
    %v6547 = vunpack.c.l.b16 %v6487
    %v6548 = vunpack.c.l.b16 %v6488
    %v6549 = vunpack.c.h.b16 %v6487
    %v6550 = vunpack.c.h.b16 %v6488
    %v6551 = vunpack.c.l.b16 %v6489
    %v6552 = vunpack.c.l.b16 %v6490
    %v6553 = vunpack.c.h.b16 %v6489
    %v6554 = vunpack.c.h.b16 %v6490
    %v6555 = vunpack.c.l.b16 %v6491
    %v6556 = vunpack.c.l.b16 %v6492
    %v6557 = vunpack.c.h.b16 %v6491
    %v6558 = vunpack.c.h.b16 %v6492
    %v6559 = vunpack.c.l.b16 %v6493
    %v6560 = vunpack.c.l.b16 %v6494
    %v6561 = vunpack.c.h.b16 %v6493
    %v6562 = vunpack.c.h.b16 %v6494
    %v6563 = vunpack.c.l.b16 %v6495
    %v6564 = vunpack.c.l.b16 %v6496
    %v6565 = vunpack.c.h.b16 %v6495
    %v6566 = vunpack.c.h.b16 %v6496
    %v6567 = vunpack.c.l.b16 %v6497
    %v6568 = vunpack.c.l.b16 %v6498
    %v6569 = vunpack.c.h.b16 %v6497
    %v6570 = vunpack.c.h.b16 %v6498
    %v6571 = vunpack.c.l.b16 %v6499
    %v6572 = vunpack.c.l.b16 %v6500
    %v6573 = vunpack.c.h.b16 %v6499
    %v6574 = vunpack.c.h.b16 %v6500
    %v6575 = vunpack.c.l.b16 %v6501
    %v6576 = vunpack.c.l.b16 %v6502
    %v6577 = vunpack.c.h.b16 %v6501
    %v6578 = vunpack.c.h.b16 %v6502
    %v6579 = vunpack.c.l.b16 %v6503
    %v6580 = vunpack.c.l.b16 %v6504
    %v6581 = vunpack.c.h.b16 %v6503
    %v6582 = vunpack.c.h.b16 %v6504
    %v6583 = vunpack.c.l.b16 %v6505
    %v6584 = vunpack.c.l.b16 %v6506
    %v6585 = vunpack.c.h.b16 %v6505
    %v6586 = vunpack.c.h.b16 %v6506
    %v6587 = vunpack.c.l.b16 %v6507
    %v6588 = vunpack.c.l.b16 %v6508
    %v6589 = vunpack.c.h.b16 %v6507
    %v6590 = vunpack.c.h.b16 %v6508
    %v6591 = vunpack.c.l.b16 %v6509
    %v6592 = vunpack.c.l.b16 %v6510
    %v6593 = vunpack.c.h.b16 %v6509
    %v6594 = vunpack.c.h.b16 %v6510
    %v6595 = vpack.c.b16 %v6540, %v6539
    %v6596 = vpack.c.b16 %v6542, %v6541
    %v6597 = vpack.c.b16 %v6544, %v6543
    %v6598 = vpack.c.b16 %v6546, %v6545
    %v6599 = vpack.c.b16 %v6548, %v6547
    %v6600 = vpack.c.b16 %v6550, %v6549
    %v6601 = vpack.c.b16 %v6552, %v6551
    %v6602 = vpack.c.b16 %v6554, %v6553
    %v6603 = vpack.c.b16 %v6556, %v6555
    %v6604 = vpack.c.b16 %v6558, %v6557
    %v6605 = vpack.c.b16 %v6560, %v6559
    %v6606 = vpack.c.b16 %v6562, %v6561
    %v6607 = vpack.c.b16 %v6564, %v6563
    %v6608 = vpack.c.b16 %v6566, %v6565
    %v6609 = vpack.c.b16 %v6568, %v6567
    %v6610 = vpack.c.b16 %v6570, %v6569
    %v6611 = vpack.c.b16 %v6572, %v6571
    %v6612 = vpack.c.b16 %v6574, %v6573
    %v6613 = vpack.c.b16 %v6576, %v6575
    %v6614 = vpack.c.b16 %v6578, %v6577
    %v6615 = vpack.c.b16 %v6580, %v6579
    %v6616 = vpack.c.b16 %v6582, %v6581
    %v6617 = vpack.c.b16 %v6584, %v6583
    %v6618 = vpack.c.b16 %v6586, %v6585
    %v6619 = vpack.c.b16 %v6588, %v6587
    %v6620 = vpack.c.b16 %v6590, %v6589
    %v6621 = vpack.c.b16 %v6592, %v6591
    %v6622 = vpack.c.b16 %v6594, %v6593
    %s6651 = scalar_lea.vmem [#allocation9], 672
    %6652 = vst.msk [vmem:[%s6651] sm:$0xff] %vm1588, %v6595
    %6653 = vst.msk [vmem:[%s6651 + $0x8] sm:$0xff] %vm1588, %v6596
    %6654 = vst.msk [vmem:[%s6651 + $0x10] sm:$0xff] %vm1588, %v6597
    %6655 = vst.msk [vmem:[%s6651 + $0x18] sm:$0xff] %vm1588, %v6598
    %6656 = vst.msk [vmem:[%s6651 + $0x20] sm:$0xff] %vm1588, %v6599
    %6657 = vst.msk [vmem:[%s6651 + $0x28] sm:$0xff] %vm1588, %v6600
    %6658 = vst.msk [vmem:[%s6651 + $0x30] sm:$0xff] %vm1588, %v6601
    %6659 = vst.msk [vmem:[%s6651 + $0x38] sm:$0xff] %vm1588, %v6602
    %6660 = vst.msk [vmem:[%s6651 + $0x40] sm:$0xff] %vm1588, %v6603
    %6661 = vst.msk [vmem:[%s6651 + $0x48] sm:$0xff] %vm1588, %v6604
    %6662 = vst.msk [vmem:[%s6651 + $0x50] sm:$0xff] %vm1588, %v6605
    %6663 = vst.msk [vmem:[%s6651 + $0x58] sm:$0xff] %vm1588, %v6606
    %6664 = vst.msk [vmem:[%s6651 + $0x60] sm:$0xff] %vm1588, %v6607
    %6665 = vst.msk [vmem:[%s6651 + $0x68] sm:$0xff] %vm1588, %v6608
    %6666 = vst.msk [vmem:[%s6651 + $0x70] sm:$0xff] %vm1588, %v6609
    %6667 = vst.msk [vmem:[%s6651 + $0x78] sm:$0xff] %vm1588, %v6610
    %6668 = vst.msk [vmem:[%s6651 + $0x80] sm:$0xff] %vm1588, %v6611
    %6669 = vst.msk [vmem:[%s6651 + $0x88] sm:$0xff] %vm1588, %v6612
    %6670 = vst.msk [vmem:[%s6651 + $0x90] sm:$0xff] %vm1588, %v6613
    %6671 = vst.msk [vmem:[%s6651 + $0x98] sm:$0xff] %vm1588, %v6614
    %6672 = vst.msk [vmem:[%s6651 + $0xa0] sm:$0xff] %vm1588, %v6615
    %6673 = vst.msk [vmem:[%s6651 + $0xa8] sm:$0xff] %vm1588, %v6616
    %6674 = vst.msk [vmem:[%s6651 + $0xb0] sm:$0xff] %vm1588, %v6617
    %6675 = vst.msk [vmem:[%s6651 + $0xb8] sm:$0xff] %vm1588, %v6618
    %6676 = vst.msk [vmem:[%s6651 + $0xc0] sm:$0xff] %vm1588, %v6619
    %6677 = vst.msk [vmem:[%s6651 + $0xc8] sm:$0xff] %vm1588, %v6620
    %6678 = vst.msk [vmem:[%s6651 + $0xd0] sm:$0xff] %vm1588, %v6621
    %6679 = vst.msk [vmem:[%s6651 + $0xd8] sm:$0xff] %vm1588, %v6622
    %v6680 = vmul.f32 %v5796, %v6060
    %v6681 = vmul.f32 %v5799, %v6060
    %v6682 = vmul.f32 %v5804, %v6060
    %v6683 = vmul.f32 %v5807, %v6060
    %v6684 = vmul.f32 %v5812, %v6060
    %v6685 = vmul.f32 %v5815, %v6060
    %v6686 = vmul.f32 %v5820, %v6060
    %v6687 = vmul.f32 %v5823, %v6060
    %v6688 = vmul.f32 %v5828, %v6060
    %v6689 = vmul.f32 %v5831, %v6060
    %v6690 = vmul.f32 %v5836, %v6060
    %v6691 = vmul.f32 %v5839, %v6060
    %v6692 = vadd.f32 %v6680, %v6117
    %v6693 = vadd.f32 %v6681, %v6117
    %v6694 = vadd.f32 %v6682, %v6117
    %v6695 = vadd.f32 %v6683, %v6117
    %v6696 = vadd.f32 %v6684, %v6117
    %v6697 = vadd.f32 %v6685, %v6117
    %v6698 = vadd.f32 %v6686, %v6117
    %v6699 = vadd.f32 %v6687, %v6117
    %v6700 = vadd.f32 %v6688, %v6117
    %v6701 = vadd.f32 %v6689, %v6117
    %v6702 = vadd.f32 %v6690, %v6117
    %v6703 = vadd.f32 %v6691, %v6117
    %v6704 = vpack.c.bf16 %v6693, %v6692
    %v6705 = vpack.c.bf16 %v6695, %v6694
    %v6706 = vpack.c.bf16 %v6697, %v6696
    %v6707 = vpack.c.bf16 %v6699, %v6698
    %v6708 = vpack.c.bf16 %v6701, %v6700
    %v6709 = vpack.c.bf16 %v6703, %v6702
    %v6716 = vunpack.c.l.b16 %v6704
    %v6717 = vunpack.c.h.b16 %v6704
    %v6718 = vunpack.c.l.b16 %v6705
    %v6719 = vunpack.c.h.b16 %v6705
    %v6720 = vunpack.c.l.b16 %v6706
    %v6721 = vunpack.c.h.b16 %v6706
    %v6722 = vunpack.c.l.b16 %v6707
    %v6723 = vunpack.c.h.b16 %v6707
    %v6724 = vunpack.c.l.b16 %v6708
    %v6725 = vunpack.c.h.b16 %v6708
    %v6726 = vunpack.c.l.b16 %v6709
    %v6727 = vunpack.c.h.b16 %v6709
    %v6728 = vpack.c.b16 %v6716, %v6716
    %v6729 = vpack.c.b16 %v6717, %v6717
    %v6730 = vpack.c.b16 %v6718, %v6718
    %v6731 = vpack.c.b16 %v6719, %v6719
    %v6732 = vpack.c.b16 %v6720, %v6720
    %v6733 = vpack.c.b16 %v6721, %v6721
    %v6734 = vpack.c.b16 %v6722, %v6722
    %v6735 = vpack.c.b16 %v6723, %v6723
    %v6736 = vpack.c.b16 %v6724, %v6724
    %v6737 = vpack.c.b16 %v6725, %v6725
    %v6738 = vpack.c.b16 %v6726, %v6726
    %v6739 = vpack.c.b16 %v6727, %v6727
    %s6752 = scalar_lea.vmem [#allocation11], 144
    %6753 = vst.msk [vmem:[%s6752] sm:$0xf] %vm1997, %v6728
    %6754 = vst.msk [vmem:[%s6752 + $0x4] sm:$0xf] %vm1997, %v6729
    %6755 = vst.msk [vmem:[%s6752 + $0x8] sm:$0xf] %vm1997, %v6730
    %6756 = vst.msk [vmem:[%s6752 + $0xc] sm:$0xf] %vm1997, %v6731
    %6757 = vst.msk [vmem:[%s6752 + $0x10] sm:$0xf] %vm1997, %v6732
    %6758 = vst.msk [vmem:[%s6752 + $0x14] sm:$0xf] %vm1997, %v6733
    %6759 = vst.msk [vmem:[%s6752 + $0x18] sm:$0xf] %vm1997, %v6734
    %6760 = vst.msk [vmem:[%s6752 + $0x1c] sm:$0xf] %vm1997, %v6735
    %6761 = vst.msk [vmem:[%s6752 + $0x20] sm:$0xf] %vm1997, %v6736
    %6762 = vst.msk [vmem:[%s6752 + $0x24] sm:$0xf] %vm1997, %v6737
    %6763 = vst.msk [vmem:[%s6752 + $0x28] sm:$0xf] %vm1997, %v6738
    %6764 = vst.msk [vmem:[%s6752 + $0x2c] sm:$0xf] %vm1997, %v6739
    %s6765 = scalar_lea.vmem %s2, 32
    %v6766 = vld [vmem:[%s6765] sm:$0xf]
    %v6767 = vld [vmem:[%s6765 + $0x4] sm:$0xf]
    %v6770 = vunpack.c.l.b16 %v6766
    %v6771 = vunpack.c.l.b16 %v6767
    %v6772 = vpack.c.b16 %v6771, %v6770
    %6774 = vmatprep.subr.bf16.mxu0 0
    %6775 = vmatpush1.bf16.msra.mxu0 %v6772
    %6776 = vmatprep.subr.bf16.mxu0 0
    %6777 = vmatpush1.bf16.msra.mxu0 0
    %6778 = vmatprep.subr.bf16.mxu0 0
    %6779 = vmatpush1.bf16.msra.mxu0 0
    %6780 = vmatprep.subr.bf16.mxu0 0
    %6781 = vmatpush1.bf16.msra.mxu0 0
    %6782 = vmatprep.subr.bf16.mxu0 0
    %6783 = vmatpush1.bf16.msra.mxu0 0
    %6784 = vmatprep.subr.bf16.mxu0 0
    %6785 = vmatpush1.bf16.msra.mxu0 0
    %6786 = vmatprep.subr.bf16.mxu0 0
    %6787 = vmatpush1.bf16.msra.mxu0 0
    %6788 = vmatprep.subr.bf16.mxu0 0
    %6789 = vmatpush1.bf16.msra.mxu0 0
    %6790 = vmatprep.subr.bf16.mxu0 0
    %6791 = vmatpush1.bf16.msra.mxu0 0
    %6792 = vmatprep.subr.bf16.mxu0 0
    %6793 = vmatpush1.bf16.msra.mxu0 0
    %6794 = vmatprep.subr.bf16.mxu0 0
    %6795 = vmatpush1.bf16.msra.mxu0 0
    %6796 = vmatprep.subr.bf16.mxu0 0
    %6797 = vmatpush1.bf16.msra.mxu0 0
    %6798 = vmatprep.subr.bf16.mxu0 0
    %6799 = vmatpush1.bf16.msra.mxu0 0
    %6800 = vmatprep.subr.bf16.mxu0 0
    %6801 = vmatpush1.bf16.msra.mxu0 0
    %6802 = vmatprep.subr.bf16.mxu0 0
    %6803 = vmatpush1.bf16.msra.mxu0 0
    %6804 = vmatprep.subr.bf16.mxu0 0
    %6805 = vmatpush1.bf16.msra.mxu0 0
    %6806 = vmatprep.mubr.bf16.mxu0 0
    %6807 = vmatmul.mubr.bf16.gmra.mrb[0].mxu0 %v307
    %v6808 = vpop.f32.mrb[0].mxu0
    %v6809 = vadd.f32 0.0, %v6808
    %v6810 = vpop.f32.mrb[0].mxu0
    %v6811 = vpop.f32.mrb[0].mxu0
    %v6812 = vadd.f32 0.0, %v6811
    %v6813 = vpop.f32.mrb[0].mxu0
    %6814 = vmatprep.mubr.bf16.mxu0 0
    %6815 = vmatmul.mubr.bf16.gmra.mrb[0].mxu0 %v310
    %v6816 = vpop.f32.mrb[0].mxu0
    %v6817 = vadd.f32 0.0, %v6816
    %v6818 = vpop.f32.mrb[0].mxu0
    %v6819 = vpop.f32.mrb[0].mxu0
    %v6820 = vadd.f32 0.0, %v6819
    %v6821 = vpop.f32.mrb[0].mxu0
    %6822 = vmatprep.mubr.bf16.mxu0 0
    %6823 = vmatmul.mubr.bf16.gmra.mrb[0].mxu0 %v313
    %v6824 = vpop.f32.mrb[0].mxu0
    %v6825 = vadd.f32 0.0, %v6824
    %v6826 = vpop.f32.mrb[0].mxu0
    %v6827 = vpop.f32.mrb[0].mxu0
    %v6828 = vadd.f32 0.0, %v6827
    %v6829 = vpop.f32.mrb[0].mxu0
    %6830 = vmatprep.mubr.bf16.mxu0 0
    %6831 = vmatmul.mubr.bf16.gmra.mrb[0].mxu0 %v316
    %v6832 = vpop.f32.mrb[0].mxu0
    %v6833 = vadd.f32 0.0, %v6832
    %v6834 = vpop.f32.mrb[0].mxu0
    %v6835 = vpop.f32.mrb[0].mxu0
    %v6836 = vadd.f32 0.0, %v6835
    %v6837 = vpop.f32.mrb[0].mxu0
    %6838 = vmatprep.mubr.bf16.mxu0 0
    %6839 = vmatmul.mubr.bf16.gmra.mrb[0].mxu0 %v319
    %v6840 = vpop.f32.mrb[0].mxu0
    %v6841 = vadd.f32 0.0, %v6840
    %v6842 = vpop.f32.mrb[0].mxu0
    %v6843 = vpop.f32.mrb[0].mxu0
    %v6844 = vadd.f32 0.0, %v6843
    %v6845 = vpop.f32.mrb[0].mxu0
    %6846 = vmatprep.mubr.bf16.mxu0 0
    %6847 = vmatmul.mubr.bf16.gmra.mrb[0].mxu0 %v322
    %v6848 = vpop.f32.mrb[0].mxu0
    %v6849 = vadd.f32 0.0, %v6848
    %v6850 = vpop.f32.mrb[0].mxu0
    %v6851 = vpop.f32.mrb[0].mxu0
    %v6852 = vadd.f32 0.0, %v6851
    %v6853 = vpop.f32.mrb[0].mxu0
    %6854 = vmatprep.mubr.bf16.mxu0 0
    %6855 = vmatmul.mubr.bf16.gmra.mrb[0].mxu0 %v325
    %v6856 = vpop.f32.mrb[0].mxu0
    %v6857 = vadd.f32 0.0, %v6856
    %v6858 = vpop.f32.mrb[0].mxu0
    %v6859 = vpop.f32.mrb[0].mxu0
    %v6860 = vadd.f32 0.0, %v6859
    %v6861 = vpop.f32.mrb[0].mxu0
    %6862 = vmatprep.mubr.bf16.mxu0 0
    %6863 = vmatmul.mubr.bf16.gmra.mrb[0].mxu0 %v328
    %v6864 = vpop.f32.mrb[0].mxu0
    %v6865 = vadd.f32 0.0, %v6864
    %v6866 = vpop.f32.mrb[0].mxu0
    %v6867 = vpop.f32.mrb[0].mxu0
    %v6868 = vadd.f32 0.0, %v6867
    %v6869 = vpop.f32.mrb[0].mxu0
    %6870 = vmatprep.mubr.bf16.mxu0 0
    %6871 = vmatmul.mubr.bf16.gmra.mrb[0].mxu0 %v331
    %v6872 = vpop.f32.mrb[0].mxu0
    %v6873 = vadd.f32 0.0, %v6872
    %v6874 = vpop.f32.mrb[0].mxu0
    %v6875 = vpop.f32.mrb[0].mxu0
    %v6876 = vadd.f32 0.0, %v6875
    %v6877 = vpop.f32.mrb[0].mxu0
    %6878 = vmatprep.mubr.bf16.mxu0 0
    %6879 = vmatmul.mubr.bf16.gmra.mrb[0].mxu0 %v334
    %v6880 = vpop.f32.mrb[0].mxu0
    %v6881 = vadd.f32 0.0, %v6880
    %v6882 = vpop.f32.mrb[0].mxu0
    %v6883 = vpop.f32.mrb[0].mxu0
    %v6884 = vadd.f32 0.0, %v6883
    %v6885 = vpop.f32.mrb[0].mxu0
    %6886 = vmatprep.mubr.bf16.mxu0 0
    %6887 = vmatmul.mubr.bf16.gmra.mrb[0].mxu0 %v337
    %v6888 = vpop.f32.mrb[0].mxu0
    %v6889 = vadd.f32 0.0, %v6888
    %v6890 = vpop.f32.mrb[0].mxu0
    %v6891 = vpop.f32.mrb[0].mxu0
    %v6892 = vadd.f32 0.0, %v6891
    %v6893 = vpop.f32.mrb[0].mxu0
    %6894 = vmatprep.mubr.bf16.mxu0 0
    %6895 = vmatmul.mubr.bf16.gmra.mrb[0].mxu0 %v340
    %v6896 = vpop.f32.mrb[0].mxu0
    %v6897 = vadd.f32 0.0, %v6896
    %v6898 = vpop.f32.mrb[0].mxu0
    %v6899 = vpop.f32.mrb[0].mxu0
    %v6900 = vadd.f32 0.0, %v6899
    %v6901 = vpop.f32.mrb[0].mxu0
    %6902 = vmatprep.mubr.bf16.mxu0 0
    %6903 = vmatmul.mubr.bf16.gmra.mrb[0].mxu0 %v343
    %v6904 = vpop.f32.mrb[0].mxu0
    %v6905 = vadd.f32 0.0, %v6904
    %v6906 = vpop.f32.mrb[0].mxu0
    %v6907 = vpop.f32.mrb[0].mxu0
    %v6908 = vadd.f32 0.0, %v6907
    %v6909 = vpop.f32.mrb[0].mxu0
    %6910 = vmatprep.mubr.bf16.mxu0 0
    %6911 = vmatmul.mubr.bf16.gmra.mrb[0].mxu0 %v346
    %v6912 = vpop.f32.mrb[0].mxu0
    %v6913 = vadd.f32 0.0, %v6912
    %v6914 = vpop.f32.mrb[0].mxu0
    %v6915 = vpop.f32.mrb[0].mxu0
    %v6916 = vadd.f32 0.0, %v6915
    %v6917 = vpop.f32.mrb[0].mxu0
    %6918 = vmatprep.mubr.bf16.mxu0 0
    %6919 = vmatmul.mubr.bf16.gmra.mrb[0].mxu0 %v349
    %v6920 = vpop.f32.mrb[0].mxu0
    %v6921 = vadd.f32 0.0, %v6920
    %v6922 = vpop.f32.mrb[0].mxu0
    %v6923 = vpop.f32.mrb[0].mxu0
    %v6924 = vadd.f32 0.0, %v6923
    %v6925 = vpop.f32.mrb[0].mxu0
    %6926 = vmatprep.mubr.bf16.mxu0 0
    %6927 = vmatmul.mubr.bf16.gmra.mrb[0].mxu0 %v352
    %v6928 = vpop.f32.mrb[0].mxu0
    %v6929 = vadd.f32 0.0, %v6928
    %v6930 = vpop.f32.mrb[0].mxu0
    %v6931 = vpop.f32.mrb[0].mxu0
    %v6932 = vadd.f32 0.0, %v6931
    %v6933 = vpop.f32.mrb[0].mxu0
    %6934 = vmatprep.mubr.bf16.mxu0 0
    %6935 = vmatmul.mubr.bf16.gmra.mrb[0].mxu0 %v355
    %v6936 = vpop.f32.mrb[0].mxu0
    %v6937 = vadd.f32 0.0, %v6936
    %v6938 = vpop.f32.mrb[0].mxu0
    %v6939 = vpop.f32.mrb[0].mxu0
    %v6940 = vadd.f32 0.0, %v6939
    %v6941 = vpop.f32.mrb[0].mxu0
    %6942 = vmatprep.mubr.bf16.mxu0 0
    %6943 = vmatmul.mubr.bf16.gmra.mrb[0].mxu0 %v358
    %v6944 = vpop.f32.mrb[0].mxu0
    %v6945 = vadd.f32 0.0, %v6944
    %v6946 = vpop.f32.mrb[0].mxu0
    %v6947 = vpop.f32.mrb[0].mxu0
    %v6948 = vadd.f32 0.0, %v6947
    %v6949 = vpop.f32.mrb[0].mxu0
    %6950 = vmatprep.mubr.bf16.mxu0 0
    %6951 = vmatmul.mubr.bf16.gmra.mrb[0].mxu0 %v361
    %v6952 = vpop.f32.mrb[0].mxu0
    %v6953 = vadd.f32 0.0, %v6952
    %v6954 = vpop.f32.mrb[0].mxu0
    %v6955 = vpop.f32.mrb[0].mxu0
    %v6956 = vadd.f32 0.0, %v6955
    %v6957 = vpop.f32.mrb[0].mxu0
    %6958 = vmatprep.mubr.bf16.mxu0 0
    %6959 = vmatmul.mubr.bf16.gmra.mrb[0].mxu0 %v364
    %v6960 = vpop.f32.mrb[0].mxu0
    %v6961 = vadd.f32 0.0, %v6960
    %v6962 = vpop.f32.mrb[0].mxu0
    %v6963 = vpop.f32.mrb[0].mxu0
    %v6964 = vadd.f32 0.0, %v6963
    %v6965 = vpop.f32.mrb[0].mxu0
    %6966 = vmatprep.mubr.bf16.mxu0 0
    %6967 = vmatmul.mubr.bf16.gmra.mrb[0].mxu0 %v367
    %v6968 = vpop.f32.mrb[0].mxu0
    %v6969 = vadd.f32 0.0, %v6968
    %v6970 = vpop.f32.mrb[0].mxu0
    %v6971 = vpop.f32.mrb[0].mxu0
    %v6972 = vadd.f32 0.0, %v6971
    %v6973 = vpop.f32.mrb[0].mxu0
    %6974 = vmatprep.mubr.bf16.mxu0 0
    %6975 = vmatmul.mubr.bf16.gmra.mrb[0].mxu0 %v370
    %v6976 = vpop.f32.mrb[0].mxu0
    %v6977 = vadd.f32 0.0, %v6976
    %v6978 = vpop.f32.mrb[0].mxu0
    %v6979 = vpop.f32.mrb[0].mxu0
    %v6980 = vadd.f32 0.0, %v6979
    %v6981 = vpop.f32.mrb[0].mxu0
    %6982 = vmatprep.mubr.bf16.mxu0 0
    %6983 = vmatmul.mubr.bf16.gmra.mrb[0].mxu0 %v373
    %v6984 = vpop.f32.mrb[0].mxu0
    %v6985 = vadd.f32 0.0, %v6984
    %v6986 = vpop.f32.mrb[0].mxu0
    %v6987 = vpop.f32.mrb[0].mxu0
    %v6988 = vadd.f32 0.0, %v6987
    %v6989 = vpop.f32.mrb[0].mxu0
    %6990 = vmatprep.mubr.bf16.mxu0 0
    %6991 = vmatmul.mubr.bf16.gmra.mrb[0].mxu0 %v376
    %v6992 = vpop.f32.mrb[0].mxu0
    %v6993 = vadd.f32 0.0, %v6992
    %v6994 = vpop.f32.mrb[0].mxu0
    %v6995 = vpop.f32.mrb[0].mxu0
    %v6996 = vadd.f32 0.0, %v6995
    %v6997 = vpop.f32.mrb[0].mxu0
    %6998 = vmatprep.mubr.bf16.mxu0 0
    %6999 = vmatmul.mubr.bf16.gmra.mrb[0].mxu0 %v379
    %v7000 = vpop.f32.mrb[0].mxu0
    %v7001 = vadd.f32 0.0, %v7000
    %v7002 = vpop.f32.mrb[0].mxu0
    %v7003 = vpop.f32.mrb[0].mxu0
    %v7004 = vadd.f32 0.0, %v7003
    %v7005 = vpop.f32.mrb[0].mxu0
    %7006 = vmatprep.mubr.bf16.mxu0 0
    %7007 = vmatmul.mubr.bf16.gmra.mrb[0].mxu0 %v382
    %v7008 = vpop.f32.mrb[0].mxu0
    %v7009 = vadd.f32 0.0, %v7008
    %v7010 = vpop.f32.mrb[0].mxu0
    %v7011 = vpop.f32.mrb[0].mxu0
    %v7012 = vadd.f32 0.0, %v7011
    %v7013 = vpop.f32.mrb[0].mxu0
    %7014 = vmatprep.mubr.bf16.mxu0 0
    %7015 = vmatmul.mubr.bf16.gmra.mrb[0].mxu0 %v385
    %v7016 = vpop.f32.mrb[0].mxu0
    %v7017 = vadd.f32 0.0, %v7016
    %v7018 = vpop.f32.mrb[0].mxu0
    %v7019 = vpop.f32.mrb[0].mxu0
    %v7020 = vadd.f32 0.0, %v7019
    %v7021 = vpop.f32.mrb[0].mxu0
    %7022 = vmatprep.mubr.bf16.mxu0 0
    %7023 = vmatmul.mubr.bf16.gmra.mrb[0].mxu0 %v388
    %v7024 = vpop.f32.mrb[0].mxu0
    %v7025 = vadd.f32 0.0, %v7024
    %v7026 = vpop.f32.mrb[0].mxu0
    %v7027 = vpop.f32.mrb[0].mxu0
    %v7028 = vadd.f32 0.0, %v7027
    %v7029 = vpop.f32.mrb[0].mxu0
    %7030 = vmatprep.mubr.bf16.mxu0 0
    %7031 = vmatmul.mubr.bf16.gmra.mrb[0].mxu0 %v391
    %v7032 = vpop.f32.mrb[0].mxu0
    %v7033 = vadd.f32 0.0, %v7032
    %v7034 = vpop.f32.mrb[0].mxu0
    %v7035 = vpop.f32.mrb[0].mxu0
    %v7036 = vadd.f32 0.0, %v7035
    %v7037 = vpop.f32.mrb[0].mxu0
    %7038 = vmatprep.mubr.bf16.mxu0 0
    %7039 = vmatmul.mubr.bf16.gmra.mrb[0].mxu0 %v394
    %v7040 = vpop.f32.mrb[0].mxu0
    %v7041 = vadd.f32 0.0, %v7040
    %v7042 = vpop.f32.mrb[0].mxu0
    %v7043 = vpop.f32.mrb[0].mxu0
    %v7044 = vadd.f32 0.0, %v7043
    %v7045 = vpop.f32.mrb[0].mxu0
    %7046 = vmatprep.mubr.bf16.mxu0 0
    %7047 = vmatmul.mubr.bf16.gmra.mrb[0].mxu0 %v397
    %v7048 = vpop.f32.mrb[0].mxu0
    %v7049 = vadd.f32 0.0, %v7048
    %v7050 = vpop.f32.mrb[0].mxu0
    %v7051 = vpop.f32.mrb[0].mxu0
    %v7052 = vadd.f32 0.0, %v7051
    %v7053 = vpop.f32.mrb[0].mxu0
    %7054 = vmatprep.mubr.bf16.mxu0 0
    %7055 = vmatmul.mubr.bf16.gmra.mrb[0].mxu0 %v400
    %v7056 = vpop.f32.mrb[0].mxu0
    %v7057 = vadd.f32 0.0, %v7056
    %v7058 = vpop.f32.mrb[0].mxu0
    %v7059 = vpop.f32.mrb[0].mxu0
    %v7060 = vadd.f32 0.0, %v7059
    %v7061 = vpop.f32.mrb[0].mxu0
    %7062 = vmatprep.mubr.bf16.mxu0 0
    %7063 = vmatmul.mubr.bf16.gmra.mrb[0].mxu0 %v403
    %v7064 = vpop.f32.mrb[0].mxu0
    %v7065 = vadd.f32 0.0, %v7064
    %v7066 = vpop.f32.mrb[0].mxu0
    %v7067 = vpop.f32.mrb[0].mxu0
    %v7068 = vadd.f32 0.0, %v7067
    %v7069 = vpop.f32.mrb[0].mxu0
    %7070 = vmatprep.mubr.bf16.mxu0 0
    %7071 = vmatmul.mubr.bf16.gmra.mrb[0].mxu0 %v406
    %v7072 = vpop.f32.mrb[0].mxu0
    %v7073 = vadd.f32 0.0, %v7072
    %v7074 = vpop.f32.mrb[0].mxu0
    %v7075 = vpop.f32.mrb[0].mxu0
    %v7076 = vadd.f32 0.0, %v7075
    %v7077 = vpop.f32.mrb[0].mxu0
    %7078 = vdwg.mxu0
    %v7079 = vpack.c.bf16 %v6812, %v6809
    %v7080 = vpack.c.bf16 %v6820, %v6817
    %v7081 = vpack.c.bf16 %v6828, %v6825
    %v7082 = vpack.c.bf16 %v6836, %v6833
    %v7083 = vpack.c.bf16 %v6844, %v6841
    %v7084 = vpack.c.bf16 %v6852, %v6849
    %v7085 = vpack.c.bf16 %v6860, %v6857
    %v7086 = vpack.c.bf16 %v6868, %v6865
    %v7087 = vpack.c.bf16 %v6876, %v6873
    %v7088 = vpack.c.bf16 %v6884, %v6881
    %v7089 = vpack.c.bf16 %v6892, %v6889
    %v7090 = vpack.c.bf16 %v6900, %v6897
    %v7091 = vpack.c.bf16 %v6908, %v6905
    %v7092 = vpack.c.bf16 %v6916, %v6913
    %v7093 = vpack.c.bf16 %v6924, %v6921
    %v7094 = vpack.c.bf16 %v6932, %v6929
    %v7095 = vpack.c.bf16 %v6940, %v6937
    %v7096 = vpack.c.bf16 %v6948, %v6945
    %v7097 = vpack.c.bf16 %v6956, %v6953
    %v7098 = vpack.c.bf16 %v6964, %v6961
    %v7099 = vpack.c.bf16 %v6972, %v6969
    %v7100 = vpack.c.bf16 %v6980, %v6977
    %v7101 = vpack.c.bf16 %v6988, %v6985
    %v7102 = vpack.c.bf16 %v6996, %v6993
    %v7103 = vpack.c.bf16 %v7004, %v7001
    %v7104 = vpack.c.bf16 %v7012, %v7009
    %v7105 = vpack.c.bf16 %v7020, %v7017
    %v7106 = vpack.c.bf16 %v7028, %v7025
    %v7107 = vpack.c.bf16 %v7036, %v7033
    %v7108 = vpack.c.bf16 %v7044, %v7041
    %v7109 = vpack.c.bf16 %v7052, %v7049
    %v7110 = vpack.c.bf16 %v7060, %v7057
    %v7111 = vpack.c.bf16 %v7068, %v7065
    %v7112 = vpack.c.bf16 %v7076, %v7073
    %v7114 = vsel %vm305, %v7079, 0
    %v7117 = vsel %vm305, %v7080, 0
    %v7120 = vsel %vm305, %v7081, 0
    %v7123 = vsel %vm305, %v7082, 0
    %v7126 = vsel %vm305, %v7083, 0
    %v7129 = vsel %vm305, %v7084, 0
    %v7132 = vsel %vm305, %v7085, 0
    %v7135 = vsel %vm305, %v7086, 0
    %v7138 = vsel %vm305, %v7087, 0
    %v7141 = vsel %vm305, %v7088, 0
    %v7144 = vsel %vm305, %v7089, 0
    %v7147 = vsel %vm305, %v7090, 0
    %v7150 = vsel %vm305, %v7091, 0
    %v7153 = vsel %vm305, %v7092, 0
    %7155 = vmatprep.subr.bf16.mxu0 %v754
    %7156 = vmatpush1.bf16.msra.mxu0 %v753
    %7157 = vmatprep.subr.bf16.mxu0 0
    %7158 = vmatpush1.bf16.msra.mxu0 0
    %7159 = vmatprep.subr.bf16.mxu0 0
    %7160 = vmatpush1.bf16.msra.mxu0 0
    %7161 = vmatprep.subr.bf16.mxu0 0
    %7162 = vmatpush1.bf16.msra.mxu0 0
    %7163 = vmatprep.subr.bf16.mxu0 0
    %7164 = vmatpush1.bf16.msra.mxu0 0
    %7165 = vmatprep.subr.bf16.mxu0 0
    %7166 = vmatpush1.bf16.msra.mxu0 0
    %7167 = vmatprep.subr.bf16.mxu0 0
    %7168 = vmatpush1.bf16.msra.mxu0 0
    %7169 = vmatprep.subr.bf16.mxu0 0
    %7170 = vmatpush1.bf16.msra.mxu0 0
    %7171 = vmatprep.subr.bf16.mxu0 0
    %7172 = vmatpush1.bf16.msra.mxu0 0
    %7173 = vmatprep.subr.bf16.mxu0 0
    %7174 = vmatpush1.bf16.msra.mxu0 0
    %7175 = vmatprep.subr.bf16.mxu0 0
    %7176 = vmatpush1.bf16.msra.mxu0 0
    %7177 = vmatprep.subr.bf16.mxu0 0
    %7178 = vmatpush1.bf16.msra.mxu0 0
    %7179 = vmatprep.subr.bf16.mxu0 0
    %7180 = vmatpush1.bf16.msra.mxu0 0
    %7181 = vmatprep.subr.bf16.mxu0 0
    %7182 = vmatpush1.bf16.msra.mxu0 0
    %7183 = vmatprep.subr.bf16.mxu0 0
    %7184 = vmatpush1.bf16.msra.mxu0 0
    %7185 = vmatprep.subr.bf16.mxu0 0
    %7186 = vmatpush1.bf16.msra.mxu0 0
    %7187 = vmatprep.mubr.bf16.mxu0 0
    %7188 = vmatmul.mubr.bf16.gmra.mrb[0].mxu0 %v7114
    %v7189 = vpop.f32.mrb[0].mxu0
    %v7190 = vadd.f32 0.0, %v7189
    %v7191 = vpop.f32.mrb[0].mxu0
    %v7192 = vadd.f32 0.0, %v7191
    %v7193 = vpop.f32.mrb[0].mxu0
    %v7194 = vadd.f32 0.0, %v7193
    %v7195 = vpop.f32.mrb[0].mxu0
    %v7196 = vadd.f32 0.0, %v7195
    %7197 = vmatprep.mubr.bf16.mxu0 0
    %7198 = vmatmul.mubr.bf16.gmra.mrb[0].mxu0 %v7117
    %v7199 = vpop.f32.mrb[0].mxu0
    %v7200 = vadd.f32 0.0, %v7199
    %v7201 = vpop.f32.mrb[0].mxu0
    %v7202 = vadd.f32 0.0, %v7201
    %v7203 = vpop.f32.mrb[0].mxu0
    %v7204 = vadd.f32 0.0, %v7203
    %v7205 = vpop.f32.mrb[0].mxu0
    %v7206 = vadd.f32 0.0, %v7205
    %7207 = vmatprep.mubr.bf16.mxu0 0
    %7208 = vmatmul.mubr.bf16.gmra.mrb[0].mxu0 %v7120
    %v7209 = vpop.f32.mrb[0].mxu0
    %v7210 = vadd.f32 0.0, %v7209
    %v7211 = vpop.f32.mrb[0].mxu0
    %v7212 = vadd.f32 0.0, %v7211
    %v7213 = vpop.f32.mrb[0].mxu0
    %v7214 = vadd.f32 0.0, %v7213
    %v7215 = vpop.f32.mrb[0].mxu0
    %v7216 = vadd.f32 0.0, %v7215
    %7217 = vmatprep.mubr.bf16.mxu0 0
    %7218 = vmatmul.mubr.bf16.gmra.mrb[0].mxu0 %v7123
    %v7219 = vpop.f32.mrb[0].mxu0
    %v7220 = vadd.f32 0.0, %v7219
    %v7221 = vpop.f32.mrb[0].mxu0
    %v7222 = vadd.f32 0.0, %v7221
    %v7223 = vpop.f32.mrb[0].mxu0
    %v7224 = vadd.f32 0.0, %v7223
    %v7225 = vpop.f32.mrb[0].mxu0
    %v7226 = vadd.f32 0.0, %v7225
    %7227 = vmatprep.mubr.bf16.mxu0 0
    %7228 = vmatmul.mubr.bf16.gmra.mrb[0].mxu0 %v7126
    %v7229 = vpop.f32.mrb[0].mxu0
    %v7230 = vadd.f32 0.0, %v7229
    %v7231 = vpop.f32.mrb[0].mxu0
    %v7232 = vadd.f32 0.0, %v7231
    %v7233 = vpop.f32.mrb[0].mxu0
    %v7234 = vadd.f32 0.0, %v7233
    %v7235 = vpop.f32.mrb[0].mxu0
    %v7236 = vadd.f32 0.0, %v7235
    %7237 = vmatprep.mubr.bf16.mxu0 0
    %7238 = vmatmul.mubr.bf16.gmra.mrb[0].mxu0 %v7129
    %v7239 = vpop.f32.mrb[0].mxu0
    %v7240 = vadd.f32 0.0, %v7239
    %v7241 = vpop.f32.mrb[0].mxu0
    %v7242 = vadd.f32 0.0, %v7241
    %v7243 = vpop.f32.mrb[0].mxu0
    %v7244 = vadd.f32 0.0, %v7243
    %v7245 = vpop.f32.mrb[0].mxu0
    %v7246 = vadd.f32 0.0, %v7245
    %7247 = vmatprep.mubr.bf16.mxu0 0
    %7248 = vmatmul.mubr.bf16.gmra.mrb[0].mxu0 %v7132
    %v7249 = vpop.f32.mrb[0].mxu0
    %v7250 = vadd.f32 0.0, %v7249
    %v7251 = vpop.f32.mrb[0].mxu0
    %v7252 = vadd.f32 0.0, %v7251
    %v7253 = vpop.f32.mrb[0].mxu0
    %v7254 = vadd.f32 0.0, %v7253
    %v7255 = vpop.f32.mrb[0].mxu0
    %v7256 = vadd.f32 0.0, %v7255
    %7257 = vmatprep.mubr.bf16.mxu0 0
    %7258 = vmatmul.mubr.bf16.gmra.mrb[0].mxu0 %v7135
    %v7259 = vpop.f32.mrb[0].mxu0
    %v7260 = vadd.f32 0.0, %v7259
    %v7261 = vpop.f32.mrb[0].mxu0
    %v7262 = vadd.f32 0.0, %v7261
    %v7263 = vpop.f32.mrb[0].mxu0
    %v7264 = vadd.f32 0.0, %v7263
    %v7265 = vpop.f32.mrb[0].mxu0
    %v7266 = vadd.f32 0.0, %v7265
    %7267 = vmatprep.mubr.bf16.mxu0 0
    %7268 = vmatmul.mubr.bf16.gmra.mrb[0].mxu0 %v7138
    %v7269 = vpop.f32.mrb[0].mxu0
    %v7270 = vadd.f32 0.0, %v7269
    %v7271 = vpop.f32.mrb[0].mxu0
    %v7272 = vadd.f32 0.0, %v7271
    %v7273 = vpop.f32.mrb[0].mxu0
    %v7274 = vadd.f32 0.0, %v7273
    %v7275 = vpop.f32.mrb[0].mxu0
    %v7276 = vadd.f32 0.0, %v7275
    %7277 = vmatprep.mubr.bf16.mxu0 0
    %7278 = vmatmul.mubr.bf16.gmra.mrb[0].mxu0 %v7141
    %v7279 = vpop.f32.mrb[0].mxu0
    %v7280 = vadd.f32 0.0, %v7279
    %v7281 = vpop.f32.mrb[0].mxu0
    %v7282 = vadd.f32 0.0, %v7281
    %v7283 = vpop.f32.mrb[0].mxu0
    %v7284 = vadd.f32 0.0, %v7283
    %v7285 = vpop.f32.mrb[0].mxu0
    %v7286 = vadd.f32 0.0, %v7285
    %7287 = vmatprep.mubr.bf16.mxu0 0
    %7288 = vmatmul.mubr.bf16.gmra.mrb[0].mxu0 %v7144
    %v7289 = vpop.f32.mrb[0].mxu0
    %v7290 = vadd.f32 0.0, %v7289
    %v7291 = vpop.f32.mrb[0].mxu0
    %v7292 = vadd.f32 0.0, %v7291
    %v7293 = vpop.f32.mrb[0].mxu0
    %v7294 = vadd.f32 0.0, %v7293
    %v7295 = vpop.f32.mrb[0].mxu0
    %v7296 = vadd.f32 0.0, %v7295
    %7297 = vmatprep.mubr.bf16.mxu0 0
    %7298 = vmatmul.mubr.bf16.gmra.mrb[0].mxu0 %v7147
    %v7299 = vpop.f32.mrb[0].mxu0
    %v7300 = vadd.f32 0.0, %v7299
    %v7301 = vpop.f32.mrb[0].mxu0
    %v7302 = vadd.f32 0.0, %v7301
    %v7303 = vpop.f32.mrb[0].mxu0
    %v7304 = vadd.f32 0.0, %v7303
    %v7305 = vpop.f32.mrb[0].mxu0
    %v7306 = vadd.f32 0.0, %v7305
    %7307 = vmatprep.mubr.bf16.mxu0 0
    %7308 = vmatmul.mubr.bf16.gmra.mrb[0].mxu0 %v7150
    %v7309 = vpop.f32.mrb[0].mxu0
    %v7310 = vadd.f32 0.0, %v7309
    %v7311 = vpop.f32.mrb[0].mxu0
    %v7312 = vadd.f32 0.0, %v7311
    %v7313 = vpop.f32.mrb[0].mxu0
    %v7314 = vadd.f32 0.0, %v7313
    %v7315 = vpop.f32.mrb[0].mxu0
    %v7316 = vadd.f32 0.0, %v7315
    %7317 = vmatprep.mubr.bf16.mxu0 0
    %7318 = vmatmul.mubr.bf16.gmra.mrb[0].mxu0 %v7153
    %v7319 = vpop.f32.mrb[0].mxu0
    %v7320 = vadd.f32 0.0, %v7319
    %v7321 = vpop.f32.mrb[0].mxu0
    %v7322 = vadd.f32 0.0, %v7321
    %v7323 = vpop.f32.mrb[0].mxu0
    %v7324 = vadd.f32 0.0, %v7323
    %v7325 = vpop.f32.mrb[0].mxu0
    %v7326 = vadd.f32 0.0, %v7325
    %7327 = vdwg.mxu0
    %v7329 = vsel %vm305, %v7107, 0
    %v7332 = vsel %vm305, %v7108, 0
    %v7335 = vsel %vm305, %v7109, 0
    %v7338 = vsel %vm305, %v7110, 0
    %v7341 = vsel %vm305, %v7111, 0
    %v7344 = vsel %vm305, %v7112, 0
    %7346 = vmatprep.subr.bf16.mxu0 0
    %7347 = vmatpush1.bf16.msra.mxu0 %v976
    %7348 = vmatprep.subr.bf16.mxu0 0
    %7349 = vmatpush1.bf16.msra.mxu0 0
    %7350 = vmatprep.subr.bf16.mxu0 0
    %7351 = vmatpush1.bf16.msra.mxu0 0
    %7352 = vmatprep.subr.bf16.mxu0 0
    %7353 = vmatpush1.bf16.msra.mxu0 0
    %7354 = vmatprep.subr.bf16.mxu0 0
    %7355 = vmatpush1.bf16.msra.mxu0 0
    %7356 = vmatprep.subr.bf16.mxu0 0
    %7357 = vmatpush1.bf16.msra.mxu0 0
    %7358 = vmatprep.subr.bf16.mxu0 0
    %7359 = vmatpush1.bf16.msra.mxu0 0
    %7360 = vmatprep.subr.bf16.mxu0 0
    %7361 = vmatpush1.bf16.msra.mxu0 0
    %7362 = vmatprep.subr.bf16.mxu0 0
    %7363 = vmatpush1.bf16.msra.mxu0 0
    %7364 = vmatprep.subr.bf16.mxu0 0
    %7365 = vmatpush1.bf16.msra.mxu0 0
    %7366 = vmatprep.subr.bf16.mxu0 0
    %7367 = vmatpush1.bf16.msra.mxu0 0
    %7368 = vmatprep.subr.bf16.mxu0 0
    %7369 = vmatpush1.bf16.msra.mxu0 0
    %7370 = vmatprep.subr.bf16.mxu0 0
    %7371 = vmatpush1.bf16.msra.mxu0 0
    %7372 = vmatprep.subr.bf16.mxu0 0
    %7373 = vmatpush1.bf16.msra.mxu0 0
    %7374 = vmatprep.subr.bf16.mxu0 0
    %7375 = vmatpush1.bf16.msra.mxu0 0
    %7376 = vmatprep.subr.bf16.mxu0 0
    %7377 = vmatpush1.bf16.msra.mxu0 0
    %7378 = vmatprep.mubr.bf16.mxu0 0
    %7379 = vmatmul.mubr.bf16.gmra.mrb[0].mxu0 %v7329
    %v7380 = vpop.f32.mrb[0].mxu0
    %v7381 = vadd.f32 0.0, %v7380
    %v7382 = vpop.f32.mrb[0].mxu0
    %v7383 = vpop.f32.mrb[0].mxu0
    %v7384 = vadd.f32 0.0, %v7383
    %v7385 = vpop.f32.mrb[0].mxu0
    %7386 = vmatprep.mubr.bf16.mxu0 0
    %7387 = vmatmul.mubr.bf16.gmra.mrb[0].mxu0 %v7332
    %v7388 = vpop.f32.mrb[0].mxu0
    %v7389 = vadd.f32 0.0, %v7388
    %v7390 = vpop.f32.mrb[0].mxu0
    %v7391 = vpop.f32.mrb[0].mxu0
    %v7392 = vadd.f32 0.0, %v7391
    %v7393 = vpop.f32.mrb[0].mxu0
    %7394 = vmatprep.mubr.bf16.mxu0 0
    %7395 = vmatmul.mubr.bf16.gmra.mrb[0].mxu0 %v7335
    %v7396 = vpop.f32.mrb[0].mxu0
    %v7397 = vadd.f32 0.0, %v7396
    %v7398 = vpop.f32.mrb[0].mxu0
    %v7399 = vpop.f32.mrb[0].mxu0
    %v7400 = vadd.f32 0.0, %v7399
    %v7401 = vpop.f32.mrb[0].mxu0
    %7402 = vmatprep.mubr.bf16.mxu0 0
    %7403 = vmatmul.mubr.bf16.gmra.mrb[0].mxu0 %v7338
    %v7404 = vpop.f32.mrb[0].mxu0
    %v7405 = vadd.f32 0.0, %v7404
    %v7406 = vpop.f32.mrb[0].mxu0
    %v7407 = vpop.f32.mrb[0].mxu0
    %v7408 = vadd.f32 0.0, %v7407
    %v7409 = vpop.f32.mrb[0].mxu0
    %7410 = vmatprep.mubr.bf16.mxu0 0
    %7411 = vmatmul.mubr.bf16.gmra.mrb[0].mxu0 %v7341
    %v7412 = vpop.f32.mrb[0].mxu0
    %v7413 = vadd.f32 0.0, %v7412
    %v7414 = vpop.f32.mrb[0].mxu0
    %v7415 = vpop.f32.mrb[0].mxu0
    %v7416 = vadd.f32 0.0, %v7415
    %v7417 = vpop.f32.mrb[0].mxu0
    %7418 = vmatprep.mubr.bf16.mxu0 0
    %7419 = vmatmul.mubr.bf16.gmra.mrb[0].mxu0 %v7344
    %v7420 = vpop.f32.mrb[0].mxu0
    %v7421 = vadd.f32 0.0, %v7420
    %v7422 = vpop.f32.mrb[0].mxu0
    %v7423 = vpop.f32.mrb[0].mxu0
    %v7424 = vadd.f32 0.0, %v7423
    %v7425 = vpop.f32.mrb[0].mxu0
    %7426 = vdwg.mxu0
    %v7428 = vsel %vm305, %v7093, 0
    %v7431 = vsel %vm305, %v7094, 0
    %v7434 = vsel %vm305, %v7095, 0
    %v7437 = vsel %vm305, %v7096, 0
    %v7440 = vsel %vm305, %v7097, 0
    %v7443 = vsel %vm305, %v7098, 0
    %v7446 = vsel %vm305, %v7099, 0
    %v7449 = vsel %vm305, %v7100, 0
    %v7452 = vsel %vm305, %v7101, 0
    %v7455 = vsel %vm305, %v7102, 0
    %v7458 = vsel %vm305, %v7103, 0
    %v7461 = vsel %vm305, %v7104, 0
    %v7464 = vsel %vm305, %v7105, 0
    %v7467 = vsel %vm305, %v7106, 0
    %7469 = vmatprep.subr.bf16.mxu0 %v1084
    %7470 = vmatpush1.bf16.msra.mxu0 %v1083
    %7471 = vmatprep.subr.bf16.mxu0 0
    %7472 = vmatpush1.bf16.msra.mxu0 0
    %7473 = vmatprep.subr.bf16.mxu0 0
    %7474 = vmatpush1.bf16.msra.mxu0 0
    %7475 = vmatprep.subr.bf16.mxu0 0
    %7476 = vmatpush1.bf16.msra.mxu0 0
    %7477 = vmatprep.subr.bf16.mxu0 0
    %7478 = vmatpush1.bf16.msra.mxu0 0
    %7479 = vmatprep.subr.bf16.mxu0 0
    %7480 = vmatpush1.bf16.msra.mxu0 0
    %7481 = vmatprep.subr.bf16.mxu0 0
    %7482 = vmatpush1.bf16.msra.mxu0 0
    %7483 = vmatprep.subr.bf16.mxu0 0
    %7484 = vmatpush1.bf16.msra.mxu0 0
    %7485 = vmatprep.subr.bf16.mxu0 0
    %7486 = vmatpush1.bf16.msra.mxu0 0
    %7487 = vmatprep.subr.bf16.mxu0 0
    %7488 = vmatpush1.bf16.msra.mxu0 0
    %7489 = vmatprep.subr.bf16.mxu0 0
    %7490 = vmatpush1.bf16.msra.mxu0 0
    %7491 = vmatprep.subr.bf16.mxu0 0
    %7492 = vmatpush1.bf16.msra.mxu0 0
    %7493 = vmatprep.subr.bf16.mxu0 0
    %7494 = vmatpush1.bf16.msra.mxu0 0
    %7495 = vmatprep.subr.bf16.mxu0 0
    %7496 = vmatpush1.bf16.msra.mxu0 0
    %7497 = vmatprep.subr.bf16.mxu0 0
    %7498 = vmatpush1.bf16.msra.mxu0 0
    %7499 = vmatprep.subr.bf16.mxu0 0
    %7500 = vmatpush1.bf16.msra.mxu0 0
    %7501 = vmatprep.mubr.bf16.mxu0 0
    %7502 = vmatmul.mubr.bf16.gmra.mrb[0].mxu0 %v7428
    %v7503 = vpop.f32.mrb[0].mxu0
    %v7504 = vadd.f32 0.0, %v7503
    %v7505 = vpop.f32.mrb[0].mxu0
    %v7506 = vadd.f32 0.0, %v7505
    %v7507 = vpop.f32.mrb[0].mxu0
    %v7508 = vadd.f32 0.0, %v7507
    %v7509 = vpop.f32.mrb[0].mxu0
    %v7510 = vadd.f32 0.0, %v7509
    %7511 = vmatprep.mubr.bf16.mxu0 0
    %7512 = vmatmul.mubr.bf16.gmra.mrb[0].mxu0 %v7431
    %v7513 = vpop.f32.mrb[0].mxu0
    %v7514 = vadd.f32 0.0, %v7513
    %v7515 = vpop.f32.mrb[0].mxu0
    %v7516 = vadd.f32 0.0, %v7515
    %v7517 = vpop.f32.mrb[0].mxu0
    %v7518 = vadd.f32 0.0, %v7517
    %v7519 = vpop.f32.mrb[0].mxu0
    %v7520 = vadd.f32 0.0, %v7519
    %7521 = vmatprep.mubr.bf16.mxu0 0
    %7522 = vmatmul.mubr.bf16.gmra.mrb[0].mxu0 %v7434
    %v7523 = vpop.f32.mrb[0].mxu0
    %v7524 = vadd.f32 0.0, %v7523
    %v7525 = vpop.f32.mrb[0].mxu0
    %v7526 = vadd.f32 0.0, %v7525
    %v7527 = vpop.f32.mrb[0].mxu0
    %v7528 = vadd.f32 0.0, %v7527
    %v7529 = vpop.f32.mrb[0].mxu0
    %v7530 = vadd.f32 0.0, %v7529
    %7531 = vmatprep.mubr.bf16.mxu0 0
    %7532 = vmatmul.mubr.bf16.gmra.mrb[0].mxu0 %v7437
    %v7533 = vpop.f32.mrb[0].mxu0
    %v7534 = vadd.f32 0.0, %v7533
    %v7535 = vpop.f32.mrb[0].mxu0
    %v7536 = vadd.f32 0.0, %v7535
    %v7537 = vpop.f32.mrb[0].mxu0
    %v7538 = vadd.f32 0.0, %v7537
    %v7539 = vpop.f32.mrb[0].mxu0
    %v7540 = vadd.f32 0.0, %v7539
    %7541 = vmatprep.mubr.bf16.mxu0 0
    %7542 = vmatmul.mubr.bf16.gmra.mrb[0].mxu0 %v7440
    %v7543 = vpop.f32.mrb[0].mxu0
    %v7544 = vadd.f32 0.0, %v7543
    %v7545 = vpop.f32.mrb[0].mxu0
    %v7546 = vadd.f32 0.0, %v7545
    %v7547 = vpop.f32.mrb[0].mxu0
    %v7548 = vadd.f32 0.0, %v7547
    %v7549 = vpop.f32.mrb[0].mxu0
    %v7550 = vadd.f32 0.0, %v7549
    %7551 = vmatprep.mubr.bf16.mxu0 0
    %7552 = vmatmul.mubr.bf16.gmra.mrb[0].mxu0 %v7443
    %v7553 = vpop.f32.mrb[0].mxu0
    %v7554 = vadd.f32 0.0, %v7553
    %v7555 = vpop.f32.mrb[0].mxu0
    %v7556 = vadd.f32 0.0, %v7555
    %v7557 = vpop.f32.mrb[0].mxu0
    %v7558 = vadd.f32 0.0, %v7557
    %v7559 = vpop.f32.mrb[0].mxu0
    %v7560 = vadd.f32 0.0, %v7559
    %7561 = vmatprep.mubr.bf16.mxu0 0
    %7562 = vmatmul.mubr.bf16.gmra.mrb[0].mxu0 %v7446
    %v7563 = vpop.f32.mrb[0].mxu0
    %v7564 = vadd.f32 0.0, %v7563
    %v7565 = vpop.f32.mrb[0].mxu0
    %v7566 = vadd.f32 0.0, %v7565
    %v7567 = vpop.f32.mrb[0].mxu0
    %v7568 = vadd.f32 0.0, %v7567
    %v7569 = vpop.f32.mrb[0].mxu0
    %v7570 = vadd.f32 0.0, %v7569
    %7571 = vmatprep.mubr.bf16.mxu0 0
    %7572 = vmatmul.mubr.bf16.gmra.mrb[0].mxu0 %v7449
    %v7573 = vpop.f32.mrb[0].mxu0
    %v7574 = vadd.f32 0.0, %v7573
    %v7575 = vpop.f32.mrb[0].mxu0
    %v7576 = vadd.f32 0.0, %v7575
    %v7577 = vpop.f32.mrb[0].mxu0
    %v7578 = vadd.f32 0.0, %v7577
    %v7579 = vpop.f32.mrb[0].mxu0
    %v7580 = vadd.f32 0.0, %v7579
    %7581 = vmatprep.mubr.bf16.mxu0 0
    %7582 = vmatmul.mubr.bf16.gmra.mrb[0].mxu0 %v7452
    %v7583 = vpop.f32.mrb[0].mxu0
    %v7584 = vadd.f32 0.0, %v7583
    %v7585 = vpop.f32.mrb[0].mxu0
    %v7586 = vadd.f32 0.0, %v7585
    %v7587 = vpop.f32.mrb[0].mxu0
    %v7588 = vadd.f32 0.0, %v7587
    %v7589 = vpop.f32.mrb[0].mxu0
    %v7590 = vadd.f32 0.0, %v7589
    %7591 = vmatprep.mubr.bf16.mxu0 0
    %7592 = vmatmul.mubr.bf16.gmra.mrb[0].mxu0 %v7455
    %v7593 = vpop.f32.mrb[0].mxu0
    %v7594 = vadd.f32 0.0, %v7593
    %v7595 = vpop.f32.mrb[0].mxu0
    %v7596 = vadd.f32 0.0, %v7595
    %v7597 = vpop.f32.mrb[0].mxu0
    %v7598 = vadd.f32 0.0, %v7597
    %v7599 = vpop.f32.mrb[0].mxu0
    %v7600 = vadd.f32 0.0, %v7599
    %7601 = vmatprep.mubr.bf16.mxu0 0
    %7602 = vmatmul.mubr.bf16.gmra.mrb[0].mxu0 %v7458
    %v7603 = vpop.f32.mrb[0].mxu0
    %v7604 = vadd.f32 0.0, %v7603
    %v7605 = vpop.f32.mrb[0].mxu0
    %v7606 = vadd.f32 0.0, %v7605
    %v7607 = vpop.f32.mrb[0].mxu0
    %v7608 = vadd.f32 0.0, %v7607
    %v7609 = vpop.f32.mrb[0].mxu0
    %v7610 = vadd.f32 0.0, %v7609
    %7611 = vmatprep.mubr.bf16.mxu0 0
    %7612 = vmatmul.mubr.bf16.gmra.mrb[0].mxu0 %v7461
    %v7613 = vpop.f32.mrb[0].mxu0
    %v7614 = vadd.f32 0.0, %v7613
    %v7615 = vpop.f32.mrb[0].mxu0
    %v7616 = vadd.f32 0.0, %v7615
    %v7617 = vpop.f32.mrb[0].mxu0
    %v7618 = vadd.f32 0.0, %v7617
    %v7619 = vpop.f32.mrb[0].mxu0
    %v7620 = vadd.f32 0.0, %v7619
    %7621 = vmatprep.mubr.bf16.mxu0 0
    %7622 = vmatmul.mubr.bf16.gmra.mrb[0].mxu0 %v7464
    %v7623 = vpop.f32.mrb[0].mxu0
    %v7624 = vadd.f32 0.0, %v7623
    %v7625 = vpop.f32.mrb[0].mxu0
    %v7626 = vadd.f32 0.0, %v7625
    %v7627 = vpop.f32.mrb[0].mxu0
    %v7628 = vadd.f32 0.0, %v7627
    %v7629 = vpop.f32.mrb[0].mxu0
    %v7630 = vadd.f32 0.0, %v7629
    %7631 = vmatprep.mubr.bf16.mxu0 0
    %7632 = vmatmul.mubr.bf16.gmra.mrb[0].mxu0 %v7467
    %v7633 = vpop.f32.mrb[0].mxu0
    %v7634 = vadd.f32 0.0, %v7633
    %v7635 = vpop.f32.mrb[0].mxu0
    %v7636 = vadd.f32 0.0, %v7635
    %v7637 = vpop.f32.mrb[0].mxu0
    %v7638 = vadd.f32 0.0, %v7637
    %v7639 = vpop.f32.mrb[0].mxu0
    %v7640 = vadd.f32 0.0, %v7639
    %7641 = vdwg.mxu0
    %s7642 = sadd.s32 %s52, 4
    %s7643 = sld [smem:[#allocation3 + %s7642]]
    %s7644 = sld [smem:[#allocation4 + %s7642]]
    %v7645 = vstv %s7643
    %v7646 = vmul.f32 %v7504, %v7645
    %v7647 = vmul.f32 %v7506, %v7645
    %v7648 = vmul.f32 %v7508, %v7645
    %v7649 = vmul.f32 %v7510, %v7645
    %v7650 = vmul.f32 %v7514, %v7645
    %v7651 = vmul.f32 %v7516, %v7645
    %v7652 = vmul.f32 %v7518, %v7645
    %v7653 = vmul.f32 %v7520, %v7645
    %v7654 = vmul.f32 %v7524, %v7645
    %v7655 = vmul.f32 %v7526, %v7645
    %v7656 = vmul.f32 %v7528, %v7645
    %v7657 = vmul.f32 %v7530, %v7645
    %v7658 = vmul.f32 %v7534, %v7645
    %v7659 = vmul.f32 %v7536, %v7645
    %v7660 = vmul.f32 %v7538, %v7645
    %v7661 = vmul.f32 %v7540, %v7645
    %v7662 = vmul.f32 %v7544, %v7645
    %v7663 = vmul.f32 %v7546, %v7645
    %v7664 = vmul.f32 %v7548, %v7645
    %v7665 = vmul.f32 %v7550, %v7645
    %v7666 = vmul.f32 %v7554, %v7645
    %v7667 = vmul.f32 %v7556, %v7645
    %v7668 = vmul.f32 %v7558, %v7645
    %v7669 = vmul.f32 %v7560, %v7645
    %v7670 = vmul.f32 %v7564, %v7645
    %v7671 = vmul.f32 %v7566, %v7645
    %v7672 = vmul.f32 %v7568, %v7645
    %v7673 = vmul.f32 %v7570, %v7645
    %v7674 = vmul.f32 %v7574, %v7645
    %v7675 = vmul.f32 %v7576, %v7645
    %v7676 = vmul.f32 %v7578, %v7645
    %v7677 = vmul.f32 %v7580, %v7645
    %v7678 = vmul.f32 %v7584, %v7645
    %v7679 = vmul.f32 %v7586, %v7645
    %v7680 = vmul.f32 %v7588, %v7645
    %v7681 = vmul.f32 %v7590, %v7645
    %v7682 = vmul.f32 %v7594, %v7645
    %v7683 = vmul.f32 %v7596, %v7645
    %v7684 = vmul.f32 %v7598, %v7645
    %v7685 = vmul.f32 %v7600, %v7645
    %v7686 = vmul.f32 %v7604, %v7645
    %v7687 = vmul.f32 %v7606, %v7645
    %v7688 = vmul.f32 %v7608, %v7645
    %v7689 = vmul.f32 %v7610, %v7645
    %v7690 = vmul.f32 %v7614, %v7645
    %v7691 = vmul.f32 %v7616, %v7645
    %v7692 = vmul.f32 %v7618, %v7645
    %v7693 = vmul.f32 %v7620, %v7645
    %v7694 = vmul.f32 %v7624, %v7645
    %v7695 = vmul.f32 %v7626, %v7645
    %v7696 = vmul.f32 %v7628, %v7645
    %v7697 = vmul.f32 %v7630, %v7645
    %v7698 = vmul.f32 %v7634, %v7645
    %v7699 = vmul.f32 %v7636, %v7645
    %v7700 = vmul.f32 %v7638, %v7645
    %v7701 = vmul.f32 %v7640, %v7645
    %v7702 = vstv %s7644
    %v7703 = vadd.f32 %v7646, %v7702
    %v7704 = vadd.f32 %v7647, %v7702
    %v7705 = vadd.f32 %v7648, %v7702
    %v7706 = vadd.f32 %v7649, %v7702
    %v7707 = vadd.f32 %v7650, %v7702
    %v7708 = vadd.f32 %v7651, %v7702
    %v7709 = vadd.f32 %v7652, %v7702
    %v7710 = vadd.f32 %v7653, %v7702
    %v7711 = vadd.f32 %v7654, %v7702
    %v7712 = vadd.f32 %v7655, %v7702
    %v7713 = vadd.f32 %v7656, %v7702
    %v7714 = vadd.f32 %v7657, %v7702
    %v7715 = vadd.f32 %v7658, %v7702
    %v7716 = vadd.f32 %v7659, %v7702
    %v7717 = vadd.f32 %v7660, %v7702
    %v7718 = vadd.f32 %v7661, %v7702
    %v7719 = vadd.f32 %v7662, %v7702
    %v7720 = vadd.f32 %v7663, %v7702
    %v7721 = vadd.f32 %v7664, %v7702
    %v7722 = vadd.f32 %v7665, %v7702
    %v7723 = vadd.f32 %v7666, %v7702
    %v7724 = vadd.f32 %v7667, %v7702
    %v7725 = vadd.f32 %v7668, %v7702
    %v7726 = vadd.f32 %v7669, %v7702
    %v7727 = vadd.f32 %v7670, %v7702
    %v7728 = vadd.f32 %v7671, %v7702
    %v7729 = vadd.f32 %v7672, %v7702
    %v7730 = vadd.f32 %v7673, %v7702
    %v7731 = vadd.f32 %v7674, %v7702
    %v7732 = vadd.f32 %v7675, %v7702
    %v7733 = vadd.f32 %v7676, %v7702
    %v7734 = vadd.f32 %v7677, %v7702
    %v7735 = vadd.f32 %v7678, %v7702
    %v7736 = vadd.f32 %v7679, %v7702
    %v7737 = vadd.f32 %v7680, %v7702
    %v7738 = vadd.f32 %v7681, %v7702
    %v7739 = vadd.f32 %v7682, %v7702
    %v7740 = vadd.f32 %v7683, %v7702
    %v7741 = vadd.f32 %v7684, %v7702
    %v7742 = vadd.f32 %v7685, %v7702
    %v7743 = vadd.f32 %v7686, %v7702
    %v7744 = vadd.f32 %v7687, %v7702
    %v7745 = vadd.f32 %v7688, %v7702
    %v7746 = vadd.f32 %v7689, %v7702
    %v7747 = vadd.f32 %v7690, %v7702
    %v7748 = vadd.f32 %v7691, %v7702
    %v7749 = vadd.f32 %v7692, %v7702
    %v7750 = vadd.f32 %v7693, %v7702
    %v7751 = vadd.f32 %v7694, %v7702
    %v7752 = vadd.f32 %v7695, %v7702
    %v7753 = vadd.f32 %v7696, %v7702
    %v7754 = vadd.f32 %v7697, %v7702
    %v7755 = vadd.f32 %v7698, %v7702
    %v7756 = vadd.f32 %v7699, %v7702
    %v7757 = vadd.f32 %v7700, %v7702
    %v7758 = vadd.f32 %v7701, %v7702
    %v7759 = vpack.c.bf16 %v7705, %v7703
    %v7760 = vpack.c.bf16 %v7706, %v7704
    %v7761 = vpack.c.bf16 %v7709, %v7707
    %v7762 = vpack.c.bf16 %v7710, %v7708
    %v7763 = vpack.c.bf16 %v7713, %v7711
    %v7764 = vpack.c.bf16 %v7714, %v7712
    %v7765 = vpack.c.bf16 %v7717, %v7715
    %v7766 = vpack.c.bf16 %v7718, %v7716
    %v7767 = vpack.c.bf16 %v7721, %v7719
    %v7768 = vpack.c.bf16 %v7722, %v7720
    %v7769 = vpack.c.bf16 %v7725, %v7723
    %v7770 = vpack.c.bf16 %v7726, %v7724
    %v7771 = vpack.c.bf16 %v7729, %v7727
    %v7772 = vpack.c.bf16 %v7730, %v7728
    %v7773 = vpack.c.bf16 %v7733, %v7731
    %v7774 = vpack.c.bf16 %v7734, %v7732
    %v7775 = vpack.c.bf16 %v7737, %v7735
    %v7776 = vpack.c.bf16 %v7738, %v7736
    %v7777 = vpack.c.bf16 %v7741, %v7739
    %v7778 = vpack.c.bf16 %v7742, %v7740
    %v7779 = vpack.c.bf16 %v7745, %v7743
    %v7780 = vpack.c.bf16 %v7746, %v7744
    %v7781 = vpack.c.bf16 %v7749, %v7747
    %v7782 = vpack.c.bf16 %v7750, %v7748
    %v7783 = vpack.c.bf16 %v7753, %v7751
    %v7784 = vpack.c.bf16 %v7754, %v7752
    %v7785 = vpack.c.bf16 %v7757, %v7755
    %v7786 = vpack.c.bf16 %v7758, %v7756
    %v7815 = vunpack.c.l.b16 %v7759
    %v7816 = vunpack.c.l.b16 %v7760
    %v7817 = vunpack.c.h.b16 %v7759
    %v7818 = vunpack.c.h.b16 %v7760
    %v7819 = vunpack.c.l.b16 %v7761
    %v7820 = vunpack.c.l.b16 %v7762
    %v7821 = vunpack.c.h.b16 %v7761
    %v7822 = vunpack.c.h.b16 %v7762
    %v7823 = vunpack.c.l.b16 %v7763
    %v7824 = vunpack.c.l.b16 %v7764
    %v7825 = vunpack.c.h.b16 %v7763
    %v7826 = vunpack.c.h.b16 %v7764
    %v7827 = vunpack.c.l.b16 %v7765
    %v7828 = vunpack.c.l.b16 %v7766
    %v7829 = vunpack.c.h.b16 %v7765
    %v7830 = vunpack.c.h.b16 %v7766
    %v7831 = vunpack.c.l.b16 %v7767
    %v7832 = vunpack.c.l.b16 %v7768
    %v7833 = vunpack.c.h.b16 %v7767
    %v7834 = vunpack.c.h.b16 %v7768
    %v7835 = vunpack.c.l.b16 %v7769
    %v7836 = vunpack.c.l.b16 %v7770
    %v7837 = vunpack.c.h.b16 %v7769
    %v7838 = vunpack.c.h.b16 %v7770
    %v7839 = vunpack.c.l.b16 %v7771
    %v7840 = vunpack.c.l.b16 %v7772
    %v7841 = vunpack.c.h.b16 %v7771
    %v7842 = vunpack.c.h.b16 %v7772
    %v7843 = vunpack.c.l.b16 %v7773
    %v7844 = vunpack.c.l.b16 %v7774
    %v7845 = vunpack.c.h.b16 %v7773
    %v7846 = vunpack.c.h.b16 %v7774
    %v7847 = vunpack.c.l.b16 %v7775
    %v7848 = vunpack.c.l.b16 %v7776
    %v7849 = vunpack.c.h.b16 %v7775
    %v7850 = vunpack.c.h.b16 %v7776
    %v7851 = vunpack.c.l.b16 %v7777
    %v7852 = vunpack.c.l.b16 %v7778
    %v7853 = vunpack.c.h.b16 %v7777
    %v7854 = vunpack.c.h.b16 %v7778
    %v7855 = vunpack.c.l.b16 %v7779
    %v7856 = vunpack.c.l.b16 %v7780
    %v7857 = vunpack.c.h.b16 %v7779
    %v7858 = vunpack.c.h.b16 %v7780
    %v7859 = vunpack.c.l.b16 %v7781
    %v7860 = vunpack.c.l.b16 %v7782
    %v7861 = vunpack.c.h.b16 %v7781
    %v7862 = vunpack.c.h.b16 %v7782
    %v7863 = vunpack.c.l.b16 %v7783
    %v7864 = vunpack.c.l.b16 %v7784
    %v7865 = vunpack.c.h.b16 %v7783
    %v7866 = vunpack.c.h.b16 %v7784
    %v7867 = vunpack.c.l.b16 %v7785
    %v7868 = vunpack.c.l.b16 %v7786
    %v7869 = vunpack.c.h.b16 %v7785
    %v7870 = vunpack.c.h.b16 %v7786
    %v7871 = vpack.c.b16 %v7816, %v7815
    %v7872 = vpack.c.b16 %v7818, %v7817
    %v7873 = vpack.c.b16 %v7820, %v7819
    %v7874 = vpack.c.b16 %v7822, %v7821
    %v7875 = vpack.c.b16 %v7824, %v7823
    %v7876 = vpack.c.b16 %v7826, %v7825
    %v7877 = vpack.c.b16 %v7828, %v7827
    %v7878 = vpack.c.b16 %v7830, %v7829
    %v7879 = vpack.c.b16 %v7832, %v7831
    %v7880 = vpack.c.b16 %v7834, %v7833
    %v7881 = vpack.c.b16 %v7836, %v7835
    %v7882 = vpack.c.b16 %v7838, %v7837
    %v7883 = vpack.c.b16 %v7840, %v7839
    %v7884 = vpack.c.b16 %v7842, %v7841
    %v7885 = vpack.c.b16 %v7844, %v7843
    %v7886 = vpack.c.b16 %v7846, %v7845
    %v7887 = vpack.c.b16 %v7848, %v7847
    %v7888 = vpack.c.b16 %v7850, %v7849
    %v7889 = vpack.c.b16 %v7852, %v7851
    %v7890 = vpack.c.b16 %v7854, %v7853
    %v7891 = vpack.c.b16 %v7856, %v7855
    %v7892 = vpack.c.b16 %v7858, %v7857
    %v7893 = vpack.c.b16 %v7860, %v7859
    %v7894 = vpack.c.b16 %v7862, %v7861
    %v7895 = vpack.c.b16 %v7864, %v7863
    %v7896 = vpack.c.b16 %v7866, %v7865
    %v7897 = vpack.c.b16 %v7868, %v7867
    %v7898 = vpack.c.b16 %v7870, %v7869
    %s7927 = scalar_lea.vmem [#allocation8], 896
    %7928 = vst.msk [vmem:[%s7927] sm:$0xff] %vm1588, %v7871
    %7929 = vst.msk [vmem:[%s7927 + $0x8] sm:$0xff] %vm1588, %v7872
    %7930 = vst.msk [vmem:[%s7927 + $0x10] sm:$0xff] %vm1588, %v7873
    %7931 = vst.msk [vmem:[%s7927 + $0x18] sm:$0xff] %vm1588, %v7874
    %7932 = vst.msk [vmem:[%s7927 + $0x20] sm:$0xff] %vm1588, %v7875
    %7933 = vst.msk [vmem:[%s7927 + $0x28] sm:$0xff] %vm1588, %v7876
    %7934 = vst.msk [vmem:[%s7927 + $0x30] sm:$0xff] %vm1588, %v7877
    %7935 = vst.msk [vmem:[%s7927 + $0x38] sm:$0xff] %vm1588, %v7878
    %7936 = vst.msk [vmem:[%s7927 + $0x40] sm:$0xff] %vm1588, %v7879
    %7937 = vst.msk [vmem:[%s7927 + $0x48] sm:$0xff] %vm1588, %v7880
    %7938 = vst.msk [vmem:[%s7927 + $0x50] sm:$0xff] %vm1588, %v7881
    %7939 = vst.msk [vmem:[%s7927 + $0x58] sm:$0xff] %vm1588, %v7882
    %7940 = vst.msk [vmem:[%s7927 + $0x60] sm:$0xff] %vm1588, %v7883
    %7941 = vst.msk [vmem:[%s7927 + $0x68] sm:$0xff] %vm1588, %v7884
    %7942 = vst.msk [vmem:[%s7927 + $0x70] sm:$0xff] %vm1588, %v7885
    %7943 = vst.msk [vmem:[%s7927 + $0x78] sm:$0xff] %vm1588, %v7886
    %7944 = vst.msk [vmem:[%s7927 + $0x80] sm:$0xff] %vm1588, %v7887
    %7945 = vst.msk [vmem:[%s7927 + $0x88] sm:$0xff] %vm1588, %v7888
    %7946 = vst.msk [vmem:[%s7927 + $0x90] sm:$0xff] %vm1588, %v7889
    %7947 = vst.msk [vmem:[%s7927 + $0x98] sm:$0xff] %vm1588, %v7890
    %7948 = vst.msk [vmem:[%s7927 + $0xa0] sm:$0xff] %vm1588, %v7891
    %7949 = vst.msk [vmem:[%s7927 + $0xa8] sm:$0xff] %vm1588, %v7892
    %7950 = vst.msk [vmem:[%s7927 + $0xb0] sm:$0xff] %vm1588, %v7893
    %7951 = vst.msk [vmem:[%s7927 + $0xb8] sm:$0xff] %vm1588, %v7894
    %7952 = vst.msk [vmem:[%s7927 + $0xc0] sm:$0xff] %vm1588, %v7895
    %7953 = vst.msk [vmem:[%s7927 + $0xc8] sm:$0xff] %vm1588, %v7896
    %7954 = vst.msk [vmem:[%s7927 + $0xd0] sm:$0xff] %vm1588, %v7897
    %7955 = vst.msk [vmem:[%s7927 + $0xd8] sm:$0xff] %vm1588, %v7898
    %v7956 = vmul.f32 %v7190, %v7645
    %v7957 = vmul.f32 %v7192, %v7645
    %v7958 = vmul.f32 %v7194, %v7645
    %v7959 = vmul.f32 %v7196, %v7645
    %v7960 = vmul.f32 %v7200, %v7645
    %v7961 = vmul.f32 %v7202, %v7645
    %v7962 = vmul.f32 %v7204, %v7645
    %v7963 = vmul.f32 %v7206, %v7645
    %v7964 = vmul.f32 %v7210, %v7645
    %v7965 = vmul.f32 %v7212, %v7645
    %v7966 = vmul.f32 %v7214, %v7645
    %v7967 = vmul.f32 %v7216, %v7645
    %v7968 = vmul.f32 %v7220, %v7645
    %v7969 = vmul.f32 %v7222, %v7645
    %v7970 = vmul.f32 %v7224, %v7645
    %v7971 = vmul.f32 %v7226, %v7645
    %v7972 = vmul.f32 %v7230, %v7645
    %v7973 = vmul.f32 %v7232, %v7645
    %v7974 = vmul.f32 %v7234, %v7645
    %v7975 = vmul.f32 %v7236, %v7645
    %v7976 = vmul.f32 %v7240, %v7645
    %v7977 = vmul.f32 %v7242, %v7645
    %v7978 = vmul.f32 %v7244, %v7645
    %v7979 = vmul.f32 %v7246, %v7645
    %v7980 = vmul.f32 %v7250, %v7645
    %v7981 = vmul.f32 %v7252, %v7645
    %v7982 = vmul.f32 %v7254, %v7645
    %v7983 = vmul.f32 %v7256, %v7645
    %v7984 = vmul.f32 %v7260, %v7645
    %v7985 = vmul.f32 %v7262, %v7645
    %v7986 = vmul.f32 %v7264, %v7645
    %v7987 = vmul.f32 %v7266, %v7645
    %v7988 = vmul.f32 %v7270, %v7645
    %v7989 = vmul.f32 %v7272, %v7645
    %v7990 = vmul.f32 %v7274, %v7645
    %v7991 = vmul.f32 %v7276, %v7645
    %v7992 = vmul.f32 %v7280, %v7645
    %v7993 = vmul.f32 %v7282, %v7645
    %v7994 = vmul.f32 %v7284, %v7645
    %v7995 = vmul.f32 %v7286, %v7645
    %v7996 = vmul.f32 %v7290, %v7645
    %v7997 = vmul.f32 %v7292, %v7645
    %v7998 = vmul.f32 %v7294, %v7645
    %v7999 = vmul.f32 %v7296, %v7645
    %v8000 = vmul.f32 %v7300, %v7645
    %v8001 = vmul.f32 %v7302, %v7645
    %v8002 = vmul.f32 %v7304, %v7645
    %v8003 = vmul.f32 %v7306, %v7645
    %v8004 = vmul.f32 %v7310, %v7645
    %v8005 = vmul.f32 %v7312, %v7645
    %v8006 = vmul.f32 %v7314, %v7645
    %v8007 = vmul.f32 %v7316, %v7645
    %v8008 = vmul.f32 %v7320, %v7645
    %v8009 = vmul.f32 %v7322, %v7645
    %v8010 = vmul.f32 %v7324, %v7645
    %v8011 = vmul.f32 %v7326, %v7645
    %v8012 = vadd.f32 %v7956, %v7702
    %v8013 = vadd.f32 %v7957, %v7702
    %v8014 = vadd.f32 %v7958, %v7702
    %v8015 = vadd.f32 %v7959, %v7702
    %v8016 = vadd.f32 %v7960, %v7702
    %v8017 = vadd.f32 %v7961, %v7702
    %v8018 = vadd.f32 %v7962, %v7702
    %v8019 = vadd.f32 %v7963, %v7702
    %v8020 = vadd.f32 %v7964, %v7702
    %v8021 = vadd.f32 %v7965, %v7702
    %v8022 = vadd.f32 %v7966, %v7702
    %v8023 = vadd.f32 %v7967, %v7702
    %v8024 = vadd.f32 %v7968, %v7702
    %v8025 = vadd.f32 %v7969, %v7702
    %v8026 = vadd.f32 %v7970, %v7702
    %v8027 = vadd.f32 %v7971, %v7702
    %v8028 = vadd.f32 %v7972, %v7702
    %v8029 = vadd.f32 %v7973, %v7702
    %v8030 = vadd.f32 %v7974, %v7702
    %v8031 = vadd.f32 %v7975, %v7702
    %v8032 = vadd.f32 %v7976, %v7702
    %v8033 = vadd.f32 %v7977, %v7702
    %v8034 = vadd.f32 %v7978, %v7702
    %v8035 = vadd.f32 %v7979, %v7702
    %v8036 = vadd.f32 %v7980, %v7702
    %v8037 = vadd.f32 %v7981, %v7702
    %v8038 = vadd.f32 %v7982, %v7702
    %v8039 = vadd.f32 %v7983, %v7702
    %v8040 = vadd.f32 %v7984, %v7702
    %v8041 = vadd.f32 %v7985, %v7702
    %v8042 = vadd.f32 %v7986, %v7702
    %v8043 = vadd.f32 %v7987, %v7702
    %v8044 = vadd.f32 %v7988, %v7702
    %v8045 = vadd.f32 %v7989, %v7702
    %v8046 = vadd.f32 %v7990, %v7702
    %v8047 = vadd.f32 %v7991, %v7702
    %v8048 = vadd.f32 %v7992, %v7702
    %v8049 = vadd.f32 %v7993, %v7702
    %v8050 = vadd.f32 %v7994, %v7702
    %v8051 = vadd.f32 %v7995, %v7702
    %v8052 = vadd.f32 %v7996, %v7702
    %v8053 = vadd.f32 %v7997, %v7702
    %v8054 = vadd.f32 %v7998, %v7702
    %v8055 = vadd.f32 %v7999, %v7702
    %v8056 = vadd.f32 %v8000, %v7702
    %v8057 = vadd.f32 %v8001, %v7702
    %v8058 = vadd.f32 %v8002, %v7702
    %v8059 = vadd.f32 %v8003, %v7702
    %v8060 = vadd.f32 %v8004, %v7702
    %v8061 = vadd.f32 %v8005, %v7702
    %v8062 = vadd.f32 %v8006, %v7702
    %v8063 = vadd.f32 %v8007, %v7702
    %v8064 = vadd.f32 %v8008, %v7702
    %v8065 = vadd.f32 %v8009, %v7702
    %v8066 = vadd.f32 %v8010, %v7702
    %v8067 = vadd.f32 %v8011, %v7702
    %v8068 = vpack.c.bf16 %v8014, %v8012
    %v8069 = vpack.c.bf16 %v8015, %v8013
    %v8070 = vpack.c.bf16 %v8018, %v8016
    %v8071 = vpack.c.bf16 %v8019, %v8017
    %v8072 = vpack.c.bf16 %v8022, %v8020
    %v8073 = vpack.c.bf16 %v8023, %v8021
    %v8074 = vpack.c.bf16 %v8026, %v8024
    %v8075 = vpack.c.bf16 %v8027, %v8025
    %v8076 = vpack.c.bf16 %v8030, %v8028
    %v8077 = vpack.c.bf16 %v8031, %v8029
    %v8078 = vpack.c.bf16 %v8034, %v8032
    %v8079 = vpack.c.bf16 %v8035, %v8033
    %v8080 = vpack.c.bf16 %v8038, %v8036
    %v8081 = vpack.c.bf16 %v8039, %v8037
    %v8082 = vpack.c.bf16 %v8042, %v8040
    %v8083 = vpack.c.bf16 %v8043, %v8041
    %v8084 = vpack.c.bf16 %v8046, %v8044
    %v8085 = vpack.c.bf16 %v8047, %v8045
    %v8086 = vpack.c.bf16 %v8050, %v8048
    %v8087 = vpack.c.bf16 %v8051, %v8049
    %v8088 = vpack.c.bf16 %v8054, %v8052
    %v8089 = vpack.c.bf16 %v8055, %v8053
    %v8090 = vpack.c.bf16 %v8058, %v8056
    %v8091 = vpack.c.bf16 %v8059, %v8057
    %v8092 = vpack.c.bf16 %v8062, %v8060
    %v8093 = vpack.c.bf16 %v8063, %v8061
    %v8094 = vpack.c.bf16 %v8066, %v8064
    %v8095 = vpack.c.bf16 %v8067, %v8065
    %v8124 = vunpack.c.l.b16 %v8068
    %v8125 = vunpack.c.l.b16 %v8069
    %v8126 = vunpack.c.h.b16 %v8068
    %v8127 = vunpack.c.h.b16 %v8069
    %v8128 = vunpack.c.l.b16 %v8070
    %v8129 = vunpack.c.l.b16 %v8071
    %v8130 = vunpack.c.h.b16 %v8070
    %v8131 = vunpack.c.h.b16 %v8071
    %v8132 = vunpack.c.l.b16 %v8072
    %v8133 = vunpack.c.l.b16 %v8073
    %v8134 = vunpack.c.h.b16 %v8072
    %v8135 = vunpack.c.h.b16 %v8073
    %v8136 = vunpack.c.l.b16 %v8074
    %v8137 = vunpack.c.l.b16 %v8075
    %v8138 = vunpack.c.h.b16 %v8074
    %v8139 = vunpack.c.h.b16 %v8075
    %v8140 = vunpack.c.l.b16 %v8076
    %v8141 = vunpack.c.l.b16 %v8077
    %v8142 = vunpack.c.h.b16 %v8076
    %v8143 = vunpack.c.h.b16 %v8077
    %v8144 = vunpack.c.l.b16 %v8078
    %v8145 = vunpack.c.l.b16 %v8079
    %v8146 = vunpack.c.h.b16 %v8078
    %v8147 = vunpack.c.h.b16 %v8079
    %v8148 = vunpack.c.l.b16 %v8080
    %v8149 = vunpack.c.l.b16 %v8081
    %v8150 = vunpack.c.h.b16 %v8080
    %v8151 = vunpack.c.h.b16 %v8081
    %v8152 = vunpack.c.l.b16 %v8082
    %v8153 = vunpack.c.l.b16 %v8083
    %v8154 = vunpack.c.h.b16 %v8082
    %v8155 = vunpack.c.h.b16 %v8083
    %v8156 = vunpack.c.l.b16 %v8084
    %v8157 = vunpack.c.l.b16 %v8085
    %v8158 = vunpack.c.h.b16 %v8084
    %v8159 = vunpack.c.h.b16 %v8085
    %v8160 = vunpack.c.l.b16 %v8086
    %v8161 = vunpack.c.l.b16 %v8087
    %v8162 = vunpack.c.h.b16 %v8086
    %v8163 = vunpack.c.h.b16 %v8087
    %v8164 = vunpack.c.l.b16 %v8088
    %v8165 = vunpack.c.l.b16 %v8089
    %v8166 = vunpack.c.h.b16 %v8088
    %v8167 = vunpack.c.h.b16 %v8089
    %v8168 = vunpack.c.l.b16 %v8090
    %v8169 = vunpack.c.l.b16 %v8091
    %v8170 = vunpack.c.h.b16 %v8090
    %v8171 = vunpack.c.h.b16 %v8091
    %v8172 = vunpack.c.l.b16 %v8092
    %v8173 = vunpack.c.l.b16 %v8093
    %v8174 = vunpack.c.h.b16 %v8092
    %v8175 = vunpack.c.h.b16 %v8093
    %v8176 = vunpack.c.l.b16 %v8094
    %v8177 = vunpack.c.l.b16 %v8095
    %v8178 = vunpack.c.h.b16 %v8094
    %v8179 = vunpack.c.h.b16 %v8095
    %v8180 = vpack.c.b16 %v8125, %v8124
    %v8181 = vpack.c.b16 %v8127, %v8126
    %v8182 = vpack.c.b16 %v8129, %v8128
    %v8183 = vpack.c.b16 %v8131, %v8130
    %v8184 = vpack.c.b16 %v8133, %v8132
    %v8185 = vpack.c.b16 %v8135, %v8134
    %v8186 = vpack.c.b16 %v8137, %v8136
    %v8187 = vpack.c.b16 %v8139, %v8138
    %v8188 = vpack.c.b16 %v8141, %v8140
    %v8189 = vpack.c.b16 %v8143, %v8142
    %v8190 = vpack.c.b16 %v8145, %v8144
    %v8191 = vpack.c.b16 %v8147, %v8146
    %v8192 = vpack.c.b16 %v8149, %v8148
    %v8193 = vpack.c.b16 %v8151, %v8150
    %v8194 = vpack.c.b16 %v8153, %v8152
    %v8195 = vpack.c.b16 %v8155, %v8154
    %v8196 = vpack.c.b16 %v8157, %v8156
    %v8197 = vpack.c.b16 %v8159, %v8158
    %v8198 = vpack.c.b16 %v8161, %v8160
    %v8199 = vpack.c.b16 %v8163, %v8162
    %v8200 = vpack.c.b16 %v8165, %v8164
    %v8201 = vpack.c.b16 %v8167, %v8166
    %v8202 = vpack.c.b16 %v8169, %v8168
    %v8203 = vpack.c.b16 %v8171, %v8170
    %v8204 = vpack.c.b16 %v8173, %v8172
    %v8205 = vpack.c.b16 %v8175, %v8174
    %v8206 = vpack.c.b16 %v8177, %v8176
    %v8207 = vpack.c.b16 %v8179, %v8178
    %s8236 = scalar_lea.vmem [#allocation9], 896
    %8237 = vst.msk [vmem:[%s8236] sm:$0xff] %vm1588, %v8180
    %8238 = vst.msk [vmem:[%s8236 + $0x8] sm:$0xff] %vm1588, %v8181
    %8239 = vst.msk [vmem:[%s8236 + $0x10] sm:$0xff] %vm1588, %v8182
    %8240 = vst.msk [vmem:[%s8236 + $0x18] sm:$0xff] %vm1588, %v8183
    %8241 = vst.msk [vmem:[%s8236 + $0x20] sm:$0xff] %vm1588, %v8184
    %8242 = vst.msk [vmem:[%s8236 + $0x28] sm:$0xff] %vm1588, %v8185
    %8243 = vst.msk [vmem:[%s8236 + $0x30] sm:$0xff] %vm1588, %v8186
    %8244 = vst.msk [vmem:[%s8236 + $0x38] sm:$0xff] %vm1588, %v8187
    %8245 = vst.msk [vmem:[%s8236 + $0x40] sm:$0xff] %vm1588, %v8188
    %8246 = vst.msk [vmem:[%s8236 + $0x48] sm:$0xff] %vm1588, %v8189
    %8247 = vst.msk [vmem:[%s8236 + $0x50] sm:$0xff] %vm1588, %v8190
    %8248 = vst.msk [vmem:[%s8236 + $0x58] sm:$0xff] %vm1588, %v8191
    %8249 = vst.msk [vmem:[%s8236 + $0x60] sm:$0xff] %vm1588, %v8192
    %8250 = vst.msk [vmem:[%s8236 + $0x68] sm:$0xff] %vm1588, %v8193
    %8251 = vst.msk [vmem:[%s8236 + $0x70] sm:$0xff] %vm1588, %v8194
    %8252 = vst.msk [vmem:[%s8236 + $0x78] sm:$0xff] %vm1588, %v8195
    %8253 = vst.msk [vmem:[%s8236 + $0x80] sm:$0xff] %vm1588, %v8196
    %8254 = vst.msk [vmem:[%s8236 + $0x88] sm:$0xff] %vm1588, %v8197
    %8255 = vst.msk [vmem:[%s8236 + $0x90] sm:$0xff] %vm1588, %v8198
    %8256 = vst.msk [vmem:[%s8236 + $0x98] sm:$0xff] %vm1588, %v8199
    %8257 = vst.msk [vmem:[%s8236 + $0xa0] sm:$0xff] %vm1588, %v8200
    %8258 = vst.msk [vmem:[%s8236 + $0xa8] sm:$0xff] %vm1588, %v8201
    %8259 = vst.msk [vmem:[%s8236 + $0xb0] sm:$0xff] %vm1588, %v8202
    %8260 = vst.msk [vmem:[%s8236 + $0xb8] sm:$0xff] %vm1588, %v8203
    %8261 = vst.msk [vmem:[%s8236 + $0xc0] sm:$0xff] %vm1588, %v8204
    %8262 = vst.msk [vmem:[%s8236 + $0xc8] sm:$0xff] %vm1588, %v8205
    %8263 = vst.msk [vmem:[%s8236 + $0xd0] sm:$0xff] %vm1588, %v8206
    %8264 = vst.msk [vmem:[%s8236 + $0xd8] sm:$0xff] %vm1588, %v8207
    %v8265 = vmul.f32 %v7381, %v7645
    %v8266 = vmul.f32 %v7384, %v7645
    %v8267 = vmul.f32 %v7389, %v7645
    %v8268 = vmul.f32 %v7392, %v7645
    %v8269 = vmul.f32 %v7397, %v7645
    %v8270 = vmul.f32 %v7400, %v7645
    %v8271 = vmul.f32 %v7405, %v7645
    %v8272 = vmul.f32 %v7408, %v7645
    %v8273 = vmul.f32 %v7413, %v7645
    %v8274 = vmul.f32 %v7416, %v7645
    %v8275 = vmul.f32 %v7421, %v7645
    %v8276 = vmul.f32 %v7424, %v7645
    %v8277 = vadd.f32 %v8265, %v7702
    %v8278 = vadd.f32 %v8266, %v7702
    %v8279 = vadd.f32 %v8267, %v7702
    %v8280 = vadd.f32 %v8268, %v7702
    %v8281 = vadd.f32 %v8269, %v7702
    %v8282 = vadd.f32 %v8270, %v7702
    %v8283 = vadd.f32 %v8271, %v7702
    %v8284 = vadd.f32 %v8272, %v7702
    %v8285 = vadd.f32 %v8273, %v7702
    %v8286 = vadd.f32 %v8274, %v7702
    %v8287 = vadd.f32 %v8275, %v7702
    %v8288 = vadd.f32 %v8276, %v7702
    %v8289 = vpack.c.bf16 %v8278, %v8277
    %v8290 = vpack.c.bf16 %v8280, %v8279
    %v8291 = vpack.c.bf16 %v8282, %v8281
    %v8292 = vpack.c.bf16 %v8284, %v8283
    %v8293 = vpack.c.bf16 %v8286, %v8285
    %v8294 = vpack.c.bf16 %v8288, %v8287
    %v8301 = vunpack.c.l.b16 %v8289
    %v8302 = vunpack.c.h.b16 %v8289
    %v8303 = vunpack.c.l.b16 %v8290
    %v8304 = vunpack.c.h.b16 %v8290
    %v8305 = vunpack.c.l.b16 %v8291
    %v8306 = vunpack.c.h.b16 %v8291
    %v8307 = vunpack.c.l.b16 %v8292
    %v8308 = vunpack.c.h.b16 %v8292
    %v8309 = vunpack.c.l.b16 %v8293
    %v8310 = vunpack.c.h.b16 %v8293
    %v8311 = vunpack.c.l.b16 %v8294
    %v8312 = vunpack.c.h.b16 %v8294
    %v8313 = vpack.c.b16 %v8301, %v8301
    %v8314 = vpack.c.b16 %v8302, %v8302
    %v8315 = vpack.c.b16 %v8303, %v8303
    %v8316 = vpack.c.b16 %v8304, %v8304
    %v8317 = vpack.c.b16 %v8305, %v8305
    %v8318 = vpack.c.b16 %v8306, %v8306
    %v8319 = vpack.c.b16 %v8307, %v8307
    %v8320 = vpack.c.b16 %v8308, %v8308
    %v8321 = vpack.c.b16 %v8309, %v8309
    %v8322 = vpack.c.b16 %v8310, %v8310
    %v8323 = vpack.c.b16 %v8311, %v8311
    %v8324 = vpack.c.b16 %v8312, %v8312
    %s8337 = scalar_lea.vmem [#allocation11], 192
    %8338 = vst.msk [vmem:[%s8337] sm:$0xf] %vm1997, %v8313
    %8339 = vst.msk [vmem:[%s8337 + $0x4] sm:$0xf] %vm1997, %v8314
    %8340 = vst.msk [vmem:[%s8337 + $0x8] sm:$0xf] %vm1997, %v8315
    %8341 = vst.msk [vmem:[%s8337 + $0xc] sm:$0xf] %vm1997, %v8316
    %8342 = vst.msk [vmem:[%s8337 + $0x10] sm:$0xf] %vm1997, %v8317
    %8343 = vst.msk [vmem:[%s8337 + $0x14] sm:$0xf] %vm1997, %v8318
    %8344 = vst.msk [vmem:[%s8337 + $0x18] sm:$0xf] %vm1997, %v8319
    %8345 = vst.msk [vmem:[%s8337 + $0x1c] sm:$0xf] %vm1997, %v8320
    %8346 = vst.msk [vmem:[%s8337 + $0x20] sm:$0xf] %vm1997, %v8321
    %8347 = vst.msk [vmem:[%s8337 + $0x24] sm:$0xf] %vm1997, %v8322
    %8348 = vst.msk [vmem:[%s8337 + $0x28] sm:$0xf] %vm1997, %v8323
    %8349 = vst.msk [vmem:[%s8337 + $0x2c] sm:$0xf] %vm1997, %v8324
    %s8350 = scalar_lea.vmem %s2, 40
    %v8351 = vld [vmem:[%s8350] sm:$0xf]
    %v8352 = vld [vmem:[%s8350 + $0x4] sm:$0xf]
    %v8355 = vunpack.c.l.b16 %v8351
    %v8356 = vunpack.c.l.b16 %v8352
    %v8357 = vpack.c.b16 %v8356, %v8355
    %8359 = vmatprep.subr.bf16.mxu0 0
    %8360 = vmatpush1.bf16.msra.mxu0 %v8357
    %8361 = vmatprep.subr.bf16.mxu0 0
    %8362 = vmatpush1.bf16.msra.mxu0 0
    %8363 = vmatprep.subr.bf16.mxu0 0
    %8364 = vmatpush1.bf16.msra.mxu0 0
    %8365 = vmatprep.subr.bf16.mxu0 0
    %8366 = vmatpush1.bf16.msra.mxu0 0
    %8367 = vmatprep.subr.bf16.mxu0 0
    %8368 = vmatpush1.bf16.msra.mxu0 0
    %8369 = vmatprep.subr.bf16.mxu0 0
    %8370 = vmatpush1.bf16.msra.mxu0 0
    %8371 = vmatprep.subr.bf16.mxu0 0
    %8372 = vmatpush1.bf16.msra.mxu0 0
    %8373 = vmatprep.subr.bf16.mxu0 0
    %8374 = vmatpush1.bf16.msra.mxu0 0
    %8375 = vmatprep.subr.bf16.mxu0 0
    %8376 = vmatpush1.bf16.msra.mxu0 0
    %8377 = vmatprep.subr.bf16.mxu0 0
    %8378 = vmatpush1.bf16.msra.mxu0 0
    %8379 = vmatprep.subr.bf16.mxu0 0
    %8380 = vmatpush1.bf16.msra.mxu0 0
    %8381 = vmatprep.subr.bf16.mxu0 0
    %8382 = vmatpush1.bf16.msra.mxu0 0
    %8383 = vmatprep.subr.bf16.mxu0 0
    %8384 = vmatpush1.bf16.msra.mxu0 0
    %8385 = vmatprep.subr.bf16.mxu0 0
    %8386 = vmatpush1.bf16.msra.mxu0 0
    %8387 = vmatprep.subr.bf16.mxu0 0
    %8388 = vmatpush1.bf16.msra.mxu0 0
    %8389 = vmatprep.subr.bf16.mxu0 0
    %8390 = vmatpush1.bf16.msra.mxu0 0
    %8391 = vmatprep.mubr.bf16.mxu0 0
    %8392 = vmatmul.mubr.bf16.gmra.mrb[0].mxu0 %v307
    %v8393 = vpop.f32.mrb[0].mxu0
    %v8394 = vadd.f32 0.0, %v8393
    %v8395 = vpop.f32.mrb[0].mxu0
    %v8396 = vpop.f32.mrb[0].mxu0
    %v8397 = vadd.f32 0.0, %v8396
    %v8398 = vpop.f32.mrb[0].mxu0
    %8399 = vmatprep.mubr.bf16.mxu0 0
    %8400 = vmatmul.mubr.bf16.gmra.mrb[0].mxu0 %v310
    %v8401 = vpop.f32.mrb[0].mxu0
    %v8402 = vadd.f32 0.0, %v8401
    %v8403 = vpop.f32.mrb[0].mxu0
    %v8404 = vpop.f32.mrb[0].mxu0
    %v8405 = vadd.f32 0.0, %v8404
    %v8406 = vpop.f32.mrb[0].mxu0
    %8407 = vmatprep.mubr.bf16.mxu0 0
    %8408 = vmatmul.mubr.bf16.gmra.mrb[0].mxu0 %v313
    %v8409 = vpop.f32.mrb[0].mxu0
    %v8410 = vadd.f32 0.0, %v8409
    %v8411 = vpop.f32.mrb[0].mxu0
    %v8412 = vpop.f32.mrb[0].mxu0
    %v8413 = vadd.f32 0.0, %v8412
    %v8414 = vpop.f32.mrb[0].mxu0
    %8415 = vmatprep.mubr.bf16.mxu0 0
    %8416 = vmatmul.mubr.bf16.gmra.mrb[0].mxu0 %v316
    %v8417 = vpop.f32.mrb[0].mxu0
    %v8418 = vadd.f32 0.0, %v8417
    %v8419 = vpop.f32.mrb[0].mxu0
    %v8420 = vpop.f32.mrb[0].mxu0
    %v8421 = vadd.f32 0.0, %v8420
    %v8422 = vpop.f32.mrb[0].mxu0
    %8423 = vmatprep.mubr.bf16.mxu0 0
    %8424 = vmatmul.mubr.bf16.gmra.mrb[0].mxu0 %v319
    %v8425 = vpop.f32.mrb[0].mxu0
    %v8426 = vadd.f32 0.0, %v8425
    %v8427 = vpop.f32.mrb[0].mxu0
    %v8428 = vpop.f32.mrb[0].mxu0
    %v8429 = vadd.f32 0.0, %v8428
    %v8430 = vpop.f32.mrb[0].mxu0
    %8431 = vmatprep.mubr.bf16.mxu0 0
    %8432 = vmatmul.mubr.bf16.gmra.mrb[0].mxu0 %v322
    %v8433 = vpop.f32.mrb[0].mxu0
    %v8434 = vadd.f32 0.0, %v8433
    %v8435 = vpop.f32.mrb[0].mxu0
    %v8436 = vpop.f32.mrb[0].mxu0
    %v8437 = vadd.f32 0.0, %v8436
    %v8438 = vpop.f32.mrb[0].mxu0
    %8439 = vmatprep.mubr.bf16.mxu0 0
    %8440 = vmatmul.mubr.bf16.gmra.mrb[0].mxu0 %v325
    %v8441 = vpop.f32.mrb[0].mxu0
    %v8442 = vadd.f32 0.0, %v8441
    %v8443 = vpop.f32.mrb[0].mxu0
    %v8444 = vpop.f32.mrb[0].mxu0
    %v8445 = vadd.f32 0.0, %v8444
    %v8446 = vpop.f32.mrb[0].mxu0
    %8447 = vmatprep.mubr.bf16.mxu0 0
    %8448 = vmatmul.mubr.bf16.gmra.mrb[0].mxu0 %v328
    %v8449 = vpop.f32.mrb[0].mxu0
    %v8450 = vadd.f32 0.0, %v8449
    %v8451 = vpop.f32.mrb[0].mxu0
    %v8452 = vpop.f32.mrb[0].mxu0
    %v8453 = vadd.f32 0.0, %v8452
    %v8454 = vpop.f32.mrb[0].mxu0
    %8455 = vmatprep.mubr.bf16.mxu0 0
    %8456 = vmatmul.mubr.bf16.gmra.mrb[0].mxu0 %v331
    %v8457 = vpop.f32.mrb[0].mxu0
    %v8458 = vadd.f32 0.0, %v8457
    %v8459 = vpop.f32.mrb[0].mxu0
    %v8460 = vpop.f32.mrb[0].mxu0
    %v8461 = vadd.f32 0.0, %v8460
    %v8462 = vpop.f32.mrb[0].mxu0
    %8463 = vmatprep.mubr.bf16.mxu0 0
    %8464 = vmatmul.mubr.bf16.gmra.mrb[0].mxu0 %v334
    %v8465 = vpop.f32.mrb[0].mxu0
    %v8466 = vadd.f32 0.0, %v8465
    %v8467 = vpop.f32.mrb[0].mxu0
    %v8468 = vpop.f32.mrb[0].mxu0
    %v8469 = vadd.f32 0.0, %v8468
    %v8470 = vpop.f32.mrb[0].mxu0
    %8471 = vmatprep.mubr.bf16.mxu0 0
    %8472 = vmatmul.mubr.bf16.gmra.mrb[0].mxu0 %v337
    %v8473 = vpop.f32.mrb[0].mxu0
    %v8474 = vadd.f32 0.0, %v8473
    %v8475 = vpop.f32.mrb[0].mxu0
    %v8476 = vpop.f32.mrb[0].mxu0
    %v8477 = vadd.f32 0.0, %v8476
    %v8478 = vpop.f32.mrb[0].mxu0
    %8479 = vmatprep.mubr.bf16.mxu0 0
    %8480 = vmatmul.mubr.bf16.gmra.mrb[0].mxu0 %v340
    %v8481 = vpop.f32.mrb[0].mxu0
    %v8482 = vadd.f32 0.0, %v8481
    %v8483 = vpop.f32.mrb[0].mxu0
    %v8484 = vpop.f32.mrb[0].mxu0
    %v8485 = vadd.f32 0.0, %v8484
    %v8486 = vpop.f32.mrb[0].mxu0
    %8487 = vmatprep.mubr.bf16.mxu0 0
    %8488 = vmatmul.mubr.bf16.gmra.mrb[0].mxu0 %v343
    %v8489 = vpop.f32.mrb[0].mxu0
    %v8490 = vadd.f32 0.0, %v8489
    %v8491 = vpop.f32.mrb[0].mxu0
    %v8492 = vpop.f32.mrb[0].mxu0
    %v8493 = vadd.f32 0.0, %v8492
    %v8494 = vpop.f32.mrb[0].mxu0
    %8495 = vmatprep.mubr.bf16.mxu0 0
    %8496 = vmatmul.mubr.bf16.gmra.mrb[0].mxu0 %v346
    %v8497 = vpop.f32.mrb[0].mxu0
    %v8498 = vadd.f32 0.0, %v8497
    %v8499 = vpop.f32.mrb[0].mxu0
    %v8500 = vpop.f32.mrb[0].mxu0
    %v8501 = vadd.f32 0.0, %v8500
    %v8502 = vpop.f32.mrb[0].mxu0
    %8503 = vmatprep.mubr.bf16.mxu0 0
    %8504 = vmatmul.mubr.bf16.gmra.mrb[0].mxu0 %v349
    %v8505 = vpop.f32.mrb[0].mxu0
    %v8506 = vadd.f32 0.0, %v8505
    %v8507 = vpop.f32.mrb[0].mxu0
    %v8508 = vpop.f32.mrb[0].mxu0
    %v8509 = vadd.f32 0.0, %v8508
    %v8510 = vpop.f32.mrb[0].mxu0
    %8511 = vmatprep.mubr.bf16.mxu0 0
    %8512 = vmatmul.mubr.bf16.gmra.mrb[0].mxu0 %v352
    %v8513 = vpop.f32.mrb[0].mxu0
    %v8514 = vadd.f32 0.0, %v8513
    %v8515 = vpop.f32.mrb[0].mxu0
    %v8516 = vpop.f32.mrb[0].mxu0
    %v8517 = vadd.f32 0.0, %v8516
    %v8518 = vpop.f32.mrb[0].mxu0
    %8519 = vmatprep.mubr.bf16.mxu0 0
    %8520 = vmatmul.mubr.bf16.gmra.mrb[0].mxu0 %v355
    %v8521 = vpop.f32.mrb[0].mxu0
    %v8522 = vadd.f32 0.0, %v8521
    %v8523 = vpop.f32.mrb[0].mxu0
    %v8524 = vpop.f32.mrb[0].mxu0
    %v8525 = vadd.f32 0.0, %v8524
    %v8526 = vpop.f32.mrb[0].mxu0
    %8527 = vmatprep.mubr.bf16.mxu0 0
    %8528 = vmatmul.mubr.bf16.gmra.mrb[0].mxu0 %v358
    %v8529 = vpop.f32.mrb[0].mxu0
    %v8530 = vadd.f32 0.0, %v8529
    %v8531 = vpop.f32.mrb[0].mxu0
    %v8532 = vpop.f32.mrb[0].mxu0
    %v8533 = vadd.f32 0.0, %v8532
    %v8534 = vpop.f32.mrb[0].mxu0
    %8535 = vmatprep.mubr.bf16.mxu0 0
    %8536 = vmatmul.mubr.bf16.gmra.mrb[0].mxu0 %v361
    %v8537 = vpop.f32.mrb[0].mxu0
    %v8538 = vadd.f32 0.0, %v8537
    %v8539 = vpop.f32.mrb[0].mxu0
    %v8540 = vpop.f32.mrb[0].mxu0
    %v8541 = vadd.f32 0.0, %v8540
    %v8542 = vpop.f32.mrb[0].mxu0
    %8543 = vmatprep.mubr.bf16.mxu0 0
    %8544 = vmatmul.mubr.bf16.gmra.mrb[0].mxu0 %v364
    %v8545 = vpop.f32.mrb[0].mxu0
    %v8546 = vadd.f32 0.0, %v8545
    %v8547 = vpop.f32.mrb[0].mxu0
    %v8548 = vpop.f32.mrb[0].mxu0
    %v8549 = vadd.f32 0.0, %v8548
    %v8550 = vpop.f32.mrb[0].mxu0
    %8551 = vmatprep.mubr.bf16.mxu0 0
    %8552 = vmatmul.mubr.bf16.gmra.mrb[0].mxu0 %v367
    %v8553 = vpop.f32.mrb[0].mxu0
    %v8554 = vadd.f32 0.0, %v8553
    %v8555 = vpop.f32.mrb[0].mxu0
    %v8556 = vpop.f32.mrb[0].mxu0
    %v8557 = vadd.f32 0.0, %v8556
    %v8558 = vpop.f32.mrb[0].mxu0
    %8559 = vmatprep.mubr.bf16.mxu0 0
    %8560 = vmatmul.mubr.bf16.gmra.mrb[0].mxu0 %v370
    %v8561 = vpop.f32.mrb[0].mxu0
    %v8562 = vadd.f32 0.0, %v8561
    %v8563 = vpop.f32.mrb[0].mxu0
    %v8564 = vpop.f32.mrb[0].mxu0
    %v8565 = vadd.f32 0.0, %v8564
    %v8566 = vpop.f32.mrb[0].mxu0
    %8567 = vmatprep.mubr.bf16.mxu0 0
    %8568 = vmatmul.mubr.bf16.gmra.mrb[0].mxu0 %v373
    %v8569 = vpop.f32.mrb[0].mxu0
    %v8570 = vadd.f32 0.0, %v8569
    %v8571 = vpop.f32.mrb[0].mxu0
    %v8572 = vpop.f32.mrb[0].mxu0
    %v8573 = vadd.f32 0.0, %v8572
    %v8574 = vpop.f32.mrb[0].mxu0
    %8575 = vmatprep.mubr.bf16.mxu0 0
    %8576 = vmatmul.mubr.bf16.gmra.mrb[0].mxu0 %v376
    %v8577 = vpop.f32.mrb[0].mxu0
    %v8578 = vadd.f32 0.0, %v8577
    %v8579 = vpop.f32.mrb[0].mxu0
    %v8580 = vpop.f32.mrb[0].mxu0
    %v8581 = vadd.f32 0.0, %v8580
    %v8582 = vpop.f32.mrb[0].mxu0
    %8583 = vmatprep.mubr.bf16.mxu0 0
    %8584 = vmatmul.mubr.bf16.gmra.mrb[0].mxu0 %v379
    %v8585 = vpop.f32.mrb[0].mxu0
    %v8586 = vadd.f32 0.0, %v8585
    %v8587 = vpop.f32.mrb[0].mxu0
    %v8588 = vpop.f32.mrb[0].mxu0
    %v8589 = vadd.f32 0.0, %v8588
    %v8590 = vpop.f32.mrb[0].mxu0
    %8591 = vmatprep.mubr.bf16.mxu0 0
    %8592 = vmatmul.mubr.bf16.gmra.mrb[0].mxu0 %v382
    %v8593 = vpop.f32.mrb[0].mxu0
    %v8594 = vadd.f32 0.0, %v8593
    %v8595 = vpop.f32.mrb[0].mxu0
    %v8596 = vpop.f32.mrb[0].mxu0
    %v8597 = vadd.f32 0.0, %v8596
    %v8598 = vpop.f32.mrb[0].mxu0
    %8599 = vmatprep.mubr.bf16.mxu0 0
    %8600 = vmatmul.mubr.bf16.gmra.mrb[0].mxu0 %v385
    %v8601 = vpop.f32.mrb[0].mxu0
    %v8602 = vadd.f32 0.0, %v8601
    %v8603 = vpop.f32.mrb[0].mxu0
    %v8604 = vpop.f32.mrb[0].mxu0
    %v8605 = vadd.f32 0.0, %v8604
    %v8606 = vpop.f32.mrb[0].mxu0
    %8607 = vmatprep.mubr.bf16.mxu0 0
    %8608 = vmatmul.mubr.bf16.gmra.mrb[0].mxu0 %v388
    %v8609 = vpop.f32.mrb[0].mxu0
    %v8610 = vadd.f32 0.0, %v8609
    %v8611 = vpop.f32.mrb[0].mxu0
    %v8612 = vpop.f32.mrb[0].mxu0
    %v8613 = vadd.f32 0.0, %v8612
    %v8614 = vpop.f32.mrb[0].mxu0
    %8615 = vmatprep.mubr.bf16.mxu0 0
    %8616 = vmatmul.mubr.bf16.gmra.mrb[0].mxu0 %v391
    %v8617 = vpop.f32.mrb[0].mxu0
    %v8618 = vadd.f32 0.0, %v8617
    %v8619 = vpop.f32.mrb[0].mxu0
    %v8620 = vpop.f32.mrb[0].mxu0
    %v8621 = vadd.f32 0.0, %v8620
    %v8622 = vpop.f32.mrb[0].mxu0
    %8623 = vmatprep.mubr.bf16.mxu0 0
    %8624 = vmatmul.mubr.bf16.gmra.mrb[0].mxu0 %v394
    %v8625 = vpop.f32.mrb[0].mxu0
    %v8626 = vadd.f32 0.0, %v8625
    %v8627 = vpop.f32.mrb[0].mxu0
    %v8628 = vpop.f32.mrb[0].mxu0
    %v8629 = vadd.f32 0.0, %v8628
    %v8630 = vpop.f32.mrb[0].mxu0
    %8631 = vmatprep.mubr.bf16.mxu0 0
    %8632 = vmatmul.mubr.bf16.gmra.mrb[0].mxu0 %v397
    %v8633 = vpop.f32.mrb[0].mxu0
    %v8634 = vadd.f32 0.0, %v8633
    %v8635 = vpop.f32.mrb[0].mxu0
    %v8636 = vpop.f32.mrb[0].mxu0
    %v8637 = vadd.f32 0.0, %v8636
    %v8638 = vpop.f32.mrb[0].mxu0
    %8639 = vmatprep.mubr.bf16.mxu0 0
    %8640 = vmatmul.mubr.bf16.gmra.mrb[0].mxu0 %v400
    %v8641 = vpop.f32.mrb[0].mxu0
    %v8642 = vadd.f32 0.0, %v8641
    %v8643 = vpop.f32.mrb[0].mxu0
    %v8644 = vpop.f32.mrb[0].mxu0
    %v8645 = vadd.f32 0.0, %v8644
    %v8646 = vpop.f32.mrb[0].mxu0
    %8647 = vmatprep.mubr.bf16.mxu0 0
    %8648 = vmatmul.mubr.bf16.gmra.mrb[0].mxu0 %v403
    %v8649 = vpop.f32.mrb[0].mxu0
    %v8650 = vadd.f32 0.0, %v8649
    %v8651 = vpop.f32.mrb[0].mxu0
    %v8652 = vpop.f32.mrb[0].mxu0
    %v8653 = vadd.f32 0.0, %v8652
    %v8654 = vpop.f32.mrb[0].mxu0
    %8655 = vmatprep.mubr.bf16.mxu0 0
    %8656 = vmatmul.mubr.bf16.gmra.mrb[0].mxu0 %v406
    %v8657 = vpop.f32.mrb[0].mxu0
    %v8658 = vadd.f32 0.0, %v8657
    %v8659 = vpop.f32.mrb[0].mxu0
    %v8660 = vpop.f32.mrb[0].mxu0
    %v8661 = vadd.f32 0.0, %v8660
    %v8662 = vpop.f32.mrb[0].mxu0
    %8663 = vdwg.mxu0
    %v8664 = vpack.c.bf16 %v8397, %v8394
    %v8665 = vpack.c.bf16 %v8405, %v8402
    %v8666 = vpack.c.bf16 %v8413, %v8410
    %v8667 = vpack.c.bf16 %v8421, %v8418
    %v8668 = vpack.c.bf16 %v8429, %v8426
    %v8669 = vpack.c.bf16 %v8437, %v8434
    %v8670 = vpack.c.bf16 %v8445, %v8442
    %v8671 = vpack.c.bf16 %v8453, %v8450
    %v8672 = vpack.c.bf16 %v8461, %v8458
    %v8673 = vpack.c.bf16 %v8469, %v8466
    %v8674 = vpack.c.bf16 %v8477, %v8474
    %v8675 = vpack.c.bf16 %v8485, %v8482
    %v8676 = vpack.c.bf16 %v8493, %v8490
    %v8677 = vpack.c.bf16 %v8501, %v8498
    %v8678 = vpack.c.bf16 %v8509, %v8506
    %v8679 = vpack.c.bf16 %v8517, %v8514
    %v8680 = vpack.c.bf16 %v8525, %v8522
    %v8681 = vpack.c.bf16 %v8533, %v8530
    %v8682 = vpack.c.bf16 %v8541, %v8538
    %v8683 = vpack.c.bf16 %v8549, %v8546
    %v8684 = vpack.c.bf16 %v8557, %v8554
    %v8685 = vpack.c.bf16 %v8565, %v8562
    %v8686 = vpack.c.bf16 %v8573, %v8570
    %v8687 = vpack.c.bf16 %v8581, %v8578
    %v8688 = vpack.c.bf16 %v8589, %v8586
    %v8689 = vpack.c.bf16 %v8597, %v8594
    %v8690 = vpack.c.bf16 %v8605, %v8602
    %v8691 = vpack.c.bf16 %v8613, %v8610
    %v8692 = vpack.c.bf16 %v8621, %v8618
    %v8693 = vpack.c.bf16 %v8629, %v8626
    %v8694 = vpack.c.bf16 %v8637, %v8634
    %v8695 = vpack.c.bf16 %v8645, %v8642
    %v8696 = vpack.c.bf16 %v8653, %v8650
    %v8697 = vpack.c.bf16 %v8661, %v8658
    %v8699 = vsel %vm305, %v8664, 0
    %v8702 = vsel %vm305, %v8665, 0
    %v8705 = vsel %vm305, %v8666, 0
    %v8708 = vsel %vm305, %v8667, 0
    %v8711 = vsel %vm305, %v8668, 0
    %v8714 = vsel %vm305, %v8669, 0
    %v8717 = vsel %vm305, %v8670, 0
    %v8720 = vsel %vm305, %v8671, 0
    %v8723 = vsel %vm305, %v8672, 0
    %v8726 = vsel %vm305, %v8673, 0
    %v8729 = vsel %vm305, %v8674, 0
    %v8732 = vsel %vm305, %v8675, 0
    %v8735 = vsel %vm305, %v8676, 0
    %v8738 = vsel %vm305, %v8677, 0
    %8740 = vmatprep.subr.bf16.mxu0 %v754
    %8741 = vmatpush1.bf16.msra.mxu0 %v753
    %8742 = vmatprep.subr.bf16.mxu0 0
    %8743 = vmatpush1.bf16.msra.mxu0 0
    %8744 = vmatprep.subr.bf16.mxu0 0
    %8745 = vmatpush1.bf16.msra.mxu0 0
    %8746 = vmatprep.subr.bf16.mxu0 0
    %8747 = vmatpush1.bf16.msra.mxu0 0
    %8748 = vmatprep.subr.bf16.mxu0 0
    %8749 = vmatpush1.bf16.msra.mxu0 0
    %8750 = vmatprep.subr.bf16.mxu0 0
    %8751 = vmatpush1.bf16.msra.mxu0 0
    %8752 = vmatprep.subr.bf16.mxu0 0
    %8753 = vmatpush1.bf16.msra.mxu0 0
    %8754 = vmatprep.subr.bf16.mxu0 0
    %8755 = vmatpush1.bf16.msra.mxu0 0
    %8756 = vmatprep.subr.bf16.mxu0 0
    %8757 = vmatpush1.bf16.msra.mxu0 0
    %8758 = vmatprep.subr.bf16.mxu0 0
    %8759 = vmatpush1.bf16.msra.mxu0 0
    %8760 = vmatprep.subr.bf16.mxu0 0
    %8761 = vmatpush1.bf16.msra.mxu0 0
    %8762 = vmatprep.subr.bf16.mxu0 0
    %8763 = vmatpush1.bf16.msra.mxu0 0
    %8764 = vmatprep.subr.bf16.mxu0 0
    %8765 = vmatpush1.bf16.msra.mxu0 0
    %8766 = vmatprep.subr.bf16.mxu0 0
    %8767 = vmatpush1.bf16.msra.mxu0 0
    %8768 = vmatprep.subr.bf16.mxu0 0
    %8769 = vmatpush1.bf16.msra.mxu0 0
    %8770 = vmatprep.subr.bf16.mxu0 0
    %8771 = vmatpush1.bf16.msra.mxu0 0
    %8772 = vmatprep.mubr.bf16.mxu0 0
    %8773 = vmatmul.mubr.bf16.gmra.mrb[0].mxu0 %v8699
    %v8774 = vpop.f32.mrb[0].mxu0
    %v8775 = vadd.f32 0.0, %v8774
    %v8776 = vpop.f32.mrb[0].mxu0
    %v8777 = vadd.f32 0.0, %v8776
    %v8778 = vpop.f32.mrb[0].mxu0
    %v8779 = vadd.f32 0.0, %v8778
    %v8780 = vpop.f32.mrb[0].mxu0
    %v8781 = vadd.f32 0.0, %v8780
    %8782 = vmatprep.mubr.bf16.mxu0 0
    %8783 = vmatmul.mubr.bf16.gmra.mrb[0].mxu0 %v8702
    %v8784 = vpop.f32.mrb[0].mxu0
    %v8785 = vadd.f32 0.0, %v8784
    %v8786 = vpop.f32.mrb[0].mxu0
    %v8787 = vadd.f32 0.0, %v8786
    %v8788 = vpop.f32.mrb[0].mxu0
    %v8789 = vadd.f32 0.0, %v8788
    %v8790 = vpop.f32.mrb[0].mxu0
    %v8791 = vadd.f32 0.0, %v8790
    %8792 = vmatprep.mubr.bf16.mxu0 0
    %8793 = vmatmul.mubr.bf16.gmra.mrb[0].mxu0 %v8705
    %v8794 = vpop.f32.mrb[0].mxu0
    %v8795 = vadd.f32 0.0, %v8794
    %v8796 = vpop.f32.mrb[0].mxu0
    %v8797 = vadd.f32 0.0, %v8796
    %v8798 = vpop.f32.mrb[0].mxu0
    %v8799 = vadd.f32 0.0, %v8798
    %v8800 = vpop.f32.mrb[0].mxu0
    %v8801 = vadd.f32 0.0, %v8800
    %8802 = vmatprep.mubr.bf16.mxu0 0
    %8803 = vmatmul.mubr.bf16.gmra.mrb[0].mxu0 %v8708
    %v8804 = vpop.f32.mrb[0].mxu0
    %v8805 = vadd.f32 0.0, %v8804
    %v8806 = vpop.f32.mrb[0].mxu0
    %v8807 = vadd.f32 0.0, %v8806
    %v8808 = vpop.f32.mrb[0].mxu0
    %v8809 = vadd.f32 0.0, %v8808
    %v8810 = vpop.f32.mrb[0].mxu0
    %v8811 = vadd.f32 0.0, %v8810
    %8812 = vmatprep.mubr.bf16.mxu0 0
    %8813 = vmatmul.mubr.bf16.gmra.mrb[0].mxu0 %v8711
    %v8814 = vpop.f32.mrb[0].mxu0
    %v8815 = vadd.f32 0.0, %v8814
    %v8816 = vpop.f32.mrb[0].mxu0
    %v8817 = vadd.f32 0.0, %v8816
    %v8818 = vpop.f32.mrb[0].mxu0
    %v8819 = vadd.f32 0.0, %v8818
    %v8820 = vpop.f32.mrb[0].mxu0
    %v8821 = vadd.f32 0.0, %v8820
    %8822 = vmatprep.mubr.bf16.mxu0 0
    %8823 = vmatmul.mubr.bf16.gmra.mrb[0].mxu0 %v8714
    %v8824 = vpop.f32.mrb[0].mxu0
    %v8825 = vadd.f32 0.0, %v8824
    %v8826 = vpop.f32.mrb[0].mxu0
    %v8827 = vadd.f32 0.0, %v8826
    %v8828 = vpop.f32.mrb[0].mxu0
    %v8829 = vadd.f32 0.0, %v8828
    %v8830 = vpop.f32.mrb[0].mxu0
    %v8831 = vadd.f32 0.0, %v8830
    %8832 = vmatprep.mubr.bf16.mxu0 0
    %8833 = vmatmul.mubr.bf16.gmra.mrb[0].mxu0 %v8717
    %v8834 = vpop.f32.mrb[0].mxu0
    %v8835 = vadd.f32 0.0, %v8834
    %v8836 = vpop.f32.mrb[0].mxu0
    %v8837 = vadd.f32 0.0, %v8836
    %v8838 = vpop.f32.mrb[0].mxu0
    %v8839 = vadd.f32 0.0, %v8838
    %v8840 = vpop.f32.mrb[0].mxu0
    %v8841 = vadd.f32 0.0, %v8840
    %8842 = vmatprep.mubr.bf16.mxu0 0
    %8843 = vmatmul.mubr.bf16.gmra.mrb[0].mxu0 %v8720
    %v8844 = vpop.f32.mrb[0].mxu0
    %v8845 = vadd.f32 0.0, %v8844
    %v8846 = vpop.f32.mrb[0].mxu0
    %v8847 = vadd.f32 0.0, %v8846
    %v8848 = vpop.f32.mrb[0].mxu0
    %v8849 = vadd.f32 0.0, %v8848
    %v8850 = vpop.f32.mrb[0].mxu0
    %v8851 = vadd.f32 0.0, %v8850
    %8852 = vmatprep.mubr.bf16.mxu0 0
    %8853 = vmatmul.mubr.bf16.gmra.mrb[0].mxu0 %v8723
    %v8854 = vpop.f32.mrb[0].mxu0
    %v8855 = vadd.f32 0.0, %v8854
    %v8856 = vpop.f32.mrb[0].mxu0
    %v8857 = vadd.f32 0.0, %v8856
    %v8858 = vpop.f32.mrb[0].mxu0
    %v8859 = vadd.f32 0.0, %v8858
    %v8860 = vpop.f32.mrb[0].mxu0
    %v8861 = vadd.f32 0.0, %v8860
    %8862 = vmatprep.mubr.bf16.mxu0 0
    %8863 = vmatmul.mubr.bf16.gmra.mrb[0].mxu0 %v8726
    %v8864 = vpop.f32.mrb[0].mxu0
    %v8865 = vadd.f32 0.0, %v8864
    %v8866 = vpop.f32.mrb[0].mxu0
    %v8867 = vadd.f32 0.0, %v8866
    %v8868 = vpop.f32.mrb[0].mxu0
    %v8869 = vadd.f32 0.0, %v8868
    %v8870 = vpop.f32.mrb[0].mxu0
    %v8871 = vadd.f32 0.0, %v8870
    %8872 = vmatprep.mubr.bf16.mxu0 0
    %8873 = vmatmul.mubr.bf16.gmra.mrb[0].mxu0 %v8729
    %v8874 = vpop.f32.mrb[0].mxu0
    %v8875 = vadd.f32 0.0, %v8874
    %v8876 = vpop.f32.mrb[0].mxu0
    %v8877 = vadd.f32 0.0, %v8876
    %v8878 = vpop.f32.mrb[0].mxu0
    %v8879 = vadd.f32 0.0, %v8878
    %v8880 = vpop.f32.mrb[0].mxu0
    %v8881 = vadd.f32 0.0, %v8880
    %8882 = vmatprep.mubr.bf16.mxu0 0
    %8883 = vmatmul.mubr.bf16.gmra.mrb[0].mxu0 %v8732
    %v8884 = vpop.f32.mrb[0].mxu0
    %v8885 = vadd.f32 0.0, %v8884
    %v8886 = vpop.f32.mrb[0].mxu0
    %v8887 = vadd.f32 0.0, %v8886
    %v8888 = vpop.f32.mrb[0].mxu0
    %v8889 = vadd.f32 0.0, %v8888
    %v8890 = vpop.f32.mrb[0].mxu0
    %v8891 = vadd.f32 0.0, %v8890
    %8892 = vmatprep.mubr.bf16.mxu0 0
    %8893 = vmatmul.mubr.bf16.gmra.mrb[0].mxu0 %v8735
    %v8894 = vpop.f32.mrb[0].mxu0
    %v8895 = vadd.f32 0.0, %v8894
    %v8896 = vpop.f32.mrb[0].mxu0
    %v8897 = vadd.f32 0.0, %v8896
    %v8898 = vpop.f32.mrb[0].mxu0
    %v8899 = vadd.f32 0.0, %v8898
    %v8900 = vpop.f32.mrb[0].mxu0
    %v8901 = vadd.f32 0.0, %v8900
    %8902 = vmatprep.mubr.bf16.mxu0 0
    %8903 = vmatmul.mubr.bf16.gmra.mrb[0].mxu0 %v8738
    %v8904 = vpop.f32.mrb[0].mxu0
    %v8905 = vadd.f32 0.0, %v8904
    %v8906 = vpop.f32.mrb[0].mxu0
    %v8907 = vadd.f32 0.0, %v8906
    %v8908 = vpop.f32.mrb[0].mxu0
    %v8909 = vadd.f32 0.0, %v8908
    %v8910 = vpop.f32.mrb[0].mxu0
    %v8911 = vadd.f32 0.0, %v8910
    %8912 = vdwg.mxu0
    %v8914 = vsel %vm305, %v8692, 0
    %v8917 = vsel %vm305, %v8693, 0
    %v8920 = vsel %vm305, %v8694, 0
    %v8923 = vsel %vm305, %v8695, 0
    %v8926 = vsel %vm305, %v8696, 0
    %v8929 = vsel %vm305, %v8697, 0
    %8931 = vmatprep.subr.bf16.mxu0 0
    %8932 = vmatpush1.bf16.msra.mxu0 %v976
    %8933 = vmatprep.subr.bf16.mxu0 0
    %8934 = vmatpush1.bf16.msra.mxu0 0
    %8935 = vmatprep.subr.bf16.mxu0 0
    %8936 = vmatpush1.bf16.msra.mxu0 0
    %8937 = vmatprep.subr.bf16.mxu0 0
    %8938 = vmatpush1.bf16.msra.mxu0 0
    %8939 = vmatprep.subr.bf16.mxu0 0
    %8940 = vmatpush1.bf16.msra.mxu0 0
    %8941 = vmatprep.subr.bf16.mxu0 0
    %8942 = vmatpush1.bf16.msra.mxu0 0
    %8943 = vmatprep.subr.bf16.mxu0 0
    %8944 = vmatpush1.bf16.msra.mxu0 0
    %8945 = vmatprep.subr.bf16.mxu0 0
    %8946 = vmatpush1.bf16.msra.mxu0 0
    %8947 = vmatprep.subr.bf16.mxu0 0
    %8948 = vmatpush1.bf16.msra.mxu0 0
    %8949 = vmatprep.subr.bf16.mxu0 0
    %8950 = vmatpush1.bf16.msra.mxu0 0
    %8951 = vmatprep.subr.bf16.mxu0 0
    %8952 = vmatpush1.bf16.msra.mxu0 0
    %8953 = vmatprep.subr.bf16.mxu0 0
    %8954 = vmatpush1.bf16.msra.mxu0 0
    %8955 = vmatprep.subr.bf16.mxu0 0
    %8956 = vmatpush1.bf16.msra.mxu0 0
    %8957 = vmatprep.subr.bf16.mxu0 0
    %8958 = vmatpush1.bf16.msra.mxu0 0
    %8959 = vmatprep.subr.bf16.mxu0 0
    %8960 = vmatpush1.bf16.msra.mxu0 0
    %8961 = vmatprep.subr.bf16.mxu0 0
    %8962 = vmatpush1.bf16.msra.mxu0 0
    %8963 = vmatprep.mubr.bf16.mxu0 0
    %8964 = vmatmul.mubr.bf16.gmra.mrb[0].mxu0 %v8914
    %v8965 = vpop.f32.mrb[0].mxu0
    %v8966 = vadd.f32 0.0, %v8965
    %v8967 = vpop.f32.mrb[0].mxu0
    %v8968 = vpop.f32.mrb[0].mxu0
    %v8969 = vadd.f32 0.0, %v8968
    %v8970 = vpop.f32.mrb[0].mxu0
    %8971 = vmatprep.mubr.bf16.mxu0 0
    %8972 = vmatmul.mubr.bf16.gmra.mrb[0].mxu0 %v8917
    %v8973 = vpop.f32.mrb[0].mxu0
    %v8974 = vadd.f32 0.0, %v8973
    %v8975 = vpop.f32.mrb[0].mxu0
    %v8976 = vpop.f32.mrb[0].mxu0
    %v8977 = vadd.f32 0.0, %v8976
    %v8978 = vpop.f32.mrb[0].mxu0
    %8979 = vmatprep.mubr.bf16.mxu0 0
    %8980 = vmatmul.mubr.bf16.gmra.mrb[0].mxu0 %v8920
    %v8981 = vpop.f32.mrb[0].mxu0
    %v8982 = vadd.f32 0.0, %v8981
    %v8983 = vpop.f32.mrb[0].mxu0
    %v8984 = vpop.f32.mrb[0].mxu0
    %v8985 = vadd.f32 0.0, %v8984
    %v8986 = vpop.f32.mrb[0].mxu0
    %8987 = vmatprep.mubr.bf16.mxu0 0
    %8988 = vmatmul.mubr.bf16.gmra.mrb[0].mxu0 %v8923
    %v8989 = vpop.f32.mrb[0].mxu0
    %v8990 = vadd.f32 0.0, %v8989
    %v8991 = vpop.f32.mrb[0].mxu0
    %v8992 = vpop.f32.mrb[0].mxu0
    %v8993 = vadd.f32 0.0, %v8992
    %v8994 = vpop.f32.mrb[0].mxu0
    %8995 = vmatprep.mubr.bf16.mxu0 0
    %8996 = vmatmul.mubr.bf16.gmra.mrb[0].mxu0 %v8926
    %v8997 = vpop.f32.mrb[0].mxu0
    %v8998 = vadd.f32 0.0, %v8997
    %v8999 = vpop.f32.mrb[0].mxu0
    %v9000 = vpop.f32.mrb[0].mxu0
    %v9001 = vadd.f32 0.0, %v9000
    %v9002 = vpop.f32.mrb[0].mxu0
    %9003 = vmatprep.mubr.bf16.mxu0 0
    %9004 = vmatmul.mubr.bf16.gmra.mrb[0].mxu0 %v8929
    %v9005 = vpop.f32.mrb[0].mxu0
    %v9006 = vadd.f32 0.0, %v9005
    %v9007 = vpop.f32.mrb[0].mxu0
    %v9008 = vpop.f32.mrb[0].mxu0
    %v9009 = vadd.f32 0.0, %v9008
    %v9010 = vpop.f32.mrb[0].mxu0
    %9011 = vdwg.mxu0
    %v9013 = vsel %vm305, %v8678, 0
    %v9016 = vsel %vm305, %v8679, 0
    %v9019 = vsel %vm305, %v8680, 0
    %v9022 = vsel %vm305, %v8681, 0
    %v9025 = vsel %vm305, %v8682, 0
    %v9028 = vsel %vm305, %v8683, 0
    %v9031 = vsel %vm305, %v8684, 0
    %v9034 = vsel %vm305, %v8685, 0
    %v9037 = vsel %vm305, %v8686, 0
    %v9040 = vsel %vm305, %v8687, 0
    %v9043 = vsel %vm305, %v8688, 0
    %v9046 = vsel %vm305, %v8689, 0
    %v9049 = vsel %vm305, %v8690, 0
    %v9052 = vsel %vm305, %v8691, 0
    %9054 = vmatprep.subr.bf16.mxu0 %v1084
    %9055 = vmatpush1.bf16.msra.mxu0 %v1083
    %9056 = vmatprep.subr.bf16.mxu0 0
    %9057 = vmatpush1.bf16.msra.mxu0 0
    %9058 = vmatprep.subr.bf16.mxu0 0
    %9059 = vmatpush1.bf16.msra.mxu0 0
    %9060 = vmatprep.subr.bf16.mxu0 0
    %9061 = vmatpush1.bf16.msra.mxu0 0
    %9062 = vmatprep.subr.bf16.mxu0 0
    %9063 = vmatpush1.bf16.msra.mxu0 0
    %9064 = vmatprep.subr.bf16.mxu0 0
    %9065 = vmatpush1.bf16.msra.mxu0 0
    %9066 = vmatprep.subr.bf16.mxu0 0
    %9067 = vmatpush1.bf16.msra.mxu0 0
    %9068 = vmatprep.subr.bf16.mxu0 0
    %9069 = vmatpush1.bf16.msra.mxu0 0
    %9070 = vmatprep.subr.bf16.mxu0 0
    %9071 = vmatpush1.bf16.msra.mxu0 0
    %9072 = vmatprep.subr.bf16.mxu0 0
    %9073 = vmatpush1.bf16.msra.mxu0 0
    %9074 = vmatprep.subr.bf16.mxu0 0
    %9075 = vmatpush1.bf16.msra.mxu0 0
    %9076 = vmatprep.subr.bf16.mxu0 0
    %9077 = vmatpush1.bf16.msra.mxu0 0
    %9078 = vmatprep.subr.bf16.mxu0 0
    %9079 = vmatpush1.bf16.msra.mxu0 0
    %9080 = vmatprep.subr.bf16.mxu0 0
    %9081 = vmatpush1.bf16.msra.mxu0 0
    %9082 = vmatprep.subr.bf16.mxu0 0
    %9083 = vmatpush1.bf16.msra.mxu0 0
    %9084 = vmatprep.subr.bf16.mxu0 0
    %9085 = vmatpush1.bf16.msra.mxu0 0
    %9086 = vmatprep.mubr.bf16.mxu0 0
    %9087 = vmatmul.mubr.bf16.gmra.mrb[0].mxu0 %v9013
    %v9088 = vpop.f32.mrb[0].mxu0
    %v9089 = vadd.f32 0.0, %v9088
    %v9090 = vpop.f32.mrb[0].mxu0
    %v9091 = vadd.f32 0.0, %v9090
    %v9092 = vpop.f32.mrb[0].mxu0
    %v9093 = vadd.f32 0.0, %v9092
    %v9094 = vpop.f32.mrb[0].mxu0
    %v9095 = vadd.f32 0.0, %v9094
    %9096 = vmatprep.mubr.bf16.mxu0 0
    %9097 = vmatmul.mubr.bf16.gmra.mrb[0].mxu0 %v9016
    %v9098 = vpop.f32.mrb[0].mxu0
    %v9099 = vadd.f32 0.0, %v9098
    %v9100 = vpop.f32.mrb[0].mxu0
    %v9101 = vadd.f32 0.0, %v9100
    %v9102 = vpop.f32.mrb[0].mxu0
    %v9103 = vadd.f32 0.0, %v9102
    %v9104 = vpop.f32.mrb[0].mxu0
    %v9105 = vadd.f32 0.0, %v9104
    %9106 = vmatprep.mubr.bf16.mxu0 0
    %9107 = vmatmul.mubr.bf16.gmra.mrb[0].mxu0 %v9019
    %v9108 = vpop.f32.mrb[0].mxu0
    %v9109 = vadd.f32 0.0, %v9108
    %v9110 = vpop.f32.mrb[0].mxu0
    %v9111 = vadd.f32 0.0, %v9110
    %v9112 = vpop.f32.mrb[0].mxu0
    %v9113 = vadd.f32 0.0, %v9112
    %v9114 = vpop.f32.mrb[0].mxu0
    %v9115 = vadd.f32 0.0, %v9114
    %9116 = vmatprep.mubr.bf16.mxu0 0
    %9117 = vmatmul.mubr.bf16.gmra.mrb[0].mxu0 %v9022
    %v9118 = vpop.f32.mrb[0].mxu0
    %v9119 = vadd.f32 0.0, %v9118
    %v9120 = vpop.f32.mrb[0].mxu0
    %v9121 = vadd.f32 0.0, %v9120
    %v9122 = vpop.f32.mrb[0].mxu0
    %v9123 = vadd.f32 0.0, %v9122
    %v9124 = vpop.f32.mrb[0].mxu0
    %v9125 = vadd.f32 0.0, %v9124
    %9126 = vmatprep.mubr.bf16.mxu0 0
    %9127 = vmatmul.mubr.bf16.gmra.mrb[0].mxu0 %v9025
    %v9128 = vpop.f32.mrb[0].mxu0
    %v9129 = vadd.f32 0.0, %v9128
    %v9130 = vpop.f32.mrb[0].mxu0
    %v9131 = vadd.f32 0.0, %v9130
    %v9132 = vpop.f32.mrb[0].mxu0
    %v9133 = vadd.f32 0.0, %v9132
    %v9134 = vpop.f32.mrb[0].mxu0
    %v9135 = vadd.f32 0.0, %v9134
    %9136 = vmatprep.mubr.bf16.mxu0 0
    %9137 = vmatmul.mubr.bf16.gmra.mrb[0].mxu0 %v9028
    %v9138 = vpop.f32.mrb[0].mxu0
    %v9139 = vadd.f32 0.0, %v9138
    %v9140 = vpop.f32.mrb[0].mxu0
    %v9141 = vadd.f32 0.0, %v9140
    %v9142 = vpop.f32.mrb[0].mxu0
    %v9143 = vadd.f32 0.0, %v9142
    %v9144 = vpop.f32.mrb[0].mxu0
    %v9145 = vadd.f32 0.0, %v9144
    %9146 = vmatprep.mubr.bf16.mxu0 0
    %9147 = vmatmul.mubr.bf16.gmra.mrb[0].mxu0 %v9031
    %v9148 = vpop.f32.mrb[0].mxu0
    %v9149 = vadd.f32 0.0, %v9148
    %v9150 = vpop.f32.mrb[0].mxu0
    %v9151 = vadd.f32 0.0, %v9150
    %v9152 = vpop.f32.mrb[0].mxu0
    %v9153 = vadd.f32 0.0, %v9152
    %v9154 = vpop.f32.mrb[0].mxu0
    %v9155 = vadd.f32 0.0, %v9154
    %9156 = vmatprep.mubr.bf16.mxu0 0
    %9157 = vmatmul.mubr.bf16.gmra.mrb[0].mxu0 %v9034
    %v9158 = vpop.f32.mrb[0].mxu0
    %v9159 = vadd.f32 0.0, %v9158
    %v9160 = vpop.f32.mrb[0].mxu0
    %v9161 = vadd.f32 0.0, %v9160
    %v9162 = vpop.f32.mrb[0].mxu0
    %v9163 = vadd.f32 0.0, %v9162
    %v9164 = vpop.f32.mrb[0].mxu0
    %v9165 = vadd.f32 0.0, %v9164
    %9166 = vmatprep.mubr.bf16.mxu0 0
    %9167 = vmatmul.mubr.bf16.gmra.mrb[0].mxu0 %v9037
    %v9168 = vpop.f32.mrb[0].mxu0
    %v9169 = vadd.f32 0.0, %v9168
    %v9170 = vpop.f32.mrb[0].mxu0
    %v9171 = vadd.f32 0.0, %v9170
    %v9172 = vpop.f32.mrb[0].mxu0
    %v9173 = vadd.f32 0.0, %v9172
    %v9174 = vpop.f32.mrb[0].mxu0
    %v9175 = vadd.f32 0.0, %v9174
    %9176 = vmatprep.mubr.bf16.mxu0 0
    %9177 = vmatmul.mubr.bf16.gmra.mrb[0].mxu0 %v9040
    %v9178 = vpop.f32.mrb[0].mxu0
    %v9179 = vadd.f32 0.0, %v9178
    %v9180 = vpop.f32.mrb[0].mxu0
    %v9181 = vadd.f32 0.0, %v9180
    %v9182 = vpop.f32.mrb[0].mxu0
    %v9183 = vadd.f32 0.0, %v9182
    %v9184 = vpop.f32.mrb[0].mxu0
    %v9185 = vadd.f32 0.0, %v9184
    %9186 = vmatprep.mubr.bf16.mxu0 0
    %9187 = vmatmul.mubr.bf16.gmra.mrb[0].mxu0 %v9043
    %v9188 = vpop.f32.mrb[0].mxu0
    %v9189 = vadd.f32 0.0, %v9188
    %v9190 = vpop.f32.mrb[0].mxu0
    %v9191 = vadd.f32 0.0, %v9190
    %v9192 = vpop.f32.mrb[0].mxu0
    %v9193 = vadd.f32 0.0, %v9192
    %v9194 = vpop.f32.mrb[0].mxu0
    %v9195 = vadd.f32 0.0, %v9194
    %9196 = vmatprep.mubr.bf16.mxu0 0
    %9197 = vmatmul.mubr.bf16.gmra.mrb[0].mxu0 %v9046
    %v9198 = vpop.f32.mrb[0].mxu0
    %v9199 = vadd.f32 0.0, %v9198
    %v9200 = vpop.f32.mrb[0].mxu0
    %v9201 = vadd.f32 0.0, %v9200
    %v9202 = vpop.f32.mrb[0].mxu0
    %v9203 = vadd.f32 0.0, %v9202
    %v9204 = vpop.f32.mrb[0].mxu0
    %v9205 = vadd.f32 0.0, %v9204
    %9206 = vmatprep.mubr.bf16.mxu0 0
    %9207 = vmatmul.mubr.bf16.gmra.mrb[0].mxu0 %v9049
    %v9208 = vpop.f32.mrb[0].mxu0
    %v9209 = vadd.f32 0.0, %v9208
    %v9210 = vpop.f32.mrb[0].mxu0
    %v9211 = vadd.f32 0.0, %v9210
    %v9212 = vpop.f32.mrb[0].mxu0
    %v9213 = vadd.f32 0.0, %v9212
    %v9214 = vpop.f32.mrb[0].mxu0
    %v9215 = vadd.f32 0.0, %v9214
    %9216 = vmatprep.mubr.bf16.mxu0 0
    %9217 = vmatmul.mubr.bf16.gmra.mrb[0].mxu0 %v9052
    %v9218 = vpop.f32.mrb[0].mxu0
    %v9219 = vadd.f32 0.0, %v9218
    %v9220 = vpop.f32.mrb[0].mxu0
    %v9221 = vadd.f32 0.0, %v9220
    %v9222 = vpop.f32.mrb[0].mxu0
    %v9223 = vadd.f32 0.0, %v9222
    %v9224 = vpop.f32.mrb[0].mxu0
    %v9225 = vadd.f32 0.0, %v9224
    %9226 = vdwg.mxu0
    %s9227 = sadd.s32 %s52, 5
    %s9228 = sld [smem:[#allocation3 + %s9227]]
    %s9229 = sld [smem:[#allocation4 + %s9227]]
    %v9230 = vstv %s9228
    %v9231 = vmul.f32 %v9089, %v9230
    %v9232 = vmul.f32 %v9091, %v9230
    %v9233 = vmul.f32 %v9093, %v9230
    %v9234 = vmul.f32 %v9095, %v9230
    %v9235 = vmul.f32 %v9099, %v9230
    %v9236 = vmul.f32 %v9101, %v9230
    %v9237 = vmul.f32 %v9103, %v9230
    %v9238 = vmul.f32 %v9105, %v9230
    %v9239 = vmul.f32 %v9109, %v9230
    %v9240 = vmul.f32 %v9111, %v9230
    %v9241 = vmul.f32 %v9113, %v9230
    %v9242 = vmul.f32 %v9115, %v9230
    %v9243 = vmul.f32 %v9119, %v9230
    %v9244 = vmul.f32 %v9121, %v9230
    %v9245 = vmul.f32 %v9123, %v9230
    %v9246 = vmul.f32 %v9125, %v9230
    %v9247 = vmul.f32 %v9129, %v9230
    %v9248 = vmul.f32 %v9131, %v9230
    %v9249 = vmul.f32 %v9133, %v9230
    %v9250 = vmul.f32 %v9135, %v9230
    %v9251 = vmul.f32 %v9139, %v9230
    %v9252 = vmul.f32 %v9141, %v9230
    %v9253 = vmul.f32 %v9143, %v9230
    %v9254 = vmul.f32 %v9145, %v9230
    %v9255 = vmul.f32 %v9149, %v9230
    %v9256 = vmul.f32 %v9151, %v9230
    %v9257 = vmul.f32 %v9153, %v9230
    %v9258 = vmul.f32 %v9155, %v9230
    %v9259 = vmul.f32 %v9159, %v9230
    %v9260 = vmul.f32 %v9161, %v9230
    %v9261 = vmul.f32 %v9163, %v9230
    %v9262 = vmul.f32 %v9165, %v9230
    %v9263 = vmul.f32 %v9169, %v9230
    %v9264 = vmul.f32 %v9171, %v9230
    %v9265 = vmul.f32 %v9173, %v9230
    %v9266 = vmul.f32 %v9175, %v9230
    %v9267 = vmul.f32 %v9179, %v9230
    %v9268 = vmul.f32 %v9181, %v9230
    %v9269 = vmul.f32 %v9183, %v9230
    %v9270 = vmul.f32 %v9185, %v9230
    %v9271 = vmul.f32 %v9189, %v9230
    %v9272 = vmul.f32 %v9191, %v9230
    %v9273 = vmul.f32 %v9193, %v9230
    %v9274 = vmul.f32 %v9195, %v9230
    %v9275 = vmul.f32 %v9199, %v9230
    %v9276 = vmul.f32 %v9201, %v9230
    %v9277 = vmul.f32 %v9203, %v9230
    %v9278 = vmul.f32 %v9205, %v9230
    %v9279 = vmul.f32 %v9209, %v9230
    %v9280 = vmul.f32 %v9211, %v9230
    %v9281 = vmul.f32 %v9213, %v9230
    %v9282 = vmul.f32 %v9215, %v9230
    %v9283 = vmul.f32 %v9219, %v9230
    %v9284 = vmul.f32 %v9221, %v9230
    %v9285 = vmul.f32 %v9223, %v9230
    %v9286 = vmul.f32 %v9225, %v9230
    %v9287 = vstv %s9229
    %v9288 = vadd.f32 %v9231, %v9287
    %v9289 = vadd.f32 %v9232, %v9287
    %v9290 = vadd.f32 %v9233, %v9287
    %v9291 = vadd.f32 %v9234, %v9287
    %v9292 = vadd.f32 %v9235, %v9287
    %v9293 = vadd.f32 %v9236, %v9287
    %v9294 = vadd.f32 %v9237, %v9287
    %v9295 = vadd.f32 %v9238, %v9287
    %v9296 = vadd.f32 %v9239, %v9287
    %v9297 = vadd.f32 %v9240, %v9287
    %v9298 = vadd.f32 %v9241, %v9287
    %v9299 = vadd.f32 %v9242, %v9287
    %v9300 = vadd.f32 %v9243, %v9287
    %v9301 = vadd.f32 %v9244, %v9287
    %v9302 = vadd.f32 %v9245, %v9287
    %v9303 = vadd.f32 %v9246, %v9287
    %v9304 = vadd.f32 %v9247, %v9287
    %v9305 = vadd.f32 %v9248, %v9287
    %v9306 = vadd.f32 %v9249, %v9287
    %v9307 = vadd.f32 %v9250, %v9287
    %v9308 = vadd.f32 %v9251, %v9287
    %v9309 = vadd.f32 %v9252, %v9287
    %v9310 = vadd.f32 %v9253, %v9287
    %v9311 = vadd.f32 %v9254, %v9287
    %v9312 = vadd.f32 %v9255, %v9287
    %v9313 = vadd.f32 %v9256, %v9287
    %v9314 = vadd.f32 %v9257, %v9287
    %v9315 = vadd.f32 %v9258, %v9287
    %v9316 = vadd.f32 %v9259, %v9287
    %v9317 = vadd.f32 %v9260, %v9287
    %v9318 = vadd.f32 %v9261, %v9287
    %v9319 = vadd.f32 %v9262, %v9287
    %v9320 = vadd.f32 %v9263, %v9287
    %v9321 = vadd.f32 %v9264, %v9287
    %v9322 = vadd.f32 %v9265, %v9287
    %v9323 = vadd.f32 %v9266, %v9287
    %v9324 = vadd.f32 %v9267, %v9287
    %v9325 = vadd.f32 %v9268, %v9287
    %v9326 = vadd.f32 %v9269, %v9287
    %v9327 = vadd.f32 %v9270, %v9287
    %v9328 = vadd.f32 %v9271, %v9287
    %v9329 = vadd.f32 %v9272, %v9287
    %v9330 = vadd.f32 %v9273, %v9287
    %v9331 = vadd.f32 %v9274, %v9287
    %v9332 = vadd.f32 %v9275, %v9287
    %v9333 = vadd.f32 %v9276, %v9287
    %v9334 = vadd.f32 %v9277, %v9287
    %v9335 = vadd.f32 %v9278, %v9287
    %v9336 = vadd.f32 %v9279, %v9287
    %v9337 = vadd.f32 %v9280, %v9287
    %v9338 = vadd.f32 %v9281, %v9287
    %v9339 = vadd.f32 %v9282, %v9287
    %v9340 = vadd.f32 %v9283, %v9287
    %v9341 = vadd.f32 %v9284, %v9287
    %v9342 = vadd.f32 %v9285, %v9287
    %v9343 = vadd.f32 %v9286, %v9287
    %v9344 = vpack.c.bf16 %v9290, %v9288
    %v9345 = vpack.c.bf16 %v9291, %v9289
    %v9346 = vpack.c.bf16 %v9294, %v9292
    %v9347 = vpack.c.bf16 %v9295, %v9293
    %v9348 = vpack.c.bf16 %v9298, %v9296
    %v9349 = vpack.c.bf16 %v9299, %v9297
    %v9350 = vpack.c.bf16 %v9302, %v9300
    %v9351 = vpack.c.bf16 %v9303, %v9301
    %v9352 = vpack.c.bf16 %v9306, %v9304
    %v9353 = vpack.c.bf16 %v9307, %v9305
    %v9354 = vpack.c.bf16 %v9310, %v9308
    %v9355 = vpack.c.bf16 %v9311, %v9309
    %v9356 = vpack.c.bf16 %v9314, %v9312
    %v9357 = vpack.c.bf16 %v9315, %v9313
    %v9358 = vpack.c.bf16 %v9318, %v9316
    %v9359 = vpack.c.bf16 %v9319, %v9317
    %v9360 = vpack.c.bf16 %v9322, %v9320
    %v9361 = vpack.c.bf16 %v9323, %v9321
    %v9362 = vpack.c.bf16 %v9326, %v9324
    %v9363 = vpack.c.bf16 %v9327, %v9325
    %v9364 = vpack.c.bf16 %v9330, %v9328
    %v9365 = vpack.c.bf16 %v9331, %v9329
    %v9366 = vpack.c.bf16 %v9334, %v9332
    %v9367 = vpack.c.bf16 %v9335, %v9333
    %v9368 = vpack.c.bf16 %v9338, %v9336
    %v9369 = vpack.c.bf16 %v9339, %v9337
    %v9370 = vpack.c.bf16 %v9342, %v9340
    %v9371 = vpack.c.bf16 %v9343, %v9341
    %v9400 = vunpack.c.l.b16 %v9344
    %v9401 = vunpack.c.l.b16 %v9345
    %v9402 = vunpack.c.h.b16 %v9344
    %v9403 = vunpack.c.h.b16 %v9345
    %v9404 = vunpack.c.l.b16 %v9346
    %v9405 = vunpack.c.l.b16 %v9347
    %v9406 = vunpack.c.h.b16 %v9346
    %v9407 = vunpack.c.h.b16 %v9347
    %v9408 = vunpack.c.l.b16 %v9348
    %v9409 = vunpack.c.l.b16 %v9349
    %v9410 = vunpack.c.h.b16 %v9348
    %v9411 = vunpack.c.h.b16 %v9349
    %v9412 = vunpack.c.l.b16 %v9350
    %v9413 = vunpack.c.l.b16 %v9351
    %v9414 = vunpack.c.h.b16 %v9350
    %v9415 = vunpack.c.h.b16 %v9351
    %v9416 = vunpack.c.l.b16 %v9352
    %v9417 = vunpack.c.l.b16 %v9353
    %v9418 = vunpack.c.h.b16 %v9352
    %v9419 = vunpack.c.h.b16 %v9353
    %v9420 = vunpack.c.l.b16 %v9354
    %v9421 = vunpack.c.l.b16 %v9355
    %v9422 = vunpack.c.h.b16 %v9354
    %v9423 = vunpack.c.h.b16 %v9355
    %v9424 = vunpack.c.l.b16 %v9356
    %v9425 = vunpack.c.l.b16 %v9357
    %v9426 = vunpack.c.h.b16 %v9356
    %v9427 = vunpack.c.h.b16 %v9357
    %v9428 = vunpack.c.l.b16 %v9358
    %v9429 = vunpack.c.l.b16 %v9359
    %v9430 = vunpack.c.h.b16 %v9358
    %v9431 = vunpack.c.h.b16 %v9359
    %v9432 = vunpack.c.l.b16 %v9360
    %v9433 = vunpack.c.l.b16 %v9361
    %v9434 = vunpack.c.h.b16 %v9360
    %v9435 = vunpack.c.h.b16 %v9361
    %v9436 = vunpack.c.l.b16 %v9362
    %v9437 = vunpack.c.l.b16 %v9363
    %v9438 = vunpack.c.h.b16 %v9362
    %v9439 = vunpack.c.h.b16 %v9363
    %v9440 = vunpack.c.l.b16 %v9364
    %v9441 = vunpack.c.l.b16 %v9365
    %v9442 = vunpack.c.h.b16 %v9364
    %v9443 = vunpack.c.h.b16 %v9365
    %v9444 = vunpack.c.l.b16 %v9366
    %v9445 = vunpack.c.l.b16 %v9367
    %v9446 = vunpack.c.h.b16 %v9366
    %v9447 = vunpack.c.h.b16 %v9367
    %v9448 = vunpack.c.l.b16 %v9368
    %v9449 = vunpack.c.l.b16 %v9369
    %v9450 = vunpack.c.h.b16 %v9368
    %v9451 = vunpack.c.h.b16 %v9369
    %v9452 = vunpack.c.l.b16 %v9370
    %v9453 = vunpack.c.l.b16 %v9371
    %v9454 = vunpack.c.h.b16 %v9370
    %v9455 = vunpack.c.h.b16 %v9371
    %v9456 = vpack.c.b16 %v9401, %v9400
    %v9457 = vpack.c.b16 %v9403, %v9402
    %v9458 = vpack.c.b16 %v9405, %v9404
    %v9459 = vpack.c.b16 %v9407, %v9406
    %v9460 = vpack.c.b16 %v9409, %v9408
    %v9461 = vpack.c.b16 %v9411, %v9410
    %v9462 = vpack.c.b16 %v9413, %v9412
    %v9463 = vpack.c.b16 %v9415, %v9414
    %v9464 = vpack.c.b16 %v9417, %v9416
    %v9465 = vpack.c.b16 %v9419, %v9418
    %v9466 = vpack.c.b16 %v9421, %v9420
    %v9467 = vpack.c.b16 %v9423, %v9422
    %v9468 = vpack.c.b16 %v9425, %v9424
    %v9469 = vpack.c.b16 %v9427, %v9426
    %v9470 = vpack.c.b16 %v9429, %v9428
    %v9471 = vpack.c.b16 %v9431, %v9430
    %v9472 = vpack.c.b16 %v9433, %v9432
    %v9473 = vpack.c.b16 %v9435, %v9434
    %v9474 = vpack.c.b16 %v9437, %v9436
    %v9475 = vpack.c.b16 %v9439, %v9438
    %v9476 = vpack.c.b16 %v9441, %v9440
    %v9477 = vpack.c.b16 %v9443, %v9442
    %v9478 = vpack.c.b16 %v9445, %v9444
    %v9479 = vpack.c.b16 %v9447, %v9446
    %v9480 = vpack.c.b16 %v9449, %v9448
    %v9481 = vpack.c.b16 %v9451, %v9450
    %v9482 = vpack.c.b16 %v9453, %v9452
    %v9483 = vpack.c.b16 %v9455, %v9454
    %s9512 = scalar_lea.vmem [#allocation8], 1120
    %9513 = vst.msk [vmem:[%s9512] sm:$0xff] %vm1588, %v9456
    %9514 = vst.msk [vmem:[%s9512 + $0x8] sm:$0xff] %vm1588, %v9457
    %9515 = vst.msk [vmem:[%s9512 + $0x10] sm:$0xff] %vm1588, %v9458
    %9516 = vst.msk [vmem:[%s9512 + $0x18] sm:$0xff] %vm1588, %v9459
    %9517 = vst.msk [vmem:[%s9512 + $0x20] sm:$0xff] %vm1588, %v9460
    %9518 = vst.msk [vmem:[%s9512 + $0x28] sm:$0xff] %vm1588, %v9461
    %9519 = vst.msk [vmem:[%s9512 + $0x30] sm:$0xff] %vm1588, %v9462
    %9520 = vst.msk [vmem:[%s9512 + $0x38] sm:$0xff] %vm1588, %v9463
    %9521 = vst.msk [vmem:[%s9512 + $0x40] sm:$0xff] %vm1588, %v9464
    %9522 = vst.msk [vmem:[%s9512 + $0x48] sm:$0xff] %vm1588, %v9465
    %9523 = vst.msk [vmem:[%s9512 + $0x50] sm:$0xff] %vm1588, %v9466
    %9524 = vst.msk [vmem:[%s9512 + $0x58] sm:$0xff] %vm1588, %v9467
    %9525 = vst.msk [vmem:[%s9512 + $0x60] sm:$0xff] %vm1588, %v9468
    %9526 = vst.msk [vmem:[%s9512 + $0x68] sm:$0xff] %vm1588, %v9469
    %9527 = vst.msk [vmem:[%s9512 + $0x70] sm:$0xff] %vm1588, %v9470
    %9528 = vst.msk [vmem:[%s9512 + $0x78] sm:$0xff] %vm1588, %v9471
    %9529 = vst.msk [vmem:[%s9512 + $0x80] sm:$0xff] %vm1588, %v9472
    %9530 = vst.msk [vmem:[%s9512 + $0x88] sm:$0xff] %vm1588, %v9473
    %9531 = vst.msk [vmem:[%s9512 + $0x90] sm:$0xff] %vm1588, %v9474
    %9532 = vst.msk [vmem:[%s9512 + $0x98] sm:$0xff] %vm1588, %v9475
    %9533 = vst.msk [vmem:[%s9512 + $0xa0] sm:$0xff] %vm1588, %v9476
    %9534 = vst.msk [vmem:[%s9512 + $0xa8] sm:$0xff] %vm1588, %v9477
    %9535 = vst.msk [vmem:[%s9512 + $0xb0] sm:$0xff] %vm1588, %v9478
    %9536 = vst.msk [vmem:[%s9512 + $0xb8] sm:$0xff] %vm1588, %v9479
    %9537 = vst.msk [vmem:[%s9512 + $0xc0] sm:$0xff] %vm1588, %v9480
    %9538 = vst.msk [vmem:[%s9512 + $0xc8] sm:$0xff] %vm1588, %v9481
    %9539 = vst.msk [vmem:[%s9512 + $0xd0] sm:$0xff] %vm1588, %v9482
    %9540 = vst.msk [vmem:[%s9512 + $0xd8] sm:$0xff] %vm1588, %v9483
    %v9541 = vmul.f32 %v8775, %v9230
    %v9542 = vmul.f32 %v8777, %v9230
    %v9543 = vmul.f32 %v8779, %v9230
    %v9544 = vmul.f32 %v8781, %v9230
    %v9545 = vmul.f32 %v8785, %v9230
    %v9546 = vmul.f32 %v8787, %v9230
    %v9547 = vmul.f32 %v8789, %v9230
    %v9548 = vmul.f32 %v8791, %v9230
    %v9549 = vmul.f32 %v8795, %v9230
    %v9550 = vmul.f32 %v8797, %v9230
    %v9551 = vmul.f32 %v8799, %v9230
    %v9552 = vmul.f32 %v8801, %v9230
    %v9553 = vmul.f32 %v8805, %v9230
    %v9554 = vmul.f32 %v8807, %v9230
    %v9555 = vmul.f32 %v8809, %v9230
    %v9556 = vmul.f32 %v8811, %v9230
    %v9557 = vmul.f32 %v8815, %v9230
    %v9558 = vmul.f32 %v8817, %v9230
    %v9559 = vmul.f32 %v8819, %v9230
    %v9560 = vmul.f32 %v8821, %v9230
    %v9561 = vmul.f32 %v8825, %v9230
    %v9562 = vmul.f32 %v8827, %v9230
    %v9563 = vmul.f32 %v8829, %v9230
    %v9564 = vmul.f32 %v8831, %v9230
    %v9565 = vmul.f32 %v8835, %v9230
    %v9566 = vmul.f32 %v8837, %v9230
    %v9567 = vmul.f32 %v8839, %v9230
    %v9568 = vmul.f32 %v8841, %v9230
    %v9569 = vmul.f32 %v8845, %v9230
    %v9570 = vmul.f32 %v8847, %v9230
    %v9571 = vmul.f32 %v8849, %v9230
    %v9572 = vmul.f32 %v8851, %v9230
    %v9573 = vmul.f32 %v8855, %v9230
    %v9574 = vmul.f32 %v8857, %v9230
    %v9575 = vmul.f32 %v8859, %v9230
    %v9576 = vmul.f32 %v8861, %v9230
    %v9577 = vmul.f32 %v8865, %v9230
    %v9578 = vmul.f32 %v8867, %v9230
    %v9579 = vmul.f32 %v8869, %v9230
    %v9580 = vmul.f32 %v8871, %v9230
    %v9581 = vmul.f32 %v8875, %v9230
    %v9582 = vmul.f32 %v8877, %v9230
    %v9583 = vmul.f32 %v8879, %v9230
    %v9584 = vmul.f32 %v8881, %v9230
    %v9585 = vmul.f32 %v8885, %v9230
    %v9586 = vmul.f32 %v8887, %v9230
    %v9587 = vmul.f32 %v8889, %v9230
    %v9588 = vmul.f32 %v8891, %v9230
    %v9589 = vmul.f32 %v8895, %v9230
    %v9590 = vmul.f32 %v8897, %v9230
    %v9591 = vmul.f32 %v8899, %v9230
    %v9592 = vmul.f32 %v8901, %v9230
    %v9593 = vmul.f32 %v8905, %v9230
    %v9594 = vmul.f32 %v8907, %v9230
    %v9595 = vmul.f32 %v8909, %v9230
    %v9596 = vmul.f32 %v8911, %v9230
    %v9597 = vadd.f32 %v9541, %v9287
    %v9598 = vadd.f32 %v9542, %v9287
    %v9599 = vadd.f32 %v9543, %v9287
    %v9600 = vadd.f32 %v9544, %v9287
    %v9601 = vadd.f32 %v9545, %v9287
    %v9602 = vadd.f32 %v9546, %v9287
    %v9603 = vadd.f32 %v9547, %v9287
    %v9604 = vadd.f32 %v9548, %v9287
    %v9605 = vadd.f32 %v9549, %v9287
    %v9606 = vadd.f32 %v9550, %v9287
    %v9607 = vadd.f32 %v9551, %v9287
    %v9608 = vadd.f32 %v9552, %v9287
    %v9609 = vadd.f32 %v9553, %v9287
    %v9610 = vadd.f32 %v9554, %v9287
    %v9611 = vadd.f32 %v9555, %v9287
    %v9612 = vadd.f32 %v9556, %v9287
    %v9613 = vadd.f32 %v9557, %v9287
    %v9614 = vadd.f32 %v9558, %v9287
    %v9615 = vadd.f32 %v9559, %v9287
    %v9616 = vadd.f32 %v9560, %v9287
    %v9617 = vadd.f32 %v9561, %v9287
    %v9618 = vadd.f32 %v9562, %v9287
    %v9619 = vadd.f32 %v9563, %v9287
    %v9620 = vadd.f32 %v9564, %v9287
    %v9621 = vadd.f32 %v9565, %v9287
    %v9622 = vadd.f32 %v9566, %v9287
    %v9623 = vadd.f32 %v9567, %v9287
    %v9624 = vadd.f32 %v9568, %v9287
    %v9625 = vadd.f32 %v9569, %v9287
    %v9626 = vadd.f32 %v9570, %v9287
    %v9627 = vadd.f32 %v9571, %v9287
    %v9628 = vadd.f32 %v9572, %v9287
    %v9629 = vadd.f32 %v9573, %v9287
    %v9630 = vadd.f32 %v9574, %v9287
    %v9631 = vadd.f32 %v9575, %v9287
    %v9632 = vadd.f32 %v9576, %v9287
    %v9633 = vadd.f32 %v9577, %v9287
    %v9634 = vadd.f32 %v9578, %v9287
    %v9635 = vadd.f32 %v9579, %v9287
    %v9636 = vadd.f32 %v9580, %v9287
    %v9637 = vadd.f32 %v9581, %v9287
    %v9638 = vadd.f32 %v9582, %v9287
    %v9639 = vadd.f32 %v9583, %v9287
    %v9640 = vadd.f32 %v9584, %v9287
    %v9641 = vadd.f32 %v9585, %v9287
    %v9642 = vadd.f32 %v9586, %v9287
    %v9643 = vadd.f32 %v9587, %v9287
    %v9644 = vadd.f32 %v9588, %v9287
    %v9645 = vadd.f32 %v9589, %v9287
    %v9646 = vadd.f32 %v9590, %v9287
    %v9647 = vadd.f32 %v9591, %v9287
    %v9648 = vadd.f32 %v9592, %v9287
    %v9649 = vadd.f32 %v9593, %v9287
    %v9650 = vadd.f32 %v9594, %v9287
    %v9651 = vadd.f32 %v9595, %v9287
    %v9652 = vadd.f32 %v9596, %v9287
    %v9653 = vpack.c.bf16 %v9599, %v9597
    %v9654 = vpack.c.bf16 %v9600, %v9598
    %v9655 = vpack.c.bf16 %v9603, %v9601
    %v9656 = vpack.c.bf16 %v9604, %v9602
    %v9657 = vpack.c.bf16 %v9607, %v9605
    %v9658 = vpack.c.bf16 %v9608, %v9606
    %v9659 = vpack.c.bf16 %v9611, %v9609
    %v9660 = vpack.c.bf16 %v9612, %v9610
    %v9661 = vpack.c.bf16 %v9615, %v9613
    %v9662 = vpack.c.bf16 %v9616, %v9614
    %v9663 = vpack.c.bf16 %v9619, %v9617
    %v9664 = vpack.c.bf16 %v9620, %v9618
    %v9665 = vpack.c.bf16 %v9623, %v9621
    %v9666 = vpack.c.bf16 %v9624, %v9622
    %v9667 = vpack.c.bf16 %v9627, %v9625
    %v9668 = vpack.c.bf16 %v9628, %v9626
    %v9669 = vpack.c.bf16 %v9631, %v9629
    %v9670 = vpack.c.bf16 %v9632, %v9630
    %v9671 = vpack.c.bf16 %v9635, %v9633
    %v9672 = vpack.c.bf16 %v9636, %v9634
    %v9673 = vpack.c.bf16 %v9639, %v9637
    %v9674 = vpack.c.bf16 %v9640, %v9638
    %v9675 = vpack.c.bf16 %v9643, %v9641
    %v9676 = vpack.c.bf16 %v9644, %v9642
    %v9677 = vpack.c.bf16 %v9647, %v9645
    %v9678 = vpack.c.bf16 %v9648, %v9646
    %v9679 = vpack.c.bf16 %v9651, %v9649
    %v9680 = vpack.c.bf16 %v9652, %v9650
    %v9709 = vunpack.c.l.b16 %v9653
    %v9710 = vunpack.c.l.b16 %v9654
    %v9711 = vunpack.c.h.b16 %v9653
    %v9712 = vunpack.c.h.b16 %v9654
    %v9713 = vunpack.c.l.b16 %v9655
    %v9714 = vunpack.c.l.b16 %v9656
    %v9715 = vunpack.c.h.b16 %v9655
    %v9716 = vunpack.c.h.b16 %v9656
    %v9717 = vunpack.c.l.b16 %v9657
    %v9718 = vunpack.c.l.b16 %v9658
    %v9719 = vunpack.c.h.b16 %v9657
    %v9720 = vunpack.c.h.b16 %v9658
    %v9721 = vunpack.c.l.b16 %v9659
    %v9722 = vunpack.c.l.b16 %v9660
    %v9723 = vunpack.c.h.b16 %v9659
    %v9724 = vunpack.c.h.b16 %v9660
    %v9725 = vunpack.c.l.b16 %v9661
    %v9726 = vunpack.c.l.b16 %v9662
    %v9727 = vunpack.c.h.b16 %v9661
    %v9728 = vunpack.c.h.b16 %v9662
    %v9729 = vunpack.c.l.b16 %v9663
    %v9730 = vunpack.c.l.b16 %v9664
    %v9731 = vunpack.c.h.b16 %v9663
    %v9732 = vunpack.c.h.b16 %v9664
    %v9733 = vunpack.c.l.b16 %v9665
    %v9734 = vunpack.c.l.b16 %v9666
    %v9735 = vunpack.c.h.b16 %v9665
    %v9736 = vunpack.c.h.b16 %v9666
    %v9737 = vunpack.c.l.b16 %v9667
    %v9738 = vunpack.c.l.b16 %v9668
    %v9739 = vunpack.c.h.b16 %v9667
    %v9740 = vunpack.c.h.b16 %v9668
    %v9741 = vunpack.c.l.b16 %v9669
    %v9742 = vunpack.c.l.b16 %v9670
    %v9743 = vunpack.c.h.b16 %v9669
    %v9744 = vunpack.c.h.b16 %v9670
    %v9745 = vunpack.c.l.b16 %v9671
    %v9746 = vunpack.c.l.b16 %v9672
    %v9747 = vunpack.c.h.b16 %v9671
    %v9748 = vunpack.c.h.b16 %v9672
    %v9749 = vunpack.c.l.b16 %v9673
    %v9750 = vunpack.c.l.b16 %v9674
    %v9751 = vunpack.c.h.b16 %v9673
    %v9752 = vunpack.c.h.b16 %v9674
    %v9753 = vunpack.c.l.b16 %v9675
    %v9754 = vunpack.c.l.b16 %v9676
    %v9755 = vunpack.c.h.b16 %v9675
    %v9756 = vunpack.c.h.b16 %v9676
    %v9757 = vunpack.c.l.b16 %v9677
    %v9758 = vunpack.c.l.b16 %v9678
    %v9759 = vunpack.c.h.b16 %v9677
    %v9760 = vunpack.c.h.b16 %v9678
    %v9761 = vunpack.c.l.b16 %v9679
    %v9762 = vunpack.c.l.b16 %v9680
    %v9763 = vunpack.c.h.b16 %v9679
    %v9764 = vunpack.c.h.b16 %v9680
    %v9765 = vpack.c.b16 %v9710, %v9709
    %v9766 = vpack.c.b16 %v9712, %v9711
    %v9767 = vpack.c.b16 %v9714, %v9713
    %v9768 = vpack.c.b16 %v9716, %v9715
    %v9769 = vpack.c.b16 %v9718, %v9717
    %v9770 = vpack.c.b16 %v9720, %v9719
    %v9771 = vpack.c.b16 %v9722, %v9721
    %v9772 = vpack.c.b16 %v9724, %v9723
    %v9773 = vpack.c.b16 %v9726, %v9725
    %v9774 = vpack.c.b16 %v9728, %v9727
    %v9775 = vpack.c.b16 %v9730, %v9729
    %v9776 = vpack.c.b16 %v9732, %v9731
    %v9777 = vpack.c.b16 %v9734, %v9733
    %v9778 = vpack.c.b16 %v9736, %v9735
    %v9779 = vpack.c.b16 %v9738, %v9737
    %v9780 = vpack.c.b16 %v9740, %v9739
    %v9781 = vpack.c.b16 %v9742, %v9741
    %v9782 = vpack.c.b16 %v9744, %v9743
    %v9783 = vpack.c.b16 %v9746, %v9745
    %v9784 = vpack.c.b16 %v9748, %v9747
    %v9785 = vpack.c.b16 %v9750, %v9749
    %v9786 = vpack.c.b16 %v9752, %v9751
    %v9787 = vpack.c.b16 %v9754, %v9753
    %v9788 = vpack.c.b16 %v9756, %v9755
    %v9789 = vpack.c.b16 %v9758, %v9757
    %v9790 = vpack.c.b16 %v9760, %v9759
    %v9791 = vpack.c.b16 %v9762, %v9761
    %v9792 = vpack.c.b16 %v9764, %v9763
    %s9821 = scalar_lea.vmem [#allocation9], 1120
    %9822 = vst.msk [vmem:[%s9821] sm:$0xff] %vm1588, %v9765
    %9823 = vst.msk [vmem:[%s9821 + $0x8] sm:$0xff] %vm1588, %v9766
    %9824 = vst.msk [vmem:[%s9821 + $0x10] sm:$0xff] %vm1588, %v9767
    %9825 = vst.msk [vmem:[%s9821 + $0x18] sm:$0xff] %vm1588, %v9768
    %9826 = vst.msk [vmem:[%s9821 + $0x20] sm:$0xff] %vm1588, %v9769
    %9827 = vst.msk [vmem:[%s9821 + $0x28] sm:$0xff] %vm1588, %v9770
    %9828 = vst.msk [vmem:[%s9821 + $0x30] sm:$0xff] %vm1588, %v9771
    %9829 = vst.msk [vmem:[%s9821 + $0x38] sm:$0xff] %vm1588, %v9772
    %9830 = vst.msk [vmem:[%s9821 + $0x40] sm:$0xff] %vm1588, %v9773
    %9831 = vst.msk [vmem:[%s9821 + $0x48] sm:$0xff] %vm1588, %v9774
    %9832 = vst.msk [vmem:[%s9821 + $0x50] sm:$0xff] %vm1588, %v9775
    %9833 = vst.msk [vmem:[%s9821 + $0x58] sm:$0xff] %vm1588, %v9776
    %9834 = vst.msk [vmem:[%s9821 + $0x60] sm:$0xff] %vm1588, %v9777
    %9835 = vst.msk [vmem:[%s9821 + $0x68] sm:$0xff] %vm1588, %v9778
    %9836 = vst.msk [vmem:[%s9821 + $0x70] sm:$0xff] %vm1588, %v9779
    %9837 = vst.msk [vmem:[%s9821 + $0x78] sm:$0xff] %vm1588, %v9780
    %9838 = vst.msk [vmem:[%s9821 + $0x80] sm:$0xff] %vm1588, %v9781
    %9839 = vst.msk [vmem:[%s9821 + $0x88] sm:$0xff] %vm1588, %v9782
    %9840 = vst.msk [vmem:[%s9821 + $0x90] sm:$0xff] %vm1588, %v9783
    %9841 = vst.msk [vmem:[%s9821 + $0x98] sm:$0xff] %vm1588, %v9784
    %9842 = vst.msk [vmem:[%s9821 + $0xa0] sm:$0xff] %vm1588, %v9785
    %9843 = vst.msk [vmem:[%s9821 + $0xa8] sm:$0xff] %vm1588, %v9786
    %9844 = vst.msk [vmem:[%s9821 + $0xb0] sm:$0xff] %vm1588, %v9787
    %9845 = vst.msk [vmem:[%s9821 + $0xb8] sm:$0xff] %vm1588, %v9788
    %9846 = vst.msk [vmem:[%s9821 + $0xc0] sm:$0xff] %vm1588, %v9789
    %9847 = vst.msk [vmem:[%s9821 + $0xc8] sm:$0xff] %vm1588, %v9790
    %9848 = vst.msk [vmem:[%s9821 + $0xd0] sm:$0xff] %vm1588, %v9791
    %9849 = vst.msk [vmem:[%s9821 + $0xd8] sm:$0xff] %vm1588, %v9792
    %v9850 = vmul.f32 %v8966, %v9230
    %v9851 = vmul.f32 %v8969, %v9230
    %v9852 = vmul.f32 %v8974, %v9230
    %v9853 = vmul.f32 %v8977, %v9230
    %v9854 = vmul.f32 %v8982, %v9230
    %v9855 = vmul.f32 %v8985, %v9230
    %v9856 = vmul.f32 %v8990, %v9230
    %v9857 = vmul.f32 %v8993, %v9230
    %v9858 = vmul.f32 %v8998, %v9230
    %v9859 = vmul.f32 %v9001, %v9230
    %v9860 = vmul.f32 %v9006, %v9230
    %v9861 = vmul.f32 %v9009, %v9230
    %v9862 = vadd.f32 %v9850, %v9287
    %v9863 = vadd.f32 %v9851, %v9287
    %v9864 = vadd.f32 %v9852, %v9287
    %v9865 = vadd.f32 %v9853, %v9287
    %v9866 = vadd.f32 %v9854, %v9287
    %v9867 = vadd.f32 %v9855, %v9287
    %v9868 = vadd.f32 %v9856, %v9287
    %v9869 = vadd.f32 %v9857, %v9287
    %v9870 = vadd.f32 %v9858, %v9287
    %v9871 = vadd.f32 %v9859, %v9287
    %v9872 = vadd.f32 %v9860, %v9287
    %v9873 = vadd.f32 %v9861, %v9287
    %v9874 = vpack.c.bf16 %v9863, %v9862
    %v9875 = vpack.c.bf16 %v9865, %v9864
    %v9876 = vpack.c.bf16 %v9867, %v9866
    %v9877 = vpack.c.bf16 %v9869, %v9868
    %v9878 = vpack.c.bf16 %v9871, %v9870
    %v9879 = vpack.c.bf16 %v9873, %v9872
    %v9886 = vunpack.c.l.b16 %v9874
    %v9887 = vunpack.c.h.b16 %v9874
    %v9888 = vunpack.c.l.b16 %v9875
    %v9889 = vunpack.c.h.b16 %v9875
    %v9890 = vunpack.c.l.b16 %v9876
    %v9891 = vunpack.c.h.b16 %v9876
    %v9892 = vunpack.c.l.b16 %v9877
    %v9893 = vunpack.c.h.b16 %v9877
    %v9894 = vunpack.c.l.b16 %v9878
    %v9895 = vunpack.c.h.b16 %v9878
    %v9896 = vunpack.c.l.b16 %v9879
    %v9897 = vunpack.c.h.b16 %v9879
    %v9898 = vpack.c.b16 %v9886, %v9886
    %v9899 = vpack.c.b16 %v9887, %v9887
    %v9900 = vpack.c.b16 %v9888, %v9888
    %v9901 = vpack.c.b16 %v9889, %v9889
    %v9902 = vpack.c.b16 %v9890, %v9890
    %v9903 = vpack.c.b16 %v9891, %v9891
    %v9904 = vpack.c.b16 %v9892, %v9892
    %v9905 = vpack.c.b16 %v9893, %v9893
    %v9906 = vpack.c.b16 %v9894, %v9894
    %v9907 = vpack.c.b16 %v9895, %v9895
    %v9908 = vpack.c.b16 %v9896, %v9896
    %v9909 = vpack.c.b16 %v9897, %v9897
    %s9922 = scalar_lea.vmem [#allocation11], 240
    %9923 = vst.msk [vmem:[%s9922] sm:$0xf] %vm1997, %v9898
    %9924 = vst.msk [vmem:[%s9922 + $0x4] sm:$0xf] %vm1997, %v9899
    %9925 = vst.msk [vmem:[%s9922 + $0x8] sm:$0xf] %vm1997, %v9900
    %9926 = vst.msk [vmem:[%s9922 + $0xc] sm:$0xf] %vm1997, %v9901
    %9927 = vst.msk [vmem:[%s9922 + $0x10] sm:$0xf] %vm1997, %v9902
    %9928 = vst.msk [vmem:[%s9922 + $0x14] sm:$0xf] %vm1997, %v9903
    %9929 = vst.msk [vmem:[%s9922 + $0x18] sm:$0xf] %vm1997, %v9904
    %9930 = vst.msk [vmem:[%s9922 + $0x1c] sm:$0xf] %vm1997, %v9905
    %9931 = vst.msk [vmem:[%s9922 + $0x20] sm:$0xf] %vm1997, %v9906
    %9932 = vst.msk [vmem:[%s9922 + $0x24] sm:$0xf] %vm1997, %v9907
    %9933 = vst.msk [vmem:[%s9922 + $0x28] sm:$0xf] %vm1997, %v9908
    %9934 = vst.msk [vmem:[%s9922 + $0x2c] sm:$0xf] %vm1997, %v9909
    // Predicated region
    $region26: #{_forward_impl.1} parent=1 // pred_check
      _
    $region27: #{_forward_impl.1} parent=1 // pred_check_branch
      %9936 = sbr.rel (0) target = $region29
    $region28: #{_forward_impl.1} parent=1 // pred_region
      %s9938 = ssub.s32 21504, 21504
      %9939 = vsyncadd [#allocation7], %s9938
      %s9940 = sshll.u32 [#allocation8], 4
      %s9941 = int_to_ptr.vmem [resolvable:$true] %s9940
      %9946 = dma.vmem_to_hbm [thread:$0]  %s9941, 21504, %s7, [#allocation7], 128, 128, 8
    $region29: #{_forward_impl.1} parent=1 // pred_fallthru
      _
    // Predicated region
    $region30: #{_forward_impl.1} parent=1 // pred_check
      _
    $region31: #{_forward_impl.1} parent=1 // pred_check_branch
      %9948 = sbr.rel (0) target = $region33
    $region32: #{_forward_impl.1} parent=1 // pred_region
      %s9950 = ssub.s32 21504, 21504
      %9951 = vsyncadd [#allocation10], %s9950
      %s9952 = sshll.u32 [#allocation9], 4
      %s9953 = int_to_ptr.vmem [resolvable:$true] %s9952
      %9958 = dma.vmem_to_hbm [thread:$0]  %s9953, 21504, %s8, [#allocation10], 128, 128, 8
    $region33: #{_forward_impl.1} parent=1 // pred_fallthru
      _
    // Predicated region
    $region34: #{_forward_impl.1} parent=1 // pred_check
      _
    $region35: #{_forward_impl.1} parent=1 // pred_check_branch
      %9960 = sbr.rel (0) target = $region37
    $region36: #{_forward_impl.1} parent=1 // pred_region
      %s9962 = ssub.s32 4608, 4608
      %9963 = vsyncadd [#allocation10], %s9962
      %s9964 = sshll.u32 [#allocation11], 4
      %s9965 = int_to_ptr.vmem [resolvable:$true] %s9964
      %9970 = dma.vmem_to_hbm [thread:$0]  %s9965, 4608, %s9, [#allocation10], 64, 64, 4
    $region37: #{_forward_impl.1} parent=1 // pred_fallthru
      _
    // Predicated region
    $region38: #{_forward_impl.1} parent=1 // pred_check
      _
    $region39: #{_forward_impl.1} parent=1 // pred_check_branch
      %9972 = sbr.rel (0) target = $region41
    $region40: #{_forward_impl.1} parent=1 // pred_region
      %9973 = dma.done [#allocation7], 21504
    $region41: #{_forward_impl.1} parent=1 // pred_fallthru
      _
    // Predicated region
    $region42: #{_forward_impl.1} parent=1 // pred_check
      _
    $region43: #{_forward_impl.1} parent=1 // pred_check_branch
      %9975 = sbr.rel (0) target = $region45
    $region44: #{_forward_impl.1} parent=1 // pred_region
      %9976 = dma.done [#allocation10], 21504
    $region45: #{_forward_impl.1} parent=1 // pred_fallthru
      _
    // Predicated region
    $region46: #{_forward_impl.1} parent=1 // pred_check
      _
    $region47: #{_forward_impl.1} parent=1 // pred_check_branch
      %9978 = sbr.rel (0) target = $region49
    $region48: #{_forward_impl.1} parent=1 // pred_region
      %9979 = dma.done [#allocation10], 4608
    $region49: #{_forward_impl.1} parent=1 // pred_fallthru
      _
    %9980 = vsyncpa [#allocation6], 1
    %9981 = vsyncpa [#allocation7], 1
    %9982 = vsyncpa [#allocation10], 1

</llo_original>
